<compile_context>
chip_gen: v5e
topology: v5e:2x2
jax: 0.10.0
libtpu: 0.0.40
codegen_flags: <defaults>
</compile_context>

<pallas_src>
import functools

import jax
import jax.numpy as jnp
from jax.experimental import pallas as pl
from jax.experimental.pallas import tpu as pltpu

BN_EPS = 1e-5


# --------------------------------------------------------------------------
# Fused ResidualBlock Pallas kernel
# --------------------------------------------------------------------------

def _residual_block_kernel(x_ref, w1_ref, s1_ref, b1_ref,
                           w2_ref, s2_ref, b2_ref,
                           se_w1_ref, se_w2_ref,
                           *rest, has_shortcut):
    """Fused ResidualBlock forward for one batch element.

    x_ref    : (1, H, W, Cin)      input features (NHWC)
    w1_ref   : (9, Cin, Cout)      conv1 weights, tap-major (t = ky*3 + kx)
    s1/b1    : (1, Cout)           folded BN1 scale / bias
    w2_ref   : (9, Cout, Cout)     conv2 weights
    s2/b2    : (1, Cout)           folded BN2 scale / bias
    se_w1    : (Cr, Cout)          SE fc1 weight (out, in), bias-free
    se_w2    : (Cr, Cout)          SE fc2 weight transposed (in, out), bias-free
    [sc_w (Cin, Cout), sc_s/sc_b (1, Cout)]   1x1 shortcut + BN (Cin != Cout)
    o_ref    : (1, H, W, Cout)
    xpad_ref : VMEM (H+2, W+2, Cin)   zero-padded input scratch
    hpad_ref : VMEM (H+2, W+2, Cout)  zero-padded conv1-output scratch
    """
    if has_shortcut:
        sc_w_ref, sc_s_ref, sc_b_ref, o_ref, xpad_ref, hpad_ref = rest
    else:
        o_ref, xpad_ref, hpad_ref = rest

    _, H, W, Cout = o_ref.shape
    Cin = x_ref.shape[-1]
    HW = H * W

    xin = x_ref[0]                                            # (H, W, Cin)

    # Stage input into a zero-padded VMEM scratch (1-pixel halo).
    xpad_ref[...] = jnp.zeros_like(xpad_ref)
    xpad_ref[1:H + 1, 1:W + 1, :] = xin

    def conv3x3(src_ref, w_ref, cin):
        """3x3 'SAME' conv as 9 shifted (HW, cin) @ (cin, Cout) MXU matmuls."""
        acc = jnp.zeros((HW, Cout), jnp.float32)
        for t in range(9):                                    # static unroll
            dy, dx = t // 3, t % 3
            tap = src_ref[dy:dy + H, dx:dx + W, :].reshape(HW, cin)
            acc = acc + jnp.dot(tap, w_ref[t],
                                preferred_element_type=jnp.float32)
        return acc

    # conv1 + folded BN1 + ReLU, staged (padded) in VMEM for conv2.
    h1 = jnp.maximum(
        conv3x3(xpad_ref, w1_ref, Cin) * s1_ref[...] + b1_ref[...], 0.0)
    hpad_ref[...] = jnp.zeros_like(hpad_ref)
    hpad_ref[1:H + 1, 1:W + 1, :] = h1.reshape(H, W, Cout)

    # conv2 + folded BN2.
    h2 = conv3x3(hpad_ref, w2_ref, Cout) * s2_ref[...] + b2_ref[...]

    # SE: global average pool + fc1 / ReLU / fc2 / sigmoid (bias-free FCs,
    # done as VPU broadcast-multiply + reduce since Cr is tiny).
    pooled = jnp.sum(h2, axis=0, keepdims=True) * (1.0 / HW)       # (1, Cout)
    z = jnp.maximum(
        jnp.sum(se_w1_ref[...] * pooled, axis=1, keepdims=True), 0.0)  # (Cr, 1)
    gate = jax.nn.sigmoid(
        jnp.sum(se_w2_ref[...] * z, axis=0, keepdims=True))           # (1, Cout)

    # Shortcut branch: 1x1 conv + folded BN, or identity when Cin == Cout.
    if has_shortcut:
        sc = (jnp.dot(xin.reshape(HW, Cin), sc_w_ref[...],
                      preferred_element_type=jnp.float32)
              * sc_s_ref[...] + sc_b_ref[...])
    else:
        sc = xin.reshape(HW, Cin)

    out = jnp.maximum(h2 * gate + sc, 0.0)
    o_ref[...] = out.reshape(1, H, W, Cout).astype(o_ref.dtype)


# --------------------------------------------------------------------------
# Wrappers
# --------------------------------------------------------------------------

def _fold_bn(conv_bias, bn):
    scale = bn["gamma"] / jnp.sqrt(bn["var"] + BN_EPS)
    bias = (conv_bias - bn["mean"]) * scale + bn["beta"]
    return scale, bias


def residual_block(x_nhwc, p):
    """Fused ResidualBlock: a single pallas_call, grid over the batch dim."""
    B, H, W, Cin = x_nhwc.shape
    Cout = p["conv1_w"].shape[-1]
    Cr = p["se_w1"].shape[0]
    has_sc = "sc_w" in p

    s1, b1 = _fold_bn(p["conv1_b"], p["bn1"])
    s2, b2 = _fold_bn(p["conv2_b"], p["bn2"])

    def row_spec():
        return pl.BlockSpec((1, Cout), lambda b: (0, 0))

    operands = [
        x_nhwc,
        p["conv1_w"].reshape(9, Cin, Cout),
        s1.reshape(1, Cout), b1.reshape(1, Cout),
        p["conv2_w"].reshape(9, Cout, Cout),
        s2.reshape(1, Cout), b2.reshape(1, Cout),
        p["se_w1"], p["se_w2"],
    ]
    in_specs = [
        pl.BlockSpec((1, H, W, Cin), lambda b: (b, 0, 0, 0)),
        pl.BlockSpec((9, Cin, Cout), lambda b: (0, 0, 0)), row_spec(), row_spec(),
        pl.BlockSpec((9, Cout, Cout), lambda b: (0, 0, 0)), row_spec(), row_spec(),
        pl.BlockSpec((Cr, Cout), lambda b: (0, 0)),
        pl.BlockSpec((Cr, Cout), lambda b: (0, 0)),
    ]
    if has_sc:
        ss, sb = _fold_bn(p["sc_b"], p["sc_bn"])
        operands += [p["sc_w"], ss.reshape(1, Cout), sb.reshape(1, Cout)]
        in_specs += [pl.BlockSpec((Cin, Cout), lambda b: (0, 0)),
                     row_spec(), row_spec()]

    return pl.pallas_call(
        functools.partial(_residual_block_kernel, has_shortcut=has_sc),
        out_shape=jax.ShapeDtypeStruct((B, H, W, Cout), jnp.float32),
        grid_spec=pltpu.PrefetchScalarGridSpec(
            num_scalar_prefetch=0,
            grid=(B,),
            in_specs=in_specs,
            out_specs=pl.BlockSpec((1, H, W, Cout), lambda b: (b, 0, 0, 0)),
            scratch_shapes=[
                pltpu.VMEM((H + 2, W + 2, Cin), jnp.float32),
                pltpu.VMEM((H + 2, W + 2, Cout), jnp.float32),
            ]),
        compiler_params=pltpu.CompilerParams(
            dimension_semantics=("parallel",)),
    )(*operands)


def dense_block(x_nchw, params):
    """DenseBlock forward (NCHW in / NCHW out), dense connectivity via a
    pre-allocated channel buffer updated in place."""
    x = jnp.transpose(x_nchw, (0, 2, 3, 1))                  # NCHW -> NHWC
    B, H, W, C0 = x.shape
    couts = [p["conv1_w"].shape[-1] for p in params["layers"]]
    c_total = C0 + sum(couts)

    buf = jnp.zeros((B, H, W, c_total), x.dtype)
    buf = jax.lax.dynamic_update_slice(buf, x, (0, 0, 0, 0))
    c = C0
    for p, co in zip(params["layers"], couts):
        inp = jax.lax.slice(buf, (0, 0, 0, 0), (B, H, W, c))  # channel prefix
        out = residual_block(inp, p)
        buf = jax.lax.dynamic_update_slice(buf, out, (0, 0, 0, c))
        c += co
    return jnp.transpose(buf, (0, 3, 1, 2))                  # NHWC -> NCHW


# --------------------------------------------------------------------------
# Parameter construction (PyTorch-default-like init, deterministic)
# --------------------------------------------------------------------------

def _bn_params(c):
    return dict(gamma=jnp.ones((c,), jnp.float32),
                beta=jnp.zeros((c,), jnp.float32),
                mean=jnp.zeros((c,), jnp.float32),
                var=jnp.ones((c,), jnp.float32))


def init_residual_block(key, cin, cout, reduction=16):
    keys = jax.random.split(key, 8)

    def u(k, shape, fan_in):
        bound = 1.0 / (float(fan_in) ** 0.5)
        return jax.random.uniform(k, shape, jnp.float32, -bound, bound)

    cr = cout // reduction
    assert cr >= 1, "growth_rate must be >= reduction for a valid SE block"

    p = {
        "conv1_w": u(keys[0], (3, 3, cin, cout), 9 * cin),
        "conv1_b": u(keys[1], (cout,), 9 * cin),
        "bn1": _bn_params(cout),
        "conv2_w": u(keys[2], (3, 3, cout, cout), 9 * cout),
        "conv2_b": u(keys[3], (cout,), 9 * cout),
        "bn2": _bn_params(cout),
        "se_w1": u(keys[4], (cr, cout), cout),   # fc1 weight (out, in)
        "se_w2": u(keys[5], (cr, cout), cr),     # fc2 weight transposed (in, out)
    }
    if cin != cout:
        p["sc_w"] = u(keys[6], (cin, cout), cin)
        p["sc_b"] = u(keys[7], (cout,), cin)
        p["sc_bn"] = _bn_params(cout)
    return p


def init_dense_block(key, in_channels, growth_rate, num_layers, reduction=16):
    keys = jax.random.split(key, num_layers)
    layers = [
        init_residual_block(keys[i], in_channels + i * growth_rate, growth_rate,
                            reduction)
        for i in range(num_layers)
    ]
    return {"layers": layers}


# --------------------------------------------------------------------------
# Pure-JAX reference (mirrors the PyTorch forward, inference-mode BN)
# --------------------------------------------------------------------------

def _bn_ref(y, bn):
    return (y - bn["mean"]) / jnp.sqrt(bn["var"] + BN_EPS) * bn["gamma"] + bn["beta"]


def residual_block_ref(x_nhwc, p):
    def conv(x, w, b):
        y = jax.lax.conv_general_dilated(
            x, w, window_strides=(1, 1), padding="SAME",
            dimension_numbers=("NHWC", "HWIO", "NHWC"),
            precision=jax.lax.Precision.HIGHEST)
        return y + b

    h = jax.nn.relu(_bn_ref(conv(x_nhwc, p["conv1_w"], p["conv1_b"]), p["bn1"]))
    h = _bn_ref(conv(h, p["conv2_w"], p["conv2_b"]), p["bn2"])
    pooled = jnp.mean(h, axis=(1, 2))                     # (B, C)
    g = jax.nn.relu(pooled @ p["se_w1"].T)                # (B, Cr)
    g = jax.nn.sigmoid(g @ p["se_w2"])                    # (B, C)
    h = h * g[:, None, None, :]
    if "sc_w" in p:
        sc = _bn_ref(conv(x_nhwc, p["sc_w"][None, None, :, :], p["sc_b"]),
                     p["sc_bn"])
    else:
        sc = x_nhwc
    return jax.nn.relu(h + sc)


def dense_block_ref(x_nchw, params):
    x = jnp.transpose(x_nchw, (0, 2, 3, 1))
    feats = [x]
    for p in params["layers"]:
        feats.append(residual_block_ref(jnp.concatenate(feats, axis=-1), p))
    return jnp.transpose(jnp.concatenate(feats, axis=-1), (0, 3, 1, 2))


# --------------------------------------------------------------------------

if __name__ == "__main__":
    key = jax.random.PRNGKey(0)
    k_x, k_p = jax.random.split(key)

    # growth_rate >= 16 so the SE hidden dim (channel // 16) is non-degenerate,
    # matching the PyTorch module's reduction=16.
    B, C, H, W = 2, 16, 16, 16
    growth_rate, num_layers = 16, 2

    x = jax.random.normal(k_x, (B, C, H, W), dtype=jnp.float32)
    params = init_dense_block(k_p, C, growth_rate, num_layers)

    fwd = jax.jit(dense_block)
    out = jax.block_until_ready(fwd(x, params))

    ref = jax.block_until_ready(dense_block_ref(x, params))

    assert out.shape == (B, C + num_layers * growth_rate, H, W), out.shape
    assert jnp.allclose(out, ref, atol=2e-3, rtol=2e-3), float(
        jnp.max(jnp.abs(out - ref)))

    print("KERNEL_OK")
</pallas_src>

<mosaic_0001>
module attributes {stable_mosaic.version = 11 : i64} {
  func.func @_residual_block_kernel(%arg0: i32, %arg1: memref<1x16x16x16xf32, #tpu.memory_space<vmem>>, %arg2: memref<9x16x16xf32, #tpu.memory_space<vmem>>, %arg3: memref<1x16xf32, #tpu.memory_space<vmem>>, %arg4: memref<1x16xf32, #tpu.memory_space<vmem>>, %arg5: memref<9x16x16xf32, #tpu.memory_space<vmem>>, %arg6: memref<1x16xf32, #tpu.memory_space<vmem>>, %arg7: memref<1x16xf32, #tpu.memory_space<vmem>>, %arg8: memref<1x16xf32, #tpu.memory_space<vmem>>, %arg9: memref<1x16xf32, #tpu.memory_space<vmem>>, %arg10: memref<1x16x16x16xf32, #tpu.memory_space<vmem>>, %arg11: memref<18x18x16xf32, #tpu.memory_space<vmem>>, %arg12: memref<18x18x16xf32, #tpu.memory_space<vmem>>) attributes {dimension_semantics = [#tpu.dimension_semantics<parallel>], iteration_bounds = array<i64: 2>, scalar_prefetch = 0 : i64, scratch_operands = 2 : i64, tpu.core_type = #tpu.core_type<tc>, window_params = [{transform_indices = @transform_0, window_bounds = array<i64: 1, 16, 16, 16>}, {pipeline_mode = #tpu.pipeline_mode<synchronous>, transform_indices = @transform_1, window_bounds = array<i64: 9, 16, 16>}, {pipeline_mode = #tpu.pipeline_mode<synchronous>, transform_indices = @transform_2, window_bounds = array<i64: 1, 16>}, {pipeline_mode = #tpu.pipeline_mode<synchronous>, transform_indices = @transform_3, window_bounds = array<i64: 1, 16>}, {pipeline_mode = #tpu.pipeline_mode<synchronous>, transform_indices = @transform_4, window_bounds = array<i64: 9, 16, 16>}, {pipeline_mode = #tpu.pipeline_mode<synchronous>, transform_indices = @transform_5, window_bounds = array<i64: 1, 16>}, {pipeline_mode = #tpu.pipeline_mode<synchronous>, transform_indices = @transform_6, window_bounds = array<i64: 1, 16>}, {pipeline_mode = #tpu.pipeline_mode<synchronous>, transform_indices = @transform_7, window_bounds = array<i64: 1, 16>}, {pipeline_mode = #tpu.pipeline_mode<synchronous>, transform_indices = @transform_8, window_bounds = array<i64: 1, 16>}, {transform_indices = @transform_9, window_bounds = array<i64: 1, 16, 16, 16>}]} {
    %c0 = arith.constant 0 : index
    %c0_0 = arith.constant 0 : index
    %c0_1 = arith.constant 0 : index
    %c0_2 = arith.constant 0 : index
    %0 = vector.load %arg1[%c0, %c0_0, %c0_1, %c0_2] : memref<1x16x16x16xf32, #tpu.memory_space<vmem>>, vector<1x16x16x16xf32>
    %1 = vector.shape_cast %0 : vector<1x16x16x16xf32> to vector<16x16x16xf32>
    %cst = arith.constant 0.000000e+00 : f32
    %2 = vector.broadcast %cst : f32 to vector<18x18x16xf32>
    %c0_3 = arith.constant 0 : index
    %c0_4 = arith.constant 0 : index
    %c0_5 = arith.constant 0 : index
    %3 = vector.load %arg11[%c0_3, %c0_4, %c0_5] : memref<18x18x16xf32, #tpu.memory_space<vmem>>, vector<18x18x16xf32>
    tpu.vector_store %arg11[%c0_3, %c0_4, %c0_5], %2 {strides = array<i32>} : memref<18x18x16xf32, #tpu.memory_space<vmem>>, vector<18x18x16xf32>,
    %c1 = arith.constant 1 : index
    %c1_6 = arith.constant 1 : index
    %c0_7 = arith.constant 0 : index
    %4 = vector.load %arg11[%c1, %c1_6, %c0_7] : memref<18x18x16xf32, #tpu.memory_space<vmem>>, vector<16x16x16xf32>
    tpu.vector_store %arg11[%c1, %c1_6, %c0_7], %1 {strides = array<i32>} : memref<18x18x16xf32, #tpu.memory_space<vmem>>, vector<16x16x16xf32>,
    %cst_8 = arith.constant 0.000000e+00 : f32
    %5 = vector.broadcast %cst_8 : f32 to vector<256x16xf32>
    %c0_9 = arith.constant 0 : index
    %c0_10 = arith.constant 0 : index
    %c0_11 = arith.constant 0 : index
    %6 = vector.load %arg11[%c0_9, %c0_10, %c0_11] : memref<18x18x16xf32, #tpu.memory_space<vmem>>, vector<16x16x16xf32>
    %7 = vector.shape_cast %6 : vector<16x16x16xf32> to vector<256x16xf32>
    %c0_12 = arith.constant 0 : index
    %c0_13 = arith.constant 0 : index
    %c0_14 = arith.constant 0 : index
    %8 = vector.load %arg2[%c0_12, %c0_13, %c0_14] : memref<9x16x16xf32, #tpu.memory_space<vmem>>, vector<1x16x16xf32>
    %9 = vector.shape_cast %8 : vector<1x16x16xf32> to vector<16x16xf32>
    %cst_15 = arith.constant dense<0.000000e+00> : vector<256x16xf32>
    %10 = tpu.matmul %7, %9, %cst_15 {dimension_numbers = #tpu.dot_dimension_numbers<[1], [0], [0], [1], [0, 0, 1, 1], [], []>} : vector<256x16xf32>, vector<16x16xf32>, vector<256x16xf32> -> vector<256x16xf32>
    %11 = arith.addf %5, %10 : vector<256x16xf32>
    %c0_16 = arith.constant 0 : index
    %c1_17 = arith.constant 1 : index
    %c0_18 = arith.constant 0 : index
    %12 = vector.load %arg11[%c0_16, %c1_17, %c0_18] : memref<18x18x16xf32, #tpu.memory_space<vmem>>, vector<16x16x16xf32>
    %13 = vector.shape_cast %12 : vector<16x16x16xf32> to vector<256x16xf32>
    %c1_19 = arith.constant 1 : index
    %c0_20 = arith.constant 0 : index
    %c0_21 = arith.constant 0 : index
    %14 = vector.load %arg2[%c1_19, %c0_20, %c0_21] : memref<9x16x16xf32, #tpu.memory_space<vmem>>, vector<1x16x16xf32>
    %15 = vector.shape_cast %14 : vector<1x16x16xf32> to vector<16x16xf32>
    %cst_22 = arith.constant dense<0.000000e+00> : vector<256x16xf32>
    %16 = tpu.matmul %13, %15, %cst_22 {dimension_numbers = #tpu.dot_dimension_numbers<[1], [0], [0], [1], [0, 0, 1, 1], [], []>} : vector<256x16xf32>, vector<16x16xf32>, vector<256x16xf32> -> vector<256x16xf32>
    %17 = arith.addf %11, %16 : vector<256x16xf32>
    %c0_23 = arith.constant 0 : index
    %c2 = arith.constant 2 : index
    %c0_24 = arith.constant 0 : index
    %18 = vector.load %arg11[%c0_23, %c2, %c0_24] : memref<18x18x16xf32, #tpu.memory_space<vmem>>, vector<16x16x16xf32>
    %19 = vector.shape_cast %18 : vector<16x16x16xf32> to vector<256x16xf32>
    %c2_25 = arith.constant 2 : index
    %c0_26 = arith.constant 0 : index
    %c0_27 = arith.constant 0 : index
    %20 = vector.load %arg2[%c2_25, %c0_26, %c0_27] : memref<9x16x16xf32, #tpu.memory_space<vmem>>, vector<1x16x16xf32>
    %21 = vector.shape_cast %20 : vector<1x16x16xf32> to vector<16x16xf32>
    %cst_28 = arith.constant dense<0.000000e+00> : vector<256x16xf32>
    %22 = tpu.matmul %19, %21, %cst_28 {dimension_numbers = #tpu.dot_dimension_numbers<[1], [0], [0], [1], [0, 0, 1, 1], [], []>} : vector<256x16xf32>, vector<16x16xf32>, vector<256x16xf32> -> vector<256x16xf32>
    %23 = arith.addf %17, %22 : vector<256x16xf32>
    %c1_29 = arith.constant 1 : index
    %c0_30 = arith.constant 0 : index
    %c0_31 = arith.constant 0 : index
    %24 = vector.load %arg11[%c1_29, %c0_30, %c0_31] : memref<18x18x16xf32, #tpu.memory_space<vmem>>, vector<16x16x16xf32>
    %25 = vector.shape_cast %24 : vector<16x16x16xf32> to vector<256x16xf32>
    %c3 = arith.constant 3 : index
    %c0_32 = arith.constant 0 : index
    %c0_33 = arith.constant 0 : index
    %26 = vector.load %arg2[%c3, %c0_32, %c0_33] : memref<9x16x16xf32, #tpu.memory_space<vmem>>, vector<1x16x16xf32>
    %27 = vector.shape_cast %26 : vector<1x16x16xf32> to vector<16x16xf32>
    %cst_34 = arith.constant dense<0.000000e+00> : vector<256x16xf32>
    %28 = tpu.matmul %25, %27, %cst_34 {dimension_numbers = #tpu.dot_dimension_numbers<[1], [0], [0], [1], [0, 0, 1, 1], [], []>} : vector<256x16xf32>, vector<16x16xf32>, vector<256x16xf32> -> vector<256x16xf32>
    %29 = arith.addf %23, %28 : vector<256x16xf32>
    %c1_35 = arith.constant 1 : index
    %c1_36 = arith.constant 1 : index
    %c0_37 = arith.constant 0 : index
    %30 = vector.load %arg11[%c1_35, %c1_36, %c0_37] : memref<18x18x16xf32, #tpu.memory_space<vmem>>, vector<16x16x16xf32>
    %31 = vector.shape_cast %30 : vector<16x16x16xf32> to vector<256x16xf32>
    %c4 = arith.constant 4 : index
    %c0_38 = arith.constant 0 : index
    %c0_39 = arith.constant 0 : index
    %32 = vector.load %arg2[%c4, %c0_38, %c0_39] : memref<9x16x16xf32, #tpu.memory_space<vmem>>, vector<1x16x16xf32>
    %33 = vector.shape_cast %32 : vector<1x16x16xf32> to vector<16x16xf32>
    %cst_40 = arith.constant dense<0.000000e+00> : vector<256x16xf32>
    %34 = tpu.matmul %31, %33, %cst_40 {dimension_numbers = #tpu.dot_dimension_numbers<[1], [0], [0], [1], [0, 0, 1, 1], [], []>} : vector<256x16xf32>, vector<16x16xf32>, vector<256x16xf32> -> vector<256x16xf32>
    %35 = arith.addf %29, %34 : vector<256x16xf32>
    %c1_41 = arith.constant 1 : index
    %c2_42 = arith.constant 2 : index
    %c0_43 = arith.constant 0 : index
    %36 = vector.load %arg11[%c1_41, %c2_42, %c0_43] : memref<18x18x16xf32, #tpu.memory_space<vmem>>, vector<16x16x16xf32>
    %37 = vector.shape_cast %36 : vector<16x16x16xf32> to vector<256x16xf32>
    %c5 = arith.constant 5 : index
    %c0_44 = arith.constant 0 : index
    %c0_45 = arith.constant 0 : index
    %38 = vector.load %arg2[%c5, %c0_44, %c0_45] : memref<9x16x16xf32, #tpu.memory_space<vmem>>, vector<1x16x16xf32>
    %39 = vector.shape_cast %38 : vector<1x16x16xf32> to vector<16x16xf32>
    %cst_46 = arith.constant dense<0.000000e+00> : vector<256x16xf32>
    %40 = tpu.matmul %37, %39, %cst_46 {dimension_numbers = #tpu.dot_dimension_numbers<[1], [0], [0], [1], [0, 0, 1, 1], [], []>} : vector<256x16xf32>, vector<16x16xf32>, vector<256x16xf32> -> vector<256x16xf32>
    %41 = arith.addf %35, %40 : vector<256x16xf32>
    %c2_47 = arith.constant 2 : index
    %c0_48 = arith.constant 0 : index
    %c0_49 = arith.constant 0 : index
    %42 = vector.load %arg11[%c2_47, %c0_48, %c0_49] : memref<18x18x16xf32, #tpu.memory_space<vmem>>, vector<16x16x16xf32>
    %43 = vector.shape_cast %42 : vector<16x16x16xf32> to vector<256x16xf32>
    %c6 = arith.constant 6 : index
    %c0_50 = arith.constant 0 : index
    %c0_51 = arith.constant 0 : index
    %44 = vector.load %arg2[%c6, %c0_50, %c0_51] : memref<9x16x16xf32, #tpu.memory_space<vmem>>, vector<1x16x16xf32>
    %45 = vector.shape_cast %44 : vector<1x16x16xf32> to vector<16x16xf32>
    %cst_52 = arith.constant dense<0.000000e+00> : vector<256x16xf32>
    %46 = tpu.matmul %43, %45, %cst_52 {dimension_numbers = #tpu.dot_dimension_numbers<[1], [0], [0], [1], [0, 0, 1, 1], [], []>} : vector<256x16xf32>, vector<16x16xf32>, vector<256x16xf32> -> vector<256x16xf32>
    %47 = arith.addf %41, %46 : vector<256x16xf32>
    %c2_53 = arith.constant 2 : index
    %c1_54 = arith.constant 1 : index
    %c0_55 = arith.constant 0 : index
    %48 = vector.load %arg11[%c2_53, %c1_54, %c0_55] : memref<18x18x16xf32, #tpu.memory_space<vmem>>, vector<16x16x16xf32>
    %49 = vector.shape_cast %48 : vector<16x16x16xf32> to vector<256x16xf32>
    %c7 = arith.constant 7 : index
    %c0_56 = arith.constant 0 : index
    %c0_57 = arith.constant 0 : index
    %50 = vector.load %arg2[%c7, %c0_56, %c0_57] : memref<9x16x16xf32, #tpu.memory_space<vmem>>, vector<1x16x16xf32>
    %51 = vector.shape_cast %50 : vector<1x16x16xf32> to vector<16x16xf32>
    %cst_58 = arith.constant dense<0.000000e+00> : vector<256x16xf32>
    %52 = tpu.matmul %49, %51, %cst_58 {dimension_numbers = #tpu.dot_dimension_numbers<[1], [0], [0], [1], [0, 0, 1, 1], [], []>} : vector<256x16xf32>, vector<16x16xf32>, vector<256x16xf32> -> vector<256x16xf32>
    %53 = arith.addf %47, %52 : vector<256x16xf32>
    %c2_59 = arith.constant 2 : index
    %c2_60 = arith.constant 2 : index
    %c0_61 = arith.constant 0 : index
    %54 = vector.load %arg11[%c2_59, %c2_60, %c0_61] : memref<18x18x16xf32, #tpu.memory_space<vmem>>, vector<16x16x16xf32>
    %55 = vector.shape_cast %54 : vector<16x16x16xf32> to vector<256x16xf32>
    %c8 = arith.constant 8 : index
    %c0_62 = arith.constant 0 : index
    %c0_63 = arith.constant 0 : index
    %56 = vector.load %arg2[%c8, %c0_62, %c0_63] : memref<9x16x16xf32, #tpu.memory_space<vmem>>, vector<1x16x16xf32>
    %57 = vector.shape_cast %56 : vector<1x16x16xf32> to vector<16x16xf32>
    %cst_64 = arith.constant dense<0.000000e+00> : vector<256x16xf32>
    %58 = tpu.matmul %55, %57, %cst_64 {dimension_numbers = #tpu.dot_dimension_numbers<[1], [0], [0], [1], [0, 0, 1, 1], [], []>} : vector<256x16xf32>, vector<16x16xf32>, vector<256x16xf32> -> vector<256x16xf32>
    %59 = arith.addf %53, %58 : vector<256x16xf32>
    %c0_65 = arith.constant 0 : index
    %c0_66 = arith.constant 0 : index
    %60 = vector.load %arg3[%c0_65, %c0_66] : memref<1x16xf32, #tpu.memory_space<vmem>>, vector<1x16xf32>
    %61 = vector.broadcast %60 : vector<1x16xf32> to vector<256x16xf32>
    %62 = arith.mulf %59, %61 : vector<256x16xf32>
    %c0_67 = arith.constant 0 : index
    %c0_68 = arith.constant 0 : index
    %63 = vector.load %arg4[%c0_67, %c0_68] : memref<1x16xf32, #tpu.memory_space<vmem>>, vector<1x16xf32>
    %64 = vector.broadcast %63 : vector<1x16xf32> to vector<256x16xf32>
    %65 = arith.addf %62, %64 : vector<256x16xf32>
    %cst_69 = arith.constant 0.000000e+00 : f32
    %66 = vector.broadcast %cst_69 : f32 to vector<256x16xf32>
    %67 = arith.maximumf %65, %66 : vector<256x16xf32>
    %cst_70 = arith.constant 0.000000e+00 : f32
    %68 = vector.broadcast %cst_70 : f32 to vector<18x18x16xf32>
    %c0_71 = arith.constant 0 : index
    %c0_72 = arith.constant 0 : index
    %c0_73 = arith.constant 0 : index
    %69 = vector.load %arg12[%c0_71, %c0_72, %c0_73] : memref<18x18x16xf32, #tpu.memory_space<vmem>>, vector<18x18x16xf32>
    tpu.vector_store %arg12[%c0_71, %c0_72, %c0_73], %68 {strides = array<i32>} : memref<18x18x16xf32, #tpu.memory_space<vmem>>, vector<18x18x16xf32>,
    %70 = vector.shape_cast %67 : vector<256x16xf32> to vector<16x16x16xf32>
    %c1_74 = arith.constant 1 : index
    %c1_75 = arith.constant 1 : index
    %c0_76 = arith.constant 0 : index
    %71 = vector.load %arg12[%c1_74, %c1_75, %c0_76] : memref<18x18x16xf32, #tpu.memory_space<vmem>>, vector<16x16x16xf32>
    tpu.vector_store %arg12[%c1_74, %c1_75, %c0_76], %70 {strides = array<i32>} : memref<18x18x16xf32, #tpu.memory_space<vmem>>, vector<16x16x16xf32>,
    %cst_77 = arith.constant 0.000000e+00 : f32
    %72 = vector.broadcast %cst_77 : f32 to vector<256x16xf32>
    %c0_78 = arith.constant 0 : index
    %c0_79 = arith.constant 0 : index
    %c0_80 = arith.constant 0 : index
    %73 = vector.load %arg12[%c0_78, %c0_79, %c0_80] : memref<18x18x16xf32, #tpu.memory_space<vmem>>, vector<16x16x16xf32>
    %74 = vector.shape_cast %73 : vector<16x16x16xf32> to vector<256x16xf32>
    %c0_81 = arith.constant 0 : index
    %c0_82 = arith.constant 0 : index
    %c0_83 = arith.constant 0 : index
    %75 = vector.load %arg5[%c0_81, %c0_82, %c0_83] : memref<9x16x16xf32, #tpu.memory_space<vmem>>, vector<1x16x16xf32>
    %76 = vector.shape_cast %75 : vector<1x16x16xf32> to vector<16x16xf32>
    %cst_84 = arith.constant dense<0.000000e+00> : vector<256x16xf32>
    %77 = tpu.matmul %74, %76, %cst_84 {dimension_numbers = #tpu.dot_dimension_numbers<[1], [0], [0], [1], [0, 0, 1, 1], [], []>} : vector<256x16xf32>, vector<16x16xf32>, vector<256x16xf32> -> vector<256x16xf32>
    %78 = arith.addf %72, %77 : vector<256x16xf32>
    %c0_85 = arith.constant 0 : index
    %c1_86 = arith.constant 1 : index
    %c0_87 = arith.constant 0 : index
    %79 = vector.load %arg12[%c0_85, %c1_86, %c0_87] : memref<18x18x16xf32, #tpu.memory_space<vmem>>, vector<16x16x16xf32>
    %80 = vector.shape_cast %79 : vector<16x16x16xf32> to vector<256x16xf32>
    %c1_88 = arith.constant 1 : index
    %c0_89 = arith.constant 0 : index
    %c0_90 = arith.constant 0 : index
    %81 = vector.load %arg5[%c1_88, %c0_89, %c0_90] : memref<9x16x16xf32, #tpu.memory_space<vmem>>, vector<1x16x16xf32>
    %82 = vector.shape_cast %81 : vector<1x16x16xf32> to vector<16x16xf32>
    %cst_91 = arith.constant dense<0.000000e+00> : vector<256x16xf32>
    %83 = tpu.matmul %80, %82, %cst_91 {dimension_numbers = #tpu.dot_dimension_numbers<[1], [0], [0], [1], [0, 0, 1, 1], [], []>} : vector<256x16xf32>, vector<16x16xf32>, vector<256x16xf32> -> vector<256x16xf32>
    %84 = arith.addf %78, %83 : vector<256x16xf32>
    %c0_92 = arith.constant 0 : index
    %c2_93 = arith.constant 2 : index
    %c0_94 = arith.constant 0 : index
    %85 = vector.load %arg12[%c0_92, %c2_93, %c0_94] : memref<18x18x16xf32, #tpu.memory_space<vmem>>, vector<16x16x16xf32>
    %86 = vector.shape_cast %85 : vector<16x16x16xf32> to vector<256x16xf32>
    %c2_95 = arith.constant 2 : index
    %c0_96 = arith.constant 0 : index
    %c0_97 = arith.constant 0 : index
    %87 = vector.load %arg5[%c2_95, %c0_96, %c0_97] : memref<9x16x16xf32, #tpu.memory_space<vmem>>, vector<1x16x16xf32>
    %88 = vector.shape_cast %87 : vector<1x16x16xf32> to vector<16x16xf32>
    %cst_98 = arith.constant dense<0.000000e+00> : vector<256x16xf32>
    %89 = tpu.matmul %86, %88, %cst_98 {dimension_numbers = #tpu.dot_dimension_numbers<[1], [0], [0], [1], [0, 0, 1, 1], [], []>} : vector<256x16xf32>, vector<16x16xf32>, vector<256x16xf32> -> vector<256x16xf32>
    %90 = arith.addf %84, %89 : vector<256x16xf32>
    %c1_99 = arith.constant 1 : index
    %c0_100 = arith.constant 0 : index
    %c0_101 = arith.constant 0 : index
    %91 = vector.load %arg12[%c1_99, %c0_100, %c0_101] : memref<18x18x16xf32, #tpu.memory_space<vmem>>, vector<16x16x16xf32>
    %92 = vector.shape_cast %91 : vector<16x16x16xf32> to vector<256x16xf32>
    %c3_102 = arith.constant 3 : index
    %c0_103 = arith.constant 0 : index
    %c0_104 = arith.constant 0 : index
    %93 = vector.load %arg5[%c3_102, %c0_103, %c0_104] : memref<9x16x16xf32, #tpu.memory_space<vmem>>, vector<1x16x16xf32>
    %94 = vector.shape_cast %93 : vector<1x16x16xf32> to vector<16x16xf32>
    %cst_105 = arith.constant dense<0.000000e+00> : vector<256x16xf32>
    %95 = tpu.matmul %92, %94, %cst_105 {dimension_numbers = #tpu.dot_dimension_numbers<[1], [0], [0], [1], [0, 0, 1, 1], [], []>} : vector<256x16xf32>, vector<16x16xf32>, vector<256x16xf32> -> vector<256x16xf32>
    %96 = arith.addf %90, %95 : vector<256x16xf32>
    %c1_106 = arith.constant 1 : index
    %c1_107 = arith.constant 1 : index
    %c0_108 = arith.constant 0 : index
    %97 = vector.load %arg12[%c1_106, %c1_107, %c0_108] : memref<18x18x16xf32, #tpu.memory_space<vmem>>, vector<16x16x16xf32>
    %98 = vector.shape_cast %97 : vector<16x16x16xf32> to vector<256x16xf32>
    %c4_109 = arith.constant 4 : index
    %c0_110 = arith.constant 0 : index
    %c0_111 = arith.constant 0 : index
    %99 = vector.load %arg5[%c4_109, %c0_110, %c0_111] : memref<9x16x16xf32, #tpu.memory_space<vmem>>, vector<1x16x16xf32>
    %100 = vector.shape_cast %99 : vector<1x16x16xf32> to vector<16x16xf32>
    %cst_112 = arith.constant dense<0.000000e+00> : vector<256x16xf32>
    %101 = tpu.matmul %98, %100, %cst_112 {dimension_numbers = #tpu.dot_dimension_numbers<[1], [0], [0], [1], [0, 0, 1, 1], [], []>} : vector<256x16xf32>, vector<16x16xf32>, vector<256x16xf32> -> vector<256x16xf32>
    %102 = arith.addf %96, %101 : vector<256x16xf32>
    %c1_113 = arith.constant 1 : index
    %c2_114 = arith.constant 2 : index
    %c0_115 = arith.constant 0 : index
    %103 = vector.load %arg12[%c1_113, %c2_114, %c0_115] : memref<18x18x16xf32, #tpu.memory_space<vmem>>, vector<16x16x16xf32>
    %104 = vector.shape_cast %103 : vector<16x16x16xf32> to vector<256x16xf32>
    %c5_116 = arith.constant 5 : index
    %c0_117 = arith.constant 0 : index
    %c0_118 = arith.constant 0 : index
    %105 = vector.load %arg5[%c5_116, %c0_117, %c0_118] : memref<9x16x16xf32, #tpu.memory_space<vmem>>, vector<1x16x16xf32>
    %106 = vector.shape_cast %105 : vector<1x16x16xf32> to vector<16x16xf32>
    %cst_119 = arith.constant dense<0.000000e+00> : vector<256x16xf32>
    %107 = tpu.matmul %104, %106, %cst_119 {dimension_numbers = #tpu.dot_dimension_numbers<[1], [0], [0], [1], [0, 0, 1, 1], [], []>} : vector<256x16xf32>, vector<16x16xf32>, vector<256x16xf32> -> vector<256x16xf32>
    %108 = arith.addf %102, %107 : vector<256x16xf32>
    %c2_120 = arith.constant 2 : index
    %c0_121 = arith.constant 0 : index
    %c0_122 = arith.constant 0 : index
    %109 = vector.load %arg12[%c2_120, %c0_121, %c0_122] : memref<18x18x16xf32, #tpu.memory_space<vmem>>, vector<16x16x16xf32>
    %110 = vector.shape_cast %109 : vector<16x16x16xf32> to vector<256x16xf32>
    %c6_123 = arith.constant 6 : index
    %c0_124 = arith.constant 0 : index
    %c0_125 = arith.constant 0 : index
    %111 = vector.load %arg5[%c6_123, %c0_124, %c0_125] : memref<9x16x16xf32, #tpu.memory_space<vmem>>, vector<1x16x16xf32>
    %112 = vector.shape_cast %111 : vector<1x16x16xf32> to vector<16x16xf32>
    %cst_126 = arith.constant dense<0.000000e+00> : vector<256x16xf32>
    %113 = tpu.matmul %110, %112, %cst_126 {dimension_numbers = #tpu.dot_dimension_numbers<[1], [0], [0], [1], [0, 0, 1, 1], [], []>} : vector<256x16xf32>, vector<16x16xf32>, vector<256x16xf32> -> vector<256x16xf32>
    %114 = arith.addf %108, %113 : vector<256x16xf32>
    %c2_127 = arith.constant 2 : index
    %c1_128 = arith.constant 1 : index
    %c0_129 = arith.constant 0 : index
    %115 = vector.load %arg12[%c2_127, %c1_128, %c0_129] : memref<18x18x16xf32, #tpu.memory_space<vmem>>, vector<16x16x16xf32>
    %116 = vector.shape_cast %115 : vector<16x16x16xf32> to vector<256x16xf32>
    %c7_130 = arith.constant 7 : index
    %c0_131 = arith.constant 0 : index
    %c0_132 = arith.constant 0 : index
    %117 = vector.load %arg5[%c7_130, %c0_131, %c0_132] : memref<9x16x16xf32, #tpu.memory_space<vmem>>, vector<1x16x16xf32>
    %118 = vector.shape_cast %117 : vector<1x16x16xf32> to vector<16x16xf32>
    %cst_133 = arith.constant dense<0.000000e+00> : vector<256x16xf32>
    %119 = tpu.matmul %116, %118, %cst_133 {dimension_numbers = #tpu.dot_dimension_numbers<[1], [0], [0], [1], [0, 0, 1, 1], [], []>} : vector<256x16xf32>, vector<16x16xf32>, vector<256x16xf32> -> vector<256x16xf32>
    %120 = arith.addf %114, %119 : vector<256x16xf32>
    %c2_134 = arith.constant 2 : index
    %c2_135 = arith.constant 2 : index
    %c0_136 = arith.constant 0 : index
    %121 = vector.load %arg12[%c2_134, %c2_135, %c0_136] : memref<18x18x16xf32, #tpu.memory_space<vmem>>, vector<16x16x16xf32>
    %122 = vector.shape_cast %121 : vector<16x16x16xf32> to vector<256x16xf32>
    %c8_137 = arith.constant 8 : index
    %c0_138 = arith.constant 0 : index
    %c0_139 = arith.constant 0 : index
    %123 = vector.load %arg5[%c8_137, %c0_138, %c0_139] : memref<9x16x16xf32, #tpu.memory_space<vmem>>, vector<1x16x16xf32>
    %124 = vector.shape_cast %123 : vector<1x16x16xf32> to vector<16x16xf32>
    %cst_140 = arith.constant dense<0.000000e+00> : vector<256x16xf32>
    %125 = tpu.matmul %122, %124, %cst_140 {dimension_numbers = #tpu.dot_dimension_numbers<[1], [0], [0], [1], [0, 0, 1, 1], [], []>} : vector<256x16xf32>, vector<16x16xf32>, vector<256x16xf32> -> vector<256x16xf32>
    %126 = arith.addf %120, %125 : vector<256x16xf32>
    %c0_141 = arith.constant 0 : index
    %c0_142 = arith.constant 0 : index
    %127 = vector.load %arg6[%c0_141, %c0_142] : memref<1x16xf32, #tpu.memory_space<vmem>>, vector<1x16xf32>
    %128 = vector.broadcast %127 : vector<1x16xf32> to vector<256x16xf32>
    %129 = arith.mulf %126, %128 : vector<256x16xf32>
    %c0_143 = arith.constant 0 : index
    %c0_144 = arith.constant 0 : index
    %130 = vector.load %arg7[%c0_143, %c0_144] : memref<1x16xf32, #tpu.memory_space<vmem>>, vector<1x16xf32>
    %131 = vector.broadcast %130 : vector<1x16xf32> to vector<256x16xf32>
    %132 = arith.addf %129, %131 : vector<256x16xf32>
    %cst_145 = arith.constant dense<0.000000e+00> : vector<16xf32>
    %133 = vector.multi_reduction <add>, %132, %cst_145 [0] : vector<256x16xf32> to vector<16xf32>
    %134 = vector.shape_cast %133 : vector<16xf32> to vector<1x16xf32>
    %cst_146 = arith.constant 3.906250e-03 : f32
    %135 = vector.broadcast %cst_146 : f32 to vector<1x16xf32>
    %136 = arith.mulf %134, %135 : vector<1x16xf32>
    %c0_147 = arith.constant 0 : index
    %c0_148 = arith.constant 0 : index
    %137 = vector.load %arg8[%c0_147, %c0_148] : memref<1x16xf32, #tpu.memory_space<vmem>>, vector<1x16xf32>
    %138 = arith.mulf %137, %136 : vector<1x16xf32>
    %cst_149 = arith.constant dense<0.000000e+00> : vector<1xf32>
    %139 = vector.multi_reduction <add>, %138, %cst_149 [1] : vector<1x16xf32> to vector<1xf32>
    %140 = vector.shape_cast %139 : vector<1xf32> to vector<1x1xf32>
    %cst_150 = arith.constant 0.000000e+00 : f32
    %141 = vector.broadcast %cst_150 : f32 to vector<1x1xf32>
    %142 = arith.maximumf %140, %141 : vector<1x1xf32>
    %c0_151 = arith.constant 0 : index
    %c0_152 = arith.constant 0 : index
    %143 = vector.load %arg9[%c0_151, %c0_152] : memref<1x16xf32, #tpu.memory_space<vmem>>, vector<1x16xf32>
    %144 = vector.broadcast %142 : vector<1x1xf32> to vector<1x16xf32>
    %145 = arith.mulf %143, %144 : vector<1x16xf32>
    %cst_153 = arith.constant dense<0.000000e+00> : vector<16xf32>
    %146 = vector.multi_reduction <add>, %145, %cst_153 [0] : vector<1x16xf32> to vector<16xf32>
    %147 = vector.shape_cast %146 : vector<16xf32> to vector<1x16xf32>
    %148 = arith.negf %147 : vector<1x16xf32>
    %149 = math.exp %148 : vector<1x16xf32>
    %cst_154 = arith.constant 1.000000e+00 : f32
    %150 = vector.broadcast %cst_154 : f32 to vector<1x16xf32>
    %151 = arith.addf %150, %149 : vector<1x16xf32>
    %152 = arith.divf %150, %151 : vector<1x16xf32>
    %153 = vector.shape_cast %1 : vector<16x16x16xf32> to vector<256x16xf32>
    %154 = vector.broadcast %152 : vector<1x16xf32> to vector<256x16xf32>
    %155 = arith.mulf %132, %154 : vector<256x16xf32>
    %156 = arith.addf %155, %153 : vector<256x16xf32>
    %cst_155 = arith.constant 0.000000e+00 : f32
    %157 = vector.broadcast %cst_155 : f32 to vector<256x16xf32>
    %158 = arith.maximumf %156, %157 : vector<256x16xf32>
    %159 = vector.shape_cast %158 : vector<256x16xf32> to vector<1x16x16x16xf32>
    %c0_156 = arith.constant 0 : index
    %c0_157 = arith.constant 0 : index
    %c0_158 = arith.constant 0 : index
    %c0_159 = arith.constant 0 : index
    %160 = vector.load %arg10[%c0_156, %c0_157, %c0_158, %c0_159] : memref<1x16x16x16xf32, #tpu.memory_space<vmem>>, vector<1x16x16x16xf32>
    tpu.vector_store %arg10[%c0_156, %c0_157, %c0_158, %c0_159], %159 {strides = array<i32>} : memref<1x16x16x16xf32, #tpu.memory_space<vmem>>, vector<1x16x16x16xf32>,
    return
  }
  func.func @transform_0(%arg0: i32) -> (i32, i32, i32, i32) {
    %c0_i32 = arith.constant 0 : i32
    %c0_i32_0 = arith.constant 0 : i32
    %c0_i32_1 = arith.constant 0 : i32
    %c0_i32_2 = arith.constant 0 : i32
    return %arg0, %c0_i32, %c0_i32_0, %c0_i32_1 : i32, i32, i32, i32
  }
  func.func @transform_1(%arg0: i32) -> (i32, i32, i32) {
    %c0_i32 = arith.constant 0 : i32
    %c0_i32_0 = arith.constant 0 : i32
    %c0_i32_1 = arith.constant 0 : i32
    %c0_i32_2 = arith.constant 0 : i32
    return %c0_i32, %c0_i32_0, %c0_i32_1 : i32, i32, i32
  }
  func.func @transform_2(%arg0: i32) -> (i32, i32) {
    %c0_i32 = arith.constant 0 : i32
    %c0_i32_0 = arith.constant 0 : i32
    %c0_i32_1 = arith.constant 0 : i32
    return %c0_i32, %c0_i32_0 : i32, i32
  }
  func.func @transform_3(%arg0: i32) -> (i32, i32) {
    %c0_i32 = arith.constant 0 : i32
    %c0_i32_0 = arith.constant 0 : i32
    %c0_i32_1 = arith.constant 0 : i32
    return %c0_i32, %c0_i32_0 : i32, i32
  }
  func.func @transform_4(%arg0: i32) -> (i32, i32, i32) {
    %c0_i32 = arith.constant 0 : i32
    %c0_i32_0 = arith.constant 0 : i32
    %c0_i32_1 = arith.constant 0 : i32
    %c0_i32_2 = arith.constant 0 : i32
    return %c0_i32, %c0_i32_0, %c0_i32_1 : i32, i32, i32
  }
  func.func @transform_5(%arg0: i32) -> (i32, i32) {
    %c0_i32 = arith.constant 0 : i32
    %c0_i32_0 = arith.constant 0 : i32
    %c0_i32_1 = arith.constant 0 : i32
    return %c0_i32, %c0_i32_0 : i32, i32
  }
  func.func @transform_6(%arg0: i32) -> (i32, i32) {
    %c0_i32 = arith.constant 0 : i32
    %c0_i32_0 = arith.constant 0 : i32
    %c0_i32_1 = arith.constant 0 : i32
    return %c0_i32, %c0_i32_0 : i32, i32
  }
  func.func @transform_7(%arg0: i32) -> (i32, i32) {
    %c0_i32 = arith.constant 0 : i32
    %c0_i32_0 = arith.constant 0 : i32
    %c0_i32_1 = arith.constant 0 : i32
    return %c0_i32, %c0_i32_0 : i32, i32
  }
  func.func @transform_8(%arg0: i32) -> (i32, i32) {
    %c0_i32 = arith.constant 0 : i32
    %c0_i32_0 = arith.constant 0 : i32
    %c0_i32_1 = arith.constant 0 : i32
    return %c0_i32, %c0_i32_0 : i32, i32
  }
  func.func @transform_9(%arg0: i32) -> (i32, i32, i32, i32) {
    %c0_i32 = arith.constant 0 : i32
    %c0_i32_0 = arith.constant 0 : i32
    %c0_i32_1 = arith.constant 0 : i32
    %c0_i32_2 = arith.constant 0 : i32
    return %arg0, %c0_i32, %c0_i32_0, %c0_i32_1 : i32, i32, i32, i32
  }
}

module attributes {stable_mosaic.version = 11 : i64} {
  func.func @_residual_block_kernel(%arg0: i32, %arg1: memref<1x16x16x32xf32, #tpu.memory_space<vmem>>, %arg2: memref<9x32x16xf32, #tpu.memory_space<vmem>>, %arg3: memref<1x16xf32, #tpu.memory_space<vmem>>, %arg4: memref<1x16xf32, #tpu.memory_space<vmem>>, %arg5: memref<9x16x16xf32, #tpu.memory_space<vmem>>, %arg6: memref<1x16xf32, #tpu.memory_space<vmem>>, %arg7: memref<1x16xf32, #tpu.memory_space<vmem>>, %arg8: memref<1x16xf32, #tpu.memory_space<vmem>>, %arg9: memref<1x16xf32, #tpu.memory_space<vmem>>, %arg10: memref<32x16xf32, #tpu.memory_space<vmem>>, %arg11: memref<1x16xf32, #tpu.memory_space<vmem>>, %arg12: memref<1x16xf32, #tpu.memory_space<vmem>>, %arg13: memref<1x16x16x16xf32, #tpu.memory_space<vmem>>, %arg14: memref<18x18x32xf32, #tpu.memory_space<vmem>>, %arg15: memref<18x18x16xf32, #tpu.memory_space<vmem>>) attributes {dimension_semantics = [#tpu.dimension_semantics<parallel>], iteration_bounds = array<i64: 2>, scalar_prefetch = 0 : i64, scratch_operands = 2 : i64, tpu.core_type = #tpu.core_type<tc>, window_params = [{transform_indices = @transform_0, window_bounds = array<i64: 1, 16, 16, 32>}, {pipeline_mode = #tpu.pipeline_mode<synchronous>, transform_indices = @transform_1, window_bounds = array<i64: 9, 32, 16>}, {pipeline_mode = #tpu.pipeline_mode<synchronous>, transform_indices = @transform_2, window_bounds = array<i64: 1, 16>}, {pipeline_mode = #tpu.pipeline_mode<synchronous>, transform_indices = @transform_3, window_bounds = array<i64: 1, 16>}, {pipeline_mode = #tpu.pipeline_mode<synchronous>, transform_indices = @transform_4, window_bounds = array<i64: 9, 16, 16>}, {pipeline_mode = #tpu.pipeline_mode<synchronous>, transform_indices = @transform_5, window_bounds = array<i64: 1, 16>}, {pipeline_mode = #tpu.pipeline_mode<synchronous>, transform_indices = @transform_6, window_bounds = array<i64: 1, 16>}, {pipeline_mode = #tpu.pipeline_mode<synchronous>, transform_indices = @transform_7, window_bounds = array<i64: 1, 16>}, {pipeline_mode = #tpu.pipeline_mode<synchronous>, transform_indices = @transform_8, window_bounds = array<i64: 1, 16>}, {pipeline_mode = #tpu.pipeline_mode<synchronous>, transform_indices = @transform_9, window_bounds = array<i64: 32, 16>}, {pipeline_mode = #tpu.pipeline_mode<synchronous>, transform_indices = @transform_10, window_bounds = array<i64: 1, 16>}, {pipeline_mode = #tpu.pipeline_mode<synchronous>, transform_indices = @transform_11, window_bounds = array<i64: 1, 16>}, {transform_indices = @transform_12, window_bounds = array<i64: 1, 16, 16, 16>}]} {
    %c0 = arith.constant 0 : index
    %c0_0 = arith.constant 0 : index
    %c0_1 = arith.constant 0 : index
    %c0_2 = arith.constant 0 : index
    %0 = vector.load %arg1[%c0, %c0_0, %c0_1, %c0_2] : memref<1x16x16x32xf32, #tpu.memory_space<vmem>>, vector<1x16x16x32xf32>
    %1 = vector.shape_cast %0 : vector<1x16x16x32xf32> to vector<16x16x32xf32>
    %cst = arith.constant 0.000000e+00 : f32
    %2 = vector.broadcast %cst : f32 to vector<18x18x32xf32>
    %c0_3 = arith.constant 0 : index
    %c0_4 = arith.constant 0 : index
    %c0_5 = arith.constant 0 : index
    %3 = vector.load %arg14[%c0_3, %c0_4, %c0_5] : memref<18x18x32xf32, #tpu.memory_space<vmem>>, vector<18x18x32xf32>
    tpu.vector_store %arg14[%c0_3, %c0_4, %c0_5], %2 {strides = array<i32>} : memref<18x18x32xf32, #tpu.memory_space<vmem>>, vector<18x18x32xf32>,
    %c1 = arith.constant 1 : index
    %c1_6 = arith.constant 1 : index
    %c0_7 = arith.constant 0 : index
    %4 = vector.load %arg14[%c1, %c1_6, %c0_7] : memref<18x18x32xf32, #tpu.memory_space<vmem>>, vector<16x16x32xf32>
    tpu.vector_store %arg14[%c1, %c1_6, %c0_7], %1 {strides = array<i32>} : memref<18x18x32xf32, #tpu.memory_space<vmem>>, vector<16x16x32xf32>,
    %cst_8 = arith.constant 0.000000e+00 : f32
    %5 = vector.broadcast %cst_8 : f32 to vector<256x16xf32>
    %c0_9 = arith.constant 0 : index
    %c0_10 = arith.constant 0 : index
    %c0_11 = arith.constant 0 : index
    %6 = vector.load %arg14[%c0_9, %c0_10, %c0_11] : memref<18x18x32xf32, #tpu.memory_space<vmem>>, vector<16x16x32xf32>
    %7 = vector.shape_cast %6 : vector<16x16x32xf32> to vector<256x32xf32>
    %c0_12 = arith.constant 0 : index
    %c0_13 = arith.constant 0 : index
    %c0_14 = arith.constant 0 : index
    %8 = vector.load %arg2[%c0_12, %c0_13, %c0_14] : memref<9x32x16xf32, #tpu.memory_space<vmem>>, vector<1x32x16xf32>
    %9 = vector.shape_cast %8 : vector<1x32x16xf32> to vector<32x16xf32>
    %cst_15 = arith.constant dense<0.000000e+00> : vector<256x16xf32>
    %10 = tpu.matmul %7, %9, %cst_15 {dimension_numbers = #tpu.dot_dimension_numbers<[1], [0], [0], [1], [0, 0, 1, 1], [], []>} : vector<256x32xf32>, vector<32x16xf32>, vector<256x16xf32> -> vector<256x16xf32>
    %11 = arith.addf %5, %10 : vector<256x16xf32>
    %c0_16 = arith.constant 0 : index
    %c1_17 = arith.constant 1 : index
    %c0_18 = arith.constant 0 : index
    %12 = vector.load %arg14[%c0_16, %c1_17, %c0_18] : memref<18x18x32xf32, #tpu.memory_space<vmem>>, vector<16x16x32xf32>
    %13 = vector.shape_cast %12 : vector<16x16x32xf32> to vector<256x32xf32>
    %c1_19 = arith.constant 1 : index
    %c0_20 = arith.constant 0 : index
    %c0_21 = arith.constant 0 : index
    %14 = vector.load %arg2[%c1_19, %c0_20, %c0_21] : memref<9x32x16xf32, #tpu.memory_space<vmem>>, vector<1x32x16xf32>
    %15 = vector.shape_cast %14 : vector<1x32x16xf32> to vector<32x16xf32>
    %cst_22 = arith.constant dense<0.000000e+00> : vector<256x16xf32>
    %16 = tpu.matmul %13, %15, %cst_22 {dimension_numbers = #tpu.dot_dimension_numbers<[1], [0], [0], [1], [0, 0, 1, 1], [], []>} : vector<256x32xf32>, vector<32x16xf32>, vector<256x16xf32> -> vector<256x16xf32>
    %17 = arith.addf %11, %16 : vector<256x16xf32>
    %c0_23 = arith.constant 0 : index
    %c2 = arith.constant 2 : index
    %c0_24 = arith.constant 0 : index
    %18 = vector.load %arg14[%c0_23, %c2, %c0_24] : memref<18x18x32xf32, #tpu.memory_space<vmem>>, vector<16x16x32xf32>
    %19 = vector.shape_cast %18 : vector<16x16x32xf32> to vector<256x32xf32>
    %c2_25 = arith.constant 2 : index
    %c0_26 = arith.constant 0 : index
    %c0_27 = arith.constant 0 : index
    %20 = vector.load %arg2[%c2_25, %c0_26, %c0_27] : memref<9x32x16xf32, #tpu.memory_space<vmem>>, vector<1x32x16xf32>
    %21 = vector.shape_cast %20 : vector<1x32x16xf32> to vector<32x16xf32>
    %cst_28 = arith.constant dense<0.000000e+00> : vector<256x16xf32>
    %22 = tpu.matmul %19, %21, %cst_28 {dimension_numbers = #tpu.dot_dimension_numbers<[1], [0], [0], [1], [0, 0, 1, 1], [], []>} : vector<256x32xf32>, vector<32x16xf32>, vector<256x16xf32> -> vector<256x16xf32>
    %23 = arith.addf %17, %22 : vector<256x16xf32>
    %c1_29 = arith.constant 1 : index
    %c0_30 = arith.constant 0 : index
    %c0_31 = arith.constant 0 : index
    %24 = vector.load %arg14[%c1_29, %c0_30, %c0_31] : memref<18x18x32xf32, #tpu.memory_space<vmem>>, vector<16x16x32xf32>
    %25 = vector.shape_cast %24 : vector<16x16x32xf32> to vector<256x32xf32>
    %c3 = arith.constant 3 : index
    %c0_32 = arith.constant 0 : index
    %c0_33 = arith.constant 0 : index
    %26 = vector.load %arg2[%c3, %c0_32, %c0_33] : memref<9x32x16xf32, #tpu.memory_space<vmem>>, vector<1x32x16xf32>
    %27 = vector.shape_cast %26 : vector<1x32x16xf32> to vector<32x16xf32>
    %cst_34 = arith.constant dense<0.000000e+00> : vector<256x16xf32>
    %28 = tpu.matmul %25, %27, %cst_34 {dimension_numbers = #tpu.dot_dimension_numbers<[1], [0], [0], [1], [0, 0, 1, 1], [], []>} : vector<256x32xf32>, vector<32x16xf32>, vector<256x16xf32> -> vector<256x16xf32>
    %29 = arith.addf %23, %28 : vector<256x16xf32>
    %c1_35 = arith.constant 1 : index
    %c1_36 = arith.constant 1 : index
    %c0_37 = arith.constant 0 : index
    %30 = vector.load %arg14[%c1_35, %c1_36, %c0_37] : memref<18x18x32xf32, #tpu.memory_space<vmem>>, vector<16x16x32xf32>
    %31 = vector.shape_cast %30 : vector<16x16x32xf32> to vector<256x32xf32>
    %c4 = arith.constant 4 : index
    %c0_38 = arith.constant 0 : index
    %c0_39 = arith.constant 0 : index
    %32 = vector.load %arg2[%c4, %c0_38, %c0_39] : memref<9x32x16xf32, #tpu.memory_space<vmem>>, vector<1x32x16xf32>
    %33 = vector.shape_cast %32 : vector<1x32x16xf32> to vector<32x16xf32>
    %cst_40 = arith.constant dense<0.000000e+00> : vector<256x16xf32>
    %34 = tpu.matmul %31, %33, %cst_40 {dimension_numbers = #tpu.dot_dimension_numbers<[1], [0], [0], [1], [0, 0, 1, 1], [], []>} : vector<256x32xf32>, vector<32x16xf32>, vector<256x16xf32> -> vector<256x16xf32>
    %35 = arith.addf %29, %34 : vector<256x16xf32>
    %c1_41 = arith.constant 1 : index
    %c2_42 = arith.constant 2 : index
    %c0_43 = arith.constant 0 : index
    %36 = vector.load %arg14[%c1_41, %c2_42, %c0_43] : memref<18x18x32xf32, #tpu.memory_space<vmem>>, vector<16x16x32xf32>
    %37 = vector.shape_cast %36 : vector<16x16x32xf32> to vector<256x32xf32>
    %c5 = arith.constant 5 : index
    %c0_44 = arith.constant 0 : index
    %c0_45 = arith.constant 0 : index
    %38 = vector.load %arg2[%c5, %c0_44, %c0_45] : memref<9x32x16xf32, #tpu.memory_space<vmem>>, vector<1x32x16xf32>
    %39 = vector.shape_cast %38 : vector<1x32x16xf32> to vector<32x16xf32>
    %cst_46 = arith.constant dense<0.000000e+00> : vector<256x16xf32>
    %40 = tpu.matmul %37, %39, %cst_46 {dimension_numbers = #tpu.dot_dimension_numbers<[1], [0], [0], [1], [0, 0, 1, 1], [], []>} : vector<256x32xf32>, vector<32x16xf32>, vector<256x16xf32> -> vector<256x16xf32>
    %41 = arith.addf %35, %40 : vector<256x16xf32>
    %c2_47 = arith.constant 2 : index
    %c0_48 = arith.constant 0 : index
    %c0_49 = arith.constant 0 : index
    %42 = vector.load %arg14[%c2_47, %c0_48, %c0_49] : memref<18x18x32xf32, #tpu.memory_space<vmem>>, vector<16x16x32xf32>
    %43 = vector.shape_cast %42 : vector<16x16x32xf32> to vector<256x32xf32>
    %c6 = arith.constant 6 : index
    %c0_50 = arith.constant 0 : index
    %c0_51 = arith.constant 0 : index
    %44 = vector.load %arg2[%c6, %c0_50, %c0_51] : memref<9x32x16xf32, #tpu.memory_space<vmem>>, vector<1x32x16xf32>
    %45 = vector.shape_cast %44 : vector<1x32x16xf32> to vector<32x16xf32>
    %cst_52 = arith.constant dense<0.000000e+00> : vector<256x16xf32>
    %46 = tpu.matmul %43, %45, %cst_52 {dimension_numbers = #tpu.dot_dimension_numbers<[1], [0], [0], [1], [0, 0, 1, 1], [], []>} : vector<256x32xf32>, vector<32x16xf32>, vector<256x16xf32> -> vector<256x16xf32>
    %47 = arith.addf %41, %46 : vector<256x16xf32>
    %c2_53 = arith.constant 2 : index
    %c1_54 = arith.constant 1 : index
    %c0_55 = arith.constant 0 : index
    %48 = vector.load %arg14[%c2_53, %c1_54, %c0_55] : memref<18x18x32xf32, #tpu.memory_space<vmem>>, vector<16x16x32xf32>
    %49 = vector.shape_cast %48 : vector<16x16x32xf32> to vector<256x32xf32>
    %c7 = arith.constant 7 : index
    %c0_56 = arith.constant 0 : index
    %c0_57 = arith.constant 0 : index
    %50 = vector.load %arg2[%c7, %c0_56, %c0_57] : memref<9x32x16xf32, #tpu.memory_space<vmem>>, vector<1x32x16xf32>
    %51 = vector.shape_cast %50 : vector<1x32x16xf32> to vector<32x16xf32>
    %cst_58 = arith.constant dense<0.000000e+00> : vector<256x16xf32>
    %52 = tpu.matmul %49, %51, %cst_58 {dimension_numbers = #tpu.dot_dimension_numbers<[1], [0], [0], [1], [0, 0, 1, 1], [], []>} : vector<256x32xf32>, vector<32x16xf32>, vector<256x16xf32> -> vector<256x16xf32>
    %53 = arith.addf %47, %52 : vector<256x16xf32>
    %c2_59 = arith.constant 2 : index
    %c2_60 = arith.constant 2 : index
    %c0_61 = arith.constant 0 : index
    %54 = vector.load %arg14[%c2_59, %c2_60, %c0_61] : memref<18x18x32xf32, #tpu.memory_space<vmem>>, vector<16x16x32xf32>
    %55 = vector.shape_cast %54 : vector<16x16x32xf32> to vector<256x32xf32>
    %c8 = arith.constant 8 : index
    %c0_62 = arith.constant 0 : index
    %c0_63 = arith.constant 0 : index
    %56 = vector.load %arg2[%c8, %c0_62, %c0_63] : memref<9x32x16xf32, #tpu.memory_space<vmem>>, vector<1x32x16xf32>
    %57 = vector.shape_cast %56 : vector<1x32x16xf32> to vector<32x16xf32>
    %cst_64 = arith.constant dense<0.000000e+00> : vector<256x16xf32>
    %58 = tpu.matmul %55, %57, %cst_64 {dimension_numbers = #tpu.dot_dimension_numbers<[1], [0], [0], [1], [0, 0, 1, 1], [], []>} : vector<256x32xf32>, vector<32x16xf32>, vector<256x16xf32> -> vector<256x16xf32>
    %59 = arith.addf %53, %58 : vector<256x16xf32>
    %c0_65 = arith.constant 0 : index
    %c0_66 = arith.constant 0 : index
    %60 = vector.load %arg3[%c0_65, %c0_66] : memref<1x16xf32, #tpu.memory_space<vmem>>, vector<1x16xf32>
    %61 = vector.broadcast %60 : vector<1x16xf32> to vector<256x16xf32>
    %62 = arith.mulf %59, %61 : vector<256x16xf32>
    %c0_67 = arith.constant 0 : index
    %c0_68 = arith.constant 0 : index
    %63 = vector.load %arg4[%c0_67, %c0_68] : memref<1x16xf32, #tpu.memory_space<vmem>>, vector<1x16xf32>
    %64 = vector.broadcast %63 : vector<1x16xf32> to vector<256x16xf32>
    %65 = arith.addf %62, %64 : vector<256x16xf32>
    %cst_69 = arith.constant 0.000000e+00 : f32
    %66 = vector.broadcast %cst_69 : f32 to vector<256x16xf32>
    %67 = arith.maximumf %65, %66 : vector<256x16xf32>
    %cst_70 = arith.constant 0.000000e+00 : f32
    %68 = vector.broadcast %cst_70 : f32 to vector<18x18x16xf32>
    %c0_71 = arith.constant 0 : index
    %c0_72 = arith.constant 0 : index
    %c0_73 = arith.constant 0 : index
    %69 = vector.load %arg15[%c0_71, %c0_72, %c0_73] : memref<18x18x16xf32, #tpu.memory_space<vmem>>, vector<18x18x16xf32>
    tpu.vector_store %arg15[%c0_71, %c0_72, %c0_73], %68 {strides = array<i32>} : memref<18x18x16xf32, #tpu.memory_space<vmem>>, vector<18x18x16xf32>,
    %70 = vector.shape_cast %67 : vector<256x16xf32> to vector<16x16x16xf32>
    %c1_74 = arith.constant 1 : index
    %c1_75 = arith.constant 1 : index
    %c0_76 = arith.constant 0 : index
    %71 = vector.load %arg15[%c1_74, %c1_75, %c0_76] : memref<18x18x16xf32, #tpu.memory_space<vmem>>, vector<16x16x16xf32>
    tpu.vector_store %arg15[%c1_74, %c1_75, %c0_76], %70 {strides = array<i32>} : memref<18x18x16xf32, #tpu.memory_space<vmem>>, vector<16x16x16xf32>,
    %cst_77 = arith.constant 0.000000e+00 : f32
    %72 = vector.broadcast %cst_77 : f32 to vector<256x16xf32>
    %c0_78 = arith.constant 0 : index
    %c0_79 = arith.constant 0 : index
    %c0_80 = arith.constant 0 : index
    %73 = vector.load %arg15[%c0_78, %c0_79, %c0_80] : memref<18x18x16xf32, #tpu.memory_space<vmem>>, vector<16x16x16xf32>
    %74 = vector.shape_cast %73 : vector<16x16x16xf32> to vector<256x16xf32>
    %c0_81 = arith.constant 0 : index
    %c0_82 = arith.constant 0 : index
    %c0_83 = arith.constant 0 : index
    %75 = vector.load %arg5[%c0_81, %c0_82, %c0_83] : memref<9x16x16xf32, #tpu.memory_space<vmem>>, vector<1x16x16xf32>
    %76 = vector.shape_cast %75 : vector<1x16x16xf32> to vector<16x16xf32>
    %cst_84 = arith.constant dense<0.000000e+00> : vector<256x16xf32>
    %77 = tpu.matmul %74, %76, %cst_84 {dimension_numbers = #tpu.dot_dimension_numbers<[1], [0], [0], [1], [0, 0, 1, 1], [], []>} : vector<256x16xf32>, vector<16x16xf32>, vector<256x16xf32> -> vector<256x16xf32>
    %78 = arith.addf %72, %77 : vector<256x16xf32>
    %c0_85 = arith.constant 0 : index
    %c1_86 = arith.constant 1 : index
    %c0_87 = arith.constant 0 : index
    %79 = vector.load %arg15[%c0_85, %c1_86, %c0_87] : memref<18x18x16xf32, #tpu.memory_space<vmem>>, vector<16x16x16xf32>
    %80 = vector.shape_cast %79 : vector<16x16x16xf32> to vector<256x16xf32>
    %c1_88 = arith.constant 1 : index
    %c0_89 = arith.constant 0 : index
    %c0_90 = arith.constant 0 : index
    %81 = vector.load %arg5[%c1_88, %c0_89, %c0_90] : memref<9x16x16xf32, #tpu.memory_space<vmem>>, vector<1x16x16xf32>
    %82 = vector.shape_cast %81 : vector<1x16x16xf32> to vector<16x16xf32>
    %cst_91 = arith.constant dense<0.000000e+00> : vector<256x16xf32>
    %83 = tpu.matmul %80, %82, %cst_91 {dimension_numbers = #tpu.dot_dimension_numbers<[1], [0], [0], [1], [0, 0, 1, 1], [], []>} : vector<256x16xf32>, vector<16x16xf32>, vector<256x16xf32> -> vector<256x16xf32>
    %84 = arith.addf %78, %83 : vector<256x16xf32>
    %c0_92 = arith.constant 0 : index
    %c2_93 = arith.constant 2 : index
    %c0_94 = arith.constant 0 : index
    %85 = vector.load %arg15[%c0_92, %c2_93, %c0_94] : memref<18x18x16xf32, #tpu.memory_space<vmem>>, vector<16x16x16xf32>
    %86 = vector.shape_cast %85 : vector<16x16x16xf32> to vector<256x16xf32>
    %c2_95 = arith.constant 2 : index
    %c0_96 = arith.constant 0 : index
    %c0_97 = arith.constant 0 : index
    %87 = vector.load %arg5[%c2_95, %c0_96, %c0_97] : memref<9x16x16xf32, #tpu.memory_space<vmem>>, vector<1x16x16xf32>
    %88 = vector.shape_cast %87 : vector<1x16x16xf32> to vector<16x16xf32>
    %cst_98 = arith.constant dense<0.000000e+00> : vector<256x16xf32>
    %89 = tpu.matmul %86, %88, %cst_98 {dimension_numbers = #tpu.dot_dimension_numbers<[1], [0], [0], [1], [0, 0, 1, 1], [], []>} : vector<256x16xf32>, vector<16x16xf32>, vector<256x16xf32> -> vector<256x16xf32>
    %90 = arith.addf %84, %89 : vector<256x16xf32>
    %c1_99 = arith.constant 1 : index
    %c0_100 = arith.constant 0 : index
    %c0_101 = arith.constant 0 : index
    %91 = vector.load %arg15[%c1_99, %c0_100, %c0_101] : memref<18x18x16xf32, #tpu.memory_space<vmem>>, vector<16x16x16xf32>
    %92 = vector.shape_cast %91 : vector<16x16x16xf32> to vector<256x16xf32>
    %c3_102 = arith.constant 3 : index
    %c0_103 = arith.constant 0 : index
    %c0_104 = arith.constant 0 : index
    %93 = vector.load %arg5[%c3_102, %c0_103, %c0_104] : memref<9x16x16xf32, #tpu.memory_space<vmem>>, vector<1x16x16xf32>
    %94 = vector.shape_cast %93 : vector<1x16x16xf32> to vector<16x16xf32>
    %cst_105 = arith.constant dense<0.000000e+00> : vector<256x16xf32>
    %95 = tpu.matmul %92, %94, %cst_105 {dimension_numbers = #tpu.dot_dimension_numbers<[1], [0], [0], [1], [0, 0, 1, 1], [], []>} : vector<256x16xf32>, vector<16x16xf32>, vector<256x16xf32> -> vector<256x16xf32>
    %96 = arith.addf %90, %95 : vector<256x16xf32>
    %c1_106 = arith.constant 1 : index
    %c1_107 = arith.constant 1 : index
    %c0_108 = arith.constant 0 : index
    %97 = vector.load %arg15[%c1_106, %c1_107, %c0_108] : memref<18x18x16xf32, #tpu.memory_space<vmem>>, vector<16x16x16xf32>
    %98 = vector.shape_cast %97 : vector<16x16x16xf32> to vector<256x16xf32>
    %c4_109 = arith.constant 4 : index
    %c0_110 = arith.constant 0 : index
    %c0_111 = arith.constant 0 : index
    %99 = vector.load %arg5[%c4_109, %c0_110, %c0_111] : memref<9x16x16xf32, #tpu.memory_space<vmem>>, vector<1x16x16xf32>
    %100 = vector.shape_cast %99 : vector<1x16x16xf32> to vector<16x16xf32>
    %cst_112 = arith.constant dense<0.000000e+00> : vector<256x16xf32>
    %101 = tpu.matmul %98, %100, %cst_112 {dimension_numbers = #tpu.dot_dimension_numbers<[1], [0], [0], [1], [0, 0, 1, 1], [], []>} : vector<256x16xf32>, vector<16x16xf32>, vector<256x16xf32> -> vector<256x16xf32>
    %102 = arith.addf %96, %101 : vector<256x16xf32>
    %c1_113 = arith.constant 1 : index
    %c2_114 = arith.constant 2 : index
    %c0_115 = arith.constant 0 : index
    %103 = vector.load %arg15[%c1_113, %c2_114, %c0_115] : memref<18x18x16xf32, #tpu.memory_space<vmem>>, vector<16x16x16xf32>
    %104 = vector.shape_cast %103 : vector<16x16x16xf32> to vector<256x16xf32>
    %c5_116 = arith.constant 5 : index
    %c0_117 = arith.constant 0 : index
    %c0_118 = arith.constant 0 : index
    %105 = vector.load %arg5[%c5_116, %c0_117, %c0_118] : memref<9x16x16xf32, #tpu.memory_space<vmem>>, vector<1x16x16xf32>
    %106 = vector.shape_cast %105 : vector<1x16x16xf32> to vector<16x16xf32>
    %cst_119 = arith.constant dense<0.000000e+00> : vector<256x16xf32>
    %107 = tpu.matmul %104, %106, %cst_119 {dimension_numbers = #tpu.dot_dimension_numbers<[1], [0], [0], [1], [0, 0, 1, 1], [], []>} : vector<256x16xf32>, vector<16x16xf32>, vector<256x16xf32> -> vector<256x16xf32>
    %108 = arith.addf %102, %107 : vector<256x16xf32>
    %c2_120 = arith.constant 2 : index
    %c0_121 = arith.constant 0 : index
    %c0_122 = arith.constant 0 : index
    %109 = vector.load %arg15[%c2_120, %c0_121, %c0_122] : memref<18x18x16xf32, #tpu.memory_space<vmem>>, vector<16x16x16xf32>
    %110 = vector.shape_cast %109 : vector<16x16x16xf32> to vector<256x16xf32>
    %c6_123 = arith.constant 6 : index
    %c0_124 = arith.constant 0 : index
    %c0_125 = arith.constant 0 : index
    %111 = vector.load %arg5[%c6_123, %c0_124, %c0_125] : memref<9x16x16xf32, #tpu.memory_space<vmem>>, vector<1x16x16xf32>
    %112 = vector.shape_cast %111 : vector<1x16x16xf32> to vector<16x16xf32>
    %cst_126 = arith.constant dense<0.000000e+00> : vector<256x16xf32>
    %113 = tpu.matmul %110, %112, %cst_126 {dimension_numbers = #tpu.dot_dimension_numbers<[1], [0], [0], [1], [0, 0, 1, 1], [], []>} : vector<256x16xf32>, vector<16x16xf32>, vector<256x16xf32> -> vector<256x16xf32>
    %114 = arith.addf %108, %113 : vector<256x16xf32>
    %c2_127 = arith.constant 2 : index
    %c1_128 = arith.constant 1 : index
    %c0_129 = arith.constant 0 : index
    %115 = vector.load %arg15[%c2_127, %c1_128, %c0_129] : memref<18x18x16xf32, #tpu.memory_space<vmem>>, vector<16x16x16xf32>
    %116 = vector.shape_cast %115 : vector<16x16x16xf32> to vector<256x16xf32>
    %c7_130 = arith.constant 7 : index
    %c0_131 = arith.constant 0 : index
    %c0_132 = arith.constant 0 : index
    %117 = vector.load %arg5[%c7_130, %c0_131, %c0_132] : memref<9x16x16xf32, #tpu.memory_space<vmem>>, vector<1x16x16xf32>
    %118 = vector.shape_cast %117 : vector<1x16x16xf32> to vector<16x16xf32>
    %cst_133 = arith.constant dense<0.000000e+00> : vector<256x16xf32>
    %119 = tpu.matmul %116, %118, %cst_133 {dimension_numbers = #tpu.dot_dimension_numbers<[1], [0], [0], [1], [0, 0, 1, 1], [], []>} : vector<256x16xf32>, vector<16x16xf32>, vector<256x16xf32> -> vector<256x16xf32>
    %120 = arith.addf %114, %119 : vector<256x16xf32>
    %c2_134 = arith.constant 2 : index
    %c2_135 = arith.constant 2 : index
    %c0_136 = arith.constant 0 : index
    %121 = vector.load %arg15[%c2_134, %c2_135, %c0_136] : memref<18x18x16xf32, #tpu.memory_space<vmem>>, vector<16x16x16xf32>
    %122 = vector.shape_cast %121 : vector<16x16x16xf32> to vector<256x16xf32>
    %c8_137 = arith.constant 8 : index
    %c0_138 = arith.constant 0 : index
    %c0_139 = arith.constant 0 : index
    %123 = vector.load %arg5[%c8_137, %c0_138, %c0_139] : memref<9x16x16xf32, #tpu.memory_space<vmem>>, vector<1x16x16xf32>
    %124 = vector.shape_cast %123 : vector<1x16x16xf32> to vector<16x16xf32>
    %cst_140 = arith.constant dense<0.000000e+00> : vector<256x16xf32>
    %125 = tpu.matmul %122, %124, %cst_140 {dimension_numbers = #tpu.dot_dimension_numbers<[1], [0], [0], [1], [0, 0, 1, 1], [], []>} : vector<256x16xf32>, vector<16x16xf32>, vector<256x16xf32> -> vector<256x16xf32>
    %126 = arith.addf %120, %125 : vector<256x16xf32>
    %c0_141 = arith.constant 0 : index
    %c0_142 = arith.constant 0 : index
    %127 = vector.load %arg6[%c0_141, %c0_142] : memref<1x16xf32, #tpu.memory_space<vmem>>, vector<1x16xf32>
    %128 = vector.broadcast %127 : vector<1x16xf32> to vector<256x16xf32>
    %129 = arith.mulf %126, %128 : vector<256x16xf32>
    %c0_143 = arith.constant 0 : index
    %c0_144 = arith.constant 0 : index
    %130 = vector.load %arg7[%c0_143, %c0_144] : memref<1x16xf32, #tpu.memory_space<vmem>>, vector<1x16xf32>
    %131 = vector.broadcast %130 : vector<1x16xf32> to vector<256x16xf32>
    %132 = arith.addf %129, %131 : vector<256x16xf32>
    %cst_145 = arith.constant dense<0.000000e+00> : vector<16xf32>
    %133 = vector.multi_reduction <add>, %132, %cst_145 [0] : vector<256x16xf32> to vector<16xf32>
    %134 = vector.shape_cast %133 : vector<16xf32> to vector<1x16xf32>
    %cst_146 = arith.constant 3.906250e-03 : f32
    %135 = vector.broadcast %cst_146 : f32 to vector<1x16xf32>
    %136 = arith.mulf %134, %135 : vector<1x16xf32>
    %c0_147 = arith.constant 0 : index
    %c0_148 = arith.constant 0 : index
    %137 = vector.load %arg8[%c0_147, %c0_148] : memref<1x16xf32, #tpu.memory_space<vmem>>, vector<1x16xf32>
    %138 = arith.mulf %137, %136 : vector<1x16xf32>
    %cst_149 = arith.constant dense<0.000000e+00> : vector<1xf32>
    %139 = vector.multi_reduction <add>, %138, %cst_149 [1] : vector<1x16xf32> to vector<1xf32>
    %140 = vector.shape_cast %139 : vector<1xf32> to vector<1x1xf32>
    %cst_150 = arith.constant 0.000000e+00 : f32
    %141 = vector.broadcast %cst_150 : f32 to vector<1x1xf32>
    %142 = arith.maximumf %140, %141 : vector<1x1xf32>
    %c0_151 = arith.constant 0 : index
    %c0_152 = arith.constant 0 : index
    %143 = vector.load %arg9[%c0_151, %c0_152] : memref<1x16xf32, #tpu.memory_space<vmem>>, vector<1x16xf32>
    %144 = vector.broadcast %142 : vector<1x1xf32> to vector<1x16xf32>
    %145 = arith.mulf %143, %144 : vector<1x16xf32>
    %cst_153 = arith.constant dense<0.000000e+00> : vector<16xf32>
    %146 = vector.multi_reduction <add>, %145, %cst_153 [0] : vector<1x16xf32> to vector<16xf32>
    %147 = vector.shape_cast %146 : vector<16xf32> to vector<1x16xf32>
    %148 = arith.negf %147 : vector<1x16xf32>
    %149 = math.exp %148 : vector<1x16xf32>
    %cst_154 = arith.constant 1.000000e+00 : f32
    %150 = vector.broadcast %cst_154 : f32 to vector<1x16xf32>
    %151 = arith.addf %150, %149 : vector<1x16xf32>
    %152 = arith.divf %150, %151 : vector<1x16xf32>
    %153 = vector.shape_cast %1 : vector<16x16x32xf32> to vector<256x32xf32>
    %c0_155 = arith.constant 0 : index
    %c0_156 = arith.constant 0 : index
    %154 = vector.load %arg10[%c0_155, %c0_156] : memref<32x16xf32, #tpu.memory_space<vmem>>, vector<32x16xf32>
    %cst_157 = arith.constant dense<0.000000e+00> : vector<256x16xf32>
    %155 = tpu.matmul %153, %154, %cst_157 {dimension_numbers = #tpu.dot_dimension_numbers<[1], [0], [0], [1], [0, 0, 1, 1], [], []>} : vector<256x32xf32>, vector<32x16xf32>, vector<256x16xf32> -> vector<256x16xf32>
    %c0_158 = arith.constant 0 : index
    %c0_159 = arith.constant 0 : index
    %156 = vector.load %arg11[%c0_158, %c0_159] : memref<1x16xf32, #tpu.memory_space<vmem>>, vector<1x16xf32>
    %157 = vector.broadcast %156 : vector<1x16xf32> to vector<256x16xf32>
    %158 = arith.mulf %155, %157 : vector<256x16xf32>
    %c0_160 = arith.constant 0 : index
    %c0_161 = arith.constant 0 : index
    %159 = vector.load %arg12[%c0_160, %c0_161] : memref<1x16xf32, #tpu.memory_space<vmem>>, vector<1x16xf32>
    %160 = vector.broadcast %159 : vector<1x16xf32> to vector<256x16xf32>
    %161 = arith.addf %158, %160 : vector<256x16xf32>
    %162 = vector.broadcast %152 : vector<1x16xf32> to vector<256x16xf32>
    %163 = arith.mulf %132, %162 : vector<256x16xf32>
    %164 = arith.addf %163, %161 : vector<256x16xf32>
    %cst_162 = arith.constant 0.000000e+00 : f32
    %165 = vector.broadcast %cst_162 : f32 to vector<256x16xf32>
    %166 = arith.maximumf %164, %165 : vector<256x16xf32>
    %167 = vector.shape_cast %166 : vector<256x16xf32> to vector<1x16x16x16xf32>
    %c0_163 = arith.constant 0 : index
    %c0_164 = arith.constant 0 : index
    %c0_165 = arith.constant 0 : index
    %c0_166 = arith.constant 0 : index
    %168 = vector.load %arg13[%c0_163, %c0_164, %c0_165, %c0_166] : memref<1x16x16x16xf32, #tpu.memory_space<vmem>>, vector<1x16x16x16xf32>
    tpu.vector_store %arg13[%c0_163, %c0_164, %c0_165, %c0_166], %167 {strides = array<i32>} : memref<1x16x16x16xf32, #tpu.memory_space<vmem>>, vector<1x16x16x16xf32>,
    return
  }
  func.func @transform_0(%arg0: i32) -> (i32, i32, i32, i32) {
    %c0_i32 = arith.constant 0 : i32
    %c0_i32_0 = arith.constant 0 : i32
    %c0_i32_1 = arith.constant 0 : i32
    %c0_i32_2 = arith.constant 0 : i32
    return %arg0, %c0_i32, %c0_i32_0, %c0_i32_1 : i32, i32, i32, i32
  }
  func.func @transform_1(%arg0: i32) -> (i32, i32, i32) {
    %c0_i32 = arith.constant 0 : i32
    %c0_i32_0 = arith.constant 0 : i32
    %c0_i32_1 = arith.constant 0 : i32
    %c0_i32_2 = arith.constant 0 : i32
    return %c0_i32, %c0_i32_0, %c0_i32_1 : i32, i32, i32
  }
  func.func @transform_2(%arg0: i32) -> (i32, i32) {
    %c0_i32 = arith.constant 0 : i32
    %c0_i32_0 = arith.constant 0 : i32
    %c0_i32_1 = arith.constant 0 : i32
    return %c0_i32, %c0_i32_0 : i32, i32
  }
  func.func @transform_3(%arg0: i32) -> (i32, i32) {
    %c0_i32 = arith.constant 0 : i32
    %c0_i32_0 = arith.constant 0 : i32
    %c0_i32_1 = arith.constant 0 : i32
    return %c0_i32, %c0_i32_0 : i32, i32
  }
  func.func @transform_4(%arg0: i32) -> (i32, i32, i32) {
    %c0_i32 = arith.constant 0 : i32
    %c0_i32_0 = arith.constant 0 : i32
    %c0_i32_1 = arith.constant 0 : i32
    %c0_i32_2 = arith.constant 0 : i32
    return %c0_i32, %c0_i32_0, %c0_i32_1 : i32, i32, i32
  }
  func.func @transform_5(%arg0: i32) -> (i32, i32) {
    %c0_i32 = arith.constant 0 : i32
    %c0_i32_0 = arith.constant 0 : i32
    %c0_i32_1 = arith.constant 0 : i32
    return %c0_i32, %c0_i32_0 : i32, i32
  }
  func.func @transform_6(%arg0: i32) -> (i32, i32) {
    %c0_i32 = arith.constant 0 : i32
    %c0_i32_0 = arith.constant 0 : i32
    %c0_i32_1 = arith.constant 0 : i32
    return %c0_i32, %c0_i32_0 : i32, i32
  }
  func.func @transform_7(%arg0: i32) -> (i32, i32) {
    %c0_i32 = arith.constant 0 : i32
    %c0_i32_0 = arith.constant 0 : i32
    %c0_i32_1 = arith.constant 0 : i32
    return %c0_i32, %c0_i32_0 : i32, i32
  }
  func.func @transform_8(%arg0: i32) -> (i32, i32) {
    %c0_i32 = arith.constant 0 : i32
    %c0_i32_0 = arith.constant 0 : i32
    %c0_i32_1 = arith.constant 0 : i32
    return %c0_i32, %c0_i32_0 : i32, i32
  }
  func.func @transform_9(%arg0: i32) -> (i32, i32) {
    %c0_i32 = arith.constant 0 : i32
    %c0_i32_0 = arith.constant 0 : i32
    %c0_i32_1 = arith.constant 0 : i32
    return %c0_i32, %c0_i32_0 : i32, i32
  }
  func.func @transform_10(%arg0: i32) -> (i32, i32) {
    %c0_i32 = arith.constant 0 : i32
    %c0_i32_0 = arith.constant 0 : i32
    %c0_i32_1 = arith.constant 0 : i32
    return %c0_i32, %c0_i32_0 : i32, i32
  }
  func.func @transform_11(%arg0: i32) -> (i32, i32) {
    %c0_i32 = arith.constant 0 : i32
    %c0_i32_0 = arith.constant 0 : i32
    %c0_i32_1 = arith.constant 0 : i32
    return %c0_i32, %c0_i32_0 : i32, i32
  }
  func.func @transform_12(%arg0: i32) -> (i32, i32, i32, i32) {
    %c0_i32 = arith.constant 0 : i32
    %c0_i32_0 = arith.constant 0 : i32
    %c0_i32_1 = arith.constant 0 : i32
    %c0_i32_2 = arith.constant 0 : i32
    return %arg0, %c0_i32, %c0_i32_0, %c0_i32_1 : i32, i32, i32, i32
  }
}

</mosaic_0001>

<llo_original>
// kernel: dense_block.2
$region0: #{dense_block.2}
  #allocation0 [shape = 'u32[]', space=smem, size = 0x4, offset = 0x4, fixed_abs, tag = 'smem constant byte address 0x4 - core index']
  #allocation1 [shape = 'u32[72,128]{1,0:T(1,128)}', space=vmem, size = 0x9000, scoped, tag = 'internal scratch']
  #allocation2 [shape = 'f32[18,18,16]{2,1,0:T(8,128)}', space=vmem, size = 0x36000, scoped, tag = 'scratch operand']
  #allocation3 [shape = 'f32[18,18,16]{2,1,0:T(8,128)}', space=vmem, size = 0x36000, scoped, tag = 'scratch operand']
  %s0 = inlined_call_operand.vmem [shape: f32[2,16,16,16], index: 0, kind: input, shape index: {}]
  %s1 = inlined_call_operand.vmem [shape: f32[9,16,16], index: 1, kind: input, shape index: {}]
  %s2 = inlined_call_operand.vmem [shape: f32[1,16], index: 2, kind: input, shape index: {}]
  %s3 = inlined_call_operand.vmem [shape: f32[1,16], index: 3, kind: input, shape index: {}]
  %s4 = inlined_call_operand.vmem [shape: f32[9,16,16], index: 4, kind: input, shape index: {}]
  %s5 = inlined_call_operand.vmem [shape: f32[1,16], index: 5, kind: input, shape index: {}]
  %s6 = inlined_call_operand.vmem [shape: f32[1,16], index: 6, kind: input, shape index: {}]
  %s7 = inlined_call_operand.vmem [shape: f32[1,16], index: 7, kind: input, shape index: {}]
  %s8 = inlined_call_operand.vmem [shape: f32[1,16], index: 8, kind: input, shape index: {}]
  %s9 = inlined_call_operand.vmem [shape: f32[2,16,16,16], index: 9, kind: output, shape index: {}]
  %s10 = sld [smem:[#allocation0]]
  $region69: #{dense_block.2} parent=0
    _
  %s12 = ssub.s32 1, %s10
  %s13 = scalar_select 0, %s12, %s10
  loop: start=0, step=1, limit=4
  $region2: #{dense_block.2} parent=0 // loop_pre_header
    _
  $region3: #{dense_block.2} parent=0 // loop_header
    %s15 = sphi 0, %s19
    %p16 = scmp.ge.s32.totalorder %s15, 4
    %s25 = sphi 0, %s27
    %s28 = sphi 0, %s25
    %s29 = sphi 0, %s28
    %s45 = sphi 0, %s29
    %s49 = sphi 0, %s49
    %s51 = sphi 0, %s49
    %s52 = sphi 0, %s51
    %s66 = sphi 0, %s52
    %s70 = sphi 0, %s70
    %s72 = sphi 0, %s70
    %s73 = sphi 0, %s72
    %s87 = sphi 0, %s73
    %s91 = sphi 0, %s91
    %s93 = sphi 0, %s91
    %s94 = sphi 0, %s93
    %s108 = sphi 0, %s94
    %s112 = sphi 0, %s112
    %s114 = sphi 0, %s112
    %s115 = sphi 0, %s114
    %s129 = sphi 0, %s115
    %s133 = sphi 0, %s133
    %s135 = sphi 0, %s133
    %s136 = sphi 0, %s135
    %s150 = sphi 0, %s136
    %s154 = sphi 0, %s154
    %s156 = sphi 0, %s154
    %s157 = sphi 0, %s156
    %s171 = sphi 0, %s157
    %s175 = sphi 0, %s175
    %s177 = sphi 0, %s175
    %s178 = sphi 0, %s177
    %s192 = sphi 0, %s178
    %s196 = sphi 0, %s196
    %s198 = sphi 0, %s196
    %s199 = sphi 0, %s198
    %s213 = sphi 0, %s199
    %s219 = sphi 0, %s221
    %s222 = sphi 0, %s219
    %s223 = sphi 0, %s222
    %s239 = sphi 0, %s223
  $region4: #{dense_block.2} parent=0 // loop_header_branch
    %18 = sbr.rel (%p16) target = $region8
  $region5: #{dense_block.2} parent=0 // loop_body
    %s20 = ssub.s32 %s15, 1
    %s21 = ssub.s32 %s15, 2
    %s22 = sadd.s32 %s15, 1
    %s23 = ssub.s32 %s15, %s22
    %p24 = scmp.eq.s32.totalorder %s23, 0
    %s26 = sadd.s32 %s25, 1
    %s27 = scalar_select %p24, %s25, %s26
    %p30 = pneg %p24
    %p31 = scmp.eq.s32.totalorder %s15, 1
    %p32 = por %p30, %p31
    %p33 = scmp.ne.s32.totalorder %s25, %s28
    %p34 = scmp.eq.s32.totalorder %s15, 0
    %p35 = por %p33, %p34
    %p36 = scmp.ne.s32.totalorder %s25, %s28
    %p37 = scmp.eq.s32.totalorder %s20, 1
    %p38 = por %p36, %p37
    %p39 = scmp.ne.s32.totalorder %s28, %s29
    %p40 = scmp.eq.s32.totalorder %s20, 0
    %p41 = por %p39, %p40
    %p42 = scmp.ne.s32.totalorder %s28, %s29
    %p43 = scmp.eq.s32.totalorder %s21, 1
    %p44 = por %p42, %p43
    %p46 = scmp.ne.s32.totalorder %s29, %s45
    %p47 = scmp.eq.s32.totalorder %s21, 0
    %p48 = por %p46, %p47
    %s50 = sadd.s32 %s49, 1
    %p53 = scmp.eq.s32.totalorder %s15, 1
    %p54 = scmp.ne.s32.totalorder %s49, %s51
    %p55 = scmp.eq.s32.totalorder %s15, 0
    %p56 = por %p54, %p55
    %p57 = scmp.ne.s32.totalorder %s49, %s51
    %p58 = scmp.eq.s32.totalorder %s20, 1
    %p59 = por %p57, %p58
    %p60 = scmp.ne.s32.totalorder %s51, %s52
    %p61 = scmp.eq.s32.totalorder %s20, 0
    %p62 = por %p60, %p61
    %p63 = scmp.ne.s32.totalorder %s51, %s52
    %p64 = scmp.eq.s32.totalorder %s21, 1
    %p65 = por %p63, %p64
    %p67 = scmp.ne.s32.totalorder %s52, %s66
    %p68 = scmp.eq.s32.totalorder %s21, 0
    %p69 = por %p67, %p68
    %s71 = sadd.s32 %s70, 1
    %p74 = scmp.eq.s32.totalorder %s15, 1
    %p75 = scmp.ne.s32.totalorder %s70, %s72
    %p76 = scmp.eq.s32.totalorder %s15, 0
    %p77 = por %p75, %p76
    %p78 = scmp.ne.s32.totalorder %s70, %s72
    %p79 = scmp.eq.s32.totalorder %s20, 1
    %p80 = por %p78, %p79
    %p81 = scmp.ne.s32.totalorder %s72, %s73
    %p82 = scmp.eq.s32.totalorder %s20, 0
    %p83 = por %p81, %p82
    %p84 = scmp.ne.s32.totalorder %s72, %s73
    %p85 = scmp.eq.s32.totalorder %s21, 1
    %p86 = por %p84, %p85
    %p88 = scmp.ne.s32.totalorder %s73, %s87
    %p89 = scmp.eq.s32.totalorder %s21, 0
    %p90 = por %p88, %p89
    %s92 = sadd.s32 %s91, 1
    %p95 = scmp.eq.s32.totalorder %s15, 1
    %p96 = scmp.ne.s32.totalorder %s91, %s93
    %p97 = scmp.eq.s32.totalorder %s15, 0
    %p98 = por %p96, %p97
    %p99 = scmp.ne.s32.totalorder %s91, %s93
    %p100 = scmp.eq.s32.totalorder %s20, 1
    %p101 = por %p99, %p100
    %p102 = scmp.ne.s32.totalorder %s93, %s94
    %p103 = scmp.eq.s32.totalorder %s20, 0
    %p104 = por %p102, %p103
    %p105 = scmp.ne.s32.totalorder %s93, %s94
    %p106 = scmp.eq.s32.totalorder %s21, 1
    %p107 = por %p105, %p106
    %p109 = scmp.ne.s32.totalorder %s94, %s108
    %p110 = scmp.eq.s32.totalorder %s21, 0
    %p111 = por %p109, %p110
    %s113 = sadd.s32 %s112, 1
    %p116 = scmp.eq.s32.totalorder %s15, 1
    %p117 = scmp.ne.s32.totalorder %s112, %s114
    %p118 = scmp.eq.s32.totalorder %s15, 0
    %p119 = por %p117, %p118
    %p120 = scmp.ne.s32.totalorder %s112, %s114
    %p121 = scmp.eq.s32.totalorder %s20, 1
    %p122 = por %p120, %p121
    %p123 = scmp.ne.s32.totalorder %s114, %s115
    %p124 = scmp.eq.s32.totalorder %s20, 0
    %p125 = por %p123, %p124
    %p126 = scmp.ne.s32.totalorder %s114, %s115
    %p127 = scmp.eq.s32.totalorder %s21, 1
    %p128 = por %p126, %p127
    %p130 = scmp.ne.s32.totalorder %s115, %s129
    %p131 = scmp.eq.s32.totalorder %s21, 0
    %p132 = por %p130, %p131
    %s134 = sadd.s32 %s133, 1
    %p137 = scmp.eq.s32.totalorder %s15, 1
    %p138 = scmp.ne.s32.totalorder %s133, %s135
    %p139 = scmp.eq.s32.totalorder %s15, 0
    %p140 = por %p138, %p139
    %p141 = scmp.ne.s32.totalorder %s133, %s135
    %p142 = scmp.eq.s32.totalorder %s20, 1
    %p143 = por %p141, %p142
    %p144 = scmp.ne.s32.totalorder %s135, %s136
    %p145 = scmp.eq.s32.totalorder %s20, 0
    %p146 = por %p144, %p145
    %p147 = scmp.ne.s32.totalorder %s135, %s136
    %p148 = scmp.eq.s32.totalorder %s21, 1
    %p149 = por %p147, %p148
    %p151 = scmp.ne.s32.totalorder %s136, %s150
    %p152 = scmp.eq.s32.totalorder %s21, 0
    %p153 = por %p151, %p152
    %s155 = sadd.s32 %s154, 1
    %p158 = scmp.eq.s32.totalorder %s15, 1
    %p159 = scmp.ne.s32.totalorder %s154, %s156
    %p160 = scmp.eq.s32.totalorder %s15, 0
    %p161 = por %p159, %p160
    %p162 = scmp.ne.s32.totalorder %s154, %s156
    %p163 = scmp.eq.s32.totalorder %s20, 1
    %p164 = por %p162, %p163
    %p165 = scmp.ne.s32.totalorder %s156, %s157
    %p166 = scmp.eq.s32.totalorder %s20, 0
    %p167 = por %p165, %p166
    %p168 = scmp.ne.s32.totalorder %s156, %s157
    %p169 = scmp.eq.s32.totalorder %s21, 1
    %p170 = por %p168, %p169
    %p172 = scmp.ne.s32.totalorder %s157, %s171
    %p173 = scmp.eq.s32.totalorder %s21, 0
    %p174 = por %p172, %p173
    %s176 = sadd.s32 %s175, 1
    %p179 = scmp.eq.s32.totalorder %s15, 1
    %p180 = scmp.ne.s32.totalorder %s175, %s177
    %p181 = scmp.eq.s32.totalorder %s15, 0
    %p182 = por %p180, %p181
    %p183 = scmp.ne.s32.totalorder %s175, %s177
    %p184 = scmp.eq.s32.totalorder %s20, 1
    %p185 = por %p183, %p184
    %p186 = scmp.ne.s32.totalorder %s177, %s178
    %p187 = scmp.eq.s32.totalorder %s20, 0
    %p188 = por %p186, %p187
    %p189 = scmp.ne.s32.totalorder %s177, %s178
    %p190 = scmp.eq.s32.totalorder %s21, 1
    %p191 = por %p189, %p190
    %p193 = scmp.ne.s32.totalorder %s178, %s192
    %p194 = scmp.eq.s32.totalorder %s21, 0
    %p195 = por %p193, %p194
    %s197 = sadd.s32 %s196, 1
    %p200 = scmp.eq.s32.totalorder %s15, 1
    %p201 = scmp.ne.s32.totalorder %s196, %s198
    %p202 = scmp.eq.s32.totalorder %s15, 0
    %p203 = por %p201, %p202
    %p204 = scmp.ne.s32.totalorder %s196, %s198
    %p205 = scmp.eq.s32.totalorder %s20, 1
    %p206 = por %p204, %p205
    %p207 = scmp.ne.s32.totalorder %s198, %s199
    %p208 = scmp.eq.s32.totalorder %s20, 0
    %p209 = por %p207, %p208
    %p210 = scmp.ne.s32.totalorder %s198, %s199
    %p211 = scmp.eq.s32.totalorder %s21, 1
    %p212 = por %p210, %p211
    %p214 = scmp.ne.s32.totalorder %s199, %s213
    %p215 = scmp.eq.s32.totalorder %s21, 0
    %p216 = por %p214, %p215
    %s217 = ssub.s32 %s15, %s22
    %p218 = scmp.eq.s32.totalorder %s217, 0
    %s220 = sadd.s32 %s219, 1
    %s221 = scalar_select %p218, %s219, %s220
    %p224 = pneg %p218
    %p225 = scmp.eq.s32.totalorder %s15, 1
    %p226 = por %p224, %p225
    %p227 = scmp.ne.s32.totalorder %s219, %s222
    %p228 = scmp.eq.s32.totalorder %s15, 0
    %p229 = por %p227, %p228
    %p230 = scmp.ne.s32.totalorder %s219, %s222
    %p231 = scmp.eq.s32.totalorder %s20, 1
    %p232 = por %p230, %p231
    %p233 = scmp.ne.s32.totalorder %s222, %s223
    %p234 = scmp.eq.s32.totalorder %s20, 0
    %p235 = por %p233, %p234
    %p236 = scmp.ne.s32.totalorder %s222, %s223
    %p237 = scmp.eq.s32.totalorder %s21, 1
    %p238 = por %p236, %p237
    %p240 = scmp.ne.s32.totalorder %s223, %s239
    %p241 = scmp.eq.s32.totalorder %s21, 0
    %p242 = por %p240, %p241
    %p243 = scmp.le.s32.totalorder 1, %s15
    %p244 = scmp.lt.s32.totalorder %s15, 3
    %p245 = pnand %p243, %p244
    %p246 = pneg %p245
    // Predicated region
    $region9: #{dense_block.2} parent=5 // pred_check
      _
    $region10: #{dense_block.2} parent=5 // pred_check_branch
      %248 = sbr.rel (%p245) target = $region12
    $region11: #{dense_block.2} parent=5 // pred_region
      %s249 = ssub.s32 %s15, 1
      // Predicated region
      $region13: #{dense_block.2} parent=11 // pred_check
        %p250 = pneg %p62
      $region14: #{dense_block.2} parent=11 // pred_check_branch
        %252 = sbr.rel (%p250) target = $region16
      $region15: #{dense_block.2} parent=11 // pred_region
        _
      $region16: #{dense_block.2} parent=11 // pred_fallthru
        _
      // Predicated region
      $region17: #{dense_block.2} parent=11 // pred_check
        %p253 = pneg %p83
      $region18: #{dense_block.2} parent=11 // pred_check_branch
        %255 = sbr.rel (%p253) target = $region20
      $region19: #{dense_block.2} parent=11 // pred_region
        _
      $region20: #{dense_block.2} parent=11 // pred_fallthru
        _
      // Predicated region
      $region21: #{dense_block.2} parent=11 // pred_check
        %p256 = pneg %p104
      $region22: #{dense_block.2} parent=11 // pred_check_branch
        %258 = sbr.rel (%p256) target = $region24
      $region23: #{dense_block.2} parent=11 // pred_region
        _
      $region24: #{dense_block.2} parent=11 // pred_fallthru
        _
      // Predicated region
      $region25: #{dense_block.2} parent=11 // pred_check
        %p259 = pneg %p125
      $region26: #{dense_block.2} parent=11 // pred_check_branch
        %261 = sbr.rel (%p259) target = $region28
      $region27: #{dense_block.2} parent=11 // pred_region
        _
      $region28: #{dense_block.2} parent=11 // pred_fallthru
        _
      // Predicated region
      $region29: #{dense_block.2} parent=11 // pred_check
        %p262 = pneg %p146
      $region30: #{dense_block.2} parent=11 // pred_check_branch
        %264 = sbr.rel (%p262) target = $region32
      $region31: #{dense_block.2} parent=11 // pred_region
        _
      $region32: #{dense_block.2} parent=11 // pred_fallthru
        _
      // Predicated region
      $region33: #{dense_block.2} parent=11 // pred_check
        %p265 = pneg %p167
      $region34: #{dense_block.2} parent=11 // pred_check_branch
        %267 = sbr.rel (%p265) target = $region36
      $region35: #{dense_block.2} parent=11 // pred_region
        _
      $region36: #{dense_block.2} parent=11 // pred_fallthru
        _
      // Predicated region
      $region37: #{dense_block.2} parent=11 // pred_check
        %p268 = pneg %p188
      $region38: #{dense_block.2} parent=11 // pred_check_branch
        %270 = sbr.rel (%p268) target = $region40
      $region39: #{dense_block.2} parent=11 // pred_region
        _
      $region40: #{dense_block.2} parent=11 // pred_fallthru
        _
      // Predicated region
      $region41: #{dense_block.2} parent=11 // pred_check
        %p271 = pneg %p209
      $region42: #{dense_block.2} parent=11 // pred_check_branch
        %273 = sbr.rel (%p271) target = $region44
      $region43: #{dense_block.2} parent=11 // pred_region
        _
      $region44: #{dense_block.2} parent=11 // pred_fallthru
        _
    $region12: #{dense_block.2} parent=5 // pred_fallthru
      _
    %p274 = scmp.lt.s32.totalorder %s15, 2
    // Predicated region
    $region45: #{dense_block.2} parent=5 // pred_check
      %p275 = pneg %p274
    $region46: #{dense_block.2} parent=5 // pred_check_branch
      %277 = sbr.rel (%p275) target = $region48
    $region47: #{dense_block.2} parent=5 // pred_region
      // Predicated region
      $region49: #{dense_block.2} parent=47 // pred_check
        %p278 = pneg %p35
      $region50: #{dense_block.2} parent=47 // pred_check_branch
        %280 = sbr.rel (%p278) target = $region52
      $region51: #{dense_block.2} parent=47 // pred_region
        %p281 = scmp.lt.s32.totalorder %s15, 1
        %s282 = scalar_select %p281, %s15, 1
        %s283 = smul.addr %s282, 32
        %s284 = smul.addr %s283, 8
        %s285 = scalar_lea.vmem %s0, %s284
      $region52: #{dense_block.2} parent=47 // pred_fallthru
        _
    $region48: #{dense_block.2} parent=5 // pred_fallthru
      _
    %p286 = scmp.le.s32.totalorder 1, %s15
    %p287 = scmp.lt.s32.totalorder %s15, 3
    %p288 = pnand %p286, %p287
    %p289 = pneg %p288
    // Predicated region
    $region53: #{dense_block.2} parent=5 // pred_check
      _
    $region54: #{dense_block.2} parent=5 // pred_check_branch
      %291 = sbr.rel (%p288) target = $region56
    $region55: #{dense_block.2} parent=5 // pred_region
      %s292 = ssub.s32 %s15, 1
      %p293 = scmp.lt.s32.totalorder %s20, 1
      %s294 = scalar_select %p293, %s20, 1
      %s295 = smul.addr %s294, 32
      %s296 = smul.addr %s295, 8
      %s297 = scalar_lea.vmem %s0, %s296
      %p298 = pneg %p41
      %p299 = pneg %p38
      %p300 = pneg %p62
      %p301 = pneg %p59
      %p302 = pneg %p83
      %p303 = pneg %p80
      %p304 = pneg %p104
      %p305 = pneg %p101
      %p306 = pneg %p125
      %p307 = pneg %p122
      %p308 = pneg %p146
      %p309 = pneg %p143
      %p310 = pneg %p167
      %p311 = pneg %p164
      %p312 = pneg %p188
      %p313 = pneg %p185
      %p314 = pneg %p209
      %p315 = pneg %p206
      %p316 = pneg %p235
      %p317 = pneg %p232
      %p318 = scmp.lt.s32.totalorder %s20, 1
      %s319 = scalar_select %p318, %s20, 1
      %s320 = smul.addr %s319, 32
      %s321 = smul.addr %s320, 8
      %s322 = scalar_lea.vmem %s9, %s321
      %p323 = scmp.lt.s32.totalorder %s20, 1
      %s324 = scalar_select %p323, %s20, 1
      %s325 = smul.addr %s324, 32
      %s326 = smul.addr %s325, 8
      %s327 = scalar_lea.vmem %s0, %s326
      %p328 = scmp.lt.s32.totalorder %s20, 1
      %s329 = scalar_select %p328, %s20, 1
      %s330 = smul.addr %s329, 32
      %s331 = smul.addr %s330, 8
      %s332 = scalar_lea.vmem %s9, %s331
      %v333 = vld [vmem:[%s327] sm:$0xff]
      %v334 = vld [vmem:[%s327 + $0x8] sm:$0xff]
      %v335 = vld [vmem:[%s327 + $0x10] sm:$0xff]
      %v336 = vld [vmem:[%s327 + $0x18] sm:$0xff]
      %v337 = vld [vmem:[%s327 + $0x20] sm:$0xff]
      %v338 = vld [vmem:[%s327 + $0x28] sm:$0xff]
      %v339 = vld [vmem:[%s327 + $0x30] sm:$0xff]
      %v340 = vld [vmem:[%s327 + $0x38] sm:$0xff]
      %v341 = vld [vmem:[%s327 + $0x40] sm:$0xff]
      %v342 = vld [vmem:[%s327 + $0x48] sm:$0xff]
      %v343 = vld [vmem:[%s327 + $0x50] sm:$0xff]
      %v344 = vld [vmem:[%s327 + $0x58] sm:$0xff]
      %v345 = vld [vmem:[%s327 + $0x60] sm:$0xff]
      %v346 = vld [vmem:[%s327 + $0x68] sm:$0xff]
      %v347 = vld [vmem:[%s327 + $0x70] sm:$0xff]
      %v348 = vld [vmem:[%s327 + $0x78] sm:$0xff]
      %v349 = vld [vmem:[%s327 + $0x80] sm:$0xff]
      %v350 = vld [vmem:[%s327 + $0x88] sm:$0xff]
      %v351 = vld [vmem:[%s327 + $0x90] sm:$0xff]
      %v352 = vld [vmem:[%s327 + $0x98] sm:$0xff]
      %v353 = vld [vmem:[%s327 + $0xa0] sm:$0xff]
      %v354 = vld [vmem:[%s327 + $0xa8] sm:$0xff]
      %v355 = vld [vmem:[%s327 + $0xb0] sm:$0xff]
      %v356 = vld [vmem:[%s327 + $0xb8] sm:$0xff]
      %v357 = vld [vmem:[%s327 + $0xc0] sm:$0xff]
      %v358 = vld [vmem:[%s327 + $0xc8] sm:$0xff]
      %v359 = vld [vmem:[%s327 + $0xd0] sm:$0xff]
      %v360 = vld [vmem:[%s327 + $0xd8] sm:$0xff]
      %v361 = vld [vmem:[%s327 + $0xe0] sm:$0xff]
      %v362 = vld [vmem:[%s327 + $0xe8] sm:$0xff]
      %v363 = vld [vmem:[%s327 + $0xf0] sm:$0xff]
      %v364 = vld [vmem:[%s327 + $0xf8] sm:$0xff]
      %vm365 = vcmask 130048
      %366 = vst.msk [vmem:[#allocation2] sm:$0xff] %vm365, 0.0
      %367 = vst.msk [vmem:[#allocation2 + $0x8] sm:$0xff] %vm365, 0.0
      %vm368 = vcmask 123904
      %369 = vst.msk [vmem:[#allocation2 + $0x10] sm:$0x3] %vm368, 0.0
      %370 = vst.msk [vmem:[#allocation2 + $0x18] sm:$0xff] %vm365, 0.0
      %371 = vst.msk [vmem:[#allocation2 + $0x20] sm:$0xff] %vm365, 0.0
      %372 = vst.msk [vmem:[#allocation2 + $0x28] sm:$0x3] %vm368, 0.0
      %373 = vst.msk [vmem:[#allocation2 + $0x30] sm:$0xff] %vm365, 0.0
      %374 = vst.msk [vmem:[#allocation2 + $0x38] sm:$0xff] %vm365, 0.0
      %375 = vst.msk [vmem:[#allocation2 + $0x40] sm:$0x3] %vm368, 0.0
      %376 = vst.msk [vmem:[#allocation2 + $0x48] sm:$0xff] %vm365, 0.0
      %377 = vst.msk [vmem:[#allocation2 + $0x50] sm:$0xff] %vm365, 0.0
      %378 = vst.msk [vmem:[#allocation2 + $0x58] sm:$0x3] %vm368, 0.0
      %379 = vst.msk [vmem:[#allocation2 + $0x60] sm:$0xff] %vm365, 0.0
      %380 = vst.msk [vmem:[#allocation2 + $0x68] sm:$0xff] %vm365, 0.0
      %381 = vst.msk [vmem:[#allocation2 + $0x70] sm:$0x3] %vm368, 0.0
      %382 = vst.msk [vmem:[#allocation2 + $0x78] sm:$0xff] %vm365, 0.0
      %383 = vst.msk [vmem:[#allocation2 + $0x80] sm:$0xff] %vm365, 0.0
      %384 = vst.msk [vmem:[#allocation2 + $0x88] sm:$0x3] %vm368, 0.0
      %385 = vst.msk [vmem:[#allocation2 + $0x90] sm:$0xff] %vm365, 0.0
      %386 = vst.msk [vmem:[#allocation2 + $0x98] sm:$0xff] %vm365, 0.0
      %387 = vst.msk [vmem:[#allocation2 + $0xa0] sm:$0x3] %vm368, 0.0
      %388 = vst.msk [vmem:[#allocation2 + $0xa8] sm:$0xff] %vm365, 0.0
      %389 = vst.msk [vmem:[#allocation2 + $0xb0] sm:$0xff] %vm365, 0.0
      %390 = vst.msk [vmem:[#allocation2 + $0xb8] sm:$0x3] %vm368, 0.0
      %391 = vst.msk [vmem:[#allocation2 + $0xc0] sm:$0xff] %vm365, 0.0
      %392 = vst.msk [vmem:[#allocation2 + $0xc8] sm:$0xff] %vm365, 0.0
      %393 = vst.msk [vmem:[#allocation2 + $0xd0] sm:$0x3] %vm368, 0.0
      %394 = vst.msk [vmem:[#allocation2 + $0xd8] sm:$0xff] %vm365, 0.0
      %395 = vst.msk [vmem:[#allocation2 + $0xe0] sm:$0xff] %vm365, 0.0
      %396 = vst.msk [vmem:[#allocation2 + $0xe8] sm:$0x3] %vm368, 0.0
      %397 = vst.msk [vmem:[#allocation2 + $0xf0] sm:$0xff] %vm365, 0.0
      %398 = vst.msk [vmem:[#allocation2 + $0xf8] sm:$0xff] %vm365, 0.0
      %399 = vst.msk [vmem:[#allocation2 + $0x100] sm:$0x3] %vm368, 0.0
      %400 = vst.msk [vmem:[#allocation2 + $0x108] sm:$0xff] %vm365, 0.0
      %401 = vst.msk [vmem:[#allocation2 + $0x110] sm:$0xff] %vm365, 0.0
      %402 = vst.msk [vmem:[#allocation2 + $0x118] sm:$0x3] %vm368, 0.0
      %403 = vst.msk [vmem:[#allocation2 + $0x120] sm:$0xff] %vm365, 0.0
      %404 = vst.msk [vmem:[#allocation2 + $0x128] sm:$0xff] %vm365, 0.0
      %405 = vst.msk [vmem:[#allocation2 + $0x130] sm:$0x3] %vm368, 0.0
      %406 = vst.msk [vmem:[#allocation2 + $0x138] sm:$0xff] %vm365, 0.0
      %407 = vst.msk [vmem:[#allocation2 + $0x140] sm:$0xff] %vm365, 0.0
      %408 = vst.msk [vmem:[#allocation2 + $0x148] sm:$0x3] %vm368, 0.0
      %409 = vst.msk [vmem:[#allocation2 + $0x150] sm:$0xff] %vm365, 0.0
      %410 = vst.msk [vmem:[#allocation2 + $0x158] sm:$0xff] %vm365, 0.0
      %411 = vst.msk [vmem:[#allocation2 + $0x160] sm:$0x3] %vm368, 0.0
      %412 = vst.msk [vmem:[#allocation2 + $0x168] sm:$0xff] %vm365, 0.0
      %413 = vst.msk [vmem:[#allocation2 + $0x170] sm:$0xff] %vm365, 0.0
      %414 = vst.msk [vmem:[#allocation2 + $0x178] sm:$0x3] %vm368, 0.0
      %415 = vst.msk [vmem:[#allocation2 + $0x180] sm:$0xff] %vm365, 0.0
      %416 = vst.msk [vmem:[#allocation2 + $0x188] sm:$0xff] %vm365, 0.0
      %417 = vst.msk [vmem:[#allocation2 + $0x190] sm:$0x3] %vm368, 0.0
      %418 = vst.msk [vmem:[#allocation2 + $0x198] sm:$0xff] %vm365, 0.0
      %419 = vst.msk [vmem:[#allocation2 + $0x1a0] sm:$0xff] %vm365, 0.0
      %420 = vst.msk [vmem:[#allocation2 + $0x1a8] sm:$0x3] %vm368, 0.0
      %s421 = scalar_lea.vmem [#allocation2], 24
      %422 = vst.msk [vmem:[%s421 + $0x1] sm:$0xff] %vm365, %v333
      %423 = vst.msk [vmem:[%s421 + $0x9] sm:$0xff] %vm365, %v334
      %424 = vst.msk [vmem:[%s421 + $0x19] sm:$0xff] %vm365, %v335
      %425 = vst.msk [vmem:[%s421 + $0x21] sm:$0xff] %vm365, %v336
      %426 = vst.msk [vmem:[%s421 + $0x31] sm:$0xff] %vm365, %v337
      %427 = vst.msk [vmem:[%s421 + $0x39] sm:$0xff] %vm365, %v338
      %428 = vst.msk [vmem:[%s421 + $0x49] sm:$0xff] %vm365, %v339
      %429 = vst.msk [vmem:[%s421 + $0x51] sm:$0xff] %vm365, %v340
      %430 = vst.msk [vmem:[%s421 + $0x61] sm:$0xff] %vm365, %v341
      %431 = vst.msk [vmem:[%s421 + $0x69] sm:$0xff] %vm365, %v342
      %432 = vst.msk [vmem:[%s421 + $0x79] sm:$0xff] %vm365, %v343
      %433 = vst.msk [vmem:[%s421 + $0x81] sm:$0xff] %vm365, %v344
      %434 = vst.msk [vmem:[%s421 + $0x91] sm:$0xff] %vm365, %v345
      %435 = vst.msk [vmem:[%s421 + $0x99] sm:$0xff] %vm365, %v346
      %436 = vst.msk [vmem:[%s421 + $0xa9] sm:$0xff] %vm365, %v347
      %437 = vst.msk [vmem:[%s421 + $0xb1] sm:$0xff] %vm365, %v348
      %438 = vst.msk [vmem:[%s421 + $0xc1] sm:$0xff] %vm365, %v349
      %439 = vst.msk [vmem:[%s421 + $0xc9] sm:$0xff] %vm365, %v350
      %440 = vst.msk [vmem:[%s421 + $0xd9] sm:$0xff] %vm365, %v351
      %441 = vst.msk [vmem:[%s421 + $0xe1] sm:$0xff] %vm365, %v352
      %442 = vst.msk [vmem:[%s421 + $0xf1] sm:$0xff] %vm365, %v353
      %443 = vst.msk [vmem:[%s421 + $0xf9] sm:$0xff] %vm365, %v354
      %444 = vst.msk [vmem:[%s421 + $0x109] sm:$0xff] %vm365, %v355
      %445 = vst.msk [vmem:[%s421 + $0x111] sm:$0xff] %vm365, %v356
      %446 = vst.msk [vmem:[%s421 + $0x121] sm:$0xff] %vm365, %v357
      %447 = vst.msk [vmem:[%s421 + $0x129] sm:$0xff] %vm365, %v358
      %448 = vst.msk [vmem:[%s421 + $0x139] sm:$0xff] %vm365, %v359
      %449 = vst.msk [vmem:[%s421 + $0x141] sm:$0xff] %vm365, %v360
      %450 = vst.msk [vmem:[%s421 + $0x151] sm:$0xff] %vm365, %v361
      %451 = vst.msk [vmem:[%s421 + $0x159] sm:$0xff] %vm365, %v362
      %452 = vst.msk [vmem:[%s421 + $0x169] sm:$0xff] %vm365, %v363
      %453 = vst.msk [vmem:[%s421 + $0x171] sm:$0xff] %vm365, %v364
      %v454 = vld [vmem:[#allocation2] sm:$0xff]
      %v455 = vld [vmem:[#allocation2 + $0x8] sm:$0xff]
      %v456 = vld [vmem:[#allocation2 + $0x18] sm:$0xff]
      %v457 = vld [vmem:[#allocation2 + $0x20] sm:$0xff]
      %v458 = vld [vmem:[#allocation2 + $0x30] sm:$0xff]
      %v459 = vld [vmem:[#allocation2 + $0x38] sm:$0xff]
      %v460 = vld [vmem:[#allocation2 + $0x48] sm:$0xff]
      %v461 = vld [vmem:[#allocation2 + $0x50] sm:$0xff]
      %v462 = vld [vmem:[#allocation2 + $0x60] sm:$0xff]
      %v463 = vld [vmem:[#allocation2 + $0x68] sm:$0xff]
      %v464 = vld [vmem:[#allocation2 + $0x78] sm:$0xff]
      %v465 = vld [vmem:[#allocation2 + $0x80] sm:$0xff]
      %v466 = vld [vmem:[#allocation2 + $0x90] sm:$0xff]
      %v467 = vld [vmem:[#allocation2 + $0x98] sm:$0xff]
      %v468 = vld [vmem:[#allocation2 + $0xa8] sm:$0xff]
      %v469 = vld [vmem:[#allocation2 + $0xb0] sm:$0xff]
      %v470 = vld [vmem:[#allocation2 + $0xc0] sm:$0xff]
      %v471 = vld [vmem:[#allocation2 + $0xc8] sm:$0xff]
      %v472 = vld [vmem:[#allocation2 + $0xd8] sm:$0xff]
      %v473 = vld [vmem:[#allocation2 + $0xe0] sm:$0xff]
      %v474 = vld [vmem:[#allocation2 + $0xf0] sm:$0xff]
      %v475 = vld [vmem:[#allocation2 + $0xf8] sm:$0xff]
      %v476 = vld [vmem:[#allocation2 + $0x108] sm:$0xff]
      %v477 = vld [vmem:[#allocation2 + $0x110] sm:$0xff]
      %v478 = vld [vmem:[#allocation2 + $0x120] sm:$0xff]
      %v479 = vld [vmem:[#allocation2 + $0x128] sm:$0xff]
      %v480 = vld [vmem:[#allocation2 + $0x138] sm:$0xff]
      %v481 = vld [vmem:[#allocation2 + $0x140] sm:$0xff]
      %v482 = vld [vmem:[#allocation2 + $0x150] sm:$0xff]
      %v483 = vld [vmem:[#allocation2 + $0x158] sm:$0xff]
      %v484 = vld [vmem:[#allocation2 + $0x168] sm:$0xff]
      %v485 = vld [vmem:[#allocation2 + $0x170] sm:$0xff]
      %v486 = vld [vmem:[%s1] sm:$0xff]
      %v487 = vld [vmem:[%s1 + $0x8] sm:$0xff]
      %v488 = vld [vmem:[#allocation2 + $0x1] sm:$0xff]
      %v489 = vld [vmem:[#allocation2 + $0x9] sm:$0xff]
      %v490 = vld [vmem:[#allocation2 + $0x19] sm:$0xff]
      %v491 = vld [vmem:[#allocation2 + $0x21] sm:$0xff]
      %v492 = vld [vmem:[#allocation2 + $0x31] sm:$0xff]
      %v493 = vld [vmem:[#allocation2 + $0x39] sm:$0xff]
      %v494 = vld [vmem:[#allocation2 + $0x49] sm:$0xff]
      %v495 = vld [vmem:[#allocation2 + $0x51] sm:$0xff]
      %v496 = vld [vmem:[#allocation2 + $0x61] sm:$0xff]
      %v497 = vld [vmem:[#allocation2 + $0x69] sm:$0xff]
      %v498 = vld [vmem:[#allocation2 + $0x79] sm:$0xff]
      %v499 = vld [vmem:[#allocation2 + $0x81] sm:$0xff]
      %v500 = vld [vmem:[#allocation2 + $0x91] sm:$0xff]
      %v501 = vld [vmem:[#allocation2 + $0x99] sm:$0xff]
      %v502 = vld [vmem:[#allocation2 + $0xa9] sm:$0xff]
      %v503 = vld [vmem:[#allocation2 + $0xb1] sm:$0xff]
      %v504 = vld [vmem:[#allocation2 + $0xc1] sm:$0xff]
      %v505 = vld [vmem:[#allocation2 + $0xc9] sm:$0xff]
      %v506 = vld [vmem:[#allocation2 + $0xd9] sm:$0xff]
      %v507 = vld [vmem:[#allocation2 + $0xe1] sm:$0xff]
      %v508 = vld [vmem:[#allocation2 + $0xf1] sm:$0xff]
      %v509 = vld [vmem:[#allocation2 + $0xf9] sm:$0xff]
      %v510 = vld [vmem:[#allocation2 + $0x109] sm:$0xff]
      %v511 = vld [vmem:[#allocation2 + $0x111] sm:$0xff]
      %v512 = vld [vmem:[#allocation2 + $0x121] sm:$0xff]
      %v513 = vld [vmem:[#allocation2 + $0x129] sm:$0xff]
      %v514 = vld [vmem:[#allocation2 + $0x139] sm:$0xff]
      %v515 = vld [vmem:[#allocation2 + $0x141] sm:$0xff]
      %v516 = vld [vmem:[#allocation2 + $0x151] sm:$0xff]
      %v517 = vld [vmem:[#allocation2 + $0x159] sm:$0xff]
      %v518 = vld [vmem:[#allocation2 + $0x169] sm:$0xff]
      %v519 = vld [vmem:[#allocation2 + $0x171] sm:$0xff]
      %s520 = scalar_lea.vmem %s1, 16
      %v521 = vld [vmem:[%s520] sm:$0xff]
      %v522 = vld [vmem:[%s520 + $0x8] sm:$0xff]
      %v524 = vsel %vm365, %v488, 0
      %v527 = vsel %vm365, %v489, 0
      %v530 = vsel %vm365, %v490, 0
      %v533 = vsel %vm365, %v491, 0
      %v536 = vsel %vm365, %v492, 0
      %v539 = vsel %vm365, %v493, 0
      %v542 = vsel %vm365, %v494, 0
      %v545 = vsel %vm365, %v495, 0
      %v548 = vsel %vm365, %v496, 0
      %v551 = vsel %vm365, %v497, 0
      %v554 = vsel %vm365, %v498, 0
      %v557 = vsel %vm365, %v499, 0
      %v560 = vsel %vm365, %v500, 0
      %v563 = vsel %vm365, %v501, 0
      %v566 = vsel %vm365, %v502, 0
      %v569 = vsel %vm365, %v503, 0
      %v572 = vsel %vm365, %v504, 0
      %v575 = vsel %vm365, %v505, 0
      %v578 = vsel %vm365, %v506, 0
      %v581 = vsel %vm365, %v507, 0
      %v584 = vsel %vm365, %v508, 0
      %v587 = vsel %vm365, %v509, 0
      %v590 = vsel %vm365, %v510, 0
      %v593 = vsel %vm365, %v511, 0
      %v596 = vsel %vm365, %v512, 0
      %v599 = vsel %vm365, %v513, 0
      %v602 = vsel %vm365, %v514, 0
      %v605 = vsel %vm365, %v515, 0
      %v608 = vsel %vm365, %v516, 0
      %v611 = vsel %vm365, %v517, 0
      %v614 = vsel %vm365, %v518, 0
      %v617 = vsel %vm365, %v519, 0
      %619 = vmatpush.msra.mxu0 0.0
      %620 = vmatpush.msra.mxu0 0.0
      %621 = vmatpush.msra.mxu0 0.0
      %622 = vmatpush.msra.mxu0 0.0
      %623 = vmatpush.msra.mxu0 0.0
      %624 = vmatpush.msra.mxu0 0.0
      %625 = vmatpush.msra.mxu0 0.0
      %626 = vmatpush.msra.mxu0 0.0
      %627 = vmatpush.msra.mxu0 0.0
      %628 = vmatpush.msra.mxu0 0.0
      %629 = vmatpush.msra.mxu0 0.0
      %630 = vmatpush.msra.mxu0 0.0
      %631 = vmatpush.msra.mxu0 0.0
      %632 = vmatpush.msra.mxu0 0.0
      %633 = vmatpush.msra.mxu0 %v522
      %634 = vmatpush.msra.mxu0 %v521
      %635 = vmatmul.f32.gmra.mxu0 %v524
      %v636 = vpop.f32.mrf.mxu0
      %v637 = vadd.f32 0.0, %v636
      %638 = vmatmul.f32.gmra.mxu0 %v527
      %v639 = vpop.f32.mrf.mxu0
      %v640 = vadd.f32 0.0, %v639
      %641 = vmatmul.f32.gmra.mxu0 %v530
      %v642 = vpop.f32.mrf.mxu0
      %v643 = vadd.f32 0.0, %v642
      %644 = vmatmul.f32.gmra.mxu0 %v533
      %v645 = vpop.f32.mrf.mxu0
      %v646 = vadd.f32 0.0, %v645
      %647 = vmatmul.f32.gmra.mxu0 %v536
      %v648 = vpop.f32.mrf.mxu0
      %v649 = vadd.f32 0.0, %v648
      %650 = vmatmul.f32.gmra.mxu0 %v539
      %v651 = vpop.f32.mrf.mxu0
      %v652 = vadd.f32 0.0, %v651
      %653 = vmatmul.f32.gmra.mxu0 %v542
      %v654 = vpop.f32.mrf.mxu0
      %v655 = vadd.f32 0.0, %v654
      %656 = vmatmul.f32.gmra.mxu0 %v545
      %v657 = vpop.f32.mrf.mxu0
      %v658 = vadd.f32 0.0, %v657
      %659 = vmatmul.f32.gmra.mxu0 %v548
      %v660 = vpop.f32.mrf.mxu0
      %v661 = vadd.f32 0.0, %v660
      %662 = vmatmul.f32.gmra.mxu0 %v551
      %v663 = vpop.f32.mrf.mxu0
      %v664 = vadd.f32 0.0, %v663
      %665 = vmatmul.f32.gmra.mxu0 %v554
      %v666 = vpop.f32.mrf.mxu0
      %v667 = vadd.f32 0.0, %v666
      %668 = vmatmul.f32.gmra.mxu0 %v557
      %v669 = vpop.f32.mrf.mxu0
      %v670 = vadd.f32 0.0, %v669
      %671 = vmatmul.f32.gmra.mxu0 %v560
      %v672 = vpop.f32.mrf.mxu0
      %v673 = vadd.f32 0.0, %v672
      %674 = vmatmul.f32.gmra.mxu0 %v563
      %v675 = vpop.f32.mrf.mxu0
      %v676 = vadd.f32 0.0, %v675
      %677 = vmatmul.f32.gmra.mxu0 %v566
      %v678 = vpop.f32.mrf.mxu0
      %v679 = vadd.f32 0.0, %v678
      %680 = vmatmul.f32.gmra.mxu0 %v569
      %v681 = vpop.f32.mrf.mxu0
      %v682 = vadd.f32 0.0, %v681
      %683 = vmatmul.f32.gmra.mxu0 %v572
      %v684 = vpop.f32.mrf.mxu0
      %v685 = vadd.f32 0.0, %v684
      %686 = vmatmul.f32.gmra.mxu0 %v575
      %v687 = vpop.f32.mrf.mxu0
      %v688 = vadd.f32 0.0, %v687
      %689 = vmatmul.f32.gmra.mxu0 %v578
      %v690 = vpop.f32.mrf.mxu0
      %v691 = vadd.f32 0.0, %v690
      %692 = vmatmul.f32.gmra.mxu0 %v581
      %v693 = vpop.f32.mrf.mxu0
      %v694 = vadd.f32 0.0, %v693
      %695 = vmatmul.f32.gmra.mxu0 %v584
      %v696 = vpop.f32.mrf.mxu0
      %v697 = vadd.f32 0.0, %v696
      %698 = vmatmul.f32.gmra.mxu0 %v587
      %v699 = vpop.f32.mrf.mxu0
      %v700 = vadd.f32 0.0, %v699
      %701 = vmatmul.f32.gmra.mxu0 %v590
      %v702 = vpop.f32.mrf.mxu0
      %v703 = vadd.f32 0.0, %v702
      %704 = vmatmul.f32.gmra.mxu0 %v593
      %v705 = vpop.f32.mrf.mxu0
      %v706 = vadd.f32 0.0, %v705
      %707 = vmatmul.f32.gmra.mxu0 %v596
      %v708 = vpop.f32.mrf.mxu0
      %v709 = vadd.f32 0.0, %v708
      %710 = vmatmul.f32.gmra.mxu0 %v599
      %v711 = vpop.f32.mrf.mxu0
      %v712 = vadd.f32 0.0, %v711
      %713 = vmatmul.f32.gmra.mxu0 %v602
      %v714 = vpop.f32.mrf.mxu0
      %v715 = vadd.f32 0.0, %v714
      %716 = vmatmul.f32.gmra.mxu0 %v605
      %v717 = vpop.f32.mrf.mxu0
      %v718 = vadd.f32 0.0, %v717
      %719 = vmatmul.f32.gmra.mxu0 %v608
      %v720 = vpop.f32.mrf.mxu0
      %v721 = vadd.f32 0.0, %v720
      %722 = vmatmul.f32.gmra.mxu0 %v611
      %v723 = vpop.f32.mrf.mxu0
      %v724 = vadd.f32 0.0, %v723
      %725 = vmatmul.f32.gmra.mxu0 %v614
      %v726 = vpop.f32.mrf.mxu0
      %v727 = vadd.f32 0.0, %v726
      %728 = vmatmul.f32.gmra.mxu0 %v617
      %v729 = vpop.f32.mrf.mxu0
      %v730 = vadd.f32 0.0, %v729
      %731 = vdwg.mxu0
      %v733 = vsel %vm365, %v454, 0
      %v736 = vsel %vm365, %v455, 0
      %v739 = vsel %vm365, %v456, 0
      %v742 = vsel %vm365, %v457, 0
      %v745 = vsel %vm365, %v458, 0
      %v748 = vsel %vm365, %v459, 0
      %v751 = vsel %vm365, %v460, 0
      %v754 = vsel %vm365, %v461, 0
      %v757 = vsel %vm365, %v462, 0
      %v760 = vsel %vm365, %v463, 0
      %v763 = vsel %vm365, %v464, 0
      %v766 = vsel %vm365, %v465, 0
      %v769 = vsel %vm365, %v466, 0
      %v772 = vsel %vm365, %v467, 0
      %v775 = vsel %vm365, %v468, 0
      %v778 = vsel %vm365, %v469, 0
      %v781 = vsel %vm365, %v470, 0
      %v784 = vsel %vm365, %v471, 0
      %v787 = vsel %vm365, %v472, 0
      %v790 = vsel %vm365, %v473, 0
      %v793 = vsel %vm365, %v474, 0
      %v796 = vsel %vm365, %v475, 0
      %v799 = vsel %vm365, %v476, 0
      %v802 = vsel %vm365, %v477, 0
      %v805 = vsel %vm365, %v478, 0
      %v808 = vsel %vm365, %v479, 0
      %v811 = vsel %vm365, %v480, 0
      %v814 = vsel %vm365, %v481, 0
      %v817 = vsel %vm365, %v482, 0
      %v820 = vsel %vm365, %v483, 0
      %v823 = vsel %vm365, %v484, 0
      %v826 = vsel %vm365, %v485, 0
      %828 = vmatpush.msra.mxu0 0.0
      %829 = vmatpush.msra.mxu0 0.0
      %830 = vmatpush.msra.mxu0 0.0
      %831 = vmatpush.msra.mxu0 0.0
      %832 = vmatpush.msra.mxu0 0.0
      %833 = vmatpush.msra.mxu0 0.0
      %834 = vmatpush.msra.mxu0 0.0
      %835 = vmatpush.msra.mxu0 0.0
      %836 = vmatpush.msra.mxu0 0.0
      %837 = vmatpush.msra.mxu0 0.0
      %838 = vmatpush.msra.mxu0 0.0
      %839 = vmatpush.msra.mxu0 0.0
      %840 = vmatpush.msra.mxu0 0.0
      %841 = vmatpush.msra.mxu0 0.0
      %842 = vmatpush.msra.mxu0 %v487
      %843 = vmatpush.msra.mxu0 %v486
      %844 = vmatmul.f32.gmra.mxu0 %v733
      %v845 = vpop.f32.mrf.mxu0
      %v846 = vadd.f32 %v637, %v845
      %847 = vmatmul.f32.gmra.mxu0 %v736
      %v848 = vpop.f32.mrf.mxu0
      %v849 = vadd.f32 %v640, %v848
      %850 = vmatmul.f32.gmra.mxu0 %v739
      %v851 = vpop.f32.mrf.mxu0
      %v852 = vadd.f32 %v643, %v851
      %853 = vmatmul.f32.gmra.mxu0 %v742
      %v854 = vpop.f32.mrf.mxu0
      %v855 = vadd.f32 %v646, %v854
      %856 = vmatmul.f32.gmra.mxu0 %v745
      %v857 = vpop.f32.mrf.mxu0
      %v858 = vadd.f32 %v649, %v857
      %859 = vmatmul.f32.gmra.mxu0 %v748
      %v860 = vpop.f32.mrf.mxu0
      %v861 = vadd.f32 %v652, %v860
      %862 = vmatmul.f32.gmra.mxu0 %v751
      %v863 = vpop.f32.mrf.mxu0
      %v864 = vadd.f32 %v655, %v863
      %865 = vmatmul.f32.gmra.mxu0 %v754
      %v866 = vpop.f32.mrf.mxu0
      %v867 = vadd.f32 %v658, %v866
      %868 = vmatmul.f32.gmra.mxu0 %v757
      %v869 = vpop.f32.mrf.mxu0
      %v870 = vadd.f32 %v661, %v869
      %871 = vmatmul.f32.gmra.mxu0 %v760
      %v872 = vpop.f32.mrf.mxu0
      %v873 = vadd.f32 %v664, %v872
      %874 = vmatmul.f32.gmra.mxu0 %v763
      %v875 = vpop.f32.mrf.mxu0
      %v876 = vadd.f32 %v667, %v875
      %877 = vmatmul.f32.gmra.mxu0 %v766
      %v878 = vpop.f32.mrf.mxu0
      %v879 = vadd.f32 %v670, %v878
      %880 = vmatmul.f32.gmra.mxu0 %v769
      %v881 = vpop.f32.mrf.mxu0
      %v882 = vadd.f32 %v673, %v881
      %883 = vmatmul.f32.gmra.mxu0 %v772
      %v884 = vpop.f32.mrf.mxu0
      %v885 = vadd.f32 %v676, %v884
      %886 = vmatmul.f32.gmra.mxu0 %v775
      %v887 = vpop.f32.mrf.mxu0
      %v888 = vadd.f32 %v679, %v887
      %889 = vmatmul.f32.gmra.mxu0 %v778
      %v890 = vpop.f32.mrf.mxu0
      %v891 = vadd.f32 %v682, %v890
      %892 = vmatmul.f32.gmra.mxu0 %v781
      %v893 = vpop.f32.mrf.mxu0
      %v894 = vadd.f32 %v685, %v893
      %895 = vmatmul.f32.gmra.mxu0 %v784
      %v896 = vpop.f32.mrf.mxu0
      %v897 = vadd.f32 %v688, %v896
      %898 = vmatmul.f32.gmra.mxu0 %v787
      %v899 = vpop.f32.mrf.mxu0
      %v900 = vadd.f32 %v691, %v899
      %901 = vmatmul.f32.gmra.mxu0 %v790
      %v902 = vpop.f32.mrf.mxu0
      %v903 = vadd.f32 %v694, %v902
      %904 = vmatmul.f32.gmra.mxu0 %v793
      %v905 = vpop.f32.mrf.mxu0
      %v906 = vadd.f32 %v697, %v905
      %907 = vmatmul.f32.gmra.mxu0 %v796
      %v908 = vpop.f32.mrf.mxu0
      %v909 = vadd.f32 %v700, %v908
      %910 = vmatmul.f32.gmra.mxu0 %v799
      %v911 = vpop.f32.mrf.mxu0
      %v912 = vadd.f32 %v703, %v911
      %913 = vmatmul.f32.gmra.mxu0 %v802
      %v914 = vpop.f32.mrf.mxu0
      %v915 = vadd.f32 %v706, %v914
      %916 = vmatmul.f32.gmra.mxu0 %v805
      %v917 = vpop.f32.mrf.mxu0
      %v918 = vadd.f32 %v709, %v917
      %919 = vmatmul.f32.gmra.mxu0 %v808
      %v920 = vpop.f32.mrf.mxu0
      %v921 = vadd.f32 %v712, %v920
      %922 = vmatmul.f32.gmra.mxu0 %v811
      %v923 = vpop.f32.mrf.mxu0
      %v924 = vadd.f32 %v715, %v923
      %925 = vmatmul.f32.gmra.mxu0 %v814
      %v926 = vpop.f32.mrf.mxu0
      %v927 = vadd.f32 %v718, %v926
      %928 = vmatmul.f32.gmra.mxu0 %v817
      %v929 = vpop.f32.mrf.mxu0
      %v930 = vadd.f32 %v721, %v929
      %931 = vmatmul.f32.gmra.mxu0 %v820
      %v932 = vpop.f32.mrf.mxu0
      %v933 = vadd.f32 %v724, %v932
      %934 = vmatmul.f32.gmra.mxu0 %v823
      %v935 = vpop.f32.mrf.mxu0
      %v936 = vadd.f32 %v727, %v935
      %937 = vmatmul.f32.gmra.mxu0 %v826
      %v938 = vpop.f32.mrf.mxu0
      %v939 = vadd.f32 %v730, %v938
      %940 = vdwg.mxu0
      %v941 = vld [vmem:[#allocation2 + $0x2] sm:$0xff]
      %v942 = vld [vmem:[#allocation2 + $0xa] sm:$0xff]
      %v943 = vld [vmem:[#allocation2 + $0x1a] sm:$0xff]
      %v944 = vld [vmem:[#allocation2 + $0x22] sm:$0xff]
      %v945 = vld [vmem:[#allocation2 + $0x32] sm:$0xff]
      %v946 = vld [vmem:[#allocation2 + $0x3a] sm:$0xff]
      %v947 = vld [vmem:[#allocation2 + $0x4a] sm:$0xff]
      %v948 = vld [vmem:[#allocation2 + $0x52] sm:$0xff]
      %v949 = vld [vmem:[#allocation2 + $0x62] sm:$0xff]
      %v950 = vld [vmem:[#allocation2 + $0x6a] sm:$0xff]
      %v951 = vld [vmem:[#allocation2 + $0x7a] sm:$0xff]
      %v952 = vld [vmem:[#allocation2 + $0x82] sm:$0xff]
      %v953 = vld [vmem:[#allocation2 + $0x92] sm:$0xff]
      %v954 = vld [vmem:[#allocation2 + $0x9a] sm:$0xff]
      %v955 = vld [vmem:[#allocation2 + $0xaa] sm:$0xff]
      %v956 = vld [vmem:[#allocation2 + $0xb2] sm:$0xff]
      %v957 = vld [vmem:[#allocation2 + $0xc2] sm:$0xff]
      %v958 = vld [vmem:[#allocation2 + $0xca] sm:$0xff]
      %v959 = vld [vmem:[#allocation2 + $0xda] sm:$0xff]
      %v960 = vld [vmem:[#allocation2 + $0xe2] sm:$0xff]
      %v961 = vld [vmem:[#allocation2 + $0xf2] sm:$0xff]
      %v962 = vld [vmem:[#allocation2 + $0xfa] sm:$0xff]
      %v963 = vld [vmem:[#allocation2 + $0x10a] sm:$0xff]
      %v964 = vld [vmem:[#allocation2 + $0x112] sm:$0xff]
      %v965 = vld [vmem:[#allocation2 + $0x122] sm:$0xff]
      %v966 = vld [vmem:[#allocation2 + $0x12a] sm:$0xff]
      %v967 = vld [vmem:[#allocation2 + $0x13a] sm:$0xff]
      %v968 = vld [vmem:[#allocation2 + $0x142] sm:$0xff]
      %v969 = vld [vmem:[#allocation2 + $0x152] sm:$0xff]
      %v970 = vld [vmem:[#allocation2 + $0x15a] sm:$0xff]
      %v971 = vld [vmem:[#allocation2 + $0x16a] sm:$0xff]
      %v972 = vld [vmem:[#allocation2 + $0x172] sm:$0xff]
      %s973 = scalar_lea.vmem %s1, 32
      %v974 = vld [vmem:[%s973] sm:$0xff]
      %v975 = vld [vmem:[%s973 + $0x8] sm:$0xff]
      %v977 = vsel %vm365, %v941, 0
      %v980 = vsel %vm365, %v942, 0
      %v983 = vsel %vm365, %v943, 0
      %v986 = vsel %vm365, %v944, 0
      %v989 = vsel %vm365, %v945, 0
      %v992 = vsel %vm365, %v946, 0
      %v995 = vsel %vm365, %v947, 0
      %v998 = vsel %vm365, %v948, 0
      %v1001 = vsel %vm365, %v949, 0
      %v1004 = vsel %vm365, %v950, 0
      %v1007 = vsel %vm365, %v951, 0
      %v1010 = vsel %vm365, %v952, 0
      %v1013 = vsel %vm365, %v953, 0
      %v1016 = vsel %vm365, %v954, 0
      %v1019 = vsel %vm365, %v955, 0
      %v1022 = vsel %vm365, %v956, 0
      %v1025 = vsel %vm365, %v957, 0
      %v1028 = vsel %vm365, %v958, 0
      %v1031 = vsel %vm365, %v959, 0
      %v1034 = vsel %vm365, %v960, 0
      %v1037 = vsel %vm365, %v961, 0
      %v1040 = vsel %vm365, %v962, 0
      %v1043 = vsel %vm365, %v963, 0
      %v1046 = vsel %vm365, %v964, 0
      %v1049 = vsel %vm365, %v965, 0
      %v1052 = vsel %vm365, %v966, 0
      %v1055 = vsel %vm365, %v967, 0
      %v1058 = vsel %vm365, %v968, 0
      %v1061 = vsel %vm365, %v969, 0
      %v1064 = vsel %vm365, %v970, 0
      %v1067 = vsel %vm365, %v971, 0
      %v1070 = vsel %vm365, %v972, 0
      %1072 = vmatpush.msra.mxu0 0.0
      %1073 = vmatpush.msra.mxu0 0.0
      %1074 = vmatpush.msra.mxu0 0.0
      %1075 = vmatpush.msra.mxu0 0.0
      %1076 = vmatpush.msra.mxu0 0.0
      %1077 = vmatpush.msra.mxu0 0.0
      %1078 = vmatpush.msra.mxu0 0.0
      %1079 = vmatpush.msra.mxu0 0.0
      %1080 = vmatpush.msra.mxu0 0.0
      %1081 = vmatpush.msra.mxu0 0.0
      %1082 = vmatpush.msra.mxu0 0.0
      %1083 = vmatpush.msra.mxu0 0.0
      %1084 = vmatpush.msra.mxu0 0.0
      %1085 = vmatpush.msra.mxu0 0.0
      %1086 = vmatpush.msra.mxu0 %v975
      %1087 = vmatpush.msra.mxu0 %v974
      %1088 = vmatmul.f32.gmra.mxu0 %v977
      %v1089 = vpop.f32.mrf.mxu0
      %v1090 = vadd.f32 0.0, %v1089
      %1091 = vmatmul.f32.gmra.mxu0 %v980
      %v1092 = vpop.f32.mrf.mxu0
      %v1093 = vadd.f32 0.0, %v1092
      %1094 = vmatmul.f32.gmra.mxu0 %v983
      %v1095 = vpop.f32.mrf.mxu0
      %v1096 = vadd.f32 0.0, %v1095
      %1097 = vmatmul.f32.gmra.mxu0 %v986
      %v1098 = vpop.f32.mrf.mxu0
      %v1099 = vadd.f32 0.0, %v1098
      %1100 = vmatmul.f32.gmra.mxu0 %v989
      %v1101 = vpop.f32.mrf.mxu0
      %v1102 = vadd.f32 0.0, %v1101
      %1103 = vmatmul.f32.gmra.mxu0 %v992
      %v1104 = vpop.f32.mrf.mxu0
      %v1105 = vadd.f32 0.0, %v1104
      %1106 = vmatmul.f32.gmra.mxu0 %v995
      %v1107 = vpop.f32.mrf.mxu0
      %v1108 = vadd.f32 0.0, %v1107
      %1109 = vmatmul.f32.gmra.mxu0 %v998
      %v1110 = vpop.f32.mrf.mxu0
      %v1111 = vadd.f32 0.0, %v1110
      %1112 = vmatmul.f32.gmra.mxu0 %v1001
      %v1113 = vpop.f32.mrf.mxu0
      %v1114 = vadd.f32 0.0, %v1113
      %1115 = vmatmul.f32.gmra.mxu0 %v1004
      %v1116 = vpop.f32.mrf.mxu0
      %v1117 = vadd.f32 0.0, %v1116
      %1118 = vmatmul.f32.gmra.mxu0 %v1007
      %v1119 = vpop.f32.mrf.mxu0
      %v1120 = vadd.f32 0.0, %v1119
      %1121 = vmatmul.f32.gmra.mxu0 %v1010
      %v1122 = vpop.f32.mrf.mxu0
      %v1123 = vadd.f32 0.0, %v1122
      %1124 = vmatmul.f32.gmra.mxu0 %v1013
      %v1125 = vpop.f32.mrf.mxu0
      %v1126 = vadd.f32 0.0, %v1125
      %1127 = vmatmul.f32.gmra.mxu0 %v1016
      %v1128 = vpop.f32.mrf.mxu0
      %v1129 = vadd.f32 0.0, %v1128
      %1130 = vmatmul.f32.gmra.mxu0 %v1019
      %v1131 = vpop.f32.mrf.mxu0
      %v1132 = vadd.f32 0.0, %v1131
      %1133 = vmatmul.f32.gmra.mxu0 %v1022
      %v1134 = vpop.f32.mrf.mxu0
      %v1135 = vadd.f32 0.0, %v1134
      %1136 = vmatmul.f32.gmra.mxu0 %v1025
      %v1137 = vpop.f32.mrf.mxu0
      %v1138 = vadd.f32 0.0, %v1137
      %1139 = vmatmul.f32.gmra.mxu0 %v1028
      %v1140 = vpop.f32.mrf.mxu0
      %v1141 = vadd.f32 0.0, %v1140
      %1142 = vmatmul.f32.gmra.mxu0 %v1031
      %v1143 = vpop.f32.mrf.mxu0
      %v1144 = vadd.f32 0.0, %v1143
      %1145 = vmatmul.f32.gmra.mxu0 %v1034
      %v1146 = vpop.f32.mrf.mxu0
      %v1147 = vadd.f32 0.0, %v1146
      %1148 = vmatmul.f32.gmra.mxu0 %v1037
      %v1149 = vpop.f32.mrf.mxu0
      %v1150 = vadd.f32 0.0, %v1149
      %1151 = vmatmul.f32.gmra.mxu0 %v1040
      %v1152 = vpop.f32.mrf.mxu0
      %v1153 = vadd.f32 0.0, %v1152
      %1154 = vmatmul.f32.gmra.mxu0 %v1043
      %v1155 = vpop.f32.mrf.mxu0
      %v1156 = vadd.f32 0.0, %v1155
      %1157 = vmatmul.f32.gmra.mxu0 %v1046
      %v1158 = vpop.f32.mrf.mxu0
      %v1159 = vadd.f32 0.0, %v1158
      %1160 = vmatmul.f32.gmra.mxu0 %v1049
      %v1161 = vpop.f32.mrf.mxu0
      %v1162 = vadd.f32 0.0, %v1161
      %1163 = vmatmul.f32.gmra.mxu0 %v1052
      %v1164 = vpop.f32.mrf.mxu0
      %v1165 = vadd.f32 0.0, %v1164
      %1166 = vmatmul.f32.gmra.mxu0 %v1055
      %v1167 = vpop.f32.mrf.mxu0
      %v1168 = vadd.f32 0.0, %v1167
      %1169 = vmatmul.f32.gmra.mxu0 %v1058
      %v1170 = vpop.f32.mrf.mxu0
      %v1171 = vadd.f32 0.0, %v1170
      %1172 = vmatmul.f32.gmra.mxu0 %v1061
      %v1173 = vpop.f32.mrf.mxu0
      %v1174 = vadd.f32 0.0, %v1173
      %1175 = vmatmul.f32.gmra.mxu0 %v1064
      %v1176 = vpop.f32.mrf.mxu0
      %v1177 = vadd.f32 0.0, %v1176
      %1178 = vmatmul.f32.gmra.mxu0 %v1067
      %v1179 = vpop.f32.mrf.mxu0
      %v1180 = vadd.f32 0.0, %v1179
      %1181 = vmatmul.f32.gmra.mxu0 %v1070
      %v1182 = vpop.f32.mrf.mxu0
      %v1183 = vadd.f32 0.0, %v1182
      %1184 = vdwg.mxu0
      %v1185 = vadd.f32 %v846, %v1090
      %v1186 = vadd.f32 %v849, %v1093
      %v1187 = vadd.f32 %v852, %v1096
      %v1188 = vadd.f32 %v855, %v1099
      %v1189 = vadd.f32 %v858, %v1102
      %v1190 = vadd.f32 %v861, %v1105
      %v1191 = vadd.f32 %v864, %v1108
      %v1192 = vadd.f32 %v867, %v1111
      %v1193 = vadd.f32 %v870, %v1114
      %v1194 = vadd.f32 %v873, %v1117
      %v1195 = vadd.f32 %v876, %v1120
      %v1196 = vadd.f32 %v879, %v1123
      %v1197 = vadd.f32 %v882, %v1126
      %v1198 = vadd.f32 %v885, %v1129
      %v1199 = vadd.f32 %v888, %v1132
      %v1200 = vadd.f32 %v891, %v1135
      %v1201 = vadd.f32 %v894, %v1138
      %v1202 = vadd.f32 %v897, %v1141
      %v1203 = vadd.f32 %v900, %v1144
      %v1204 = vadd.f32 %v903, %v1147
      %v1205 = vadd.f32 %v906, %v1150
      %v1206 = vadd.f32 %v909, %v1153
      %v1207 = vadd.f32 %v912, %v1156
      %v1208 = vadd.f32 %v915, %v1159
      %v1209 = vadd.f32 %v918, %v1162
      %v1210 = vadd.f32 %v921, %v1165
      %v1211 = vadd.f32 %v924, %v1168
      %v1212 = vadd.f32 %v927, %v1171
      %v1213 = vadd.f32 %v930, %v1174
      %v1214 = vadd.f32 %v933, %v1177
      %v1215 = vadd.f32 %v936, %v1180
      %v1216 = vadd.f32 %v939, %v1183
      %v1217 = vld [vmem:[%s421] sm:$0xff]
      %v1218 = vld [vmem:[%s421 + $0x8] sm:$0xff]
      %v1219 = vld [vmem:[%s421 + $0x18] sm:$0xff]
      %v1220 = vld [vmem:[%s421 + $0x20] sm:$0xff]
      %v1221 = vld [vmem:[%s421 + $0x30] sm:$0xff]
      %v1222 = vld [vmem:[%s421 + $0x38] sm:$0xff]
      %v1223 = vld [vmem:[%s421 + $0x48] sm:$0xff]
      %v1224 = vld [vmem:[%s421 + $0x50] sm:$0xff]
      %v1225 = vld [vmem:[%s421 + $0x60] sm:$0xff]
      %v1226 = vld [vmem:[%s421 + $0x68] sm:$0xff]
      %v1227 = vld [vmem:[%s421 + $0x78] sm:$0xff]
      %v1228 = vld [vmem:[%s421 + $0x80] sm:$0xff]
      %v1229 = vld [vmem:[%s421 + $0x90] sm:$0xff]
      %v1230 = vld [vmem:[%s421 + $0x98] sm:$0xff]
      %v1231 = vld [vmem:[%s421 + $0xa8] sm:$0xff]
      %v1232 = vld [vmem:[%s421 + $0xb0] sm:$0xff]
      %v1233 = vld [vmem:[%s421 + $0xc0] sm:$0xff]
      %v1234 = vld [vmem:[%s421 + $0xc8] sm:$0xff]
      %v1235 = vld [vmem:[%s421 + $0xd8] sm:$0xff]
      %v1236 = vld [vmem:[%s421 + $0xe0] sm:$0xff]
      %v1237 = vld [vmem:[%s421 + $0xf0] sm:$0xff]
      %v1238 = vld [vmem:[%s421 + $0xf8] sm:$0xff]
      %v1239 = vld [vmem:[%s421 + $0x108] sm:$0xff]
      %v1240 = vld [vmem:[%s421 + $0x110] sm:$0xff]
      %v1241 = vld [vmem:[%s421 + $0x120] sm:$0xff]
      %v1242 = vld [vmem:[%s421 + $0x128] sm:$0xff]
      %v1243 = vld [vmem:[%s421 + $0x138] sm:$0xff]
      %v1244 = vld [vmem:[%s421 + $0x140] sm:$0xff]
      %v1245 = vld [vmem:[%s421 + $0x150] sm:$0xff]
      %v1246 = vld [vmem:[%s421 + $0x158] sm:$0xff]
      %v1247 = vld [vmem:[%s421 + $0x168] sm:$0xff]
      %v1248 = vld [vmem:[%s421 + $0x170] sm:$0xff]
      %s1249 = scalar_lea.vmem %s1, 48
      %v1250 = vld [vmem:[%s1249] sm:$0xff]
      %v1251 = vld [vmem:[%s1249 + $0x8] sm:$0xff]
      %v1253 = vsel %vm365, %v1217, 0
      %v1256 = vsel %vm365, %v1218, 0
      %v1259 = vsel %vm365, %v1219, 0
      %v1262 = vsel %vm365, %v1220, 0
      %v1265 = vsel %vm365, %v1221, 0
      %v1268 = vsel %vm365, %v1222, 0
      %v1271 = vsel %vm365, %v1223, 0
      %v1274 = vsel %vm365, %v1224, 0
      %v1277 = vsel %vm365, %v1225, 0
      %v1280 = vsel %vm365, %v1226, 0
      %v1283 = vsel %vm365, %v1227, 0
      %v1286 = vsel %vm365, %v1228, 0
      %v1289 = vsel %vm365, %v1229, 0
      %v1292 = vsel %vm365, %v1230, 0
      %v1295 = vsel %vm365, %v1231, 0
      %v1298 = vsel %vm365, %v1232, 0
      %v1301 = vsel %vm365, %v1233, 0
      %v1304 = vsel %vm365, %v1234, 0
      %v1307 = vsel %vm365, %v1235, 0
      %v1310 = vsel %vm365, %v1236, 0
      %v1313 = vsel %vm365, %v1237, 0
      %v1316 = vsel %vm365, %v1238, 0
      %v1319 = vsel %vm365, %v1239, 0
      %v1322 = vsel %vm365, %v1240, 0
      %v1325 = vsel %vm365, %v1241, 0
      %v1328 = vsel %vm365, %v1242, 0
      %v1331 = vsel %vm365, %v1243, 0
      %v1334 = vsel %vm365, %v1244, 0
      %v1337 = vsel %vm365, %v1245, 0
      %v1340 = vsel %vm365, %v1246, 0
      %v1343 = vsel %vm365, %v1247, 0
      %v1346 = vsel %vm365, %v1248, 0
      %1348 = vmatpush.msra.mxu0 0.0
      %1349 = vmatpush.msra.mxu0 0.0
      %1350 = vmatpush.msra.mxu0 0.0
      %1351 = vmatpush.msra.mxu0 0.0
      %1352 = vmatpush.msra.mxu0 0.0
      %1353 = vmatpush.msra.mxu0 0.0
      %1354 = vmatpush.msra.mxu0 0.0
      %1355 = vmatpush.msra.mxu0 0.0
      %1356 = vmatpush.msra.mxu0 0.0
      %1357 = vmatpush.msra.mxu0 0.0
      %1358 = vmatpush.msra.mxu0 0.0
      %1359 = vmatpush.msra.mxu0 0.0
      %1360 = vmatpush.msra.mxu0 0.0
      %1361 = vmatpush.msra.mxu0 0.0
      %1362 = vmatpush.msra.mxu0 %v1251
      %1363 = vmatpush.msra.mxu0 %v1250
      %1364 = vmatmul.f32.gmra.mxu0 %v1253
      %v1365 = vpop.f32.mrf.mxu0
      %v1366 = vadd.f32 0.0, %v1365
      %1367 = vmatmul.f32.gmra.mxu0 %v1256
      %v1368 = vpop.f32.mrf.mxu0
      %v1369 = vadd.f32 0.0, %v1368
      %1370 = vmatmul.f32.gmra.mxu0 %v1259
      %v1371 = vpop.f32.mrf.mxu0
      %v1372 = vadd.f32 0.0, %v1371
      %1373 = vmatmul.f32.gmra.mxu0 %v1262
      %v1374 = vpop.f32.mrf.mxu0
      %v1375 = vadd.f32 0.0, %v1374
      %1376 = vmatmul.f32.gmra.mxu0 %v1265
      %v1377 = vpop.f32.mrf.mxu0
      %v1378 = vadd.f32 0.0, %v1377
      %1379 = vmatmul.f32.gmra.mxu0 %v1268
      %v1380 = vpop.f32.mrf.mxu0
      %v1381 = vadd.f32 0.0, %v1380
      %1382 = vmatmul.f32.gmra.mxu0 %v1271
      %v1383 = vpop.f32.mrf.mxu0
      %v1384 = vadd.f32 0.0, %v1383
      %1385 = vmatmul.f32.gmra.mxu0 %v1274
      %v1386 = vpop.f32.mrf.mxu0
      %v1387 = vadd.f32 0.0, %v1386
      %1388 = vmatmul.f32.gmra.mxu0 %v1277
      %v1389 = vpop.f32.mrf.mxu0
      %v1390 = vadd.f32 0.0, %v1389
      %1391 = vmatmul.f32.gmra.mxu0 %v1280
      %v1392 = vpop.f32.mrf.mxu0
      %v1393 = vadd.f32 0.0, %v1392
      %1394 = vmatmul.f32.gmra.mxu0 %v1283
      %v1395 = vpop.f32.mrf.mxu0
      %v1396 = vadd.f32 0.0, %v1395
      %1397 = vmatmul.f32.gmra.mxu0 %v1286
      %v1398 = vpop.f32.mrf.mxu0
      %v1399 = vadd.f32 0.0, %v1398
      %1400 = vmatmul.f32.gmra.mxu0 %v1289
      %v1401 = vpop.f32.mrf.mxu0
      %v1402 = vadd.f32 0.0, %v1401
      %1403 = vmatmul.f32.gmra.mxu0 %v1292
      %v1404 = vpop.f32.mrf.mxu0
      %v1405 = vadd.f32 0.0, %v1404
      %1406 = vmatmul.f32.gmra.mxu0 %v1295
      %v1407 = vpop.f32.mrf.mxu0
      %v1408 = vadd.f32 0.0, %v1407
      %1409 = vmatmul.f32.gmra.mxu0 %v1298
      %v1410 = vpop.f32.mrf.mxu0
      %v1411 = vadd.f32 0.0, %v1410
      %1412 = vmatmul.f32.gmra.mxu0 %v1301
      %v1413 = vpop.f32.mrf.mxu0
      %v1414 = vadd.f32 0.0, %v1413
      %1415 = vmatmul.f32.gmra.mxu0 %v1304
      %v1416 = vpop.f32.mrf.mxu0
      %v1417 = vadd.f32 0.0, %v1416
      %1418 = vmatmul.f32.gmra.mxu0 %v1307
      %v1419 = vpop.f32.mrf.mxu0
      %v1420 = vadd.f32 0.0, %v1419
      %1421 = vmatmul.f32.gmra.mxu0 %v1310
      %v1422 = vpop.f32.mrf.mxu0
      %v1423 = vadd.f32 0.0, %v1422
      %1424 = vmatmul.f32.gmra.mxu0 %v1313
      %v1425 = vpop.f32.mrf.mxu0
      %v1426 = vadd.f32 0.0, %v1425
      %1427 = vmatmul.f32.gmra.mxu0 %v1316
      %v1428 = vpop.f32.mrf.mxu0
      %v1429 = vadd.f32 0.0, %v1428
      %1430 = vmatmul.f32.gmra.mxu0 %v1319
      %v1431 = vpop.f32.mrf.mxu0
      %v1432 = vadd.f32 0.0, %v1431
      %1433 = vmatmul.f32.gmra.mxu0 %v1322
      %v1434 = vpop.f32.mrf.mxu0
      %v1435 = vadd.f32 0.0, %v1434
      %1436 = vmatmul.f32.gmra.mxu0 %v1325
      %v1437 = vpop.f32.mrf.mxu0
      %v1438 = vadd.f32 0.0, %v1437
      %1439 = vmatmul.f32.gmra.mxu0 %v1328
      %v1440 = vpop.f32.mrf.mxu0
      %v1441 = vadd.f32 0.0, %v1440
      %1442 = vmatmul.f32.gmra.mxu0 %v1331
      %v1443 = vpop.f32.mrf.mxu0
      %v1444 = vadd.f32 0.0, %v1443
      %1445 = vmatmul.f32.gmra.mxu0 %v1334
      %v1446 = vpop.f32.mrf.mxu0
      %v1447 = vadd.f32 0.0, %v1446
      %1448 = vmatmul.f32.gmra.mxu0 %v1337
      %v1449 = vpop.f32.mrf.mxu0
      %v1450 = vadd.f32 0.0, %v1449
      %1451 = vmatmul.f32.gmra.mxu0 %v1340
      %v1452 = vpop.f32.mrf.mxu0
      %v1453 = vadd.f32 0.0, %v1452
      %1454 = vmatmul.f32.gmra.mxu0 %v1343
      %v1455 = vpop.f32.mrf.mxu0
      %v1456 = vadd.f32 0.0, %v1455
      %1457 = vmatmul.f32.gmra.mxu0 %v1346
      %v1458 = vpop.f32.mrf.mxu0
      %v1459 = vadd.f32 0.0, %v1458
      %1460 = vdwg.mxu0
      %v1461 = vadd.f32 %v1185, %v1366
      %v1462 = vadd.f32 %v1186, %v1369
      %v1463 = vadd.f32 %v1187, %v1372
      %v1464 = vadd.f32 %v1188, %v1375
      %v1465 = vadd.f32 %v1189, %v1378
      %v1466 = vadd.f32 %v1190, %v1381
      %v1467 = vadd.f32 %v1191, %v1384
      %v1468 = vadd.f32 %v1192, %v1387
      %v1469 = vadd.f32 %v1193, %v1390
      %v1470 = vadd.f32 %v1194, %v1393
      %v1471 = vadd.f32 %v1195, %v1396
      %v1472 = vadd.f32 %v1196, %v1399
      %v1473 = vadd.f32 %v1197, %v1402
      %v1474 = vadd.f32 %v1198, %v1405
      %v1475 = vadd.f32 %v1199, %v1408
      %v1476 = vadd.f32 %v1200, %v1411
      %v1477 = vadd.f32 %v1201, %v1414
      %v1478 = vadd.f32 %v1202, %v1417
      %v1479 = vadd.f32 %v1203, %v1420
      %v1480 = vadd.f32 %v1204, %v1423
      %v1481 = vadd.f32 %v1205, %v1426
      %v1482 = vadd.f32 %v1206, %v1429
      %v1483 = vadd.f32 %v1207, %v1432
      %v1484 = vadd.f32 %v1208, %v1435
      %v1485 = vadd.f32 %v1209, %v1438
      %v1486 = vadd.f32 %v1210, %v1441
      %v1487 = vadd.f32 %v1211, %v1444
      %v1488 = vadd.f32 %v1212, %v1447
      %v1489 = vadd.f32 %v1213, %v1450
      %v1490 = vadd.f32 %v1214, %v1453
      %v1491 = vadd.f32 %v1215, %v1456
      %v1492 = vadd.f32 %v1216, %v1459
      %v1493 = vld [vmem:[%s421 + $0x1] sm:$0xff]
      %v1494 = vld [vmem:[%s421 + $0x9] sm:$0xff]
      %v1495 = vld [vmem:[%s421 + $0x19] sm:$0xff]
      %v1496 = vld [vmem:[%s421 + $0x21] sm:$0xff]
      %v1497 = vld [vmem:[%s421 + $0x31] sm:$0xff]
      %v1498 = vld [vmem:[%s421 + $0x39] sm:$0xff]
      %v1499 = vld [vmem:[%s421 + $0x49] sm:$0xff]
      %v1500 = vld [vmem:[%s421 + $0x51] sm:$0xff]
      %v1501 = vld [vmem:[%s421 + $0x61] sm:$0xff]
      %v1502 = vld [vmem:[%s421 + $0x69] sm:$0xff]
      %v1503 = vld [vmem:[%s421 + $0x79] sm:$0xff]
      %v1504 = vld [vmem:[%s421 + $0x81] sm:$0xff]
      %v1505 = vld [vmem:[%s421 + $0x91] sm:$0xff]
      %v1506 = vld [vmem:[%s421 + $0x99] sm:$0xff]
      %v1507 = vld [vmem:[%s421 + $0xa9] sm:$0xff]
      %v1508 = vld [vmem:[%s421 + $0xb1] sm:$0xff]
      %v1509 = vld [vmem:[%s421 + $0xc1] sm:$0xff]
      %v1510 = vld [vmem:[%s421 + $0xc9] sm:$0xff]
      %v1511 = vld [vmem:[%s421 + $0xd9] sm:$0xff]
      %v1512 = vld [vmem:[%s421 + $0xe1] sm:$0xff]
      %v1513 = vld [vmem:[%s421 + $0xf1] sm:$0xff]
      %v1514 = vld [vmem:[%s421 + $0xf9] sm:$0xff]
      %v1515 = vld [vmem:[%s421 + $0x109] sm:$0xff]
      %v1516 = vld [vmem:[%s421 + $0x111] sm:$0xff]
      %v1517 = vld [vmem:[%s421 + $0x121] sm:$0xff]
      %v1518 = vld [vmem:[%s421 + $0x129] sm:$0xff]
      %v1519 = vld [vmem:[%s421 + $0x139] sm:$0xff]
      %v1520 = vld [vmem:[%s421 + $0x141] sm:$0xff]
      %v1521 = vld [vmem:[%s421 + $0x151] sm:$0xff]
      %v1522 = vld [vmem:[%s421 + $0x159] sm:$0xff]
      %v1523 = vld [vmem:[%s421 + $0x169] sm:$0xff]
      %v1524 = vld [vmem:[%s421 + $0x171] sm:$0xff]
      %s1525 = scalar_lea.vmem %s1, 64
      %v1526 = vld [vmem:[%s1525] sm:$0xff]
      %v1527 = vld [vmem:[%s1525 + $0x8] sm:$0xff]
      %v1529 = vsel %vm365, %v1493, 0
      %v1532 = vsel %vm365, %v1494, 0
      %v1535 = vsel %vm365, %v1495, 0
      %v1538 = vsel %vm365, %v1496, 0
      %v1541 = vsel %vm365, %v1497, 0
      %v1544 = vsel %vm365, %v1498, 0
      %v1547 = vsel %vm365, %v1499, 0
      %v1550 = vsel %vm365, %v1500, 0
      %v1553 = vsel %vm365, %v1501, 0
      %v1556 = vsel %vm365, %v1502, 0
      %v1559 = vsel %vm365, %v1503, 0
      %v1562 = vsel %vm365, %v1504, 0
      %v1565 = vsel %vm365, %v1505, 0
      %v1568 = vsel %vm365, %v1506, 0
      %v1571 = vsel %vm365, %v1507, 0
      %v1574 = vsel %vm365, %v1508, 0
      %v1577 = vsel %vm365, %v1509, 0
      %v1580 = vsel %vm365, %v1510, 0
      %v1583 = vsel %vm365, %v1511, 0
      %v1586 = vsel %vm365, %v1512, 0
      %v1589 = vsel %vm365, %v1513, 0
      %v1592 = vsel %vm365, %v1514, 0
      %v1595 = vsel %vm365, %v1515, 0
      %v1598 = vsel %vm365, %v1516, 0
      %v1601 = vsel %vm365, %v1517, 0
      %v1604 = vsel %vm365, %v1518, 0
      %v1607 = vsel %vm365, %v1519, 0
      %v1610 = vsel %vm365, %v1520, 0
      %v1613 = vsel %vm365, %v1521, 0
      %v1616 = vsel %vm365, %v1522, 0
      %v1619 = vsel %vm365, %v1523, 0
      %v1622 = vsel %vm365, %v1524, 0
      %1624 = vmatpush.msra.mxu0 0.0
      %1625 = vmatpush.msra.mxu0 0.0
      %1626 = vmatpush.msra.mxu0 0.0
      %1627 = vmatpush.msra.mxu0 0.0
      %1628 = vmatpush.msra.mxu0 0.0
      %1629 = vmatpush.msra.mxu0 0.0
      %1630 = vmatpush.msra.mxu0 0.0
      %1631 = vmatpush.msra.mxu0 0.0
      %1632 = vmatpush.msra.mxu0 0.0
      %1633 = vmatpush.msra.mxu0 0.0
      %1634 = vmatpush.msra.mxu0 0.0
      %1635 = vmatpush.msra.mxu0 0.0
      %1636 = vmatpush.msra.mxu0 0.0
      %1637 = vmatpush.msra.mxu0 0.0
      %1638 = vmatpush.msra.mxu0 %v1527
      %1639 = vmatpush.msra.mxu0 %v1526
      %1640 = vmatmul.f32.gmra.mxu0 %v1529
      %v1641 = vpop.f32.mrf.mxu0
      %v1642 = vadd.f32 0.0, %v1641
      %1643 = vmatmul.f32.gmra.mxu0 %v1532
      %v1644 = vpop.f32.mrf.mxu0
      %v1645 = vadd.f32 0.0, %v1644
      %1646 = vmatmul.f32.gmra.mxu0 %v1535
      %v1647 = vpop.f32.mrf.mxu0
      %v1648 = vadd.f32 0.0, %v1647
      %1649 = vmatmul.f32.gmra.mxu0 %v1538
      %v1650 = vpop.f32.mrf.mxu0
      %v1651 = vadd.f32 0.0, %v1650
      %1652 = vmatmul.f32.gmra.mxu0 %v1541
      %v1653 = vpop.f32.mrf.mxu0
      %v1654 = vadd.f32 0.0, %v1653
      %1655 = vmatmul.f32.gmra.mxu0 %v1544
      %v1656 = vpop.f32.mrf.mxu0
      %v1657 = vadd.f32 0.0, %v1656
      %1658 = vmatmul.f32.gmra.mxu0 %v1547
      %v1659 = vpop.f32.mrf.mxu0
      %v1660 = vadd.f32 0.0, %v1659
      %1661 = vmatmul.f32.gmra.mxu0 %v1550
      %v1662 = vpop.f32.mrf.mxu0
      %v1663 = vadd.f32 0.0, %v1662
      %1664 = vmatmul.f32.gmra.mxu0 %v1553
      %v1665 = vpop.f32.mrf.mxu0
      %v1666 = vadd.f32 0.0, %v1665
      %1667 = vmatmul.f32.gmra.mxu0 %v1556
      %v1668 = vpop.f32.mrf.mxu0
      %v1669 = vadd.f32 0.0, %v1668
      %1670 = vmatmul.f32.gmra.mxu0 %v1559
      %v1671 = vpop.f32.mrf.mxu0
      %v1672 = vadd.f32 0.0, %v1671
      %1673 = vmatmul.f32.gmra.mxu0 %v1562
      %v1674 = vpop.f32.mrf.mxu0
      %v1675 = vadd.f32 0.0, %v1674
      %1676 = vmatmul.f32.gmra.mxu0 %v1565
      %v1677 = vpop.f32.mrf.mxu0
      %v1678 = vadd.f32 0.0, %v1677
      %1679 = vmatmul.f32.gmra.mxu0 %v1568
      %v1680 = vpop.f32.mrf.mxu0
      %v1681 = vadd.f32 0.0, %v1680
      %1682 = vmatmul.f32.gmra.mxu0 %v1571
      %v1683 = vpop.f32.mrf.mxu0
      %v1684 = vadd.f32 0.0, %v1683
      %1685 = vmatmul.f32.gmra.mxu0 %v1574
      %v1686 = vpop.f32.mrf.mxu0
      %v1687 = vadd.f32 0.0, %v1686
      %1688 = vmatmul.f32.gmra.mxu0 %v1577
      %v1689 = vpop.f32.mrf.mxu0
      %v1690 = vadd.f32 0.0, %v1689
      %1691 = vmatmul.f32.gmra.mxu0 %v1580
      %v1692 = vpop.f32.mrf.mxu0
      %v1693 = vadd.f32 0.0, %v1692
      %1694 = vmatmul.f32.gmra.mxu0 %v1583
      %v1695 = vpop.f32.mrf.mxu0
      %v1696 = vadd.f32 0.0, %v1695
      %1697 = vmatmul.f32.gmra.mxu0 %v1586
      %v1698 = vpop.f32.mrf.mxu0
      %v1699 = vadd.f32 0.0, %v1698
      %1700 = vmatmul.f32.gmra.mxu0 %v1589
      %v1701 = vpop.f32.mrf.mxu0
      %v1702 = vadd.f32 0.0, %v1701
      %1703 = vmatmul.f32.gmra.mxu0 %v1592
      %v1704 = vpop.f32.mrf.mxu0
      %v1705 = vadd.f32 0.0, %v1704
      %1706 = vmatmul.f32.gmra.mxu0 %v1595
      %v1707 = vpop.f32.mrf.mxu0
      %v1708 = vadd.f32 0.0, %v1707
      %1709 = vmatmul.f32.gmra.mxu0 %v1598
      %v1710 = vpop.f32.mrf.mxu0
      %v1711 = vadd.f32 0.0, %v1710
      %1712 = vmatmul.f32.gmra.mxu0 %v1601
      %v1713 = vpop.f32.mrf.mxu0
      %v1714 = vadd.f32 0.0, %v1713
      %1715 = vmatmul.f32.gmra.mxu0 %v1604
      %v1716 = vpop.f32.mrf.mxu0
      %v1717 = vadd.f32 0.0, %v1716
      %1718 = vmatmul.f32.gmra.mxu0 %v1607
      %v1719 = vpop.f32.mrf.mxu0
      %v1720 = vadd.f32 0.0, %v1719
      %1721 = vmatmul.f32.gmra.mxu0 %v1610
      %v1722 = vpop.f32.mrf.mxu0
      %v1723 = vadd.f32 0.0, %v1722
      %1724 = vmatmul.f32.gmra.mxu0 %v1613
      %v1725 = vpop.f32.mrf.mxu0
      %v1726 = vadd.f32 0.0, %v1725
      %1727 = vmatmul.f32.gmra.mxu0 %v1616
      %v1728 = vpop.f32.mrf.mxu0
      %v1729 = vadd.f32 0.0, %v1728
      %1730 = vmatmul.f32.gmra.mxu0 %v1619
      %v1731 = vpop.f32.mrf.mxu0
      %v1732 = vadd.f32 0.0, %v1731
      %1733 = vmatmul.f32.gmra.mxu0 %v1622
      %v1734 = vpop.f32.mrf.mxu0
      %v1735 = vadd.f32 0.0, %v1734
      %1736 = vdwg.mxu0
      %v1737 = vadd.f32 %v1461, %v1642
      %v1738 = vadd.f32 %v1462, %v1645
      %v1739 = vadd.f32 %v1463, %v1648
      %v1740 = vadd.f32 %v1464, %v1651
      %v1741 = vadd.f32 %v1465, %v1654
      %v1742 = vadd.f32 %v1466, %v1657
      %v1743 = vadd.f32 %v1467, %v1660
      %v1744 = vadd.f32 %v1468, %v1663
      %v1745 = vadd.f32 %v1469, %v1666
      %v1746 = vadd.f32 %v1470, %v1669
      %v1747 = vadd.f32 %v1471, %v1672
      %v1748 = vadd.f32 %v1472, %v1675
      %v1749 = vadd.f32 %v1473, %v1678
      %v1750 = vadd.f32 %v1474, %v1681
      %v1751 = vadd.f32 %v1475, %v1684
      %v1752 = vadd.f32 %v1476, %v1687
      %v1753 = vadd.f32 %v1477, %v1690
      %v1754 = vadd.f32 %v1478, %v1693
      %v1755 = vadd.f32 %v1479, %v1696
      %v1756 = vadd.f32 %v1480, %v1699
      %v1757 = vadd.f32 %v1481, %v1702
      %v1758 = vadd.f32 %v1482, %v1705
      %v1759 = vadd.f32 %v1483, %v1708
      %v1760 = vadd.f32 %v1484, %v1711
      %v1761 = vadd.f32 %v1485, %v1714
      %v1762 = vadd.f32 %v1486, %v1717
      %v1763 = vadd.f32 %v1487, %v1720
      %v1764 = vadd.f32 %v1488, %v1723
      %v1765 = vadd.f32 %v1489, %v1726
      %v1766 = vadd.f32 %v1490, %v1729
      %v1767 = vadd.f32 %v1491, %v1732
      %v1768 = vadd.f32 %v1492, %v1735
      %v1769 = vld [vmem:[%s421 + $0x2] sm:$0xff]
      %v1770 = vld [vmem:[%s421 + $0xa] sm:$0xff]
      %v1771 = vld [vmem:[%s421 + $0x1a] sm:$0xff]
      %v1772 = vld [vmem:[%s421 + $0x22] sm:$0xff]
      %v1773 = vld [vmem:[%s421 + $0x32] sm:$0xff]
      %v1774 = vld [vmem:[%s421 + $0x3a] sm:$0xff]
      %v1775 = vld [vmem:[%s421 + $0x4a] sm:$0xff]
      %v1776 = vld [vmem:[%s421 + $0x52] sm:$0xff]
      %v1777 = vld [vmem:[%s421 + $0x62] sm:$0xff]
      %v1778 = vld [vmem:[%s421 + $0x6a] sm:$0xff]
      %v1779 = vld [vmem:[%s421 + $0x7a] sm:$0xff]
      %v1780 = vld [vmem:[%s421 + $0x82] sm:$0xff]
      %v1781 = vld [vmem:[%s421 + $0x92] sm:$0xff]
      %v1782 = vld [vmem:[%s421 + $0x9a] sm:$0xff]
      %v1783 = vld [vmem:[%s421 + $0xaa] sm:$0xff]
      %v1784 = vld [vmem:[%s421 + $0xb2] sm:$0xff]
      %v1785 = vld [vmem:[%s421 + $0xc2] sm:$0xff]
      %v1786 = vld [vmem:[%s421 + $0xca] sm:$0xff]
      %v1787 = vld [vmem:[%s421 + $0xda] sm:$0xff]
      %v1788 = vld [vmem:[%s421 + $0xe2] sm:$0xff]
      %v1789 = vld [vmem:[%s421 + $0xf2] sm:$0xff]
      %v1790 = vld [vmem:[%s421 + $0xfa] sm:$0xff]
      %v1791 = vld [vmem:[%s421 + $0x10a] sm:$0xff]
      %v1792 = vld [vmem:[%s421 + $0x112] sm:$0xff]
      %v1793 = vld [vmem:[%s421 + $0x122] sm:$0xff]
      %v1794 = vld [vmem:[%s421 + $0x12a] sm:$0xff]
      %v1795 = vld [vmem:[%s421 + $0x13a] sm:$0xff]
      %v1796 = vld [vmem:[%s421 + $0x142] sm:$0xff]
      %v1797 = vld [vmem:[%s421 + $0x152] sm:$0xff]
      %v1798 = vld [vmem:[%s421 + $0x15a] sm:$0xff]
      %v1799 = vld [vmem:[%s421 + $0x16a] sm:$0xff]
      %v1800 = vld [vmem:[%s421 + $0x172] sm:$0xff]
      %s1801 = scalar_lea.vmem %s1, 80
      %v1802 = vld [vmem:[%s1801] sm:$0xff]
      %v1803 = vld [vmem:[%s1801 + $0x8] sm:$0xff]
      %v1805 = vsel %vm365, %v1769, 0
      %v1808 = vsel %vm365, %v1770, 0
      %v1811 = vsel %vm365, %v1771, 0
      %v1814 = vsel %vm365, %v1772, 0
      %v1817 = vsel %vm365, %v1773, 0
      %v1820 = vsel %vm365, %v1774, 0
      %v1823 = vsel %vm365, %v1775, 0
      %v1826 = vsel %vm365, %v1776, 0
      %v1829 = vsel %vm365, %v1777, 0
      %v1832 = vsel %vm365, %v1778, 0
      %v1835 = vsel %vm365, %v1779, 0
      %v1838 = vsel %vm365, %v1780, 0
      %v1841 = vsel %vm365, %v1781, 0
      %v1844 = vsel %vm365, %v1782, 0
      %v1847 = vsel %vm365, %v1783, 0
      %v1850 = vsel %vm365, %v1784, 0
      %v1853 = vsel %vm365, %v1785, 0
      %v1856 = vsel %vm365, %v1786, 0
      %v1859 = vsel %vm365, %v1787, 0
      %v1862 = vsel %vm365, %v1788, 0
      %v1865 = vsel %vm365, %v1789, 0
      %v1868 = vsel %vm365, %v1790, 0
      %v1871 = vsel %vm365, %v1791, 0
      %v1874 = vsel %vm365, %v1792, 0
      %v1877 = vsel %vm365, %v1793, 0
      %v1880 = vsel %vm365, %v1794, 0
      %v1883 = vsel %vm365, %v1795, 0
      %v1886 = vsel %vm365, %v1796, 0
      %v1889 = vsel %vm365, %v1797, 0
      %v1892 = vsel %vm365, %v1798, 0
      %v1895 = vsel %vm365, %v1799, 0
      %v1898 = vsel %vm365, %v1800, 0
      %1900 = vmatpush.msra.mxu0 0.0
      %1901 = vmatpush.msra.mxu0 0.0
      %1902 = vmatpush.msra.mxu0 0.0
      %1903 = vmatpush.msra.mxu0 0.0
      %1904 = vmatpush.msra.mxu0 0.0
      %1905 = vmatpush.msra.mxu0 0.0
      %1906 = vmatpush.msra.mxu0 0.0
      %1907 = vmatpush.msra.mxu0 0.0
      %1908 = vmatpush.msra.mxu0 0.0
      %1909 = vmatpush.msra.mxu0 0.0
      %1910 = vmatpush.msra.mxu0 0.0
      %1911 = vmatpush.msra.mxu0 0.0
      %1912 = vmatpush.msra.mxu0 0.0
      %1913 = vmatpush.msra.mxu0 0.0
      %1914 = vmatpush.msra.mxu0 %v1803
      %1915 = vmatpush.msra.mxu0 %v1802
      %1916 = vmatmul.f32.gmra.mxu0 %v1805
      %v1917 = vpop.f32.mrf.mxu0
      %v1918 = vadd.f32 0.0, %v1917
      %1919 = vmatmul.f32.gmra.mxu0 %v1808
      %v1920 = vpop.f32.mrf.mxu0
      %v1921 = vadd.f32 0.0, %v1920
      %1922 = vmatmul.f32.gmra.mxu0 %v1811
      %v1923 = vpop.f32.mrf.mxu0
      %v1924 = vadd.f32 0.0, %v1923
      %1925 = vmatmul.f32.gmra.mxu0 %v1814
      %v1926 = vpop.f32.mrf.mxu0
      %v1927 = vadd.f32 0.0, %v1926
      %1928 = vmatmul.f32.gmra.mxu0 %v1817
      %v1929 = vpop.f32.mrf.mxu0
      %v1930 = vadd.f32 0.0, %v1929
      %1931 = vmatmul.f32.gmra.mxu0 %v1820
      %v1932 = vpop.f32.mrf.mxu0
      %v1933 = vadd.f32 0.0, %v1932
      %1934 = vmatmul.f32.gmra.mxu0 %v1823
      %v1935 = vpop.f32.mrf.mxu0
      %v1936 = vadd.f32 0.0, %v1935
      %1937 = vmatmul.f32.gmra.mxu0 %v1826
      %v1938 = vpop.f32.mrf.mxu0
      %v1939 = vadd.f32 0.0, %v1938
      %1940 = vmatmul.f32.gmra.mxu0 %v1829
      %v1941 = vpop.f32.mrf.mxu0
      %v1942 = vadd.f32 0.0, %v1941
      %1943 = vmatmul.f32.gmra.mxu0 %v1832
      %v1944 = vpop.f32.mrf.mxu0
      %v1945 = vadd.f32 0.0, %v1944
      %1946 = vmatmul.f32.gmra.mxu0 %v1835
      %v1947 = vpop.f32.mrf.mxu0
      %v1948 = vadd.f32 0.0, %v1947
      %1949 = vmatmul.f32.gmra.mxu0 %v1838
      %v1950 = vpop.f32.mrf.mxu0
      %v1951 = vadd.f32 0.0, %v1950
      %1952 = vmatmul.f32.gmra.mxu0 %v1841
      %v1953 = vpop.f32.mrf.mxu0
      %v1954 = vadd.f32 0.0, %v1953
      %1955 = vmatmul.f32.gmra.mxu0 %v1844
      %v1956 = vpop.f32.mrf.mxu0
      %v1957 = vadd.f32 0.0, %v1956
      %1958 = vmatmul.f32.gmra.mxu0 %v1847
      %v1959 = vpop.f32.mrf.mxu0
      %v1960 = vadd.f32 0.0, %v1959
      %1961 = vmatmul.f32.gmra.mxu0 %v1850
      %v1962 = vpop.f32.mrf.mxu0
      %v1963 = vadd.f32 0.0, %v1962
      %1964 = vmatmul.f32.gmra.mxu0 %v1853
      %v1965 = vpop.f32.mrf.mxu0
      %v1966 = vadd.f32 0.0, %v1965
      %1967 = vmatmul.f32.gmra.mxu0 %v1856
      %v1968 = vpop.f32.mrf.mxu0
      %v1969 = vadd.f32 0.0, %v1968
      %1970 = vmatmul.f32.gmra.mxu0 %v1859
      %v1971 = vpop.f32.mrf.mxu0
      %v1972 = vadd.f32 0.0, %v1971
      %1973 = vmatmul.f32.gmra.mxu0 %v1862
      %v1974 = vpop.f32.mrf.mxu0
      %v1975 = vadd.f32 0.0, %v1974
      %1976 = vmatmul.f32.gmra.mxu0 %v1865
      %v1977 = vpop.f32.mrf.mxu0
      %v1978 = vadd.f32 0.0, %v1977
      %1979 = vmatmul.f32.gmra.mxu0 %v1868
      %v1980 = vpop.f32.mrf.mxu0
      %v1981 = vadd.f32 0.0, %v1980
      %1982 = vmatmul.f32.gmra.mxu0 %v1871
      %v1983 = vpop.f32.mrf.mxu0
      %v1984 = vadd.f32 0.0, %v1983
      %1985 = vmatmul.f32.gmra.mxu0 %v1874
      %v1986 = vpop.f32.mrf.mxu0
      %v1987 = vadd.f32 0.0, %v1986
      %1988 = vmatmul.f32.gmra.mxu0 %v1877
      %v1989 = vpop.f32.mrf.mxu0
      %v1990 = vadd.f32 0.0, %v1989
      %1991 = vmatmul.f32.gmra.mxu0 %v1880
      %v1992 = vpop.f32.mrf.mxu0
      %v1993 = vadd.f32 0.0, %v1992
      %1994 = vmatmul.f32.gmra.mxu0 %v1883
      %v1995 = vpop.f32.mrf.mxu0
      %v1996 = vadd.f32 0.0, %v1995
      %1997 = vmatmul.f32.gmra.mxu0 %v1886
      %v1998 = vpop.f32.mrf.mxu0
      %v1999 = vadd.f32 0.0, %v1998
      %2000 = vmatmul.f32.gmra.mxu0 %v1889
      %v2001 = vpop.f32.mrf.mxu0
      %v2002 = vadd.f32 0.0, %v2001
      %2003 = vmatmul.f32.gmra.mxu0 %v1892
      %v2004 = vpop.f32.mrf.mxu0
      %v2005 = vadd.f32 0.0, %v2004
      %2006 = vmatmul.f32.gmra.mxu0 %v1895
      %v2007 = vpop.f32.mrf.mxu0
      %v2008 = vadd.f32 0.0, %v2007
      %2009 = vmatmul.f32.gmra.mxu0 %v1898
      %v2010 = vpop.f32.mrf.mxu0
      %v2011 = vadd.f32 0.0, %v2010
      %2012 = vdwg.mxu0
      %v2013 = vadd.f32 %v1737, %v1918
      %v2014 = vadd.f32 %v1738, %v1921
      %v2015 = vadd.f32 %v1739, %v1924
      %v2016 = vadd.f32 %v1740, %v1927
      %v2017 = vadd.f32 %v1741, %v1930
      %v2018 = vadd.f32 %v1742, %v1933
      %v2019 = vadd.f32 %v1743, %v1936
      %v2020 = vadd.f32 %v1744, %v1939
      %v2021 = vadd.f32 %v1745, %v1942
      %v2022 = vadd.f32 %v1746, %v1945
      %v2023 = vadd.f32 %v1747, %v1948
      %v2024 = vadd.f32 %v1748, %v1951
      %v2025 = vadd.f32 %v1749, %v1954
      %v2026 = vadd.f32 %v1750, %v1957
      %v2027 = vadd.f32 %v1751, %v1960
      %v2028 = vadd.f32 %v1752, %v1963
      %v2029 = vadd.f32 %v1753, %v1966
      %v2030 = vadd.f32 %v1754, %v1969
      %v2031 = vadd.f32 %v1755, %v1972
      %v2032 = vadd.f32 %v1756, %v1975
      %v2033 = vadd.f32 %v1757, %v1978
      %v2034 = vadd.f32 %v1758, %v1981
      %v2035 = vadd.f32 %v1759, %v1984
      %v2036 = vadd.f32 %v1760, %v1987
      %v2037 = vadd.f32 %v1761, %v1990
      %v2038 = vadd.f32 %v1762, %v1993
      %v2039 = vadd.f32 %v1763, %v1996
      %v2040 = vadd.f32 %v1764, %v1999
      %v2041 = vadd.f32 %v1765, %v2002
      %v2042 = vadd.f32 %v1766, %v2005
      %v2043 = vadd.f32 %v1767, %v2008
      %v2044 = vadd.f32 %v1768, %v2011
      %s2045 = scalar_lea.vmem [#allocation2], 48
      %v2046 = vld [vmem:[%s2045] sm:$0xff]
      %v2047 = vld [vmem:[%s2045 + $0x8] sm:$0xff]
      %v2048 = vld [vmem:[%s2045 + $0x18] sm:$0xff]
      %v2049 = vld [vmem:[%s2045 + $0x20] sm:$0xff]
      %v2050 = vld [vmem:[%s2045 + $0x30] sm:$0xff]
      %v2051 = vld [vmem:[%s2045 + $0x38] sm:$0xff]
      %v2052 = vld [vmem:[%s2045 + $0x48] sm:$0xff]
      %v2053 = vld [vmem:[%s2045 + $0x50] sm:$0xff]
      %v2054 = vld [vmem:[%s2045 + $0x60] sm:$0xff]
      %v2055 = vld [vmem:[%s2045 + $0x68] sm:$0xff]
      %v2056 = vld [vmem:[%s2045 + $0x78] sm:$0xff]
      %v2057 = vld [vmem:[%s2045 + $0x80] sm:$0xff]
      %v2058 = vld [vmem:[%s2045 + $0x90] sm:$0xff]
      %v2059 = vld [vmem:[%s2045 + $0x98] sm:$0xff]
      %v2060 = vld [vmem:[%s2045 + $0xa8] sm:$0xff]
      %v2061 = vld [vmem:[%s2045 + $0xb0] sm:$0xff]
      %v2062 = vld [vmem:[%s2045 + $0xc0] sm:$0xff]
      %v2063 = vld [vmem:[%s2045 + $0xc8] sm:$0xff]
      %v2064 = vld [vmem:[%s2045 + $0xd8] sm:$0xff]
      %v2065 = vld [vmem:[%s2045 + $0xe0] sm:$0xff]
      %v2066 = vld [vmem:[%s2045 + $0xf0] sm:$0xff]
      %v2067 = vld [vmem:[%s2045 + $0xf8] sm:$0xff]
      %v2068 = vld [vmem:[%s2045 + $0x108] sm:$0xff]
      %v2069 = vld [vmem:[%s2045 + $0x110] sm:$0xff]
      %v2070 = vld [vmem:[%s2045 + $0x120] sm:$0xff]
      %v2071 = vld [vmem:[%s2045 + $0x128] sm:$0xff]
      %v2072 = vld [vmem:[%s2045 + $0x138] sm:$0xff]
      %v2073 = vld [vmem:[%s2045 + $0x140] sm:$0xff]
      %v2074 = vld [vmem:[%s2045 + $0x150] sm:$0xff]
      %v2075 = vld [vmem:[%s2045 + $0x158] sm:$0xff]
      %v2076 = vld [vmem:[%s2045 + $0x168] sm:$0xff]
      %v2077 = vld [vmem:[%s2045 + $0x170] sm:$0xff]
      %s2078 = scalar_lea.vmem %s1, 96
      %v2079 = vld [vmem:[%s2078] sm:$0xff]
      %v2080 = vld [vmem:[%s2078 + $0x8] sm:$0xff]
      %v2082 = vsel %vm365, %v2046, 0
      %v2085 = vsel %vm365, %v2047, 0
      %v2088 = vsel %vm365, %v2048, 0
      %v2091 = vsel %vm365, %v2049, 0
      %v2094 = vsel %vm365, %v2050, 0
      %v2097 = vsel %vm365, %v2051, 0
      %v2100 = vsel %vm365, %v2052, 0
      %v2103 = vsel %vm365, %v2053, 0
      %v2106 = vsel %vm365, %v2054, 0
      %v2109 = vsel %vm365, %v2055, 0
      %v2112 = vsel %vm365, %v2056, 0
      %v2115 = vsel %vm365, %v2057, 0
      %v2118 = vsel %vm365, %v2058, 0
      %v2121 = vsel %vm365, %v2059, 0
      %v2124 = vsel %vm365, %v2060, 0
      %v2127 = vsel %vm365, %v2061, 0
      %v2130 = vsel %vm365, %v2062, 0
      %v2133 = vsel %vm365, %v2063, 0
      %v2136 = vsel %vm365, %v2064, 0
      %v2139 = vsel %vm365, %v2065, 0
      %v2142 = vsel %vm365, %v2066, 0
      %v2145 = vsel %vm365, %v2067, 0
      %v2148 = vsel %vm365, %v2068, 0
      %v2151 = vsel %vm365, %v2069, 0
      %v2154 = vsel %vm365, %v2070, 0
      %v2157 = vsel %vm365, %v2071, 0
      %v2160 = vsel %vm365, %v2072, 0
      %v2163 = vsel %vm365, %v2073, 0
      %v2166 = vsel %vm365, %v2074, 0
      %v2169 = vsel %vm365, %v2075, 0
      %v2172 = vsel %vm365, %v2076, 0
      %v2175 = vsel %vm365, %v2077, 0
      %2177 = vmatpush.msra.mxu0 0.0
      %2178 = vmatpush.msra.mxu0 0.0
      %2179 = vmatpush.msra.mxu0 0.0
      %2180 = vmatpush.msra.mxu0 0.0
      %2181 = vmatpush.msra.mxu0 0.0
      %2182 = vmatpush.msra.mxu0 0.0
      %2183 = vmatpush.msra.mxu0 0.0
      %2184 = vmatpush.msra.mxu0 0.0
      %2185 = vmatpush.msra.mxu0 0.0
      %2186 = vmatpush.msra.mxu0 0.0
      %2187 = vmatpush.msra.mxu0 0.0
      %2188 = vmatpush.msra.mxu0 0.0
      %2189 = vmatpush.msra.mxu0 0.0
      %2190 = vmatpush.msra.mxu0 0.0
      %2191 = vmatpush.msra.mxu0 %v2080
      %2192 = vmatpush.msra.mxu0 %v2079
      %2193 = vmatmul.f32.gmra.mxu0 %v2082
      %v2194 = vpop.f32.mrf.mxu0
      %v2195 = vadd.f32 0.0, %v2194
      %2196 = vmatmul.f32.gmra.mxu0 %v2085
      %v2197 = vpop.f32.mrf.mxu0
      %v2198 = vadd.f32 0.0, %v2197
      %2199 = vmatmul.f32.gmra.mxu0 %v2088
      %v2200 = vpop.f32.mrf.mxu0
      %v2201 = vadd.f32 0.0, %v2200
      %2202 = vmatmul.f32.gmra.mxu0 %v2091
      %v2203 = vpop.f32.mrf.mxu0
      %v2204 = vadd.f32 0.0, %v2203
      %2205 = vmatmul.f32.gmra.mxu0 %v2094
      %v2206 = vpop.f32.mrf.mxu0
      %v2207 = vadd.f32 0.0, %v2206
      %2208 = vmatmul.f32.gmra.mxu0 %v2097
      %v2209 = vpop.f32.mrf.mxu0
      %v2210 = vadd.f32 0.0, %v2209
      %2211 = vmatmul.f32.gmra.mxu0 %v2100
      %v2212 = vpop.f32.mrf.mxu0
      %v2213 = vadd.f32 0.0, %v2212
      %2214 = vmatmul.f32.gmra.mxu0 %v2103
      %v2215 = vpop.f32.mrf.mxu0
      %v2216 = vadd.f32 0.0, %v2215
      %2217 = vmatmul.f32.gmra.mxu0 %v2106
      %v2218 = vpop.f32.mrf.mxu0
      %v2219 = vadd.f32 0.0, %v2218
      %2220 = vmatmul.f32.gmra.mxu0 %v2109
      %v2221 = vpop.f32.mrf.mxu0
      %v2222 = vadd.f32 0.0, %v2221
      %2223 = vmatmul.f32.gmra.mxu0 %v2112
      %v2224 = vpop.f32.mrf.mxu0
      %v2225 = vadd.f32 0.0, %v2224
      %2226 = vmatmul.f32.gmra.mxu0 %v2115
      %v2227 = vpop.f32.mrf.mxu0
      %v2228 = vadd.f32 0.0, %v2227
      %2229 = vmatmul.f32.gmra.mxu0 %v2118
      %v2230 = vpop.f32.mrf.mxu0
      %v2231 = vadd.f32 0.0, %v2230
      %2232 = vmatmul.f32.gmra.mxu0 %v2121
      %v2233 = vpop.f32.mrf.mxu0
      %v2234 = vadd.f32 0.0, %v2233
      %2235 = vmatmul.f32.gmra.mxu0 %v2124
      %v2236 = vpop.f32.mrf.mxu0
      %v2237 = vadd.f32 0.0, %v2236
      %2238 = vmatmul.f32.gmra.mxu0 %v2127
      %v2239 = vpop.f32.mrf.mxu0
      %v2240 = vadd.f32 0.0, %v2239
      %2241 = vmatmul.f32.gmra.mxu0 %v2130
      %v2242 = vpop.f32.mrf.mxu0
      %v2243 = vadd.f32 0.0, %v2242
      %2244 = vmatmul.f32.gmra.mxu0 %v2133
      %v2245 = vpop.f32.mrf.mxu0
      %v2246 = vadd.f32 0.0, %v2245
      %2247 = vmatmul.f32.gmra.mxu0 %v2136
      %v2248 = vpop.f32.mrf.mxu0
      %v2249 = vadd.f32 0.0, %v2248
      %2250 = vmatmul.f32.gmra.mxu0 %v2139
      %v2251 = vpop.f32.mrf.mxu0
      %v2252 = vadd.f32 0.0, %v2251
      %2253 = vmatmul.f32.gmra.mxu0 %v2142
      %v2254 = vpop.f32.mrf.mxu0
      %v2255 = vadd.f32 0.0, %v2254
      %2256 = vmatmul.f32.gmra.mxu0 %v2145
      %v2257 = vpop.f32.mrf.mxu0
      %v2258 = vadd.f32 0.0, %v2257
      %2259 = vmatmul.f32.gmra.mxu0 %v2148
      %v2260 = vpop.f32.mrf.mxu0
      %v2261 = vadd.f32 0.0, %v2260
      %2262 = vmatmul.f32.gmra.mxu0 %v2151
      %v2263 = vpop.f32.mrf.mxu0
      %v2264 = vadd.f32 0.0, %v2263
      %2265 = vmatmul.f32.gmra.mxu0 %v2154
      %v2266 = vpop.f32.mrf.mxu0
      %v2267 = vadd.f32 0.0, %v2266
      %2268 = vmatmul.f32.gmra.mxu0 %v2157
      %v2269 = vpop.f32.mrf.mxu0
      %v2270 = vadd.f32 0.0, %v2269
      %2271 = vmatmul.f32.gmra.mxu0 %v2160
      %v2272 = vpop.f32.mrf.mxu0
      %v2273 = vadd.f32 0.0, %v2272
      %2274 = vmatmul.f32.gmra.mxu0 %v2163
      %v2275 = vpop.f32.mrf.mxu0
      %v2276 = vadd.f32 0.0, %v2275
      %2277 = vmatmul.f32.gmra.mxu0 %v2166
      %v2278 = vpop.f32.mrf.mxu0
      %v2279 = vadd.f32 0.0, %v2278
      %2280 = vmatmul.f32.gmra.mxu0 %v2169
      %v2281 = vpop.f32.mrf.mxu0
      %v2282 = vadd.f32 0.0, %v2281
      %2283 = vmatmul.f32.gmra.mxu0 %v2172
      %v2284 = vpop.f32.mrf.mxu0
      %v2285 = vadd.f32 0.0, %v2284
      %2286 = vmatmul.f32.gmra.mxu0 %v2175
      %v2287 = vpop.f32.mrf.mxu0
      %v2288 = vadd.f32 0.0, %v2287
      %2289 = vdwg.mxu0
      %v2290 = vadd.f32 %v2013, %v2195
      %v2291 = vadd.f32 %v2014, %v2198
      %v2292 = vadd.f32 %v2015, %v2201
      %v2293 = vadd.f32 %v2016, %v2204
      %v2294 = vadd.f32 %v2017, %v2207
      %v2295 = vadd.f32 %v2018, %v2210
      %v2296 = vadd.f32 %v2019, %v2213
      %v2297 = vadd.f32 %v2020, %v2216
      %v2298 = vadd.f32 %v2021, %v2219
      %v2299 = vadd.f32 %v2022, %v2222
      %v2300 = vadd.f32 %v2023, %v2225
      %v2301 = vadd.f32 %v2024, %v2228
      %v2302 = vadd.f32 %v2025, %v2231
      %v2303 = vadd.f32 %v2026, %v2234
      %v2304 = vadd.f32 %v2027, %v2237
      %v2305 = vadd.f32 %v2028, %v2240
      %v2306 = vadd.f32 %v2029, %v2243
      %v2307 = vadd.f32 %v2030, %v2246
      %v2308 = vadd.f32 %v2031, %v2249
      %v2309 = vadd.f32 %v2032, %v2252
      %v2310 = vadd.f32 %v2033, %v2255
      %v2311 = vadd.f32 %v2034, %v2258
      %v2312 = vadd.f32 %v2035, %v2261
      %v2313 = vadd.f32 %v2036, %v2264
      %v2314 = vadd.f32 %v2037, %v2267
      %v2315 = vadd.f32 %v2038, %v2270
      %v2316 = vadd.f32 %v2039, %v2273
      %v2317 = vadd.f32 %v2040, %v2276
      %v2318 = vadd.f32 %v2041, %v2279
      %v2319 = vadd.f32 %v2042, %v2282
      %v2320 = vadd.f32 %v2043, %v2285
      %v2321 = vadd.f32 %v2044, %v2288
      %v2322 = vld [vmem:[%s2045 + $0x1] sm:$0xff]
      %v2323 = vld [vmem:[%s2045 + $0x9] sm:$0xff]
      %v2324 = vld [vmem:[%s2045 + $0x19] sm:$0xff]
      %v2325 = vld [vmem:[%s2045 + $0x21] sm:$0xff]
      %v2326 = vld [vmem:[%s2045 + $0x31] sm:$0xff]
      %v2327 = vld [vmem:[%s2045 + $0x39] sm:$0xff]
      %v2328 = vld [vmem:[%s2045 + $0x49] sm:$0xff]
      %v2329 = vld [vmem:[%s2045 + $0x51] sm:$0xff]
      %v2330 = vld [vmem:[%s2045 + $0x61] sm:$0xff]
      %v2331 = vld [vmem:[%s2045 + $0x69] sm:$0xff]
      %v2332 = vld [vmem:[%s2045 + $0x79] sm:$0xff]
      %v2333 = vld [vmem:[%s2045 + $0x81] sm:$0xff]
      %v2334 = vld [vmem:[%s2045 + $0x91] sm:$0xff]
      %v2335 = vld [vmem:[%s2045 + $0x99] sm:$0xff]
      %v2336 = vld [vmem:[%s2045 + $0xa9] sm:$0xff]
      %v2337 = vld [vmem:[%s2045 + $0xb1] sm:$0xff]
      %v2338 = vld [vmem:[%s2045 + $0xc1] sm:$0xff]
      %v2339 = vld [vmem:[%s2045 + $0xc9] sm:$0xff]
      %v2340 = vld [vmem:[%s2045 + $0xd9] sm:$0xff]
      %v2341 = vld [vmem:[%s2045 + $0xe1] sm:$0xff]
      %v2342 = vld [vmem:[%s2045 + $0xf1] sm:$0xff]
      %v2343 = vld [vmem:[%s2045 + $0xf9] sm:$0xff]
      %v2344 = vld [vmem:[%s2045 + $0x109] sm:$0xff]
      %v2345 = vld [vmem:[%s2045 + $0x111] sm:$0xff]
      %v2346 = vld [vmem:[%s2045 + $0x121] sm:$0xff]
      %v2347 = vld [vmem:[%s2045 + $0x129] sm:$0xff]
      %v2348 = vld [vmem:[%s2045 + $0x139] sm:$0xff]
      %v2349 = vld [vmem:[%s2045 + $0x141] sm:$0xff]
      %v2350 = vld [vmem:[%s2045 + $0x151] sm:$0xff]
      %v2351 = vld [vmem:[%s2045 + $0x159] sm:$0xff]
      %v2352 = vld [vmem:[%s2045 + $0x169] sm:$0xff]
      %v2353 = vld [vmem:[%s2045 + $0x171] sm:$0xff]
      %s2354 = scalar_lea.vmem %s1, 112
      %v2355 = vld [vmem:[%s2354] sm:$0xff]
      %v2356 = vld [vmem:[%s2354 + $0x8] sm:$0xff]
      %v2358 = vsel %vm365, %v2322, 0
      %v2361 = vsel %vm365, %v2323, 0
      %v2364 = vsel %vm365, %v2324, 0
      %v2367 = vsel %vm365, %v2325, 0
      %v2370 = vsel %vm365, %v2326, 0
      %v2373 = vsel %vm365, %v2327, 0
      %v2376 = vsel %vm365, %v2328, 0
      %v2379 = vsel %vm365, %v2329, 0
      %v2382 = vsel %vm365, %v2330, 0
      %v2385 = vsel %vm365, %v2331, 0
      %v2388 = vsel %vm365, %v2332, 0
      %v2391 = vsel %vm365, %v2333, 0
      %v2394 = vsel %vm365, %v2334, 0
      %v2397 = vsel %vm365, %v2335, 0
      %v2400 = vsel %vm365, %v2336, 0
      %v2403 = vsel %vm365, %v2337, 0
      %v2406 = vsel %vm365, %v2338, 0
      %v2409 = vsel %vm365, %v2339, 0
      %v2412 = vsel %vm365, %v2340, 0
      %v2415 = vsel %vm365, %v2341, 0
      %v2418 = vsel %vm365, %v2342, 0
      %v2421 = vsel %vm365, %v2343, 0
      %v2424 = vsel %vm365, %v2344, 0
      %v2427 = vsel %vm365, %v2345, 0
      %v2430 = vsel %vm365, %v2346, 0
      %v2433 = vsel %vm365, %v2347, 0
      %v2436 = vsel %vm365, %v2348, 0
      %v2439 = vsel %vm365, %v2349, 0
      %v2442 = vsel %vm365, %v2350, 0
      %v2445 = vsel %vm365, %v2351, 0
      %v2448 = vsel %vm365, %v2352, 0
      %v2451 = vsel %vm365, %v2353, 0
      %2453 = vmatpush.msra.mxu0 0.0
      %2454 = vmatpush.msra.mxu0 0.0
      %2455 = vmatpush.msra.mxu0 0.0
      %2456 = vmatpush.msra.mxu0 0.0
      %2457 = vmatpush.msra.mxu0 0.0
      %2458 = vmatpush.msra.mxu0 0.0
      %2459 = vmatpush.msra.mxu0 0.0
      %2460 = vmatpush.msra.mxu0 0.0
      %2461 = vmatpush.msra.mxu0 0.0
      %2462 = vmatpush.msra.mxu0 0.0
      %2463 = vmatpush.msra.mxu0 0.0
      %2464 = vmatpush.msra.mxu0 0.0
      %2465 = vmatpush.msra.mxu0 0.0
      %2466 = vmatpush.msra.mxu0 0.0
      %2467 = vmatpush.msra.mxu0 %v2356
      %2468 = vmatpush.msra.mxu0 %v2355
      %2469 = vmatmul.f32.gmra.mxu0 %v2358
      %v2470 = vpop.f32.mrf.mxu0
      %v2471 = vadd.f32 0.0, %v2470
      %2472 = vmatmul.f32.gmra.mxu0 %v2361
      %v2473 = vpop.f32.mrf.mxu0
      %v2474 = vadd.f32 0.0, %v2473
      %2475 = vmatmul.f32.gmra.mxu0 %v2364
      %v2476 = vpop.f32.mrf.mxu0
      %v2477 = vadd.f32 0.0, %v2476
      %2478 = vmatmul.f32.gmra.mxu0 %v2367
      %v2479 = vpop.f32.mrf.mxu0
      %v2480 = vadd.f32 0.0, %v2479
      %2481 = vmatmul.f32.gmra.mxu0 %v2370
      %v2482 = vpop.f32.mrf.mxu0
      %v2483 = vadd.f32 0.0, %v2482
      %2484 = vmatmul.f32.gmra.mxu0 %v2373
      %v2485 = vpop.f32.mrf.mxu0
      %v2486 = vadd.f32 0.0, %v2485
      %2487 = vmatmul.f32.gmra.mxu0 %v2376
      %v2488 = vpop.f32.mrf.mxu0
      %v2489 = vadd.f32 0.0, %v2488
      %2490 = vmatmul.f32.gmra.mxu0 %v2379
      %v2491 = vpop.f32.mrf.mxu0
      %v2492 = vadd.f32 0.0, %v2491
      %2493 = vmatmul.f32.gmra.mxu0 %v2382
      %v2494 = vpop.f32.mrf.mxu0
      %v2495 = vadd.f32 0.0, %v2494
      %2496 = vmatmul.f32.gmra.mxu0 %v2385
      %v2497 = vpop.f32.mrf.mxu0
      %v2498 = vadd.f32 0.0, %v2497
      %2499 = vmatmul.f32.gmra.mxu0 %v2388
      %v2500 = vpop.f32.mrf.mxu0
      %v2501 = vadd.f32 0.0, %v2500
      %2502 = vmatmul.f32.gmra.mxu0 %v2391
      %v2503 = vpop.f32.mrf.mxu0
      %v2504 = vadd.f32 0.0, %v2503
      %2505 = vmatmul.f32.gmra.mxu0 %v2394
      %v2506 = vpop.f32.mrf.mxu0
      %v2507 = vadd.f32 0.0, %v2506
      %2508 = vmatmul.f32.gmra.mxu0 %v2397
      %v2509 = vpop.f32.mrf.mxu0
      %v2510 = vadd.f32 0.0, %v2509
      %2511 = vmatmul.f32.gmra.mxu0 %v2400
      %v2512 = vpop.f32.mrf.mxu0
      %v2513 = vadd.f32 0.0, %v2512
      %2514 = vmatmul.f32.gmra.mxu0 %v2403
      %v2515 = vpop.f32.mrf.mxu0
      %v2516 = vadd.f32 0.0, %v2515
      %2517 = vmatmul.f32.gmra.mxu0 %v2406
      %v2518 = vpop.f32.mrf.mxu0
      %v2519 = vadd.f32 0.0, %v2518
      %2520 = vmatmul.f32.gmra.mxu0 %v2409
      %v2521 = vpop.f32.mrf.mxu0
      %v2522 = vadd.f32 0.0, %v2521
      %2523 = vmatmul.f32.gmra.mxu0 %v2412
      %v2524 = vpop.f32.mrf.mxu0
      %v2525 = vadd.f32 0.0, %v2524
      %2526 = vmatmul.f32.gmra.mxu0 %v2415
      %v2527 = vpop.f32.mrf.mxu0
      %v2528 = vadd.f32 0.0, %v2527
      %2529 = vmatmul.f32.gmra.mxu0 %v2418
      %v2530 = vpop.f32.mrf.mxu0
      %v2531 = vadd.f32 0.0, %v2530
      %2532 = vmatmul.f32.gmra.mxu0 %v2421
      %v2533 = vpop.f32.mrf.mxu0
      %v2534 = vadd.f32 0.0, %v2533
      %2535 = vmatmul.f32.gmra.mxu0 %v2424
      %v2536 = vpop.f32.mrf.mxu0
      %v2537 = vadd.f32 0.0, %v2536
      %2538 = vmatmul.f32.gmra.mxu0 %v2427
      %v2539 = vpop.f32.mrf.mxu0
      %v2540 = vadd.f32 0.0, %v2539
      %2541 = vmatmul.f32.gmra.mxu0 %v2430
      %v2542 = vpop.f32.mrf.mxu0
      %v2543 = vadd.f32 0.0, %v2542
      %2544 = vmatmul.f32.gmra.mxu0 %v2433
      %v2545 = vpop.f32.mrf.mxu0
      %v2546 = vadd.f32 0.0, %v2545
      %2547 = vmatmul.f32.gmra.mxu0 %v2436
      %v2548 = vpop.f32.mrf.mxu0
      %v2549 = vadd.f32 0.0, %v2548
      %2550 = vmatmul.f32.gmra.mxu0 %v2439
      %v2551 = vpop.f32.mrf.mxu0
      %v2552 = vadd.f32 0.0, %v2551
      %2553 = vmatmul.f32.gmra.mxu0 %v2442
      %v2554 = vpop.f32.mrf.mxu0
      %v2555 = vadd.f32 0.0, %v2554
      %2556 = vmatmul.f32.gmra.mxu0 %v2445
      %v2557 = vpop.f32.mrf.mxu0
      %v2558 = vadd.f32 0.0, %v2557
      %2559 = vmatmul.f32.gmra.mxu0 %v2448
      %v2560 = vpop.f32.mrf.mxu0
      %v2561 = vadd.f32 0.0, %v2560
      %2562 = vmatmul.f32.gmra.mxu0 %v2451
      %v2563 = vpop.f32.mrf.mxu0
      %v2564 = vadd.f32 0.0, %v2563
      %2565 = vdwg.mxu0
      %v2566 = vadd.f32 %v2290, %v2471
      %v2567 = vadd.f32 %v2291, %v2474
      %v2568 = vadd.f32 %v2292, %v2477
      %v2569 = vadd.f32 %v2293, %v2480
      %v2570 = vadd.f32 %v2294, %v2483
      %v2571 = vadd.f32 %v2295, %v2486
      %v2572 = vadd.f32 %v2296, %v2489
      %v2573 = vadd.f32 %v2297, %v2492
      %v2574 = vadd.f32 %v2298, %v2495
      %v2575 = vadd.f32 %v2299, %v2498
      %v2576 = vadd.f32 %v2300, %v2501
      %v2577 = vadd.f32 %v2301, %v2504
      %v2578 = vadd.f32 %v2302, %v2507
      %v2579 = vadd.f32 %v2303, %v2510
      %v2580 = vadd.f32 %v2304, %v2513
      %v2581 = vadd.f32 %v2305, %v2516
      %v2582 = vadd.f32 %v2306, %v2519
      %v2583 = vadd.f32 %v2307, %v2522
      %v2584 = vadd.f32 %v2308, %v2525
      %v2585 = vadd.f32 %v2309, %v2528
      %v2586 = vadd.f32 %v2310, %v2531
      %v2587 = vadd.f32 %v2311, %v2534
      %v2588 = vadd.f32 %v2312, %v2537
      %v2589 = vadd.f32 %v2313, %v2540
      %v2590 = vadd.f32 %v2314, %v2543
      %v2591 = vadd.f32 %v2315, %v2546
      %v2592 = vadd.f32 %v2316, %v2549
      %v2593 = vadd.f32 %v2317, %v2552
      %v2594 = vadd.f32 %v2318, %v2555
      %v2595 = vadd.f32 %v2319, %v2558
      %v2596 = vadd.f32 %v2320, %v2561
      %v2597 = vadd.f32 %v2321, %v2564
      %v2598 = vld [vmem:[%s2045 + $0x2] sm:$0xff]
      %v2599 = vld [vmem:[%s2045 + $0xa] sm:$0xff]
      %v2600 = vld [vmem:[%s2045 + $0x1a] sm:$0xff]
      %v2601 = vld [vmem:[%s2045 + $0x22] sm:$0xff]
      %v2602 = vld [vmem:[%s2045 + $0x32] sm:$0xff]
      %v2603 = vld [vmem:[%s2045 + $0x3a] sm:$0xff]
      %v2604 = vld [vmem:[%s2045 + $0x4a] sm:$0xff]
      %v2605 = vld [vmem:[%s2045 + $0x52] sm:$0xff]
      %v2606 = vld [vmem:[%s2045 + $0x62] sm:$0xff]
      %v2607 = vld [vmem:[%s2045 + $0x6a] sm:$0xff]
      %v2608 = vld [vmem:[%s2045 + $0x7a] sm:$0xff]
      %v2609 = vld [vmem:[%s2045 + $0x82] sm:$0xff]
      %v2610 = vld [vmem:[%s2045 + $0x92] sm:$0xff]
      %v2611 = vld [vmem:[%s2045 + $0x9a] sm:$0xff]
      %v2612 = vld [vmem:[%s2045 + $0xaa] sm:$0xff]
      %v2613 = vld [vmem:[%s2045 + $0xb2] sm:$0xff]
      %v2614 = vld [vmem:[%s2045 + $0xc2] sm:$0xff]
      %v2615 = vld [vmem:[%s2045 + $0xca] sm:$0xff]
      %v2616 = vld [vmem:[%s2045 + $0xda] sm:$0xff]
      %v2617 = vld [vmem:[%s2045 + $0xe2] sm:$0xff]
      %v2618 = vld [vmem:[%s2045 + $0xf2] sm:$0xff]
      %v2619 = vld [vmem:[%s2045 + $0xfa] sm:$0xff]
      %v2620 = vld [vmem:[%s2045 + $0x10a] sm:$0xff]
      %v2621 = vld [vmem:[%s2045 + $0x112] sm:$0xff]
      %v2622 = vld [vmem:[%s2045 + $0x122] sm:$0xff]
      %v2623 = vld [vmem:[%s2045 + $0x12a] sm:$0xff]
      %v2624 = vld [vmem:[%s2045 + $0x13a] sm:$0xff]
      %v2625 = vld [vmem:[%s2045 + $0x142] sm:$0xff]
      %v2626 = vld [vmem:[%s2045 + $0x152] sm:$0xff]
      %v2627 = vld [vmem:[%s2045 + $0x15a] sm:$0xff]
      %v2628 = vld [vmem:[%s2045 + $0x16a] sm:$0xff]
      %v2629 = vld [vmem:[%s2045 + $0x172] sm:$0xff]
      %s2630 = scalar_lea.vmem %s1, 128
      %v2631 = vld [vmem:[%s2630] sm:$0xff]
      %v2632 = vld [vmem:[%s2630 + $0x8] sm:$0xff]
      %v2634 = vsel %vm365, %v2598, 0
      %v2637 = vsel %vm365, %v2599, 0
      %v2640 = vsel %vm365, %v2600, 0
      %v2643 = vsel %vm365, %v2601, 0
      %v2646 = vsel %vm365, %v2602, 0
      %v2649 = vsel %vm365, %v2603, 0
      %v2652 = vsel %vm365, %v2604, 0
      %v2655 = vsel %vm365, %v2605, 0
      %v2658 = vsel %vm365, %v2606, 0
      %v2661 = vsel %vm365, %v2607, 0
      %v2664 = vsel %vm365, %v2608, 0
      %v2667 = vsel %vm365, %v2609, 0
      %v2670 = vsel %vm365, %v2610, 0
      %v2673 = vsel %vm365, %v2611, 0
      %v2676 = vsel %vm365, %v2612, 0
      %v2679 = vsel %vm365, %v2613, 0
      %v2682 = vsel %vm365, %v2614, 0
      %v2685 = vsel %vm365, %v2615, 0
      %v2688 = vsel %vm365, %v2616, 0
      %v2691 = vsel %vm365, %v2617, 0
      %v2694 = vsel %vm365, %v2618, 0
      %v2697 = vsel %vm365, %v2619, 0
      %v2700 = vsel %vm365, %v2620, 0
      %v2703 = vsel %vm365, %v2621, 0
      %v2706 = vsel %vm365, %v2622, 0
      %v2709 = vsel %vm365, %v2623, 0
      %v2712 = vsel %vm365, %v2624, 0
      %v2715 = vsel %vm365, %v2625, 0
      %v2718 = vsel %vm365, %v2626, 0
      %v2721 = vsel %vm365, %v2627, 0
      %v2724 = vsel %vm365, %v2628, 0
      %v2727 = vsel %vm365, %v2629, 0
      %2729 = vmatpush.msra.mxu0 0.0
      %2730 = vmatpush.msra.mxu0 0.0
      %2731 = vmatpush.msra.mxu0 0.0
      %2732 = vmatpush.msra.mxu0 0.0
      %2733 = vmatpush.msra.mxu0 0.0
      %2734 = vmatpush.msra.mxu0 0.0
      %2735 = vmatpush.msra.mxu0 0.0
      %2736 = vmatpush.msra.mxu0 0.0
      %2737 = vmatpush.msra.mxu0 0.0
      %2738 = vmatpush.msra.mxu0 0.0
      %2739 = vmatpush.msra.mxu0 0.0
      %2740 = vmatpush.msra.mxu0 0.0
      %2741 = vmatpush.msra.mxu0 0.0
      %2742 = vmatpush.msra.mxu0 0.0
      %2743 = vmatpush.msra.mxu0 %v2632
      %2744 = vmatpush.msra.mxu0 %v2631
      %2745 = vmatmul.f32.gmra.mxu0 %v2634
      %v2746 = vpop.f32.mrf.mxu0
      %v2747 = vadd.f32 0.0, %v2746
      %2748 = vmatmul.f32.gmra.mxu0 %v2637
      %v2749 = vpop.f32.mrf.mxu0
      %v2750 = vadd.f32 0.0, %v2749
      %2751 = vmatmul.f32.gmra.mxu0 %v2640
      %v2752 = vpop.f32.mrf.mxu0
      %v2753 = vadd.f32 0.0, %v2752
      %2754 = vmatmul.f32.gmra.mxu0 %v2643
      %v2755 = vpop.f32.mrf.mxu0
      %v2756 = vadd.f32 0.0, %v2755
      %2757 = vmatmul.f32.gmra.mxu0 %v2646
      %v2758 = vpop.f32.mrf.mxu0
      %v2759 = vadd.f32 0.0, %v2758
      %2760 = vmatmul.f32.gmra.mxu0 %v2649
      %v2761 = vpop.f32.mrf.mxu0
      %v2762 = vadd.f32 0.0, %v2761
      %2763 = vmatmul.f32.gmra.mxu0 %v2652
      %v2764 = vpop.f32.mrf.mxu0
      %v2765 = vadd.f32 0.0, %v2764
      %2766 = vmatmul.f32.gmra.mxu0 %v2655
      %v2767 = vpop.f32.mrf.mxu0
      %v2768 = vadd.f32 0.0, %v2767
      %2769 = vmatmul.f32.gmra.mxu0 %v2658
      %v2770 = vpop.f32.mrf.mxu0
      %v2771 = vadd.f32 0.0, %v2770
      %2772 = vmatmul.f32.gmra.mxu0 %v2661
      %v2773 = vpop.f32.mrf.mxu0
      %v2774 = vadd.f32 0.0, %v2773
      %2775 = vmatmul.f32.gmra.mxu0 %v2664
      %v2776 = vpop.f32.mrf.mxu0
      %v2777 = vadd.f32 0.0, %v2776
      %2778 = vmatmul.f32.gmra.mxu0 %v2667
      %v2779 = vpop.f32.mrf.mxu0
      %v2780 = vadd.f32 0.0, %v2779
      %2781 = vmatmul.f32.gmra.mxu0 %v2670
      %v2782 = vpop.f32.mrf.mxu0
      %v2783 = vadd.f32 0.0, %v2782
      %2784 = vmatmul.f32.gmra.mxu0 %v2673
      %v2785 = vpop.f32.mrf.mxu0
      %v2786 = vadd.f32 0.0, %v2785
      %2787 = vmatmul.f32.gmra.mxu0 %v2676
      %v2788 = vpop.f32.mrf.mxu0
      %v2789 = vadd.f32 0.0, %v2788
      %2790 = vmatmul.f32.gmra.mxu0 %v2679
      %v2791 = vpop.f32.mrf.mxu0
      %v2792 = vadd.f32 0.0, %v2791
      %2793 = vmatmul.f32.gmra.mxu0 %v2682
      %v2794 = vpop.f32.mrf.mxu0
      %v2795 = vadd.f32 0.0, %v2794
      %2796 = vmatmul.f32.gmra.mxu0 %v2685
      %v2797 = vpop.f32.mrf.mxu0
      %v2798 = vadd.f32 0.0, %v2797
      %2799 = vmatmul.f32.gmra.mxu0 %v2688
      %v2800 = vpop.f32.mrf.mxu0
      %v2801 = vadd.f32 0.0, %v2800
      %2802 = vmatmul.f32.gmra.mxu0 %v2691
      %v2803 = vpop.f32.mrf.mxu0
      %v2804 = vadd.f32 0.0, %v2803
      %2805 = vmatmul.f32.gmra.mxu0 %v2694
      %v2806 = vpop.f32.mrf.mxu0
      %v2807 = vadd.f32 0.0, %v2806
      %2808 = vmatmul.f32.gmra.mxu0 %v2697
      %v2809 = vpop.f32.mrf.mxu0
      %v2810 = vadd.f32 0.0, %v2809
      %2811 = vmatmul.f32.gmra.mxu0 %v2700
      %v2812 = vpop.f32.mrf.mxu0
      %v2813 = vadd.f32 0.0, %v2812
      %2814 = vmatmul.f32.gmra.mxu0 %v2703
      %v2815 = vpop.f32.mrf.mxu0
      %v2816 = vadd.f32 0.0, %v2815
      %2817 = vmatmul.f32.gmra.mxu0 %v2706
      %v2818 = vpop.f32.mrf.mxu0
      %v2819 = vadd.f32 0.0, %v2818
      %2820 = vmatmul.f32.gmra.mxu0 %v2709
      %v2821 = vpop.f32.mrf.mxu0
      %v2822 = vadd.f32 0.0, %v2821
      %2823 = vmatmul.f32.gmra.mxu0 %v2712
      %v2824 = vpop.f32.mrf.mxu0
      %v2825 = vadd.f32 0.0, %v2824
      %2826 = vmatmul.f32.gmra.mxu0 %v2715
      %v2827 = vpop.f32.mrf.mxu0
      %v2828 = vadd.f32 0.0, %v2827
      %2829 = vmatmul.f32.gmra.mxu0 %v2718
      %v2830 = vpop.f32.mrf.mxu0
      %v2831 = vadd.f32 0.0, %v2830
      %2832 = vmatmul.f32.gmra.mxu0 %v2721
      %v2833 = vpop.f32.mrf.mxu0
      %v2834 = vadd.f32 0.0, %v2833
      %2835 = vmatmul.f32.gmra.mxu0 %v2724
      %v2836 = vpop.f32.mrf.mxu0
      %v2837 = vadd.f32 0.0, %v2836
      %2838 = vmatmul.f32.gmra.mxu0 %v2727
      %v2839 = vpop.f32.mrf.mxu0
      %v2840 = vadd.f32 0.0, %v2839
      %2841 = vdwg.mxu0
      %v2842 = vadd.f32 %v2566, %v2747
      %v2843 = vadd.f32 %v2567, %v2750
      %v2844 = vadd.f32 %v2568, %v2753
      %v2845 = vadd.f32 %v2569, %v2756
      %v2846 = vadd.f32 %v2570, %v2759
      %v2847 = vadd.f32 %v2571, %v2762
      %v2848 = vadd.f32 %v2572, %v2765
      %v2849 = vadd.f32 %v2573, %v2768
      %v2850 = vadd.f32 %v2574, %v2771
      %v2851 = vadd.f32 %v2575, %v2774
      %v2852 = vadd.f32 %v2576, %v2777
      %v2853 = vadd.f32 %v2577, %v2780
      %v2854 = vadd.f32 %v2578, %v2783
      %v2855 = vadd.f32 %v2579, %v2786
      %v2856 = vadd.f32 %v2580, %v2789
      %v2857 = vadd.f32 %v2581, %v2792
      %v2858 = vadd.f32 %v2582, %v2795
      %v2859 = vadd.f32 %v2583, %v2798
      %v2860 = vadd.f32 %v2584, %v2801
      %v2861 = vadd.f32 %v2585, %v2804
      %v2862 = vadd.f32 %v2586, %v2807
      %v2863 = vadd.f32 %v2587, %v2810
      %v2864 = vadd.f32 %v2588, %v2813
      %v2865 = vadd.f32 %v2589, %v2816
      %v2866 = vadd.f32 %v2590, %v2819
      %v2867 = vadd.f32 %v2591, %v2822
      %v2868 = vadd.f32 %v2592, %v2825
      %v2869 = vadd.f32 %v2593, %v2828
      %v2870 = vadd.f32 %v2594, %v2831
      %v2871 = vadd.f32 %v2595, %v2834
      %v2872 = vadd.f32 %v2596, %v2837
      %v2873 = vadd.f32 %v2597, %v2840
      %v2874 = vld [vmem:[%s2] sm:$0x1]
      %v2876 = vperm.slane %v2874, 0
      %v2878 = vmul.f32 %v2842, %v2876
      %v2879 = vmul.f32 %v2843, %v2876
      %v2880 = vmul.f32 %v2844, %v2876
      %v2881 = vmul.f32 %v2845, %v2876
      %v2882 = vmul.f32 %v2846, %v2876
      %v2883 = vmul.f32 %v2847, %v2876
      %v2884 = vmul.f32 %v2848, %v2876
      %v2885 = vmul.f32 %v2849, %v2876
      %v2886 = vmul.f32 %v2850, %v2876
      %v2887 = vmul.f32 %v2851, %v2876
      %v2888 = vmul.f32 %v2852, %v2876
      %v2889 = vmul.f32 %v2853, %v2876
      %v2890 = vmul.f32 %v2854, %v2876
      %v2891 = vmul.f32 %v2855, %v2876
      %v2892 = vmul.f32 %v2856, %v2876
      %v2893 = vmul.f32 %v2857, %v2876
      %v2894 = vmul.f32 %v2858, %v2876
      %v2895 = vmul.f32 %v2859, %v2876
      %v2896 = vmul.f32 %v2860, %v2876
      %v2897 = vmul.f32 %v2861, %v2876
      %v2898 = vmul.f32 %v2862, %v2876
      %v2899 = vmul.f32 %v2863, %v2876
      %v2900 = vmul.f32 %v2864, %v2876
      %v2901 = vmul.f32 %v2865, %v2876
      %v2902 = vmul.f32 %v2866, %v2876
      %v2903 = vmul.f32 %v2867, %v2876
      %v2904 = vmul.f32 %v2868, %v2876
      %v2905 = vmul.f32 %v2869, %v2876
      %v2906 = vmul.f32 %v2870, %v2876
      %v2907 = vmul.f32 %v2871, %v2876
      %v2908 = vmul.f32 %v2872, %v2876
      %v2909 = vmul.f32 %v2873, %v2876
      %v2910 = vld [vmem:[%s3] sm:$0x1]
      %v2912 = vperm.slane %v2910, 0
      %v2914 = vadd.f32 %v2878, %v2912
      %v2915 = vadd.f32 %v2879, %v2912
      %v2916 = vadd.f32 %v2880, %v2912
      %v2917 = vadd.f32 %v2881, %v2912
      %v2918 = vadd.f32 %v2882, %v2912
      %v2919 = vadd.f32 %v2883, %v2912
      %v2920 = vadd.f32 %v2884, %v2912
      %v2921 = vadd.f32 %v2885, %v2912
      %v2922 = vadd.f32 %v2886, %v2912
      %v2923 = vadd.f32 %v2887, %v2912
      %v2924 = vadd.f32 %v2888, %v2912
      %v2925 = vadd.f32 %v2889, %v2912
      %v2926 = vadd.f32 %v2890, %v2912
      %v2927 = vadd.f32 %v2891, %v2912
      %v2928 = vadd.f32 %v2892, %v2912
      %v2929 = vadd.f32 %v2893, %v2912
      %v2930 = vadd.f32 %v2894, %v2912
      %v2931 = vadd.f32 %v2895, %v2912
      %v2932 = vadd.f32 %v2896, %v2912
      %v2933 = vadd.f32 %v2897, %v2912
      %v2934 = vadd.f32 %v2898, %v2912
      %v2935 = vadd.f32 %v2899, %v2912
      %v2936 = vadd.f32 %v2900, %v2912
      %v2937 = vadd.f32 %v2901, %v2912
      %v2938 = vadd.f32 %v2902, %v2912
      %v2939 = vadd.f32 %v2903, %v2912
      %v2940 = vadd.f32 %v2904, %v2912
      %v2941 = vadd.f32 %v2905, %v2912
      %v2942 = vadd.f32 %v2906, %v2912
      %v2943 = vadd.f32 %v2907, %v2912
      %v2944 = vadd.f32 %v2908, %v2912
      %v2945 = vadd.f32 %v2909, %v2912
      %v2946 = vmax.f32 %v2914, 0.0
      %v2947 = vmax.f32 %v2915, 0.0
      %v2948 = vmax.f32 %v2916, 0.0
      %v2949 = vmax.f32 %v2917, 0.0
      %v2950 = vmax.f32 %v2918, 0.0
      %v2951 = vmax.f32 %v2919, 0.0
      %v2952 = vmax.f32 %v2920, 0.0
      %v2953 = vmax.f32 %v2921, 0.0
      %v2954 = vmax.f32 %v2922, 0.0
      %v2955 = vmax.f32 %v2923, 0.0
      %v2956 = vmax.f32 %v2924, 0.0
      %v2957 = vmax.f32 %v2925, 0.0
      %v2958 = vmax.f32 %v2926, 0.0
      %v2959 = vmax.f32 %v2927, 0.0
      %v2960 = vmax.f32 %v2928, 0.0
      %v2961 = vmax.f32 %v2929, 0.0
      %v2962 = vmax.f32 %v2930, 0.0
      %v2963 = vmax.f32 %v2931, 0.0
      %v2964 = vmax.f32 %v2932, 0.0
      %v2965 = vmax.f32 %v2933, 0.0
      %v2966 = vmax.f32 %v2934, 0.0
      %v2967 = vmax.f32 %v2935, 0.0
      %v2968 = vmax.f32 %v2936, 0.0
      %v2969 = vmax.f32 %v2937, 0.0
      %v2970 = vmax.f32 %v2938, 0.0
      %v2971 = vmax.f32 %v2939, 0.0
      %v2972 = vmax.f32 %v2940, 0.0
      %v2973 = vmax.f32 %v2941, 0.0
      %v2974 = vmax.f32 %v2942, 0.0
      %v2975 = vmax.f32 %v2943, 0.0
      %v2976 = vmax.f32 %v2944, 0.0
      %v2977 = vmax.f32 %v2945, 0.0
      %2978 = vst.msk [vmem:[#allocation3] sm:$0xff] %vm365, 0.0
      %2979 = vst.msk [vmem:[#allocation3 + $0x8] sm:$0xff] %vm365, 0.0
      %2980 = vst.msk [vmem:[#allocation3 + $0x10] sm:$0x3] %vm368, 0.0
      %2981 = vst.msk [vmem:[#allocation3 + $0x18] sm:$0xff] %vm365, 0.0
      %2982 = vst.msk [vmem:[#allocation3 + $0x20] sm:$0xff] %vm365, 0.0
      %2983 = vst.msk [vmem:[#allocation3 + $0x28] sm:$0x3] %vm368, 0.0
      %2984 = vst.msk [vmem:[#allocation3 + $0x30] sm:$0xff] %vm365, 0.0
      %2985 = vst.msk [vmem:[#allocation3 + $0x38] sm:$0xff] %vm365, 0.0
      %2986 = vst.msk [vmem:[#allocation3 + $0x40] sm:$0x3] %vm368, 0.0
      %2987 = vst.msk [vmem:[#allocation3 + $0x48] sm:$0xff] %vm365, 0.0
      %2988 = vst.msk [vmem:[#allocation3 + $0x50] sm:$0xff] %vm365, 0.0
      %2989 = vst.msk [vmem:[#allocation3 + $0x58] sm:$0x3] %vm368, 0.0
      %2990 = vst.msk [vmem:[#allocation3 + $0x60] sm:$0xff] %vm365, 0.0
      %2991 = vst.msk [vmem:[#allocation3 + $0x68] sm:$0xff] %vm365, 0.0
      %2992 = vst.msk [vmem:[#allocation3 + $0x70] sm:$0x3] %vm368, 0.0
      %2993 = vst.msk [vmem:[#allocation3 + $0x78] sm:$0xff] %vm365, 0.0
      %2994 = vst.msk [vmem:[#allocation3 + $0x80] sm:$0xff] %vm365, 0.0
      %2995 = vst.msk [vmem:[#allocation3 + $0x88] sm:$0x3] %vm368, 0.0
      %2996 = vst.msk [vmem:[#allocation3 + $0x90] sm:$0xff] %vm365, 0.0
      %2997 = vst.msk [vmem:[#allocation3 + $0x98] sm:$0xff] %vm365, 0.0
      %2998 = vst.msk [vmem:[#allocation3 + $0xa0] sm:$0x3] %vm368, 0.0
      %2999 = vst.msk [vmem:[#allocation3 + $0xa8] sm:$0xff] %vm365, 0.0
      %3000 = vst.msk [vmem:[#allocation3 + $0xb0] sm:$0xff] %vm365, 0.0
      %3001 = vst.msk [vmem:[#allocation3 + $0xb8] sm:$0x3] %vm368, 0.0
      %3002 = vst.msk [vmem:[#allocation3 + $0xc0] sm:$0xff] %vm365, 0.0
      %3003 = vst.msk [vmem:[#allocation3 + $0xc8] sm:$0xff] %vm365, 0.0
      %3004 = vst.msk [vmem:[#allocation3 + $0xd0] sm:$0x3] %vm368, 0.0
      %3005 = vst.msk [vmem:[#allocation3 + $0xd8] sm:$0xff] %vm365, 0.0
      %3006 = vst.msk [vmem:[#allocation3 + $0xe0] sm:$0xff] %vm365, 0.0
      %3007 = vst.msk [vmem:[#allocation3 + $0xe8] sm:$0x3] %vm368, 0.0
      %3008 = vst.msk [vmem:[#allocation3 + $0xf0] sm:$0xff] %vm365, 0.0
      %3009 = vst.msk [vmem:[#allocation3 + $0xf8] sm:$0xff] %vm365, 0.0
      %3010 = vst.msk [vmem:[#allocation3 + $0x100] sm:$0x3] %vm368, 0.0
      %3011 = vst.msk [vmem:[#allocation3 + $0x108] sm:$0xff] %vm365, 0.0
      %3012 = vst.msk [vmem:[#allocation3 + $0x110] sm:$0xff] %vm365, 0.0
      %3013 = vst.msk [vmem:[#allocation3 + $0x118] sm:$0x3] %vm368, 0.0
      %3014 = vst.msk [vmem:[#allocation3 + $0x120] sm:$0xff] %vm365, 0.0
      %3015 = vst.msk [vmem:[#allocation3 + $0x128] sm:$0xff] %vm365, 0.0
      %3016 = vst.msk [vmem:[#allocation3 + $0x130] sm:$0x3] %vm368, 0.0
      %3017 = vst.msk [vmem:[#allocation3 + $0x138] sm:$0xff] %vm365, 0.0
      %3018 = vst.msk [vmem:[#allocation3 + $0x140] sm:$0xff] %vm365, 0.0
      %3019 = vst.msk [vmem:[#allocation3 + $0x148] sm:$0x3] %vm368, 0.0
      %3020 = vst.msk [vmem:[#allocation3 + $0x150] sm:$0xff] %vm365, 0.0
      %3021 = vst.msk [vmem:[#allocation3 + $0x158] sm:$0xff] %vm365, 0.0
      %3022 = vst.msk [vmem:[#allocation3 + $0x160] sm:$0x3] %vm368, 0.0
      %3023 = vst.msk [vmem:[#allocation3 + $0x168] sm:$0xff] %vm365, 0.0
      %3024 = vst.msk [vmem:[#allocation3 + $0x170] sm:$0xff] %vm365, 0.0
      %3025 = vst.msk [vmem:[#allocation3 + $0x178] sm:$0x3] %vm368, 0.0
      %3026 = vst.msk [vmem:[#allocation3 + $0x180] sm:$0xff] %vm365, 0.0
      %3027 = vst.msk [vmem:[#allocation3 + $0x188] sm:$0xff] %vm365, 0.0
      %3028 = vst.msk [vmem:[#allocation3 + $0x190] sm:$0x3] %vm368, 0.0
      %3029 = vst.msk [vmem:[#allocation3 + $0x198] sm:$0xff] %vm365, 0.0
      %3030 = vst.msk [vmem:[#allocation3 + $0x1a0] sm:$0xff] %vm365, 0.0
      %3031 = vst.msk [vmem:[#allocation3 + $0x1a8] sm:$0x3] %vm368, 0.0
      %s3032 = scalar_lea.vmem [#allocation3], 24
      %3033 = vst.msk [vmem:[%s3032 + $0x1] sm:$0xff] %vm365, %v2946
      %3034 = vst.msk [vmem:[%s3032 + $0x9] sm:$0xff] %vm365, %v2947
      %3035 = vst.msk [vmem:[%s3032 + $0x19] sm:$0xff] %vm365, %v2948
      %3036 = vst.msk [vmem:[%s3032 + $0x21] sm:$0xff] %vm365, %v2949
      %3037 = vst.msk [vmem:[%s3032 + $0x31] sm:$0xff] %vm365, %v2950
      %3038 = vst.msk [vmem:[%s3032 + $0x39] sm:$0xff] %vm365, %v2951
      %3039 = vst.msk [vmem:[%s3032 + $0x49] sm:$0xff] %vm365, %v2952
      %3040 = vst.msk [vmem:[%s3032 + $0x51] sm:$0xff] %vm365, %v2953
      %3041 = vst.msk [vmem:[%s3032 + $0x61] sm:$0xff] %vm365, %v2954
      %3042 = vst.msk [vmem:[%s3032 + $0x69] sm:$0xff] %vm365, %v2955
      %3043 = vst.msk [vmem:[%s3032 + $0x79] sm:$0xff] %vm365, %v2956
      %3044 = vst.msk [vmem:[%s3032 + $0x81] sm:$0xff] %vm365, %v2957
      %3045 = vst.msk [vmem:[%s3032 + $0x91] sm:$0xff] %vm365, %v2958
      %3046 = vst.msk [vmem:[%s3032 + $0x99] sm:$0xff] %vm365, %v2959
      %3047 = vst.msk [vmem:[%s3032 + $0xa9] sm:$0xff] %vm365, %v2960
      %3048 = vst.msk [vmem:[%s3032 + $0xb1] sm:$0xff] %vm365, %v2961
      %3049 = vst.msk [vmem:[%s3032 + $0xc1] sm:$0xff] %vm365, %v2962
      %3050 = vst.msk [vmem:[%s3032 + $0xc9] sm:$0xff] %vm365, %v2963
      %3051 = vst.msk [vmem:[%s3032 + $0xd9] sm:$0xff] %vm365, %v2964
      %3052 = vst.msk [vmem:[%s3032 + $0xe1] sm:$0xff] %vm365, %v2965
      %3053 = vst.msk [vmem:[%s3032 + $0xf1] sm:$0xff] %vm365, %v2966
      %3054 = vst.msk [vmem:[%s3032 + $0xf9] sm:$0xff] %vm365, %v2967
      %3055 = vst.msk [vmem:[%s3032 + $0x109] sm:$0xff] %vm365, %v2968
      %3056 = vst.msk [vmem:[%s3032 + $0x111] sm:$0xff] %vm365, %v2969
      %3057 = vst.msk [vmem:[%s3032 + $0x121] sm:$0xff] %vm365, %v2970
      %3058 = vst.msk [vmem:[%s3032 + $0x129] sm:$0xff] %vm365, %v2971
      %3059 = vst.msk [vmem:[%s3032 + $0x139] sm:$0xff] %vm365, %v2972
      %3060 = vst.msk [vmem:[%s3032 + $0x141] sm:$0xff] %vm365, %v2973
      %3061 = vst.msk [vmem:[%s3032 + $0x151] sm:$0xff] %vm365, %v2974
      %3062 = vst.msk [vmem:[%s3032 + $0x159] sm:$0xff] %vm365, %v2975
      %3063 = vst.msk [vmem:[%s3032 + $0x169] sm:$0xff] %vm365, %v2976
      %3064 = vst.msk [vmem:[%s3032 + $0x171] sm:$0xff] %vm365, %v2977
      %v3065 = vld [vmem:[#allocation3] sm:$0xff]
      %v3066 = vld [vmem:[#allocation3 + $0x8] sm:$0xff]
      %v3067 = vld [vmem:[#allocation3 + $0x18] sm:$0xff]
      %v3068 = vld [vmem:[#allocation3 + $0x20] sm:$0xff]
      %v3069 = vld [vmem:[#allocation3 + $0x30] sm:$0xff]
      %v3070 = vld [vmem:[#allocation3 + $0x38] sm:$0xff]
      %v3071 = vld [vmem:[#allocation3 + $0x48] sm:$0xff]
      %v3072 = vld [vmem:[#allocation3 + $0x50] sm:$0xff]
      %v3073 = vld [vmem:[#allocation3 + $0x60] sm:$0xff]
      %v3074 = vld [vmem:[#allocation3 + $0x68] sm:$0xff]
      %v3075 = vld [vmem:[#allocation3 + $0x78] sm:$0xff]
      %v3076 = vld [vmem:[#allocation3 + $0x80] sm:$0xff]
      %v3077 = vld [vmem:[#allocation3 + $0x90] sm:$0xff]
      %v3078 = vld [vmem:[#allocation3 + $0x98] sm:$0xff]
      %v3079 = vld [vmem:[#allocation3 + $0xa8] sm:$0xff]
      %v3080 = vld [vmem:[#allocation3 + $0xb0] sm:$0xff]
      %v3081 = vld [vmem:[#allocation3 + $0xc0] sm:$0xff]
      %v3082 = vld [vmem:[#allocation3 + $0xc8] sm:$0xff]
      %v3083 = vld [vmem:[#allocation3 + $0xd8] sm:$0xff]
      %v3084 = vld [vmem:[#allocation3 + $0xe0] sm:$0xff]
      %v3085 = vld [vmem:[#allocation3 + $0xf0] sm:$0xff]
      %v3086 = vld [vmem:[#allocation3 + $0xf8] sm:$0xff]
      %v3087 = vld [vmem:[#allocation3 + $0x108] sm:$0xff]
      %v3088 = vld [vmem:[#allocation3 + $0x110] sm:$0xff]
      %v3089 = vld [vmem:[#allocation3 + $0x120] sm:$0xff]
      %v3090 = vld [vmem:[#allocation3 + $0x128] sm:$0xff]
      %v3091 = vld [vmem:[#allocation3 + $0x138] sm:$0xff]
      %v3092 = vld [vmem:[#allocation3 + $0x140] sm:$0xff]
      %v3093 = vld [vmem:[#allocation3 + $0x150] sm:$0xff]
      %v3094 = vld [vmem:[#allocation3 + $0x158] sm:$0xff]
      %v3095 = vld [vmem:[#allocation3 + $0x168] sm:$0xff]
      %v3096 = vld [vmem:[#allocation3 + $0x170] sm:$0xff]
      %v3097 = vld [vmem:[%s4] sm:$0xff]
      %v3098 = vld [vmem:[%s4 + $0x8] sm:$0xff]
      %v3099 = vld [vmem:[#allocation3 + $0x1] sm:$0xff]
      %v3100 = vld [vmem:[#allocation3 + $0x9] sm:$0xff]
      %v3101 = vld [vmem:[#allocation3 + $0x19] sm:$0xff]
      %v3102 = vld [vmem:[#allocation3 + $0x21] sm:$0xff]
      %v3103 = vld [vmem:[#allocation3 + $0x31] sm:$0xff]
      %v3104 = vld [vmem:[#allocation3 + $0x39] sm:$0xff]
      %v3105 = vld [vmem:[#allocation3 + $0x49] sm:$0xff]
      %v3106 = vld [vmem:[#allocation3 + $0x51] sm:$0xff]
      %v3107 = vld [vmem:[#allocation3 + $0x61] sm:$0xff]
      %v3108 = vld [vmem:[#allocation3 + $0x69] sm:$0xff]
      %v3109 = vld [vmem:[#allocation3 + $0x79] sm:$0xff]
      %v3110 = vld [vmem:[#allocation3 + $0x81] sm:$0xff]
      %v3111 = vld [vmem:[#allocation3 + $0x91] sm:$0xff]
      %v3112 = vld [vmem:[#allocation3 + $0x99] sm:$0xff]
      %v3113 = vld [vmem:[#allocation3 + $0xa9] sm:$0xff]
      %v3114 = vld [vmem:[#allocation3 + $0xb1] sm:$0xff]
      %v3115 = vld [vmem:[#allocation3 + $0xc1] sm:$0xff]
      %v3116 = vld [vmem:[#allocation3 + $0xc9] sm:$0xff]
      %v3117 = vld [vmem:[#allocation3 + $0xd9] sm:$0xff]
      %v3118 = vld [vmem:[#allocation3 + $0xe1] sm:$0xff]
      %v3119 = vld [vmem:[#allocation3 + $0xf1] sm:$0xff]
      %v3120 = vld [vmem:[#allocation3 + $0xf9] sm:$0xff]
      %v3121 = vld [vmem:[#allocation3 + $0x109] sm:$0xff]
      %v3122 = vld [vmem:[#allocation3 + $0x111] sm:$0xff]
      %v3123 = vld [vmem:[#allocation3 + $0x121] sm:$0xff]
      %v3124 = vld [vmem:[#allocation3 + $0x129] sm:$0xff]
      %v3125 = vld [vmem:[#allocation3 + $0x139] sm:$0xff]
      %v3126 = vld [vmem:[#allocation3 + $0x141] sm:$0xff]
      %v3127 = vld [vmem:[#allocation3 + $0x151] sm:$0xff]
      %v3128 = vld [vmem:[#allocation3 + $0x159] sm:$0xff]
      %v3129 = vld [vmem:[#allocation3 + $0x169] sm:$0xff]
      %v3130 = vld [vmem:[#allocation3 + $0x171] sm:$0xff]
      %s3131 = scalar_lea.vmem %s4, 16
      %v3132 = vld [vmem:[%s3131] sm:$0xff]
      %v3133 = vld [vmem:[%s3131 + $0x8] sm:$0xff]
      %v3135 = vsel %vm365, %v3099, 0
      %v3138 = vsel %vm365, %v3100, 0
      %v3141 = vsel %vm365, %v3101, 0
      %v3144 = vsel %vm365, %v3102, 0
      %v3147 = vsel %vm365, %v3103, 0
      %v3150 = vsel %vm365, %v3104, 0
      %v3153 = vsel %vm365, %v3105, 0
      %v3156 = vsel %vm365, %v3106, 0
      %v3159 = vsel %vm365, %v3107, 0
      %v3162 = vsel %vm365, %v3108, 0
      %v3165 = vsel %vm365, %v3109, 0
      %v3168 = vsel %vm365, %v3110, 0
      %v3171 = vsel %vm365, %v3111, 0
      %v3174 = vsel %vm365, %v3112, 0
      %v3177 = vsel %vm365, %v3113, 0
      %v3180 = vsel %vm365, %v3114, 0
      %v3183 = vsel %vm365, %v3115, 0
      %v3186 = vsel %vm365, %v3116, 0
      %v3189 = vsel %vm365, %v3117, 0
      %v3192 = vsel %vm365, %v3118, 0
      %v3195 = vsel %vm365, %v3119, 0
      %v3198 = vsel %vm365, %v3120, 0
      %v3201 = vsel %vm365, %v3121, 0
      %v3204 = vsel %vm365, %v3122, 0
      %v3207 = vsel %vm365, %v3123, 0
      %v3210 = vsel %vm365, %v3124, 0
      %v3213 = vsel %vm365, %v3125, 0
      %v3216 = vsel %vm365, %v3126, 0
      %v3219 = vsel %vm365, %v3127, 0
      %v3222 = vsel %vm365, %v3128, 0
      %v3225 = vsel %vm365, %v3129, 0
      %v3228 = vsel %vm365, %v3130, 0
      %3230 = vmatpush.msra.mxu0 0.0
      %3231 = vmatpush.msra.mxu0 0.0
      %3232 = vmatpush.msra.mxu0 0.0
      %3233 = vmatpush.msra.mxu0 0.0
      %3234 = vmatpush.msra.mxu0 0.0
      %3235 = vmatpush.msra.mxu0 0.0
      %3236 = vmatpush.msra.mxu0 0.0
      %3237 = vmatpush.msra.mxu0 0.0
      %3238 = vmatpush.msra.mxu0 0.0
      %3239 = vmatpush.msra.mxu0 0.0
      %3240 = vmatpush.msra.mxu0 0.0
      %3241 = vmatpush.msra.mxu0 0.0
      %3242 = vmatpush.msra.mxu0 0.0
      %3243 = vmatpush.msra.mxu0 0.0
      %3244 = vmatpush.msra.mxu0 %v3133
      %3245 = vmatpush.msra.mxu0 %v3132
      %3246 = vmatmul.f32.gmra.mxu0 %v3135
      %v3247 = vpop.f32.mrf.mxu0
      %v3248 = vadd.f32 0.0, %v3247
      %3249 = vmatmul.f32.gmra.mxu0 %v3138
      %v3250 = vpop.f32.mrf.mxu0
      %v3251 = vadd.f32 0.0, %v3250
      %3252 = vmatmul.f32.gmra.mxu0 %v3141
      %v3253 = vpop.f32.mrf.mxu0
      %v3254 = vadd.f32 0.0, %v3253
      %3255 = vmatmul.f32.gmra.mxu0 %v3144
      %v3256 = vpop.f32.mrf.mxu0
      %v3257 = vadd.f32 0.0, %v3256
      %3258 = vmatmul.f32.gmra.mxu0 %v3147
      %v3259 = vpop.f32.mrf.mxu0
      %v3260 = vadd.f32 0.0, %v3259
      %3261 = vmatmul.f32.gmra.mxu0 %v3150
      %v3262 = vpop.f32.mrf.mxu0
      %v3263 = vadd.f32 0.0, %v3262
      %3264 = vmatmul.f32.gmra.mxu0 %v3153
      %v3265 = vpop.f32.mrf.mxu0
      %v3266 = vadd.f32 0.0, %v3265
      %3267 = vmatmul.f32.gmra.mxu0 %v3156
      %v3268 = vpop.f32.mrf.mxu0
      %v3269 = vadd.f32 0.0, %v3268
      %3270 = vmatmul.f32.gmra.mxu0 %v3159
      %v3271 = vpop.f32.mrf.mxu0
      %v3272 = vadd.f32 0.0, %v3271
      %3273 = vmatmul.f32.gmra.mxu0 %v3162
      %v3274 = vpop.f32.mrf.mxu0
      %v3275 = vadd.f32 0.0, %v3274
      %3276 = vmatmul.f32.gmra.mxu0 %v3165
      %v3277 = vpop.f32.mrf.mxu0
      %v3278 = vadd.f32 0.0, %v3277
      %3279 = vmatmul.f32.gmra.mxu0 %v3168
      %v3280 = vpop.f32.mrf.mxu0
      %v3281 = vadd.f32 0.0, %v3280
      %3282 = vmatmul.f32.gmra.mxu0 %v3171
      %v3283 = vpop.f32.mrf.mxu0
      %v3284 = vadd.f32 0.0, %v3283
      %3285 = vmatmul.f32.gmra.mxu0 %v3174
      %v3286 = vpop.f32.mrf.mxu0
      %v3287 = vadd.f32 0.0, %v3286
      %3288 = vmatmul.f32.gmra.mxu0 %v3177
      %v3289 = vpop.f32.mrf.mxu0
      %v3290 = vadd.f32 0.0, %v3289
      %3291 = vmatmul.f32.gmra.mxu0 %v3180
      %v3292 = vpop.f32.mrf.mxu0
      %v3293 = vadd.f32 0.0, %v3292
      %3294 = vmatmul.f32.gmra.mxu0 %v3183
      %v3295 = vpop.f32.mrf.mxu0
      %v3296 = vadd.f32 0.0, %v3295
      %3297 = vmatmul.f32.gmra.mxu0 %v3186
      %v3298 = vpop.f32.mrf.mxu0
      %v3299 = vadd.f32 0.0, %v3298
      %3300 = vmatmul.f32.gmra.mxu0 %v3189
      %v3301 = vpop.f32.mrf.mxu0
      %v3302 = vadd.f32 0.0, %v3301
      %3303 = vmatmul.f32.gmra.mxu0 %v3192
      %v3304 = vpop.f32.mrf.mxu0
      %v3305 = vadd.f32 0.0, %v3304
      %3306 = vmatmul.f32.gmra.mxu0 %v3195
      %v3307 = vpop.f32.mrf.mxu0
      %v3308 = vadd.f32 0.0, %v3307
      %3309 = vmatmul.f32.gmra.mxu0 %v3198
      %v3310 = vpop.f32.mrf.mxu0
      %v3311 = vadd.f32 0.0, %v3310
      %3312 = vmatmul.f32.gmra.mxu0 %v3201
      %v3313 = vpop.f32.mrf.mxu0
      %v3314 = vadd.f32 0.0, %v3313
      %3315 = vmatmul.f32.gmra.mxu0 %v3204
      %v3316 = vpop.f32.mrf.mxu0
      %v3317 = vadd.f32 0.0, %v3316
      %3318 = vmatmul.f32.gmra.mxu0 %v3207
      %v3319 = vpop.f32.mrf.mxu0
      %v3320 = vadd.f32 0.0, %v3319
      %3321 = vmatmul.f32.gmra.mxu0 %v3210
      %v3322 = vpop.f32.mrf.mxu0
      %v3323 = vadd.f32 0.0, %v3322
      %3324 = vmatmul.f32.gmra.mxu0 %v3213
      %v3325 = vpop.f32.mrf.mxu0
      %v3326 = vadd.f32 0.0, %v3325
      %3327 = vmatmul.f32.gmra.mxu0 %v3216
      %v3328 = vpop.f32.mrf.mxu0
      %v3329 = vadd.f32 0.0, %v3328
      %3330 = vmatmul.f32.gmra.mxu0 %v3219
      %v3331 = vpop.f32.mrf.mxu0
      %v3332 = vadd.f32 0.0, %v3331
      %3333 = vmatmul.f32.gmra.mxu0 %v3222
      %v3334 = vpop.f32.mrf.mxu0
      %v3335 = vadd.f32 0.0, %v3334
      %3336 = vmatmul.f32.gmra.mxu0 %v3225
      %v3337 = vpop.f32.mrf.mxu0
      %v3338 = vadd.f32 0.0, %v3337
      %3339 = vmatmul.f32.gmra.mxu0 %v3228
      %v3340 = vpop.f32.mrf.mxu0
      %v3341 = vadd.f32 0.0, %v3340
      %3342 = vdwg.mxu0
      %v3344 = vsel %vm365, %v3065, 0
      %v3347 = vsel %vm365, %v3066, 0
      %v3350 = vsel %vm365, %v3067, 0
      %v3353 = vsel %vm365, %v3068, 0
      %v3356 = vsel %vm365, %v3069, 0
      %v3359 = vsel %vm365, %v3070, 0
      %v3362 = vsel %vm365, %v3071, 0
      %v3365 = vsel %vm365, %v3072, 0
      %v3368 = vsel %vm365, %v3073, 0
      %v3371 = vsel %vm365, %v3074, 0
      %v3374 = vsel %vm365, %v3075, 0
      %v3377 = vsel %vm365, %v3076, 0
      %v3380 = vsel %vm365, %v3077, 0
      %v3383 = vsel %vm365, %v3078, 0
      %v3386 = vsel %vm365, %v3079, 0
      %v3389 = vsel %vm365, %v3080, 0
      %v3392 = vsel %vm365, %v3081, 0
      %v3395 = vsel %vm365, %v3082, 0
      %v3398 = vsel %vm365, %v3083, 0
      %v3401 = vsel %vm365, %v3084, 0
      %v3404 = vsel %vm365, %v3085, 0
      %v3407 = vsel %vm365, %v3086, 0
      %v3410 = vsel %vm365, %v3087, 0
      %v3413 = vsel %vm365, %v3088, 0
      %v3416 = vsel %vm365, %v3089, 0
      %v3419 = vsel %vm365, %v3090, 0
      %v3422 = vsel %vm365, %v3091, 0
      %v3425 = vsel %vm365, %v3092, 0
      %v3428 = vsel %vm365, %v3093, 0
      %v3431 = vsel %vm365, %v3094, 0
      %v3434 = vsel %vm365, %v3095, 0
      %v3437 = vsel %vm365, %v3096, 0
      %3439 = vmatpush.msra.mxu0 0.0
      %3440 = vmatpush.msra.mxu0 0.0
      %3441 = vmatpush.msra.mxu0 0.0
      %3442 = vmatpush.msra.mxu0 0.0
      %3443 = vmatpush.msra.mxu0 0.0
      %3444 = vmatpush.msra.mxu0 0.0
      %3445 = vmatpush.msra.mxu0 0.0
      %3446 = vmatpush.msra.mxu0 0.0
      %3447 = vmatpush.msra.mxu0 0.0
      %3448 = vmatpush.msra.mxu0 0.0
      %3449 = vmatpush.msra.mxu0 0.0
      %3450 = vmatpush.msra.mxu0 0.0
      %3451 = vmatpush.msra.mxu0 0.0
      %3452 = vmatpush.msra.mxu0 0.0
      %3453 = vmatpush.msra.mxu0 %v3098
      %3454 = vmatpush.msra.mxu0 %v3097
      %3455 = vmatmul.f32.gmra.mxu0 %v3344
      %v3456 = vpop.f32.mrf.mxu0
      %v3457 = vadd.f32 %v3248, %v3456
      %3458 = vmatmul.f32.gmra.mxu0 %v3347
      %v3459 = vpop.f32.mrf.mxu0
      %v3460 = vadd.f32 %v3251, %v3459
      %3461 = vmatmul.f32.gmra.mxu0 %v3350
      %v3462 = vpop.f32.mrf.mxu0
      %v3463 = vadd.f32 %v3254, %v3462
      %3464 = vmatmul.f32.gmra.mxu0 %v3353
      %v3465 = vpop.f32.mrf.mxu0
      %v3466 = vadd.f32 %v3257, %v3465
      %3467 = vmatmul.f32.gmra.mxu0 %v3356
      %v3468 = vpop.f32.mrf.mxu0
      %v3469 = vadd.f32 %v3260, %v3468
      %3470 = vmatmul.f32.gmra.mxu0 %v3359
      %v3471 = vpop.f32.mrf.mxu0
      %v3472 = vadd.f32 %v3263, %v3471
      %3473 = vmatmul.f32.gmra.mxu0 %v3362
      %v3474 = vpop.f32.mrf.mxu0
      %v3475 = vadd.f32 %v3266, %v3474
      %3476 = vmatmul.f32.gmra.mxu0 %v3365
      %v3477 = vpop.f32.mrf.mxu0
      %v3478 = vadd.f32 %v3269, %v3477
      %3479 = vmatmul.f32.gmra.mxu0 %v3368
      %v3480 = vpop.f32.mrf.mxu0
      %v3481 = vadd.f32 %v3272, %v3480
      %3482 = vmatmul.f32.gmra.mxu0 %v3371
      %v3483 = vpop.f32.mrf.mxu0
      %v3484 = vadd.f32 %v3275, %v3483
      %3485 = vmatmul.f32.gmra.mxu0 %v3374
      %v3486 = vpop.f32.mrf.mxu0
      %v3487 = vadd.f32 %v3278, %v3486
      %3488 = vmatmul.f32.gmra.mxu0 %v3377
      %v3489 = vpop.f32.mrf.mxu0
      %v3490 = vadd.f32 %v3281, %v3489
      %3491 = vmatmul.f32.gmra.mxu0 %v3380
      %v3492 = vpop.f32.mrf.mxu0
      %v3493 = vadd.f32 %v3284, %v3492
      %3494 = vmatmul.f32.gmra.mxu0 %v3383
      %v3495 = vpop.f32.mrf.mxu0
      %v3496 = vadd.f32 %v3287, %v3495
      %3497 = vmatmul.f32.gmra.mxu0 %v3386
      %v3498 = vpop.f32.mrf.mxu0
      %v3499 = vadd.f32 %v3290, %v3498
      %3500 = vmatmul.f32.gmra.mxu0 %v3389
      %v3501 = vpop.f32.mrf.mxu0
      %v3502 = vadd.f32 %v3293, %v3501
      %3503 = vmatmul.f32.gmra.mxu0 %v3392
      %v3504 = vpop.f32.mrf.mxu0
      %v3505 = vadd.f32 %v3296, %v3504
      %3506 = vmatmul.f32.gmra.mxu0 %v3395
      %v3507 = vpop.f32.mrf.mxu0
      %v3508 = vadd.f32 %v3299, %v3507
      %3509 = vmatmul.f32.gmra.mxu0 %v3398
      %v3510 = vpop.f32.mrf.mxu0
      %v3511 = vadd.f32 %v3302, %v3510
      %3512 = vmatmul.f32.gmra.mxu0 %v3401
      %v3513 = vpop.f32.mrf.mxu0
      %v3514 = vadd.f32 %v3305, %v3513
      %3515 = vmatmul.f32.gmra.mxu0 %v3404
      %v3516 = vpop.f32.mrf.mxu0
      %v3517 = vadd.f32 %v3308, %v3516
      %3518 = vmatmul.f32.gmra.mxu0 %v3407
      %v3519 = vpop.f32.mrf.mxu0
      %v3520 = vadd.f32 %v3311, %v3519
      %3521 = vmatmul.f32.gmra.mxu0 %v3410
      %v3522 = vpop.f32.mrf.mxu0
      %v3523 = vadd.f32 %v3314, %v3522
      %3524 = vmatmul.f32.gmra.mxu0 %v3413
      %v3525 = vpop.f32.mrf.mxu0
      %v3526 = vadd.f32 %v3317, %v3525
      %3527 = vmatmul.f32.gmra.mxu0 %v3416
      %v3528 = vpop.f32.mrf.mxu0
      %v3529 = vadd.f32 %v3320, %v3528
      %3530 = vmatmul.f32.gmra.mxu0 %v3419
      %v3531 = vpop.f32.mrf.mxu0
      %v3532 = vadd.f32 %v3323, %v3531
      %3533 = vmatmul.f32.gmra.mxu0 %v3422
      %v3534 = vpop.f32.mrf.mxu0
      %v3535 = vadd.f32 %v3326, %v3534
      %3536 = vmatmul.f32.gmra.mxu0 %v3425
      %v3537 = vpop.f32.mrf.mxu0
      %v3538 = vadd.f32 %v3329, %v3537
      %3539 = vmatmul.f32.gmra.mxu0 %v3428
      %v3540 = vpop.f32.mrf.mxu0
      %v3541 = vadd.f32 %v3332, %v3540
      %3542 = vmatmul.f32.gmra.mxu0 %v3431
      %v3543 = vpop.f32.mrf.mxu0
      %v3544 = vadd.f32 %v3335, %v3543
      %3545 = vmatmul.f32.gmra.mxu0 %v3434
      %v3546 = vpop.f32.mrf.mxu0
      %v3547 = vadd.f32 %v3338, %v3546
      %3548 = vmatmul.f32.gmra.mxu0 %v3437
      %v3549 = vpop.f32.mrf.mxu0
      %v3550 = vadd.f32 %v3341, %v3549
      %3551 = vdwg.mxu0
      %v3552 = vld [vmem:[#allocation3 + $0x2] sm:$0xff]
      %v3553 = vld [vmem:[#allocation3 + $0xa] sm:$0xff]
      %v3554 = vld [vmem:[#allocation3 + $0x1a] sm:$0xff]
      %v3555 = vld [vmem:[#allocation3 + $0x22] sm:$0xff]
      %v3556 = vld [vmem:[#allocation3 + $0x32] sm:$0xff]
      %v3557 = vld [vmem:[#allocation3 + $0x3a] sm:$0xff]
      %v3558 = vld [vmem:[#allocation3 + $0x4a] sm:$0xff]
      %v3559 = vld [vmem:[#allocation3 + $0x52] sm:$0xff]
      %v3560 = vld [vmem:[#allocation3 + $0x62] sm:$0xff]
      %v3561 = vld [vmem:[#allocation3 + $0x6a] sm:$0xff]
      %v3562 = vld [vmem:[#allocation3 + $0x7a] sm:$0xff]
      %v3563 = vld [vmem:[#allocation3 + $0x82] sm:$0xff]
      %v3564 = vld [vmem:[#allocation3 + $0x92] sm:$0xff]
      %v3565 = vld [vmem:[#allocation3 + $0x9a] sm:$0xff]
      %v3566 = vld [vmem:[#allocation3 + $0xaa] sm:$0xff]
      %v3567 = vld [vmem:[#allocation3 + $0xb2] sm:$0xff]
      %v3568 = vld [vmem:[#allocation3 + $0xc2] sm:$0xff]
      %v3569 = vld [vmem:[#allocation3 + $0xca] sm:$0xff]
      %v3570 = vld [vmem:[#allocation3 + $0xda] sm:$0xff]
      %v3571 = vld [vmem:[#allocation3 + $0xe2] sm:$0xff]
      %v3572 = vld [vmem:[#allocation3 + $0xf2] sm:$0xff]
      %v3573 = vld [vmem:[#allocation3 + $0xfa] sm:$0xff]
      %v3574 = vld [vmem:[#allocation3 + $0x10a] sm:$0xff]
      %v3575 = vld [vmem:[#allocation3 + $0x112] sm:$0xff]
      %v3576 = vld [vmem:[#allocation3 + $0x122] sm:$0xff]
      %v3577 = vld [vmem:[#allocation3 + $0x12a] sm:$0xff]
      %v3578 = vld [vmem:[#allocation3 + $0x13a] sm:$0xff]
      %v3579 = vld [vmem:[#allocation3 + $0x142] sm:$0xff]
      %v3580 = vld [vmem:[#allocation3 + $0x152] sm:$0xff]
      %v3581 = vld [vmem:[#allocation3 + $0x15a] sm:$0xff]
      %v3582 = vld [vmem:[#allocation3 + $0x16a] sm:$0xff]
      %v3583 = vld [vmem:[#allocation3 + $0x172] sm:$0xff]
      %s3584 = scalar_lea.vmem %s4, 32
      %v3585 = vld [vmem:[%s3584] sm:$0xff]
      %v3586 = vld [vmem:[%s3584 + $0x8] sm:$0xff]
      %v3588 = vsel %vm365, %v3552, 0
      %v3591 = vsel %vm365, %v3553, 0
      %v3594 = vsel %vm365, %v3554, 0
      %v3597 = vsel %vm365, %v3555, 0
      %v3600 = vsel %vm365, %v3556, 0
      %v3603 = vsel %vm365, %v3557, 0
      %v3606 = vsel %vm365, %v3558, 0
      %v3609 = vsel %vm365, %v3559, 0
      %v3612 = vsel %vm365, %v3560, 0
      %v3615 = vsel %vm365, %v3561, 0
      %v3618 = vsel %vm365, %v3562, 0
      %v3621 = vsel %vm365, %v3563, 0
      %v3624 = vsel %vm365, %v3564, 0
      %v3627 = vsel %vm365, %v3565, 0
      %v3630 = vsel %vm365, %v3566, 0
      %v3633 = vsel %vm365, %v3567, 0
      %v3636 = vsel %vm365, %v3568, 0
      %v3639 = vsel %vm365, %v3569, 0
      %v3642 = vsel %vm365, %v3570, 0
      %v3645 = vsel %vm365, %v3571, 0
      %v3648 = vsel %vm365, %v3572, 0
      %v3651 = vsel %vm365, %v3573, 0
      %v3654 = vsel %vm365, %v3574, 0
      %v3657 = vsel %vm365, %v3575, 0
      %v3660 = vsel %vm365, %v3576, 0
      %v3663 = vsel %vm365, %v3577, 0
      %v3666 = vsel %vm365, %v3578, 0
      %v3669 = vsel %vm365, %v3579, 0
      %v3672 = vsel %vm365, %v3580, 0
      %v3675 = vsel %vm365, %v3581, 0
      %v3678 = vsel %vm365, %v3582, 0
      %v3681 = vsel %vm365, %v3583, 0
      %3683 = vmatpush.msra.mxu0 0.0
      %3684 = vmatpush.msra.mxu0 0.0
      %3685 = vmatpush.msra.mxu0 0.0
      %3686 = vmatpush.msra.mxu0 0.0
      %3687 = vmatpush.msra.mxu0 0.0
      %3688 = vmatpush.msra.mxu0 0.0
      %3689 = vmatpush.msra.mxu0 0.0
      %3690 = vmatpush.msra.mxu0 0.0
      %3691 = vmatpush.msra.mxu0 0.0
      %3692 = vmatpush.msra.mxu0 0.0
      %3693 = vmatpush.msra.mxu0 0.0
      %3694 = vmatpush.msra.mxu0 0.0
      %3695 = vmatpush.msra.mxu0 0.0
      %3696 = vmatpush.msra.mxu0 0.0
      %3697 = vmatpush.msra.mxu0 %v3586
      %3698 = vmatpush.msra.mxu0 %v3585
      %3699 = vmatmul.f32.gmra.mxu0 %v3588
      %v3700 = vpop.f32.mrf.mxu0
      %v3701 = vadd.f32 0.0, %v3700
      %3702 = vmatmul.f32.gmra.mxu0 %v3591
      %v3703 = vpop.f32.mrf.mxu0
      %v3704 = vadd.f32 0.0, %v3703
      %3705 = vmatmul.f32.gmra.mxu0 %v3594
      %v3706 = vpop.f32.mrf.mxu0
      %v3707 = vadd.f32 0.0, %v3706
      %3708 = vmatmul.f32.gmra.mxu0 %v3597
      %v3709 = vpop.f32.mrf.mxu0
      %v3710 = vadd.f32 0.0, %v3709
      %3711 = vmatmul.f32.gmra.mxu0 %v3600
      %v3712 = vpop.f32.mrf.mxu0
      %v3713 = vadd.f32 0.0, %v3712
      %3714 = vmatmul.f32.gmra.mxu0 %v3603
      %v3715 = vpop.f32.mrf.mxu0
      %v3716 = vadd.f32 0.0, %v3715
      %3717 = vmatmul.f32.gmra.mxu0 %v3606
      %v3718 = vpop.f32.mrf.mxu0
      %v3719 = vadd.f32 0.0, %v3718
      %3720 = vmatmul.f32.gmra.mxu0 %v3609
      %v3721 = vpop.f32.mrf.mxu0
      %v3722 = vadd.f32 0.0, %v3721
      %3723 = vmatmul.f32.gmra.mxu0 %v3612
      %v3724 = vpop.f32.mrf.mxu0
      %v3725 = vadd.f32 0.0, %v3724
      %3726 = vmatmul.f32.gmra.mxu0 %v3615
      %v3727 = vpop.f32.mrf.mxu0
      %v3728 = vadd.f32 0.0, %v3727
      %3729 = vmatmul.f32.gmra.mxu0 %v3618
      %v3730 = vpop.f32.mrf.mxu0
      %v3731 = vadd.f32 0.0, %v3730
      %3732 = vmatmul.f32.gmra.mxu0 %v3621
      %v3733 = vpop.f32.mrf.mxu0
      %v3734 = vadd.f32 0.0, %v3733
      %3735 = vmatmul.f32.gmra.mxu0 %v3624
      %v3736 = vpop.f32.mrf.mxu0
      %v3737 = vadd.f32 0.0, %v3736
      %3738 = vmatmul.f32.gmra.mxu0 %v3627
      %v3739 = vpop.f32.mrf.mxu0
      %v3740 = vadd.f32 0.0, %v3739
      %3741 = vmatmul.f32.gmra.mxu0 %v3630
      %v3742 = vpop.f32.mrf.mxu0
      %v3743 = vadd.f32 0.0, %v3742
      %3744 = vmatmul.f32.gmra.mxu0 %v3633
      %v3745 = vpop.f32.mrf.mxu0
      %v3746 = vadd.f32 0.0, %v3745
      %3747 = vmatmul.f32.gmra.mxu0 %v3636
      %v3748 = vpop.f32.mrf.mxu0
      %v3749 = vadd.f32 0.0, %v3748
      %3750 = vmatmul.f32.gmra.mxu0 %v3639
      %v3751 = vpop.f32.mrf.mxu0
      %v3752 = vadd.f32 0.0, %v3751
      %3753 = vmatmul.f32.gmra.mxu0 %v3642
      %v3754 = vpop.f32.mrf.mxu0
      %v3755 = vadd.f32 0.0, %v3754
      %3756 = vmatmul.f32.gmra.mxu0 %v3645
      %v3757 = vpop.f32.mrf.mxu0
      %v3758 = vadd.f32 0.0, %v3757
      %3759 = vmatmul.f32.gmra.mxu0 %v3648
      %v3760 = vpop.f32.mrf.mxu0
      %v3761 = vadd.f32 0.0, %v3760
      %3762 = vmatmul.f32.gmra.mxu0 %v3651
      %v3763 = vpop.f32.mrf.mxu0
      %v3764 = vadd.f32 0.0, %v3763
      %3765 = vmatmul.f32.gmra.mxu0 %v3654
      %v3766 = vpop.f32.mrf.mxu0
      %v3767 = vadd.f32 0.0, %v3766
      %3768 = vmatmul.f32.gmra.mxu0 %v3657
      %v3769 = vpop.f32.mrf.mxu0
      %v3770 = vadd.f32 0.0, %v3769
      %3771 = vmatmul.f32.gmra.mxu0 %v3660
      %v3772 = vpop.f32.mrf.mxu0
      %v3773 = vadd.f32 0.0, %v3772
      %3774 = vmatmul.f32.gmra.mxu0 %v3663
      %v3775 = vpop.f32.mrf.mxu0
      %v3776 = vadd.f32 0.0, %v3775
      %3777 = vmatmul.f32.gmra.mxu0 %v3666
      %v3778 = vpop.f32.mrf.mxu0
      %v3779 = vadd.f32 0.0, %v3778
      %3780 = vmatmul.f32.gmra.mxu0 %v3669
      %v3781 = vpop.f32.mrf.mxu0
      %v3782 = vadd.f32 0.0, %v3781
      %3783 = vmatmul.f32.gmra.mxu0 %v3672
      %v3784 = vpop.f32.mrf.mxu0
      %v3785 = vadd.f32 0.0, %v3784
      %3786 = vmatmul.f32.gmra.mxu0 %v3675
      %v3787 = vpop.f32.mrf.mxu0
      %v3788 = vadd.f32 0.0, %v3787
      %3789 = vmatmul.f32.gmra.mxu0 %v3678
      %v3790 = vpop.f32.mrf.mxu0
      %v3791 = vadd.f32 0.0, %v3790
      %3792 = vmatmul.f32.gmra.mxu0 %v3681
      %v3793 = vpop.f32.mrf.mxu0
      %v3794 = vadd.f32 0.0, %v3793
      %3795 = vdwg.mxu0
      %v3796 = vadd.f32 %v3457, %v3701
      %v3797 = vadd.f32 %v3460, %v3704
      %v3798 = vadd.f32 %v3463, %v3707
      %v3799 = vadd.f32 %v3466, %v3710
      %v3800 = vadd.f32 %v3469, %v3713
      %v3801 = vadd.f32 %v3472, %v3716
      %v3802 = vadd.f32 %v3475, %v3719
      %v3803 = vadd.f32 %v3478, %v3722
      %v3804 = vadd.f32 %v3481, %v3725
      %v3805 = vadd.f32 %v3484, %v3728
      %v3806 = vadd.f32 %v3487, %v3731
      %v3807 = vadd.f32 %v3490, %v3734
      %v3808 = vadd.f32 %v3493, %v3737
      %v3809 = vadd.f32 %v3496, %v3740
      %v3810 = vadd.f32 %v3499, %v3743
      %v3811 = vadd.f32 %v3502, %v3746
      %v3812 = vadd.f32 %v3505, %v3749
      %v3813 = vadd.f32 %v3508, %v3752
      %v3814 = vadd.f32 %v3511, %v3755
      %v3815 = vadd.f32 %v3514, %v3758
      %v3816 = vadd.f32 %v3517, %v3761
      %v3817 = vadd.f32 %v3520, %v3764
      %v3818 = vadd.f32 %v3523, %v3767
      %v3819 = vadd.f32 %v3526, %v3770
      %v3820 = vadd.f32 %v3529, %v3773
      %v3821 = vadd.f32 %v3532, %v3776
      %v3822 = vadd.f32 %v3535, %v3779
      %v3823 = vadd.f32 %v3538, %v3782
      %v3824 = vadd.f32 %v3541, %v3785
      %v3825 = vadd.f32 %v3544, %v3788
      %v3826 = vadd.f32 %v3547, %v3791
      %v3827 = vadd.f32 %v3550, %v3794
      %v3828 = vld [vmem:[%s3032] sm:$0xff]
      %v3829 = vld [vmem:[%s3032 + $0x8] sm:$0xff]
      %v3830 = vld [vmem:[%s3032 + $0x18] sm:$0xff]
      %v3831 = vld [vmem:[%s3032 + $0x20] sm:$0xff]
      %v3832 = vld [vmem:[%s3032 + $0x30] sm:$0xff]
      %v3833 = vld [vmem:[%s3032 + $0x38] sm:$0xff]
      %v3834 = vld [vmem:[%s3032 + $0x48] sm:$0xff]
      %v3835 = vld [vmem:[%s3032 + $0x50] sm:$0xff]
      %v3836 = vld [vmem:[%s3032 + $0x60] sm:$0xff]
      %v3837 = vld [vmem:[%s3032 + $0x68] sm:$0xff]
      %v3838 = vld [vmem:[%s3032 + $0x78] sm:$0xff]
      %v3839 = vld [vmem:[%s3032 + $0x80] sm:$0xff]
      %v3840 = vld [vmem:[%s3032 + $0x90] sm:$0xff]
      %v3841 = vld [vmem:[%s3032 + $0x98] sm:$0xff]
      %v3842 = vld [vmem:[%s3032 + $0xa8] sm:$0xff]
      %v3843 = vld [vmem:[%s3032 + $0xb0] sm:$0xff]
      %v3844 = vld [vmem:[%s3032 + $0xc0] sm:$0xff]
      %v3845 = vld [vmem:[%s3032 + $0xc8] sm:$0xff]
      %v3846 = vld [vmem:[%s3032 + $0xd8] sm:$0xff]
      %v3847 = vld [vmem:[%s3032 + $0xe0] sm:$0xff]
      %v3848 = vld [vmem:[%s3032 + $0xf0] sm:$0xff]
      %v3849 = vld [vmem:[%s3032 + $0xf8] sm:$0xff]
      %v3850 = vld [vmem:[%s3032 + $0x108] sm:$0xff]
      %v3851 = vld [vmem:[%s3032 + $0x110] sm:$0xff]
      %v3852 = vld [vmem:[%s3032 + $0x120] sm:$0xff]
      %v3853 = vld [vmem:[%s3032 + $0x128] sm:$0xff]
      %v3854 = vld [vmem:[%s3032 + $0x138] sm:$0xff]
      %v3855 = vld [vmem:[%s3032 + $0x140] sm:$0xff]
      %v3856 = vld [vmem:[%s3032 + $0x150] sm:$0xff]
      %v3857 = vld [vmem:[%s3032 + $0x158] sm:$0xff]
      %v3858 = vld [vmem:[%s3032 + $0x168] sm:$0xff]
      %v3859 = vld [vmem:[%s3032 + $0x170] sm:$0xff]
      %s3860 = scalar_lea.vmem %s4, 48
      %v3861 = vld [vmem:[%s3860] sm:$0xff]
      %v3862 = vld [vmem:[%s3860 + $0x8] sm:$0xff]
      %v3864 = vsel %vm365, %v3828, 0
      %v3867 = vsel %vm365, %v3829, 0
      %v3870 = vsel %vm365, %v3830, 0
      %v3873 = vsel %vm365, %v3831, 0
      %v3876 = vsel %vm365, %v3832, 0
      %v3879 = vsel %vm365, %v3833, 0
      %v3882 = vsel %vm365, %v3834, 0
      %v3885 = vsel %vm365, %v3835, 0
      %v3888 = vsel %vm365, %v3836, 0
      %v3891 = vsel %vm365, %v3837, 0
      %v3894 = vsel %vm365, %v3838, 0
      %v3897 = vsel %vm365, %v3839, 0
      %v3900 = vsel %vm365, %v3840, 0
      %v3903 = vsel %vm365, %v3841, 0
      %v3906 = vsel %vm365, %v3842, 0
      %v3909 = vsel %vm365, %v3843, 0
      %v3912 = vsel %vm365, %v3844, 0
      %v3915 = vsel %vm365, %v3845, 0
      %v3918 = vsel %vm365, %v3846, 0
      %v3921 = vsel %vm365, %v3847, 0
      %v3924 = vsel %vm365, %v3848, 0
      %v3927 = vsel %vm365, %v3849, 0
      %v3930 = vsel %vm365, %v3850, 0
      %v3933 = vsel %vm365, %v3851, 0
      %v3936 = vsel %vm365, %v3852, 0
      %v3939 = vsel %vm365, %v3853, 0
      %v3942 = vsel %vm365, %v3854, 0
      %v3945 = vsel %vm365, %v3855, 0
      %v3948 = vsel %vm365, %v3856, 0
      %v3951 = vsel %vm365, %v3857, 0
      %v3954 = vsel %vm365, %v3858, 0
      %v3957 = vsel %vm365, %v3859, 0
      %3959 = vmatpush.msra.mxu0 0.0
      %3960 = vmatpush.msra.mxu0 0.0
      %3961 = vmatpush.msra.mxu0 0.0
      %3962 = vmatpush.msra.mxu0 0.0
      %3963 = vmatpush.msra.mxu0 0.0
      %3964 = vmatpush.msra.mxu0 0.0
      %3965 = vmatpush.msra.mxu0 0.0
      %3966 = vmatpush.msra.mxu0 0.0
      %3967 = vmatpush.msra.mxu0 0.0
      %3968 = vmatpush.msra.mxu0 0.0
      %3969 = vmatpush.msra.mxu0 0.0
      %3970 = vmatpush.msra.mxu0 0.0
      %3971 = vmatpush.msra.mxu0 0.0
      %3972 = vmatpush.msra.mxu0 0.0
      %3973 = vmatpush.msra.mxu0 %v3862
      %3974 = vmatpush.msra.mxu0 %v3861
      %3975 = vmatmul.f32.gmra.mxu0 %v3864
      %v3976 = vpop.f32.mrf.mxu0
      %v3977 = vadd.f32 0.0, %v3976
      %3978 = vmatmul.f32.gmra.mxu0 %v3867
      %v3979 = vpop.f32.mrf.mxu0
      %v3980 = vadd.f32 0.0, %v3979
      %3981 = vmatmul.f32.gmra.mxu0 %v3870
      %v3982 = vpop.f32.mrf.mxu0
      %v3983 = vadd.f32 0.0, %v3982
      %3984 = vmatmul.f32.gmra.mxu0 %v3873
      %v3985 = vpop.f32.mrf.mxu0
      %v3986 = vadd.f32 0.0, %v3985
      %3987 = vmatmul.f32.gmra.mxu0 %v3876
      %v3988 = vpop.f32.mrf.mxu0
      %v3989 = vadd.f32 0.0, %v3988
      %3990 = vmatmul.f32.gmra.mxu0 %v3879
      %v3991 = vpop.f32.mrf.mxu0
      %v3992 = vadd.f32 0.0, %v3991
      %3993 = vmatmul.f32.gmra.mxu0 %v3882
      %v3994 = vpop.f32.mrf.mxu0
      %v3995 = vadd.f32 0.0, %v3994
      %3996 = vmatmul.f32.gmra.mxu0 %v3885
      %v3997 = vpop.f32.mrf.mxu0
      %v3998 = vadd.f32 0.0, %v3997
      %3999 = vmatmul.f32.gmra.mxu0 %v3888
      %v4000 = vpop.f32.mrf.mxu0
      %v4001 = vadd.f32 0.0, %v4000
      %4002 = vmatmul.f32.gmra.mxu0 %v3891
      %v4003 = vpop.f32.mrf.mxu0
      %v4004 = vadd.f32 0.0, %v4003
      %4005 = vmatmul.f32.gmra.mxu0 %v3894
      %v4006 = vpop.f32.mrf.mxu0
      %v4007 = vadd.f32 0.0, %v4006
      %4008 = vmatmul.f32.gmra.mxu0 %v3897
      %v4009 = vpop.f32.mrf.mxu0
      %v4010 = vadd.f32 0.0, %v4009
      %4011 = vmatmul.f32.gmra.mxu0 %v3900
      %v4012 = vpop.f32.mrf.mxu0
      %v4013 = vadd.f32 0.0, %v4012
      %4014 = vmatmul.f32.gmra.mxu0 %v3903
      %v4015 = vpop.f32.mrf.mxu0
      %v4016 = vadd.f32 0.0, %v4015
      %4017 = vmatmul.f32.gmra.mxu0 %v3906
      %v4018 = vpop.f32.mrf.mxu0
      %v4019 = vadd.f32 0.0, %v4018
      %4020 = vmatmul.f32.gmra.mxu0 %v3909
      %v4021 = vpop.f32.mrf.mxu0
      %v4022 = vadd.f32 0.0, %v4021
      %4023 = vmatmul.f32.gmra.mxu0 %v3912
      %v4024 = vpop.f32.mrf.mxu0
      %v4025 = vadd.f32 0.0, %v4024
      %4026 = vmatmul.f32.gmra.mxu0 %v3915
      %v4027 = vpop.f32.mrf.mxu0
      %v4028 = vadd.f32 0.0, %v4027
      %4029 = vmatmul.f32.gmra.mxu0 %v3918
      %v4030 = vpop.f32.mrf.mxu0
      %v4031 = vadd.f32 0.0, %v4030
      %4032 = vmatmul.f32.gmra.mxu0 %v3921
      %v4033 = vpop.f32.mrf.mxu0
      %v4034 = vadd.f32 0.0, %v4033
      %4035 = vmatmul.f32.gmra.mxu0 %v3924
      %v4036 = vpop.f32.mrf.mxu0
      %v4037 = vadd.f32 0.0, %v4036
      %4038 = vmatmul.f32.gmra.mxu0 %v3927
      %v4039 = vpop.f32.mrf.mxu0
      %v4040 = vadd.f32 0.0, %v4039
      %4041 = vmatmul.f32.gmra.mxu0 %v3930
      %v4042 = vpop.f32.mrf.mxu0
      %v4043 = vadd.f32 0.0, %v4042
      %4044 = vmatmul.f32.gmra.mxu0 %v3933
      %v4045 = vpop.f32.mrf.mxu0
      %v4046 = vadd.f32 0.0, %v4045
      %4047 = vmatmul.f32.gmra.mxu0 %v3936
      %v4048 = vpop.f32.mrf.mxu0
      %v4049 = vadd.f32 0.0, %v4048
      %4050 = vmatmul.f32.gmra.mxu0 %v3939
      %v4051 = vpop.f32.mrf.mxu0
      %v4052 = vadd.f32 0.0, %v4051
      %4053 = vmatmul.f32.gmra.mxu0 %v3942
      %v4054 = vpop.f32.mrf.mxu0
      %v4055 = vadd.f32 0.0, %v4054
      %4056 = vmatmul.f32.gmra.mxu0 %v3945
      %v4057 = vpop.f32.mrf.mxu0
      %v4058 = vadd.f32 0.0, %v4057
      %4059 = vmatmul.f32.gmra.mxu0 %v3948
      %v4060 = vpop.f32.mrf.mxu0
      %v4061 = vadd.f32 0.0, %v4060
      %4062 = vmatmul.f32.gmra.mxu0 %v3951
      %v4063 = vpop.f32.mrf.mxu0
      %v4064 = vadd.f32 0.0, %v4063
      %4065 = vmatmul.f32.gmra.mxu0 %v3954
      %v4066 = vpop.f32.mrf.mxu0
      %v4067 = vadd.f32 0.0, %v4066
      %4068 = vmatmul.f32.gmra.mxu0 %v3957
      %v4069 = vpop.f32.mrf.mxu0
      %v4070 = vadd.f32 0.0, %v4069
      %4071 = vdwg.mxu0
      %v4072 = vadd.f32 %v3796, %v3977
      %v4073 = vadd.f32 %v3797, %v3980
      %v4074 = vadd.f32 %v3798, %v3983
      %v4075 = vadd.f32 %v3799, %v3986
      %v4076 = vadd.f32 %v3800, %v3989
      %v4077 = vadd.f32 %v3801, %v3992
      %v4078 = vadd.f32 %v3802, %v3995
      %v4079 = vadd.f32 %v3803, %v3998
      %v4080 = vadd.f32 %v3804, %v4001
      %v4081 = vadd.f32 %v3805, %v4004
      %v4082 = vadd.f32 %v3806, %v4007
      %v4083 = vadd.f32 %v3807, %v4010
      %v4084 = vadd.f32 %v3808, %v4013
      %v4085 = vadd.f32 %v3809, %v4016
      %v4086 = vadd.f32 %v3810, %v4019
      %v4087 = vadd.f32 %v3811, %v4022
      %v4088 = vadd.f32 %v3812, %v4025
      %v4089 = vadd.f32 %v3813, %v4028
      %v4090 = vadd.f32 %v3814, %v4031
      %v4091 = vadd.f32 %v3815, %v4034
      %v4092 = vadd.f32 %v3816, %v4037
      %v4093 = vadd.f32 %v3817, %v4040
      %v4094 = vadd.f32 %v3818, %v4043
      %v4095 = vadd.f32 %v3819, %v4046
      %v4096 = vadd.f32 %v3820, %v4049
      %v4097 = vadd.f32 %v3821, %v4052
      %v4098 = vadd.f32 %v3822, %v4055
      %v4099 = vadd.f32 %v3823, %v4058
      %v4100 = vadd.f32 %v3824, %v4061
      %v4101 = vadd.f32 %v3825, %v4064
      %v4102 = vadd.f32 %v3826, %v4067
      %v4103 = vadd.f32 %v3827, %v4070
      %v4104 = vld [vmem:[%s3032 + $0x1] sm:$0xff]
      %v4105 = vld [vmem:[%s3032 + $0x9] sm:$0xff]
      %v4106 = vld [vmem:[%s3032 + $0x19] sm:$0xff]
      %v4107 = vld [vmem:[%s3032 + $0x21] sm:$0xff]
      %v4108 = vld [vmem:[%s3032 + $0x31] sm:$0xff]
      %v4109 = vld [vmem:[%s3032 + $0x39] sm:$0xff]
      %v4110 = vld [vmem:[%s3032 + $0x49] sm:$0xff]
      %v4111 = vld [vmem:[%s3032 + $0x51] sm:$0xff]
      %v4112 = vld [vmem:[%s3032 + $0x61] sm:$0xff]
      %v4113 = vld [vmem:[%s3032 + $0x69] sm:$0xff]
      %v4114 = vld [vmem:[%s3032 + $0x79] sm:$0xff]
      %v4115 = vld [vmem:[%s3032 + $0x81] sm:$0xff]
      %v4116 = vld [vmem:[%s3032 + $0x91] sm:$0xff]
      %v4117 = vld [vmem:[%s3032 + $0x99] sm:$0xff]
      %v4118 = vld [vmem:[%s3032 + $0xa9] sm:$0xff]
      %v4119 = vld [vmem:[%s3032 + $0xb1] sm:$0xff]
      %v4120 = vld [vmem:[%s3032 + $0xc1] sm:$0xff]
      %v4121 = vld [vmem:[%s3032 + $0xc9] sm:$0xff]
      %v4122 = vld [vmem:[%s3032 + $0xd9] sm:$0xff]
      %v4123 = vld [vmem:[%s3032 + $0xe1] sm:$0xff]
      %v4124 = vld [vmem:[%s3032 + $0xf1] sm:$0xff]
      %v4125 = vld [vmem:[%s3032 + $0xf9] sm:$0xff]
      %v4126 = vld [vmem:[%s3032 + $0x109] sm:$0xff]
      %v4127 = vld [vmem:[%s3032 + $0x111] sm:$0xff]
      %v4128 = vld [vmem:[%s3032 + $0x121] sm:$0xff]
      %v4129 = vld [vmem:[%s3032 + $0x129] sm:$0xff]
      %v4130 = vld [vmem:[%s3032 + $0x139] sm:$0xff]
      %v4131 = vld [vmem:[%s3032 + $0x141] sm:$0xff]
      %v4132 = vld [vmem:[%s3032 + $0x151] sm:$0xff]
      %v4133 = vld [vmem:[%s3032 + $0x159] sm:$0xff]
      %v4134 = vld [vmem:[%s3032 + $0x169] sm:$0xff]
      %v4135 = vld [vmem:[%s3032 + $0x171] sm:$0xff]
      %s4136 = scalar_lea.vmem %s4, 64
      %v4137 = vld [vmem:[%s4136] sm:$0xff]
      %v4138 = vld [vmem:[%s4136 + $0x8] sm:$0xff]
      %v4140 = vsel %vm365, %v4104, 0
      %v4143 = vsel %vm365, %v4105, 0
      %v4146 = vsel %vm365, %v4106, 0
      %v4149 = vsel %vm365, %v4107, 0
      %v4152 = vsel %vm365, %v4108, 0
      %v4155 = vsel %vm365, %v4109, 0
      %v4158 = vsel %vm365, %v4110, 0
      %v4161 = vsel %vm365, %v4111, 0
      %v4164 = vsel %vm365, %v4112, 0
      %v4167 = vsel %vm365, %v4113, 0
      %v4170 = vsel %vm365, %v4114, 0
      %v4173 = vsel %vm365, %v4115, 0
      %v4176 = vsel %vm365, %v4116, 0
      %v4179 = vsel %vm365, %v4117, 0
      %v4182 = vsel %vm365, %v4118, 0
      %v4185 = vsel %vm365, %v4119, 0
      %v4188 = vsel %vm365, %v4120, 0
      %v4191 = vsel %vm365, %v4121, 0
      %v4194 = vsel %vm365, %v4122, 0
      %v4197 = vsel %vm365, %v4123, 0
      %v4200 = vsel %vm365, %v4124, 0
      %v4203 = vsel %vm365, %v4125, 0
      %v4206 = vsel %vm365, %v4126, 0
      %v4209 = vsel %vm365, %v4127, 0
      %v4212 = vsel %vm365, %v4128, 0
      %v4215 = vsel %vm365, %v4129, 0
      %v4218 = vsel %vm365, %v4130, 0
      %v4221 = vsel %vm365, %v4131, 0
      %v4224 = vsel %vm365, %v4132, 0
      %v4227 = vsel %vm365, %v4133, 0
      %v4230 = vsel %vm365, %v4134, 0
      %v4233 = vsel %vm365, %v4135, 0
      %4235 = vmatpush.msra.mxu0 0.0
      %4236 = vmatpush.msra.mxu0 0.0
      %4237 = vmatpush.msra.mxu0 0.0
      %4238 = vmatpush.msra.mxu0 0.0
      %4239 = vmatpush.msra.mxu0 0.0
      %4240 = vmatpush.msra.mxu0 0.0
      %4241 = vmatpush.msra.mxu0 0.0
      %4242 = vmatpush.msra.mxu0 0.0
      %4243 = vmatpush.msra.mxu0 0.0
      %4244 = vmatpush.msra.mxu0 0.0
      %4245 = vmatpush.msra.mxu0 0.0
      %4246 = vmatpush.msra.mxu0 0.0
      %4247 = vmatpush.msra.mxu0 0.0
      %4248 = vmatpush.msra.mxu0 0.0
      %4249 = vmatpush.msra.mxu0 %v4138
      %4250 = vmatpush.msra.mxu0 %v4137
      %4251 = vmatmul.f32.gmra.mxu0 %v4140
      %v4252 = vpop.f32.mrf.mxu0
      %v4253 = vadd.f32 0.0, %v4252
      %4254 = vmatmul.f32.gmra.mxu0 %v4143
      %v4255 = vpop.f32.mrf.mxu0
      %v4256 = vadd.f32 0.0, %v4255
      %4257 = vmatmul.f32.gmra.mxu0 %v4146
      %v4258 = vpop.f32.mrf.mxu0
      %v4259 = vadd.f32 0.0, %v4258
      %4260 = vmatmul.f32.gmra.mxu0 %v4149
      %v4261 = vpop.f32.mrf.mxu0
      %v4262 = vadd.f32 0.0, %v4261
      %4263 = vmatmul.f32.gmra.mxu0 %v4152
      %v4264 = vpop.f32.mrf.mxu0
      %v4265 = vadd.f32 0.0, %v4264
      %4266 = vmatmul.f32.gmra.mxu0 %v4155
      %v4267 = vpop.f32.mrf.mxu0
      %v4268 = vadd.f32 0.0, %v4267
      %4269 = vmatmul.f32.gmra.mxu0 %v4158
      %v4270 = vpop.f32.mrf.mxu0
      %v4271 = vadd.f32 0.0, %v4270
      %4272 = vmatmul.f32.gmra.mxu0 %v4161
      %v4273 = vpop.f32.mrf.mxu0
      %v4274 = vadd.f32 0.0, %v4273
      %4275 = vmatmul.f32.gmra.mxu0 %v4164
      %v4276 = vpop.f32.mrf.mxu0
      %v4277 = vadd.f32 0.0, %v4276
      %4278 = vmatmul.f32.gmra.mxu0 %v4167
      %v4279 = vpop.f32.mrf.mxu0
      %v4280 = vadd.f32 0.0, %v4279
      %4281 = vmatmul.f32.gmra.mxu0 %v4170
      %v4282 = vpop.f32.mrf.mxu0
      %v4283 = vadd.f32 0.0, %v4282
      %4284 = vmatmul.f32.gmra.mxu0 %v4173
      %v4285 = vpop.f32.mrf.mxu0
      %v4286 = vadd.f32 0.0, %v4285
      %4287 = vmatmul.f32.gmra.mxu0 %v4176
      %v4288 = vpop.f32.mrf.mxu0
      %v4289 = vadd.f32 0.0, %v4288
      %4290 = vmatmul.f32.gmra.mxu0 %v4179
      %v4291 = vpop.f32.mrf.mxu0
      %v4292 = vadd.f32 0.0, %v4291
      %4293 = vmatmul.f32.gmra.mxu0 %v4182
      %v4294 = vpop.f32.mrf.mxu0
      %v4295 = vadd.f32 0.0, %v4294
      %4296 = vmatmul.f32.gmra.mxu0 %v4185
      %v4297 = vpop.f32.mrf.mxu0
      %v4298 = vadd.f32 0.0, %v4297
      %4299 = vmatmul.f32.gmra.mxu0 %v4188
      %v4300 = vpop.f32.mrf.mxu0
      %v4301 = vadd.f32 0.0, %v4300
      %4302 = vmatmul.f32.gmra.mxu0 %v4191
      %v4303 = vpop.f32.mrf.mxu0
      %v4304 = vadd.f32 0.0, %v4303
      %4305 = vmatmul.f32.gmra.mxu0 %v4194
      %v4306 = vpop.f32.mrf.mxu0
      %v4307 = vadd.f32 0.0, %v4306
      %4308 = vmatmul.f32.gmra.mxu0 %v4197
      %v4309 = vpop.f32.mrf.mxu0
      %v4310 = vadd.f32 0.0, %v4309
      %4311 = vmatmul.f32.gmra.mxu0 %v4200
      %v4312 = vpop.f32.mrf.mxu0
      %v4313 = vadd.f32 0.0, %v4312
      %4314 = vmatmul.f32.gmra.mxu0 %v4203
      %v4315 = vpop.f32.mrf.mxu0
      %v4316 = vadd.f32 0.0, %v4315
      %4317 = vmatmul.f32.gmra.mxu0 %v4206
      %v4318 = vpop.f32.mrf.mxu0
      %v4319 = vadd.f32 0.0, %v4318
      %4320 = vmatmul.f32.gmra.mxu0 %v4209
      %v4321 = vpop.f32.mrf.mxu0
      %v4322 = vadd.f32 0.0, %v4321
      %4323 = vmatmul.f32.gmra.mxu0 %v4212
      %v4324 = vpop.f32.mrf.mxu0
      %v4325 = vadd.f32 0.0, %v4324
      %4326 = vmatmul.f32.gmra.mxu0 %v4215
      %v4327 = vpop.f32.mrf.mxu0
      %v4328 = vadd.f32 0.0, %v4327
      %4329 = vmatmul.f32.gmra.mxu0 %v4218
      %v4330 = vpop.f32.mrf.mxu0
      %v4331 = vadd.f32 0.0, %v4330
      %4332 = vmatmul.f32.gmra.mxu0 %v4221
      %v4333 = vpop.f32.mrf.mxu0
      %v4334 = vadd.f32 0.0, %v4333
      %4335 = vmatmul.f32.gmra.mxu0 %v4224
      %v4336 = vpop.f32.mrf.mxu0
      %v4337 = vadd.f32 0.0, %v4336
      %4338 = vmatmul.f32.gmra.mxu0 %v4227
      %v4339 = vpop.f32.mrf.mxu0
      %v4340 = vadd.f32 0.0, %v4339
      %4341 = vmatmul.f32.gmra.mxu0 %v4230
      %v4342 = vpop.f32.mrf.mxu0
      %v4343 = vadd.f32 0.0, %v4342
      %4344 = vmatmul.f32.gmra.mxu0 %v4233
      %v4345 = vpop.f32.mrf.mxu0
      %v4346 = vadd.f32 0.0, %v4345
      %4347 = vdwg.mxu0
      %v4348 = vadd.f32 %v4072, %v4253
      %v4349 = vadd.f32 %v4073, %v4256
      %v4350 = vadd.f32 %v4074, %v4259
      %v4351 = vadd.f32 %v4075, %v4262
      %v4352 = vadd.f32 %v4076, %v4265
      %v4353 = vadd.f32 %v4077, %v4268
      %v4354 = vadd.f32 %v4078, %v4271
      %v4355 = vadd.f32 %v4079, %v4274
      %v4356 = vadd.f32 %v4080, %v4277
      %v4357 = vadd.f32 %v4081, %v4280
      %v4358 = vadd.f32 %v4082, %v4283
      %v4359 = vadd.f32 %v4083, %v4286
      %v4360 = vadd.f32 %v4084, %v4289
      %v4361 = vadd.f32 %v4085, %v4292
      %v4362 = vadd.f32 %v4086, %v4295
      %v4363 = vadd.f32 %v4087, %v4298
      %v4364 = vadd.f32 %v4088, %v4301
      %v4365 = vadd.f32 %v4089, %v4304
      %v4366 = vadd.f32 %v4090, %v4307
      %v4367 = vadd.f32 %v4091, %v4310
      %v4368 = vadd.f32 %v4092, %v4313
      %v4369 = vadd.f32 %v4093, %v4316
      %v4370 = vadd.f32 %v4094, %v4319
      %v4371 = vadd.f32 %v4095, %v4322
      %v4372 = vadd.f32 %v4096, %v4325
      %v4373 = vadd.f32 %v4097, %v4328
      %v4374 = vadd.f32 %v4098, %v4331
      %v4375 = vadd.f32 %v4099, %v4334
      %v4376 = vadd.f32 %v4100, %v4337
      %v4377 = vadd.f32 %v4101, %v4340
      %v4378 = vadd.f32 %v4102, %v4343
      %v4379 = vadd.f32 %v4103, %v4346
      %v4380 = vld [vmem:[%s3032 + $0x2] sm:$0xff]
      %v4381 = vld [vmem:[%s3032 + $0xa] sm:$0xff]
      %v4382 = vld [vmem:[%s3032 + $0x1a] sm:$0xff]
      %v4383 = vld [vmem:[%s3032 + $0x22] sm:$0xff]
      %v4384 = vld [vmem:[%s3032 + $0x32] sm:$0xff]
      %v4385 = vld [vmem:[%s3032 + $0x3a] sm:$0xff]
      %v4386 = vld [vmem:[%s3032 + $0x4a] sm:$0xff]
      %v4387 = vld [vmem:[%s3032 + $0x52] sm:$0xff]
      %v4388 = vld [vmem:[%s3032 + $0x62] sm:$0xff]
      %v4389 = vld [vmem:[%s3032 + $0x6a] sm:$0xff]
      %v4390 = vld [vmem:[%s3032 + $0x7a] sm:$0xff]
      %v4391 = vld [vmem:[%s3032 + $0x82] sm:$0xff]
      %v4392 = vld [vmem:[%s3032 + $0x92] sm:$0xff]
      %v4393 = vld [vmem:[%s3032 + $0x9a] sm:$0xff]
      %v4394 = vld [vmem:[%s3032 + $0xaa] sm:$0xff]
      %v4395 = vld [vmem:[%s3032 + $0xb2] sm:$0xff]
      %v4396 = vld [vmem:[%s3032 + $0xc2] sm:$0xff]
      %v4397 = vld [vmem:[%s3032 + $0xca] sm:$0xff]
      %v4398 = vld [vmem:[%s3032 + $0xda] sm:$0xff]
      %v4399 = vld [vmem:[%s3032 + $0xe2] sm:$0xff]
      %v4400 = vld [vmem:[%s3032 + $0xf2] sm:$0xff]
      %v4401 = vld [vmem:[%s3032 + $0xfa] sm:$0xff]
      %v4402 = vld [vmem:[%s3032 + $0x10a] sm:$0xff]
      %v4403 = vld [vmem:[%s3032 + $0x112] sm:$0xff]
      %v4404 = vld [vmem:[%s3032 + $0x122] sm:$0xff]
      %v4405 = vld [vmem:[%s3032 + $0x12a] sm:$0xff]
      %v4406 = vld [vmem:[%s3032 + $0x13a] sm:$0xff]
      %v4407 = vld [vmem:[%s3032 + $0x142] sm:$0xff]
      %v4408 = vld [vmem:[%s3032 + $0x152] sm:$0xff]
      %v4409 = vld [vmem:[%s3032 + $0x15a] sm:$0xff]
      %v4410 = vld [vmem:[%s3032 + $0x16a] sm:$0xff]
      %v4411 = vld [vmem:[%s3032 + $0x172] sm:$0xff]
      %s4412 = scalar_lea.vmem %s4, 80
      %v4413 = vld [vmem:[%s4412] sm:$0xff]
      %v4414 = vld [vmem:[%s4412 + $0x8] sm:$0xff]
      %v4416 = vsel %vm365, %v4380, 0
      %v4419 = vsel %vm365, %v4381, 0
      %v4422 = vsel %vm365, %v4382, 0
      %v4425 = vsel %vm365, %v4383, 0
      %v4428 = vsel %vm365, %v4384, 0
      %v4431 = vsel %vm365, %v4385, 0
      %v4434 = vsel %vm365, %v4386, 0
      %v4437 = vsel %vm365, %v4387, 0
      %v4440 = vsel %vm365, %v4388, 0
      %v4443 = vsel %vm365, %v4389, 0
      %v4446 = vsel %vm365, %v4390, 0
      %v4449 = vsel %vm365, %v4391, 0
      %v4452 = vsel %vm365, %v4392, 0
      %v4455 = vsel %vm365, %v4393, 0
      %v4458 = vsel %vm365, %v4394, 0
      %v4461 = vsel %vm365, %v4395, 0
      %v4464 = vsel %vm365, %v4396, 0
      %v4467 = vsel %vm365, %v4397, 0
      %v4470 = vsel %vm365, %v4398, 0
      %v4473 = vsel %vm365, %v4399, 0
      %v4476 = vsel %vm365, %v4400, 0
      %v4479 = vsel %vm365, %v4401, 0
      %v4482 = vsel %vm365, %v4402, 0
      %v4485 = vsel %vm365, %v4403, 0
      %v4488 = vsel %vm365, %v4404, 0
      %v4491 = vsel %vm365, %v4405, 0
      %v4494 = vsel %vm365, %v4406, 0
      %v4497 = vsel %vm365, %v4407, 0
      %v4500 = vsel %vm365, %v4408, 0
      %v4503 = vsel %vm365, %v4409, 0
      %v4506 = vsel %vm365, %v4410, 0
      %v4509 = vsel %vm365, %v4411, 0
      %4511 = vmatpush.msra.mxu0 0.0
      %4512 = vmatpush.msra.mxu0 0.0
      %4513 = vmatpush.msra.mxu0 0.0
      %4514 = vmatpush.msra.mxu0 0.0
      %4515 = vmatpush.msra.mxu0 0.0
      %4516 = vmatpush.msra.mxu0 0.0
      %4517 = vmatpush.msra.mxu0 0.0
      %4518 = vmatpush.msra.mxu0 0.0
      %4519 = vmatpush.msra.mxu0 0.0
      %4520 = vmatpush.msra.mxu0 0.0
      %4521 = vmatpush.msra.mxu0 0.0
      %4522 = vmatpush.msra.mxu0 0.0
      %4523 = vmatpush.msra.mxu0 0.0
      %4524 = vmatpush.msra.mxu0 0.0
      %4525 = vmatpush.msra.mxu0 %v4414
      %4526 = vmatpush.msra.mxu0 %v4413
      %4527 = vmatmul.f32.gmra.mxu0 %v4416
      %v4528 = vpop.f32.mrf.mxu0
      %v4529 = vadd.f32 0.0, %v4528
      %4530 = vmatmul.f32.gmra.mxu0 %v4419
      %v4531 = vpop.f32.mrf.mxu0
      %v4532 = vadd.f32 0.0, %v4531
      %4533 = vmatmul.f32.gmra.mxu0 %v4422
      %v4534 = vpop.f32.mrf.mxu0
      %v4535 = vadd.f32 0.0, %v4534
      %4536 = vmatmul.f32.gmra.mxu0 %v4425
      %v4537 = vpop.f32.mrf.mxu0
      %v4538 = vadd.f32 0.0, %v4537
      %4539 = vmatmul.f32.gmra.mxu0 %v4428
      %v4540 = vpop.f32.mrf.mxu0
      %v4541 = vadd.f32 0.0, %v4540
      %4542 = vmatmul.f32.gmra.mxu0 %v4431
      %v4543 = vpop.f32.mrf.mxu0
      %v4544 = vadd.f32 0.0, %v4543
      %4545 = vmatmul.f32.gmra.mxu0 %v4434
      %v4546 = vpop.f32.mrf.mxu0
      %v4547 = vadd.f32 0.0, %v4546
      %4548 = vmatmul.f32.gmra.mxu0 %v4437
      %v4549 = vpop.f32.mrf.mxu0
      %v4550 = vadd.f32 0.0, %v4549
      %4551 = vmatmul.f32.gmra.mxu0 %v4440
      %v4552 = vpop.f32.mrf.mxu0
      %v4553 = vadd.f32 0.0, %v4552
      %4554 = vmatmul.f32.gmra.mxu0 %v4443
      %v4555 = vpop.f32.mrf.mxu0
      %v4556 = vadd.f32 0.0, %v4555
      %4557 = vmatmul.f32.gmra.mxu0 %v4446
      %v4558 = vpop.f32.mrf.mxu0
      %v4559 = vadd.f32 0.0, %v4558
      %4560 = vmatmul.f32.gmra.mxu0 %v4449
      %v4561 = vpop.f32.mrf.mxu0
      %v4562 = vadd.f32 0.0, %v4561
      %4563 = vmatmul.f32.gmra.mxu0 %v4452
      %v4564 = vpop.f32.mrf.mxu0
      %v4565 = vadd.f32 0.0, %v4564
      %4566 = vmatmul.f32.gmra.mxu0 %v4455
      %v4567 = vpop.f32.mrf.mxu0
      %v4568 = vadd.f32 0.0, %v4567
      %4569 = vmatmul.f32.gmra.mxu0 %v4458
      %v4570 = vpop.f32.mrf.mxu0
      %v4571 = vadd.f32 0.0, %v4570
      %4572 = vmatmul.f32.gmra.mxu0 %v4461
      %v4573 = vpop.f32.mrf.mxu0
      %v4574 = vadd.f32 0.0, %v4573
      %4575 = vmatmul.f32.gmra.mxu0 %v4464
      %v4576 = vpop.f32.mrf.mxu0
      %v4577 = vadd.f32 0.0, %v4576
      %4578 = vmatmul.f32.gmra.mxu0 %v4467
      %v4579 = vpop.f32.mrf.mxu0
      %v4580 = vadd.f32 0.0, %v4579
      %4581 = vmatmul.f32.gmra.mxu0 %v4470
      %v4582 = vpop.f32.mrf.mxu0
      %v4583 = vadd.f32 0.0, %v4582
      %4584 = vmatmul.f32.gmra.mxu0 %v4473
      %v4585 = vpop.f32.mrf.mxu0
      %v4586 = vadd.f32 0.0, %v4585
      %4587 = vmatmul.f32.gmra.mxu0 %v4476
      %v4588 = vpop.f32.mrf.mxu0
      %v4589 = vadd.f32 0.0, %v4588
      %4590 = vmatmul.f32.gmra.mxu0 %v4479
      %v4591 = vpop.f32.mrf.mxu0
      %v4592 = vadd.f32 0.0, %v4591
      %4593 = vmatmul.f32.gmra.mxu0 %v4482
      %v4594 = vpop.f32.mrf.mxu0
      %v4595 = vadd.f32 0.0, %v4594
      %4596 = vmatmul.f32.gmra.mxu0 %v4485
      %v4597 = vpop.f32.mrf.mxu0
      %v4598 = vadd.f32 0.0, %v4597
      %4599 = vmatmul.f32.gmra.mxu0 %v4488
      %v4600 = vpop.f32.mrf.mxu0
      %v4601 = vadd.f32 0.0, %v4600
      %4602 = vmatmul.f32.gmra.mxu0 %v4491
      %v4603 = vpop.f32.mrf.mxu0
      %v4604 = vadd.f32 0.0, %v4603
      %4605 = vmatmul.f32.gmra.mxu0 %v4494
      %v4606 = vpop.f32.mrf.mxu0
      %v4607 = vadd.f32 0.0, %v4606
      %4608 = vmatmul.f32.gmra.mxu0 %v4497
      %v4609 = vpop.f32.mrf.mxu0
      %v4610 = vadd.f32 0.0, %v4609
      %4611 = vmatmul.f32.gmra.mxu0 %v4500
      %v4612 = vpop.f32.mrf.mxu0
      %v4613 = vadd.f32 0.0, %v4612
      %4614 = vmatmul.f32.gmra.mxu0 %v4503
      %v4615 = vpop.f32.mrf.mxu0
      %v4616 = vadd.f32 0.0, %v4615
      %4617 = vmatmul.f32.gmra.mxu0 %v4506
      %v4618 = vpop.f32.mrf.mxu0
      %v4619 = vadd.f32 0.0, %v4618
      %4620 = vmatmul.f32.gmra.mxu0 %v4509
      %v4621 = vpop.f32.mrf.mxu0
      %v4622 = vadd.f32 0.0, %v4621
      %4623 = vdwg.mxu0
      %v4624 = vadd.f32 %v4348, %v4529
      %v4625 = vadd.f32 %v4349, %v4532
      %v4626 = vadd.f32 %v4350, %v4535
      %v4627 = vadd.f32 %v4351, %v4538
      %v4628 = vadd.f32 %v4352, %v4541
      %v4629 = vadd.f32 %v4353, %v4544
      %v4630 = vadd.f32 %v4354, %v4547
      %v4631 = vadd.f32 %v4355, %v4550
      %v4632 = vadd.f32 %v4356, %v4553
      %v4633 = vadd.f32 %v4357, %v4556
      %v4634 = vadd.f32 %v4358, %v4559
      %v4635 = vadd.f32 %v4359, %v4562
      %v4636 = vadd.f32 %v4360, %v4565
      %v4637 = vadd.f32 %v4361, %v4568
      %v4638 = vadd.f32 %v4362, %v4571
      %v4639 = vadd.f32 %v4363, %v4574
      %v4640 = vadd.f32 %v4364, %v4577
      %v4641 = vadd.f32 %v4365, %v4580
      %v4642 = vadd.f32 %v4366, %v4583
      %v4643 = vadd.f32 %v4367, %v4586
      %v4644 = vadd.f32 %v4368, %v4589
      %v4645 = vadd.f32 %v4369, %v4592
      %v4646 = vadd.f32 %v4370, %v4595
      %v4647 = vadd.f32 %v4371, %v4598
      %v4648 = vadd.f32 %v4372, %v4601
      %v4649 = vadd.f32 %v4373, %v4604
      %v4650 = vadd.f32 %v4374, %v4607
      %v4651 = vadd.f32 %v4375, %v4610
      %v4652 = vadd.f32 %v4376, %v4613
      %v4653 = vadd.f32 %v4377, %v4616
      %v4654 = vadd.f32 %v4378, %v4619
      %v4655 = vadd.f32 %v4379, %v4622
      %s4656 = scalar_lea.vmem [#allocation3], 48
      %v4657 = vld [vmem:[%s4656] sm:$0xff]
      %v4658 = vld [vmem:[%s4656 + $0x8] sm:$0xff]
      %v4659 = vld [vmem:[%s4656 + $0x18] sm:$0xff]
      %v4660 = vld [vmem:[%s4656 + $0x20] sm:$0xff]
      %v4661 = vld [vmem:[%s4656 + $0x30] sm:$0xff]
      %v4662 = vld [vmem:[%s4656 + $0x38] sm:$0xff]
      %v4663 = vld [vmem:[%s4656 + $0x48] sm:$0xff]
      %v4664 = vld [vmem:[%s4656 + $0x50] sm:$0xff]
      %v4665 = vld [vmem:[%s4656 + $0x60] sm:$0xff]
      %v4666 = vld [vmem:[%s4656 + $0x68] sm:$0xff]
      %v4667 = vld [vmem:[%s4656 + $0x78] sm:$0xff]
      %v4668 = vld [vmem:[%s4656 + $0x80] sm:$0xff]
      %v4669 = vld [vmem:[%s4656 + $0x90] sm:$0xff]
      %v4670 = vld [vmem:[%s4656 + $0x98] sm:$0xff]
      %v4671 = vld [vmem:[%s4656 + $0xa8] sm:$0xff]
      %v4672 = vld [vmem:[%s4656 + $0xb0] sm:$0xff]
      %v4673 = vld [vmem:[%s4656 + $0xc0] sm:$0xff]
      %v4674 = vld [vmem:[%s4656 + $0xc8] sm:$0xff]
      %v4675 = vld [vmem:[%s4656 + $0xd8] sm:$0xff]
      %v4676 = vld [vmem:[%s4656 + $0xe0] sm:$0xff]
      %v4677 = vld [vmem:[%s4656 + $0xf0] sm:$0xff]
      %v4678 = vld [vmem:[%s4656 + $0xf8] sm:$0xff]
      %v4679 = vld [vmem:[%s4656 + $0x108] sm:$0xff]
      %v4680 = vld [vmem:[%s4656 + $0x110] sm:$0xff]
      %v4681 = vld [vmem:[%s4656 + $0x120] sm:$0xff]
      %v4682 = vld [vmem:[%s4656 + $0x128] sm:$0xff]
      %v4683 = vld [vmem:[%s4656 + $0x138] sm:$0xff]
      %v4684 = vld [vmem:[%s4656 + $0x140] sm:$0xff]
      %v4685 = vld [vmem:[%s4656 + $0x150] sm:$0xff]
      %v4686 = vld [vmem:[%s4656 + $0x158] sm:$0xff]
      %v4687 = vld [vmem:[%s4656 + $0x168] sm:$0xff]
      %v4688 = vld [vmem:[%s4656 + $0x170] sm:$0xff]
      %s4689 = scalar_lea.vmem %s4, 96
      %v4690 = vld [vmem:[%s4689] sm:$0xff]
      %v4691 = vld [vmem:[%s4689 + $0x8] sm:$0xff]
      %v4693 = vsel %vm365, %v4657, 0
      %v4696 = vsel %vm365, %v4658, 0
      %v4699 = vsel %vm365, %v4659, 0
      %v4702 = vsel %vm365, %v4660, 0
      %v4705 = vsel %vm365, %v4661, 0
      %v4708 = vsel %vm365, %v4662, 0
      %v4711 = vsel %vm365, %v4663, 0
      %v4714 = vsel %vm365, %v4664, 0
      %v4717 = vsel %vm365, %v4665, 0
      %v4720 = vsel %vm365, %v4666, 0
      %v4723 = vsel %vm365, %v4667, 0
      %v4726 = vsel %vm365, %v4668, 0
      %v4729 = vsel %vm365, %v4669, 0
      %v4732 = vsel %vm365, %v4670, 0
      %v4735 = vsel %vm365, %v4671, 0
      %v4738 = vsel %vm365, %v4672, 0
      %v4741 = vsel %vm365, %v4673, 0
      %v4744 = vsel %vm365, %v4674, 0
      %v4747 = vsel %vm365, %v4675, 0
      %v4750 = vsel %vm365, %v4676, 0
      %v4753 = vsel %vm365, %v4677, 0
      %v4756 = vsel %vm365, %v4678, 0
      %v4759 = vsel %vm365, %v4679, 0
      %v4762 = vsel %vm365, %v4680, 0
      %v4765 = vsel %vm365, %v4681, 0
      %v4768 = vsel %vm365, %v4682, 0
      %v4771 = vsel %vm365, %v4683, 0
      %v4774 = vsel %vm365, %v4684, 0
      %v4777 = vsel %vm365, %v4685, 0
      %v4780 = vsel %vm365, %v4686, 0
      %v4783 = vsel %vm365, %v4687, 0
      %v4786 = vsel %vm365, %v4688, 0
      %4788 = vmatpush.msra.mxu0 0.0
      %4789 = vmatpush.msra.mxu0 0.0
      %4790 = vmatpush.msra.mxu0 0.0
      %4791 = vmatpush.msra.mxu0 0.0
      %4792 = vmatpush.msra.mxu0 0.0
      %4793 = vmatpush.msra.mxu0 0.0
      %4794 = vmatpush.msra.mxu0 0.0
      %4795 = vmatpush.msra.mxu0 0.0
      %4796 = vmatpush.msra.mxu0 0.0
      %4797 = vmatpush.msra.mxu0 0.0
      %4798 = vmatpush.msra.mxu0 0.0
      %4799 = vmatpush.msra.mxu0 0.0
      %4800 = vmatpush.msra.mxu0 0.0
      %4801 = vmatpush.msra.mxu0 0.0
      %4802 = vmatpush.msra.mxu0 %v4691
      %4803 = vmatpush.msra.mxu0 %v4690
      %4804 = vmatmul.f32.gmra.mxu0 %v4693
      %v4805 = vpop.f32.mrf.mxu0
      %v4806 = vadd.f32 0.0, %v4805
      %4807 = vmatmul.f32.gmra.mxu0 %v4696
      %v4808 = vpop.f32.mrf.mxu0
      %v4809 = vadd.f32 0.0, %v4808
      %4810 = vmatmul.f32.gmra.mxu0 %v4699
      %v4811 = vpop.f32.mrf.mxu0
      %v4812 = vadd.f32 0.0, %v4811
      %4813 = vmatmul.f32.gmra.mxu0 %v4702
      %v4814 = vpop.f32.mrf.mxu0
      %v4815 = vadd.f32 0.0, %v4814
      %4816 = vmatmul.f32.gmra.mxu0 %v4705
      %v4817 = vpop.f32.mrf.mxu0
      %v4818 = vadd.f32 0.0, %v4817
      %4819 = vmatmul.f32.gmra.mxu0 %v4708
      %v4820 = vpop.f32.mrf.mxu0
      %v4821 = vadd.f32 0.0, %v4820
      %4822 = vmatmul.f32.gmra.mxu0 %v4711
      %v4823 = vpop.f32.mrf.mxu0
      %v4824 = vadd.f32 0.0, %v4823
      %4825 = vmatmul.f32.gmra.mxu0 %v4714
      %v4826 = vpop.f32.mrf.mxu0
      %v4827 = vadd.f32 0.0, %v4826
      %4828 = vmatmul.f32.gmra.mxu0 %v4717
      %v4829 = vpop.f32.mrf.mxu0
      %v4830 = vadd.f32 0.0, %v4829
      %4831 = vmatmul.f32.gmra.mxu0 %v4720
      %v4832 = vpop.f32.mrf.mxu0
      %v4833 = vadd.f32 0.0, %v4832
      %4834 = vmatmul.f32.gmra.mxu0 %v4723
      %v4835 = vpop.f32.mrf.mxu0
      %v4836 = vadd.f32 0.0, %v4835
      %4837 = vmatmul.f32.gmra.mxu0 %v4726
      %v4838 = vpop.f32.mrf.mxu0
      %v4839 = vadd.f32 0.0, %v4838
      %4840 = vmatmul.f32.gmra.mxu0 %v4729
      %v4841 = vpop.f32.mrf.mxu0
      %v4842 = vadd.f32 0.0, %v4841
      %4843 = vmatmul.f32.gmra.mxu0 %v4732
      %v4844 = vpop.f32.mrf.mxu0
      %v4845 = vadd.f32 0.0, %v4844
      %4846 = vmatmul.f32.gmra.mxu0 %v4735
      %v4847 = vpop.f32.mrf.mxu0
      %v4848 = vadd.f32 0.0, %v4847
      %4849 = vmatmul.f32.gmra.mxu0 %v4738
      %v4850 = vpop.f32.mrf.mxu0
      %v4851 = vadd.f32 0.0, %v4850
      %4852 = vmatmul.f32.gmra.mxu0 %v4741
      %v4853 = vpop.f32.mrf.mxu0
      %v4854 = vadd.f32 0.0, %v4853
      %4855 = vmatmul.f32.gmra.mxu0 %v4744
      %v4856 = vpop.f32.mrf.mxu0
      %v4857 = vadd.f32 0.0, %v4856
      %4858 = vmatmul.f32.gmra.mxu0 %v4747
      %v4859 = vpop.f32.mrf.mxu0
      %v4860 = vadd.f32 0.0, %v4859
      %4861 = vmatmul.f32.gmra.mxu0 %v4750
      %v4862 = vpop.f32.mrf.mxu0
      %v4863 = vadd.f32 0.0, %v4862
      %4864 = vmatmul.f32.gmra.mxu0 %v4753
      %v4865 = vpop.f32.mrf.mxu0
      %v4866 = vadd.f32 0.0, %v4865
      %4867 = vmatmul.f32.gmra.mxu0 %v4756
      %v4868 = vpop.f32.mrf.mxu0
      %v4869 = vadd.f32 0.0, %v4868
      %4870 = vmatmul.f32.gmra.mxu0 %v4759
      %v4871 = vpop.f32.mrf.mxu0
      %v4872 = vadd.f32 0.0, %v4871
      %4873 = vmatmul.f32.gmra.mxu0 %v4762
      %v4874 = vpop.f32.mrf.mxu0
      %v4875 = vadd.f32 0.0, %v4874
      %4876 = vmatmul.f32.gmra.mxu0 %v4765
      %v4877 = vpop.f32.mrf.mxu0
      %v4878 = vadd.f32 0.0, %v4877
      %4879 = vmatmul.f32.gmra.mxu0 %v4768
      %v4880 = vpop.f32.mrf.mxu0
      %v4881 = vadd.f32 0.0, %v4880
      %4882 = vmatmul.f32.gmra.mxu0 %v4771
      %v4883 = vpop.f32.mrf.mxu0
      %v4884 = vadd.f32 0.0, %v4883
      %4885 = vmatmul.f32.gmra.mxu0 %v4774
      %v4886 = vpop.f32.mrf.mxu0
      %v4887 = vadd.f32 0.0, %v4886
      %4888 = vmatmul.f32.gmra.mxu0 %v4777
      %v4889 = vpop.f32.mrf.mxu0
      %v4890 = vadd.f32 0.0, %v4889
      %4891 = vmatmul.f32.gmra.mxu0 %v4780
      %v4892 = vpop.f32.mrf.mxu0
      %v4893 = vadd.f32 0.0, %v4892
      %4894 = vmatmul.f32.gmra.mxu0 %v4783
      %v4895 = vpop.f32.mrf.mxu0
      %v4896 = vadd.f32 0.0, %v4895
      %4897 = vmatmul.f32.gmra.mxu0 %v4786
      %v4898 = vpop.f32.mrf.mxu0
      %v4899 = vadd.f32 0.0, %v4898
      %4900 = vdwg.mxu0
      %v4901 = vadd.f32 %v4624, %v4806
      %v4902 = vadd.f32 %v4625, %v4809
      %v4903 = vadd.f32 %v4626, %v4812
      %v4904 = vadd.f32 %v4627, %v4815
      %v4905 = vadd.f32 %v4628, %v4818
      %v4906 = vadd.f32 %v4629, %v4821
      %v4907 = vadd.f32 %v4630, %v4824
      %v4908 = vadd.f32 %v4631, %v4827
      %v4909 = vadd.f32 %v4632, %v4830
      %v4910 = vadd.f32 %v4633, %v4833
      %v4911 = vadd.f32 %v4634, %v4836
      %v4912 = vadd.f32 %v4635, %v4839
      %v4913 = vadd.f32 %v4636, %v4842
      %v4914 = vadd.f32 %v4637, %v4845
      %v4915 = vadd.f32 %v4638, %v4848
      %v4916 = vadd.f32 %v4639, %v4851
      %v4917 = vadd.f32 %v4640, %v4854
      %v4918 = vadd.f32 %v4641, %v4857
      %v4919 = vadd.f32 %v4642, %v4860
      %v4920 = vadd.f32 %v4643, %v4863
      %v4921 = vadd.f32 %v4644, %v4866
      %v4922 = vadd.f32 %v4645, %v4869
      %v4923 = vadd.f32 %v4646, %v4872
      %v4924 = vadd.f32 %v4647, %v4875
      %v4925 = vadd.f32 %v4648, %v4878
      %v4926 = vadd.f32 %v4649, %v4881
      %v4927 = vadd.f32 %v4650, %v4884
      %v4928 = vadd.f32 %v4651, %v4887
      %v4929 = vadd.f32 %v4652, %v4890
      %v4930 = vadd.f32 %v4653, %v4893
      %v4931 = vadd.f32 %v4654, %v4896
      %v4932 = vadd.f32 %v4655, %v4899
      %v4933 = vld [vmem:[%s4656 + $0x1] sm:$0xff]
      %v4934 = vld [vmem:[%s4656 + $0x9] sm:$0xff]
      %v4935 = vld [vmem:[%s4656 + $0x19] sm:$0xff]
      %v4936 = vld [vmem:[%s4656 + $0x21] sm:$0xff]
      %v4937 = vld [vmem:[%s4656 + $0x31] sm:$0xff]
      %v4938 = vld [vmem:[%s4656 + $0x39] sm:$0xff]
      %v4939 = vld [vmem:[%s4656 + $0x49] sm:$0xff]
      %v4940 = vld [vmem:[%s4656 + $0x51] sm:$0xff]
      %v4941 = vld [vmem:[%s4656 + $0x61] sm:$0xff]
      %v4942 = vld [vmem:[%s4656 + $0x69] sm:$0xff]
      %v4943 = vld [vmem:[%s4656 + $0x79] sm:$0xff]
      %v4944 = vld [vmem:[%s4656 + $0x81] sm:$0xff]
      %v4945 = vld [vmem:[%s4656 + $0x91] sm:$0xff]
      %v4946 = vld [vmem:[%s4656 + $0x99] sm:$0xff]
      %v4947 = vld [vmem:[%s4656 + $0xa9] sm:$0xff]
      %v4948 = vld [vmem:[%s4656 + $0xb1] sm:$0xff]
      %v4949 = vld [vmem:[%s4656 + $0xc1] sm:$0xff]
      %v4950 = vld [vmem:[%s4656 + $0xc9] sm:$0xff]
      %v4951 = vld [vmem:[%s4656 + $0xd9] sm:$0xff]
      %v4952 = vld [vmem:[%s4656 + $0xe1] sm:$0xff]
      %v4953 = vld [vmem:[%s4656 + $0xf1] sm:$0xff]
      %v4954 = vld [vmem:[%s4656 + $0xf9] sm:$0xff]
      %v4955 = vld [vmem:[%s4656 + $0x109] sm:$0xff]
      %v4956 = vld [vmem:[%s4656 + $0x111] sm:$0xff]
      %v4957 = vld [vmem:[%s4656 + $0x121] sm:$0xff]
      %v4958 = vld [vmem:[%s4656 + $0x129] sm:$0xff]
      %v4959 = vld [vmem:[%s4656 + $0x139] sm:$0xff]
      %v4960 = vld [vmem:[%s4656 + $0x141] sm:$0xff]
      %v4961 = vld [vmem:[%s4656 + $0x151] sm:$0xff]
      %v4962 = vld [vmem:[%s4656 + $0x159] sm:$0xff]
      %v4963 = vld [vmem:[%s4656 + $0x169] sm:$0xff]
      %v4964 = vld [vmem:[%s4656 + $0x171] sm:$0xff]
      %s4965 = scalar_lea.vmem %s4, 112
      %v4966 = vld [vmem:[%s4965] sm:$0xff]
      %v4967 = vld [vmem:[%s4965 + $0x8] sm:$0xff]
      %v4969 = vsel %vm365, %v4933, 0
      %v4972 = vsel %vm365, %v4934, 0
      %v4975 = vsel %vm365, %v4935, 0
      %v4978 = vsel %vm365, %v4936, 0
      %v4981 = vsel %vm365, %v4937, 0
      %v4984 = vsel %vm365, %v4938, 0
      %v4987 = vsel %vm365, %v4939, 0
      %v4990 = vsel %vm365, %v4940, 0
      %v4993 = vsel %vm365, %v4941, 0
      %v4996 = vsel %vm365, %v4942, 0
      %v4999 = vsel %vm365, %v4943, 0
      %v5002 = vsel %vm365, %v4944, 0
      %v5005 = vsel %vm365, %v4945, 0
      %v5008 = vsel %vm365, %v4946, 0
      %v5011 = vsel %vm365, %v4947, 0
      %v5014 = vsel %vm365, %v4948, 0
      %v5017 = vsel %vm365, %v4949, 0
      %v5020 = vsel %vm365, %v4950, 0
      %v5023 = vsel %vm365, %v4951, 0
      %v5026 = vsel %vm365, %v4952, 0
      %v5029 = vsel %vm365, %v4953, 0
      %v5032 = vsel %vm365, %v4954, 0
      %v5035 = vsel %vm365, %v4955, 0
      %v5038 = vsel %vm365, %v4956, 0
      %v5041 = vsel %vm365, %v4957, 0
      %v5044 = vsel %vm365, %v4958, 0
      %v5047 = vsel %vm365, %v4959, 0
      %v5050 = vsel %vm365, %v4960, 0
      %v5053 = vsel %vm365, %v4961, 0
      %v5056 = vsel %vm365, %v4962, 0
      %v5059 = vsel %vm365, %v4963, 0
      %v5062 = vsel %vm365, %v4964, 0
      %5064 = vmatpush.msra.mxu0 0.0
      %5065 = vmatpush.msra.mxu0 0.0
      %5066 = vmatpush.msra.mxu0 0.0
      %5067 = vmatpush.msra.mxu0 0.0
      %5068 = vmatpush.msra.mxu0 0.0
      %5069 = vmatpush.msra.mxu0 0.0
      %5070 = vmatpush.msra.mxu0 0.0
      %5071 = vmatpush.msra.mxu0 0.0
      %5072 = vmatpush.msra.mxu0 0.0
      %5073 = vmatpush.msra.mxu0 0.0
      %5074 = vmatpush.msra.mxu0 0.0
      %5075 = vmatpush.msra.mxu0 0.0
      %5076 = vmatpush.msra.mxu0 0.0
      %5077 = vmatpush.msra.mxu0 0.0
      %5078 = vmatpush.msra.mxu0 %v4967
      %5079 = vmatpush.msra.mxu0 %v4966
      %5080 = vmatmul.f32.gmra.mxu0 %v4969
      %v5081 = vpop.f32.mrf.mxu0
      %v5082 = vadd.f32 0.0, %v5081
      %5083 = vmatmul.f32.gmra.mxu0 %v4972
      %v5084 = vpop.f32.mrf.mxu0
      %v5085 = vadd.f32 0.0, %v5084
      %5086 = vmatmul.f32.gmra.mxu0 %v4975
      %v5087 = vpop.f32.mrf.mxu0
      %v5088 = vadd.f32 0.0, %v5087
      %5089 = vmatmul.f32.gmra.mxu0 %v4978
      %v5090 = vpop.f32.mrf.mxu0
      %v5091 = vadd.f32 0.0, %v5090
      %5092 = vmatmul.f32.gmra.mxu0 %v4981
      %v5093 = vpop.f32.mrf.mxu0
      %v5094 = vadd.f32 0.0, %v5093
      %5095 = vmatmul.f32.gmra.mxu0 %v4984
      %v5096 = vpop.f32.mrf.mxu0
      %v5097 = vadd.f32 0.0, %v5096
      %5098 = vmatmul.f32.gmra.mxu0 %v4987
      %v5099 = vpop.f32.mrf.mxu0
      %v5100 = vadd.f32 0.0, %v5099
      %5101 = vmatmul.f32.gmra.mxu0 %v4990
      %v5102 = vpop.f32.mrf.mxu0
      %v5103 = vadd.f32 0.0, %v5102
      %5104 = vmatmul.f32.gmra.mxu0 %v4993
      %v5105 = vpop.f32.mrf.mxu0
      %v5106 = vadd.f32 0.0, %v5105
      %5107 = vmatmul.f32.gmra.mxu0 %v4996
      %v5108 = vpop.f32.mrf.mxu0
      %v5109 = vadd.f32 0.0, %v5108
      %5110 = vmatmul.f32.gmra.mxu0 %v4999
      %v5111 = vpop.f32.mrf.mxu0
      %v5112 = vadd.f32 0.0, %v5111
      %5113 = vmatmul.f32.gmra.mxu0 %v5002
      %v5114 = vpop.f32.mrf.mxu0
      %v5115 = vadd.f32 0.0, %v5114
      %5116 = vmatmul.f32.gmra.mxu0 %v5005
      %v5117 = vpop.f32.mrf.mxu0
      %v5118 = vadd.f32 0.0, %v5117
      %5119 = vmatmul.f32.gmra.mxu0 %v5008
      %v5120 = vpop.f32.mrf.mxu0
      %v5121 = vadd.f32 0.0, %v5120
      %5122 = vmatmul.f32.gmra.mxu0 %v5011
      %v5123 = vpop.f32.mrf.mxu0
      %v5124 = vadd.f32 0.0, %v5123
      %5125 = vmatmul.f32.gmra.mxu0 %v5014
      %v5126 = vpop.f32.mrf.mxu0
      %v5127 = vadd.f32 0.0, %v5126
      %5128 = vmatmul.f32.gmra.mxu0 %v5017
      %v5129 = vpop.f32.mrf.mxu0
      %v5130 = vadd.f32 0.0, %v5129
      %5131 = vmatmul.f32.gmra.mxu0 %v5020
      %v5132 = vpop.f32.mrf.mxu0
      %v5133 = vadd.f32 0.0, %v5132
      %5134 = vmatmul.f32.gmra.mxu0 %v5023
      %v5135 = vpop.f32.mrf.mxu0
      %v5136 = vadd.f32 0.0, %v5135
      %5137 = vmatmul.f32.gmra.mxu0 %v5026
      %v5138 = vpop.f32.mrf.mxu0
      %v5139 = vadd.f32 0.0, %v5138
      %5140 = vmatmul.f32.gmra.mxu0 %v5029
      %v5141 = vpop.f32.mrf.mxu0
      %v5142 = vadd.f32 0.0, %v5141
      %5143 = vmatmul.f32.gmra.mxu0 %v5032
      %v5144 = vpop.f32.mrf.mxu0
      %v5145 = vadd.f32 0.0, %v5144
      %5146 = vmatmul.f32.gmra.mxu0 %v5035
      %v5147 = vpop.f32.mrf.mxu0
      %v5148 = vadd.f32 0.0, %v5147
      %5149 = vmatmul.f32.gmra.mxu0 %v5038
      %v5150 = vpop.f32.mrf.mxu0
      %v5151 = vadd.f32 0.0, %v5150
      %5152 = vmatmul.f32.gmra.mxu0 %v5041
      %v5153 = vpop.f32.mrf.mxu0
      %v5154 = vadd.f32 0.0, %v5153
      %5155 = vmatmul.f32.gmra.mxu0 %v5044
      %v5156 = vpop.f32.mrf.mxu0
      %v5157 = vadd.f32 0.0, %v5156
      %5158 = vmatmul.f32.gmra.mxu0 %v5047
      %v5159 = vpop.f32.mrf.mxu0
      %v5160 = vadd.f32 0.0, %v5159
      %5161 = vmatmul.f32.gmra.mxu0 %v5050
      %v5162 = vpop.f32.mrf.mxu0
      %v5163 = vadd.f32 0.0, %v5162
      %5164 = vmatmul.f32.gmra.mxu0 %v5053
      %v5165 = vpop.f32.mrf.mxu0
      %v5166 = vadd.f32 0.0, %v5165
      %5167 = vmatmul.f32.gmra.mxu0 %v5056
      %v5168 = vpop.f32.mrf.mxu0
      %v5169 = vadd.f32 0.0, %v5168
      %5170 = vmatmul.f32.gmra.mxu0 %v5059
      %v5171 = vpop.f32.mrf.mxu0
      %v5172 = vadd.f32 0.0, %v5171
      %5173 = vmatmul.f32.gmra.mxu0 %v5062
      %v5174 = vpop.f32.mrf.mxu0
      %v5175 = vadd.f32 0.0, %v5174
      %5176 = vdwg.mxu0
      %v5177 = vadd.f32 %v4901, %v5082
      %v5178 = vadd.f32 %v4902, %v5085
      %v5179 = vadd.f32 %v4903, %v5088
      %v5180 = vadd.f32 %v4904, %v5091
      %v5181 = vadd.f32 %v4905, %v5094
      %v5182 = vadd.f32 %v4906, %v5097
      %v5183 = vadd.f32 %v4907, %v5100
      %v5184 = vadd.f32 %v4908, %v5103
      %v5185 = vadd.f32 %v4909, %v5106
      %v5186 = vadd.f32 %v4910, %v5109
      %v5187 = vadd.f32 %v4911, %v5112
      %v5188 = vadd.f32 %v4912, %v5115
      %v5189 = vadd.f32 %v4913, %v5118
      %v5190 = vadd.f32 %v4914, %v5121
      %v5191 = vadd.f32 %v4915, %v5124
      %v5192 = vadd.f32 %v4916, %v5127
      %v5193 = vadd.f32 %v4917, %v5130
      %v5194 = vadd.f32 %v4918, %v5133
      %v5195 = vadd.f32 %v4919, %v5136
      %v5196 = vadd.f32 %v4920, %v5139
      %v5197 = vadd.f32 %v4921, %v5142
      %v5198 = vadd.f32 %v4922, %v5145
      %v5199 = vadd.f32 %v4923, %v5148
      %v5200 = vadd.f32 %v4924, %v5151
      %v5201 = vadd.f32 %v4925, %v5154
      %v5202 = vadd.f32 %v4926, %v5157
      %v5203 = vadd.f32 %v4927, %v5160
      %v5204 = vadd.f32 %v4928, %v5163
      %v5205 = vadd.f32 %v4929, %v5166
      %v5206 = vadd.f32 %v4930, %v5169
      %v5207 = vadd.f32 %v4931, %v5172
      %v5208 = vadd.f32 %v4932, %v5175
      %v5209 = vld [vmem:[%s4656 + $0x2] sm:$0xff]
      %v5210 = vld [vmem:[%s4656 + $0xa] sm:$0xff]
      %v5211 = vld [vmem:[%s4656 + $0x1a] sm:$0xff]
      %v5212 = vld [vmem:[%s4656 + $0x22] sm:$0xff]
      %v5213 = vld [vmem:[%s4656 + $0x32] sm:$0xff]
      %v5214 = vld [vmem:[%s4656 + $0x3a] sm:$0xff]
      %v5215 = vld [vmem:[%s4656 + $0x4a] sm:$0xff]
      %v5216 = vld [vmem:[%s4656 + $0x52] sm:$0xff]
      %v5217 = vld [vmem:[%s4656 + $0x62] sm:$0xff]
      %v5218 = vld [vmem:[%s4656 + $0x6a] sm:$0xff]
      %v5219 = vld [vmem:[%s4656 + $0x7a] sm:$0xff]
      %v5220 = vld [vmem:[%s4656 + $0x82] sm:$0xff]
      %v5221 = vld [vmem:[%s4656 + $0x92] sm:$0xff]
      %v5222 = vld [vmem:[%s4656 + $0x9a] sm:$0xff]
      %v5223 = vld [vmem:[%s4656 + $0xaa] sm:$0xff]
      %v5224 = vld [vmem:[%s4656 + $0xb2] sm:$0xff]
      %v5225 = vld [vmem:[%s4656 + $0xc2] sm:$0xff]
      %v5226 = vld [vmem:[%s4656 + $0xca] sm:$0xff]
      %v5227 = vld [vmem:[%s4656 + $0xda] sm:$0xff]
      %v5228 = vld [vmem:[%s4656 + $0xe2] sm:$0xff]
      %v5229 = vld [vmem:[%s4656 + $0xf2] sm:$0xff]
      %v5230 = vld [vmem:[%s4656 + $0xfa] sm:$0xff]
      %v5231 = vld [vmem:[%s4656 + $0x10a] sm:$0xff]
      %v5232 = vld [vmem:[%s4656 + $0x112] sm:$0xff]
      %v5233 = vld [vmem:[%s4656 + $0x122] sm:$0xff]
      %v5234 = vld [vmem:[%s4656 + $0x12a] sm:$0xff]
      %v5235 = vld [vmem:[%s4656 + $0x13a] sm:$0xff]
      %v5236 = vld [vmem:[%s4656 + $0x142] sm:$0xff]
      %v5237 = vld [vmem:[%s4656 + $0x152] sm:$0xff]
      %v5238 = vld [vmem:[%s4656 + $0x15a] sm:$0xff]
      %v5239 = vld [vmem:[%s4656 + $0x16a] sm:$0xff]
      %v5240 = vld [vmem:[%s4656 + $0x172] sm:$0xff]
      %s5241 = scalar_lea.vmem %s4, 128
      %v5242 = vld [vmem:[%s5241] sm:$0xff]
      %v5243 = vld [vmem:[%s5241 + $0x8] sm:$0xff]
      %v5245 = vsel %vm365, %v5209, 0
      %v5248 = vsel %vm365, %v5210, 0
      %v5251 = vsel %vm365, %v5211, 0
      %v5254 = vsel %vm365, %v5212, 0
      %v5257 = vsel %vm365, %v5213, 0
      %v5260 = vsel %vm365, %v5214, 0
      %v5263 = vsel %vm365, %v5215, 0
      %v5266 = vsel %vm365, %v5216, 0
      %v5269 = vsel %vm365, %v5217, 0
      %v5272 = vsel %vm365, %v5218, 0
      %v5275 = vsel %vm365, %v5219, 0
      %v5278 = vsel %vm365, %v5220, 0
      %v5281 = vsel %vm365, %v5221, 0
      %v5284 = vsel %vm365, %v5222, 0
      %v5287 = vsel %vm365, %v5223, 0
      %v5290 = vsel %vm365, %v5224, 0
      %v5293 = vsel %vm365, %v5225, 0
      %v5296 = vsel %vm365, %v5226, 0
      %v5299 = vsel %vm365, %v5227, 0
      %v5302 = vsel %vm365, %v5228, 0
      %v5305 = vsel %vm365, %v5229, 0
      %v5308 = vsel %vm365, %v5230, 0
      %v5311 = vsel %vm365, %v5231, 0
      %v5314 = vsel %vm365, %v5232, 0
      %v5317 = vsel %vm365, %v5233, 0
      %v5320 = vsel %vm365, %v5234, 0
      %v5323 = vsel %vm365, %v5235, 0
      %v5326 = vsel %vm365, %v5236, 0
      %v5329 = vsel %vm365, %v5237, 0
      %v5332 = vsel %vm365, %v5238, 0
      %v5335 = vsel %vm365, %v5239, 0
      %v5338 = vsel %vm365, %v5240, 0
      %5340 = vmatpush.msra.mxu0 0.0
      %5341 = vmatpush.msra.mxu0 0.0
      %5342 = vmatpush.msra.mxu0 0.0
      %5343 = vmatpush.msra.mxu0 0.0
      %5344 = vmatpush.msra.mxu0 0.0
      %5345 = vmatpush.msra.mxu0 0.0
      %5346 = vmatpush.msra.mxu0 0.0
      %5347 = vmatpush.msra.mxu0 0.0
      %5348 = vmatpush.msra.mxu0 0.0
      %5349 = vmatpush.msra.mxu0 0.0
      %5350 = vmatpush.msra.mxu0 0.0
      %5351 = vmatpush.msra.mxu0 0.0
      %5352 = vmatpush.msra.mxu0 0.0
      %5353 = vmatpush.msra.mxu0 0.0
      %5354 = vmatpush.msra.mxu0 %v5243
      %5355 = vmatpush.msra.mxu0 %v5242
      %5356 = vmatmul.f32.gmra.mxu0 %v5245
      %v5357 = vpop.f32.mrf.mxu0
      %v5358 = vadd.f32 0.0, %v5357
      %5359 = vmatmul.f32.gmra.mxu0 %v5248
      %v5360 = vpop.f32.mrf.mxu0
      %v5361 = vadd.f32 0.0, %v5360
      %5362 = vmatmul.f32.gmra.mxu0 %v5251
      %v5363 = vpop.f32.mrf.mxu0
      %v5364 = vadd.f32 0.0, %v5363
      %5365 = vmatmul.f32.gmra.mxu0 %v5254
      %v5366 = vpop.f32.mrf.mxu0
      %v5367 = vadd.f32 0.0, %v5366
      %5368 = vmatmul.f32.gmra.mxu0 %v5257
      %v5369 = vpop.f32.mrf.mxu0
      %v5370 = vadd.f32 0.0, %v5369
      %5371 = vmatmul.f32.gmra.mxu0 %v5260
      %v5372 = vpop.f32.mrf.mxu0
      %v5373 = vadd.f32 0.0, %v5372
      %5374 = vmatmul.f32.gmra.mxu0 %v5263
      %v5375 = vpop.f32.mrf.mxu0
      %v5376 = vadd.f32 0.0, %v5375
      %5377 = vmatmul.f32.gmra.mxu0 %v5266
      %v5378 = vpop.f32.mrf.mxu0
      %v5379 = vadd.f32 0.0, %v5378
      %5380 = vmatmul.f32.gmra.mxu0 %v5269
      %v5381 = vpop.f32.mrf.mxu0
      %v5382 = vadd.f32 0.0, %v5381
      %5383 = vmatmul.f32.gmra.mxu0 %v5272
      %v5384 = vpop.f32.mrf.mxu0
      %v5385 = vadd.f32 0.0, %v5384
      %5386 = vmatmul.f32.gmra.mxu0 %v5275
      %v5387 = vpop.f32.mrf.mxu0
      %v5388 = vadd.f32 0.0, %v5387
      %5389 = vmatmul.f32.gmra.mxu0 %v5278
      %v5390 = vpop.f32.mrf.mxu0
      %v5391 = vadd.f32 0.0, %v5390
      %5392 = vmatmul.f32.gmra.mxu0 %v5281
      %v5393 = vpop.f32.mrf.mxu0
      %v5394 = vadd.f32 0.0, %v5393
      %5395 = vmatmul.f32.gmra.mxu0 %v5284
      %v5396 = vpop.f32.mrf.mxu0
      %v5397 = vadd.f32 0.0, %v5396
      %5398 = vmatmul.f32.gmra.mxu0 %v5287
      %v5399 = vpop.f32.mrf.mxu0
      %v5400 = vadd.f32 0.0, %v5399
      %5401 = vmatmul.f32.gmra.mxu0 %v5290
      %v5402 = vpop.f32.mrf.mxu0
      %v5403 = vadd.f32 0.0, %v5402
      %5404 = vmatmul.f32.gmra.mxu0 %v5293
      %v5405 = vpop.f32.mrf.mxu0
      %v5406 = vadd.f32 0.0, %v5405
      %5407 = vmatmul.f32.gmra.mxu0 %v5296
      %v5408 = vpop.f32.mrf.mxu0
      %v5409 = vadd.f32 0.0, %v5408
      %5410 = vmatmul.f32.gmra.mxu0 %v5299
      %v5411 = vpop.f32.mrf.mxu0
      %v5412 = vadd.f32 0.0, %v5411
      %5413 = vmatmul.f32.gmra.mxu0 %v5302
      %v5414 = vpop.f32.mrf.mxu0
      %v5415 = vadd.f32 0.0, %v5414
      %5416 = vmatmul.f32.gmra.mxu0 %v5305
      %v5417 = vpop.f32.mrf.mxu0
      %v5418 = vadd.f32 0.0, %v5417
      %5419 = vmatmul.f32.gmra.mxu0 %v5308
      %v5420 = vpop.f32.mrf.mxu0
      %v5421 = vadd.f32 0.0, %v5420
      %5422 = vmatmul.f32.gmra.mxu0 %v5311
      %v5423 = vpop.f32.mrf.mxu0
      %v5424 = vadd.f32 0.0, %v5423
      %5425 = vmatmul.f32.gmra.mxu0 %v5314
      %v5426 = vpop.f32.mrf.mxu0
      %v5427 = vadd.f32 0.0, %v5426
      %5428 = vmatmul.f32.gmra.mxu0 %v5317
      %v5429 = vpop.f32.mrf.mxu0
      %v5430 = vadd.f32 0.0, %v5429
      %5431 = vmatmul.f32.gmra.mxu0 %v5320
      %v5432 = vpop.f32.mrf.mxu0
      %v5433 = vadd.f32 0.0, %v5432
      %5434 = vmatmul.f32.gmra.mxu0 %v5323
      %v5435 = vpop.f32.mrf.mxu0
      %v5436 = vadd.f32 0.0, %v5435
      %5437 = vmatmul.f32.gmra.mxu0 %v5326
      %v5438 = vpop.f32.mrf.mxu0
      %v5439 = vadd.f32 0.0, %v5438
      %5440 = vmatmul.f32.gmra.mxu0 %v5329
      %v5441 = vpop.f32.mrf.mxu0
      %v5442 = vadd.f32 0.0, %v5441
      %5443 = vmatmul.f32.gmra.mxu0 %v5332
      %v5444 = vpop.f32.mrf.mxu0
      %v5445 = vadd.f32 0.0, %v5444
      %5446 = vmatmul.f32.gmra.mxu0 %v5335
      %v5447 = vpop.f32.mrf.mxu0
      %v5448 = vadd.f32 0.0, %v5447
      %5449 = vmatmul.f32.gmra.mxu0 %v5338
      %v5450 = vpop.f32.mrf.mxu0
      %v5451 = vadd.f32 0.0, %v5450
      %5452 = vdwg.mxu0
      %v5453 = vadd.f32 %v5177, %v5358
      %v5454 = vadd.f32 %v5178, %v5361
      %v5455 = vadd.f32 %v5179, %v5364
      %v5456 = vadd.f32 %v5180, %v5367
      %v5457 = vadd.f32 %v5181, %v5370
      %v5458 = vadd.f32 %v5182, %v5373
      %v5459 = vadd.f32 %v5183, %v5376
      %v5460 = vadd.f32 %v5184, %v5379
      %v5461 = vadd.f32 %v5185, %v5382
      %v5462 = vadd.f32 %v5186, %v5385
      %v5463 = vadd.f32 %v5187, %v5388
      %v5464 = vadd.f32 %v5188, %v5391
      %v5465 = vadd.f32 %v5189, %v5394
      %v5466 = vadd.f32 %v5190, %v5397
      %v5467 = vadd.f32 %v5191, %v5400
      %v5468 = vadd.f32 %v5192, %v5403
      %v5469 = vadd.f32 %v5193, %v5406
      %v5470 = vadd.f32 %v5194, %v5409
      %v5471 = vadd.f32 %v5195, %v5412
      %v5472 = vadd.f32 %v5196, %v5415
      %v5473 = vadd.f32 %v5197, %v5418
      %v5474 = vadd.f32 %v5198, %v5421
      %v5475 = vadd.f32 %v5199, %v5424
      %v5476 = vadd.f32 %v5200, %v5427
      %v5477 = vadd.f32 %v5201, %v5430
      %v5478 = vadd.f32 %v5202, %v5433
      %v5479 = vadd.f32 %v5203, %v5436
      %v5480 = vadd.f32 %v5204, %v5439
      %v5481 = vadd.f32 %v5205, %v5442
      %v5482 = vadd.f32 %v5206, %v5445
      %v5483 = vadd.f32 %v5207, %v5448
      %v5484 = vadd.f32 %v5208, %v5451
      %v5485 = vld [vmem:[%s5] sm:$0x1]
      %v5487 = vperm.slane %v5485, 0
      %v5489 = vmul.f32 %v5453, %v5487
      %v5490 = vmul.f32 %v5454, %v5487
      %v5491 = vmul.f32 %v5455, %v5487
      %v5492 = vmul.f32 %v5456, %v5487
      %v5493 = vmul.f32 %v5457, %v5487
      %v5494 = vmul.f32 %v5458, %v5487
      %v5495 = vmul.f32 %v5459, %v5487
      %v5496 = vmul.f32 %v5460, %v5487
      %v5497 = vmul.f32 %v5461, %v5487
      %v5498 = vmul.f32 %v5462, %v5487
      %v5499 = vmul.f32 %v5463, %v5487
      %v5500 = vmul.f32 %v5464, %v5487
      %v5501 = vmul.f32 %v5465, %v5487
      %v5502 = vmul.f32 %v5466, %v5487
      %v5503 = vmul.f32 %v5467, %v5487
      %v5504 = vmul.f32 %v5468, %v5487
      %v5505 = vmul.f32 %v5469, %v5487
      %v5506 = vmul.f32 %v5470, %v5487
      %v5507 = vmul.f32 %v5471, %v5487
      %v5508 = vmul.f32 %v5472, %v5487
      %v5509 = vmul.f32 %v5473, %v5487
      %v5510 = vmul.f32 %v5474, %v5487
      %v5511 = vmul.f32 %v5475, %v5487
      %v5512 = vmul.f32 %v5476, %v5487
      %v5513 = vmul.f32 %v5477, %v5487
      %v5514 = vmul.f32 %v5478, %v5487
      %v5515 = vmul.f32 %v5479, %v5487
      %v5516 = vmul.f32 %v5480, %v5487
      %v5517 = vmul.f32 %v5481, %v5487
      %v5518 = vmul.f32 %v5482, %v5487
      %v5519 = vmul.f32 %v5483, %v5487
      %v5520 = vmul.f32 %v5484, %v5487
      %v5521 = vld [vmem:[%s6] sm:$0x1]
      %v5523 = vperm.slane %v5521, 0
      %v5525 = vadd.f32 %v5489, %v5523
      %v5526 = vadd.f32 %v5490, %v5523
      %v5527 = vadd.f32 %v5491, %v5523
      %v5528 = vadd.f32 %v5492, %v5523
      %v5529 = vadd.f32 %v5493, %v5523
      %v5530 = vadd.f32 %v5494, %v5523
      %v5531 = vadd.f32 %v5495, %v5523
      %v5532 = vadd.f32 %v5496, %v5523
      %v5533 = vadd.f32 %v5497, %v5523
      %v5534 = vadd.f32 %v5498, %v5523
      %v5535 = vadd.f32 %v5499, %v5523
      %v5536 = vadd.f32 %v5500, %v5523
      %v5537 = vadd.f32 %v5501, %v5523
      %v5538 = vadd.f32 %v5502, %v5523
      %v5539 = vadd.f32 %v5503, %v5523
      %v5540 = vadd.f32 %v5504, %v5523
      %v5541 = vadd.f32 %v5505, %v5523
      %v5542 = vadd.f32 %v5506, %v5523
      %v5543 = vadd.f32 %v5507, %v5523
      %v5544 = vadd.f32 %v5508, %v5523
      %v5545 = vadd.f32 %v5509, %v5523
      %v5546 = vadd.f32 %v5510, %v5523
      %v5547 = vadd.f32 %v5511, %v5523
      %v5548 = vadd.f32 %v5512, %v5523
      %v5549 = vadd.f32 %v5513, %v5523
      %v5550 = vadd.f32 %v5514, %v5523
      %v5551 = vadd.f32 %v5515, %v5523
      %v5552 = vadd.f32 %v5516, %v5523
      %v5553 = vadd.f32 %v5517, %v5523
      %v5554 = vadd.f32 %v5518, %v5523
      %v5555 = vadd.f32 %v5519, %v5523
      %v5556 = vadd.f32 %v5520, %v5523
      %v5557 = vsel %vm365, %v5525, 0.0
      %v5558 = vsel %vm365, %v5526, 0.0
      %v5559 = vadd.f32 %v5557, %v5558
      %v5560 = vsel %vm365, %v5527, 0.0
      %v5561 = vadd.f32 %v5559, %v5560
      %v5562 = vsel %vm365, %v5528, 0.0
      %v5563 = vadd.f32 %v5561, %v5562
      %v5564 = vsel %vm365, %v5529, 0.0
      %v5565 = vadd.f32 %v5563, %v5564
      %v5566 = vsel %vm365, %v5530, 0.0
      %v5567 = vadd.f32 %v5565, %v5566
      %v5568 = vsel %vm365, %v5531, 0.0
      %v5569 = vadd.f32 %v5567, %v5568
      %v5570 = vsel %vm365, %v5532, 0.0
      %v5571 = vadd.f32 %v5569, %v5570
      %v5572 = vsel %vm365, %v5533, 0.0
      %v5573 = vadd.f32 %v5571, %v5572
      %v5574 = vsel %vm365, %v5534, 0.0
      %v5575 = vadd.f32 %v5573, %v5574
      %v5576 = vsel %vm365, %v5535, 0.0
      %v5577 = vadd.f32 %v5575, %v5576
      %v5578 = vsel %vm365, %v5536, 0.0
      %v5579 = vadd.f32 %v5577, %v5578
      %v5580 = vsel %vm365, %v5537, 0.0
      %v5581 = vadd.f32 %v5579, %v5580
      %v5582 = vsel %vm365, %v5538, 0.0
      %v5583 = vadd.f32 %v5581, %v5582
      %v5584 = vsel %vm365, %v5539, 0.0
      %v5585 = vadd.f32 %v5583, %v5584
      %v5586 = vsel %vm365, %v5540, 0.0
      %v5587 = vadd.f32 %v5585, %v5586
      %v5588 = vsel %vm365, %v5541, 0.0
      %v5589 = vadd.f32 %v5587, %v5588
      %v5590 = vsel %vm365, %v5542, 0.0
      %v5591 = vadd.f32 %v5589, %v5590
      %v5592 = vsel %vm365, %v5543, 0.0
      %v5593 = vadd.f32 %v5591, %v5592
      %v5594 = vsel %vm365, %v5544, 0.0
      %v5595 = vadd.f32 %v5593, %v5594
      %v5596 = vsel %vm365, %v5545, 0.0
      %v5597 = vadd.f32 %v5595, %v5596
      %v5598 = vsel %vm365, %v5546, 0.0
      %v5599 = vadd.f32 %v5597, %v5598
      %v5600 = vsel %vm365, %v5547, 0.0
      %v5601 = vadd.f32 %v5599, %v5600
      %v5602 = vsel %vm365, %v5548, 0.0
      %v5603 = vadd.f32 %v5601, %v5602
      %v5604 = vsel %vm365, %v5549, 0.0
      %v5605 = vadd.f32 %v5603, %v5604
      %v5606 = vsel %vm365, %v5550, 0.0
      %v5607 = vadd.f32 %v5605, %v5606
      %v5608 = vsel %vm365, %v5551, 0.0
      %v5609 = vadd.f32 %v5607, %v5608
      %v5610 = vsel %vm365, %v5552, 0.0
      %v5611 = vadd.f32 %v5609, %v5610
      %v5612 = vsel %vm365, %v5553, 0.0
      %v5613 = vadd.f32 %v5611, %v5612
      %v5614 = vsel %vm365, %v5554, 0.0
      %v5615 = vadd.f32 %v5613, %v5614
      %v5616 = vsel %vm365, %v5555, 0.0
      %v5617 = vadd.f32 %v5615, %v5616
      %v5618 = vsel %vm365, %v5556, 0.0
      %v5619 = vadd.f32 %v5617, %v5618
      %v5620 = vrot.slane %v5619, 4
      %v5621 = vadd.f32 %v5619, %v5620
      %v5622 = vrot.slane %v5621, 2
      %v5623 = vadd.f32 %v5621, %v5622
      %v5624 = vrot.slane %v5623, 1
      %v5625 = vadd.f32 %v5623, %v5624
      %v5626 = vmul.f32 %v5625, 0.00390625
      %v5627 = vld [vmem:[%s7] sm:$0x1]
      %v5628 = vmul.f32 %v5627, %v5626
      %vm5629 = vcmask 122880
      %v5630 = vsel %vm5629, %v5628, 0.0
      %5631 = vadd.xlane.f32.xlu0 %v5630
      %v5632 = vpop.xlane.xlu0 %5631
      %v5633 = vmax.f32 %v5632, 0.0
      %v5634 = vld [vmem:[%s8] sm:$0x1]
      %v5635 = vmul.f32 %v5634, %v5633
      %v5636 = vadd.f32 %v5635, 0.0
      %v5637 = vxor.u32 %v5636, 2147483648
      %v5638 = vmul.f32 %v5637, 1.442695
      %v5639 = vpow.pop %v5638
      %v5640 = vadd.f32 %v5639, 1.0
      %v5641 = vrcp.pop %v5640
      %v5642 = vmul.f32 %v5640, %v5641
      %v5643 = vsub.f32 1.0, %v5642
      %v5644 = vmul.f32 %v5641, %v5643
      %v5645 = vadd.f32 %v5641, %v5644
      %vm5646 = vweird.f32 %v5640
      %vm5647 = vweird.f32 %v5641
      %vm5648 = vmor %vm5646, %vm5647
      %v5649 = vsel %vm5648, %v5641, %v5645
      %v5650 = vand.u32 2147483647, %v5640
      %vm5651 = vcmp.eq.f32.partialorder %v5650, 8.507059e+37
      %v5652 = vand.u32 %v5640, 2147483648
      %v5653 = vor.u32 1.1754944e-38, %v5652
      %v5654 = vsel %vm5651, %v5653, %v5649
      %v5655 = vmul.f32 1.0, %v5654
      %v5657 = vperm.slane %v5655, 0
      %v5659 = vmul.f32 %v5525, %v5657
      %v5660 = vmul.f32 %v5526, %v5657
      %v5661 = vmul.f32 %v5527, %v5657
      %v5662 = vmul.f32 %v5528, %v5657
      %v5663 = vmul.f32 %v5529, %v5657
      %v5664 = vmul.f32 %v5530, %v5657
      %v5665 = vmul.f32 %v5531, %v5657
      %v5666 = vmul.f32 %v5532, %v5657
      %v5667 = vmul.f32 %v5533, %v5657
      %v5668 = vmul.f32 %v5534, %v5657
      %v5669 = vmul.f32 %v5535, %v5657
      %v5670 = vmul.f32 %v5536, %v5657
      %v5671 = vmul.f32 %v5537, %v5657
      %v5672 = vmul.f32 %v5538, %v5657
      %v5673 = vmul.f32 %v5539, %v5657
      %v5674 = vmul.f32 %v5540, %v5657
      %v5675 = vmul.f32 %v5541, %v5657
      %v5676 = vmul.f32 %v5542, %v5657
      %v5677 = vmul.f32 %v5543, %v5657
      %v5678 = vmul.f32 %v5544, %v5657
      %v5679 = vmul.f32 %v5545, %v5657
      %v5680 = vmul.f32 %v5546, %v5657
      %v5681 = vmul.f32 %v5547, %v5657
      %v5682 = vmul.f32 %v5548, %v5657
      %v5683 = vmul.f32 %v5549, %v5657
      %v5684 = vmul.f32 %v5550, %v5657
      %v5685 = vmul.f32 %v5551, %v5657
      %v5686 = vmul.f32 %v5552, %v5657
      %v5687 = vmul.f32 %v5553, %v5657
      %v5688 = vmul.f32 %v5554, %v5657
      %v5689 = vmul.f32 %v5555, %v5657
      %v5690 = vmul.f32 %v5556, %v5657
      %v5691 = vadd.f32 %v5659, %v333
      %v5692 = vadd.f32 %v5660, %v334
      %v5693 = vadd.f32 %v5661, %v335
      %v5694 = vadd.f32 %v5662, %v336
      %v5695 = vadd.f32 %v5663, %v337
      %v5696 = vadd.f32 %v5664, %v338
      %v5697 = vadd.f32 %v5665, %v339
      %v5698 = vadd.f32 %v5666, %v340
      %v5699 = vadd.f32 %v5667, %v341
      %v5700 = vadd.f32 %v5668, %v342
      %v5701 = vadd.f32 %v5669, %v343
      %v5702 = vadd.f32 %v5670, %v344
      %v5703 = vadd.f32 %v5671, %v345
      %v5704 = vadd.f32 %v5672, %v346
      %v5705 = vadd.f32 %v5673, %v347
      %v5706 = vadd.f32 %v5674, %v348
      %v5707 = vadd.f32 %v5675, %v349
      %v5708 = vadd.f32 %v5676, %v350
      %v5709 = vadd.f32 %v5677, %v351
      %v5710 = vadd.f32 %v5678, %v352
      %v5711 = vadd.f32 %v5679, %v353
      %v5712 = vadd.f32 %v5680, %v354
      %v5713 = vadd.f32 %v5681, %v355
      %v5714 = vadd.f32 %v5682, %v356
      %v5715 = vadd.f32 %v5683, %v357
      %v5716 = vadd.f32 %v5684, %v358
      %v5717 = vadd.f32 %v5685, %v359
      %v5718 = vadd.f32 %v5686, %v360
      %v5719 = vadd.f32 %v5687, %v361
      %v5720 = vadd.f32 %v5688, %v362
      %v5721 = vadd.f32 %v5689, %v363
      %v5722 = vadd.f32 %v5690, %v364
      %v5723 = vmax.f32 %v5691, 0.0
      %v5724 = vmax.f32 %v5692, 0.0
      %v5725 = vmax.f32 %v5693, 0.0
      %v5726 = vmax.f32 %v5694, 0.0
      %v5727 = vmax.f32 %v5695, 0.0
      %v5728 = vmax.f32 %v5696, 0.0
      %v5729 = vmax.f32 %v5697, 0.0
      %v5730 = vmax.f32 %v5698, 0.0
      %v5731 = vmax.f32 %v5699, 0.0
      %v5732 = vmax.f32 %v5700, 0.0
      %v5733 = vmax.f32 %v5701, 0.0
      %v5734 = vmax.f32 %v5702, 0.0
      %v5735 = vmax.f32 %v5703, 0.0
      %v5736 = vmax.f32 %v5704, 0.0
      %v5737 = vmax.f32 %v5705, 0.0
      %v5738 = vmax.f32 %v5706, 0.0
      %v5739 = vmax.f32 %v5707, 0.0
      %v5740 = vmax.f32 %v5708, 0.0
      %v5741 = vmax.f32 %v5709, 0.0
      %v5742 = vmax.f32 %v5710, 0.0
      %v5743 = vmax.f32 %v5711, 0.0
      %v5744 = vmax.f32 %v5712, 0.0
      %v5745 = vmax.f32 %v5713, 0.0
      %v5746 = vmax.f32 %v5714, 0.0
      %v5747 = vmax.f32 %v5715, 0.0
      %v5748 = vmax.f32 %v5716, 0.0
      %v5749 = vmax.f32 %v5717, 0.0
      %v5750 = vmax.f32 %v5718, 0.0
      %v5751 = vmax.f32 %v5719, 0.0
      %v5752 = vmax.f32 %v5720, 0.0
      %v5753 = vmax.f32 %v5721, 0.0
      %v5754 = vmax.f32 %v5722, 0.0
      %5755 = vst.msk [vmem:[%s332] sm:$0xff] %vm365, %v5723
      %5756 = vst.msk [vmem:[%s332 + $0x8] sm:$0xff] %vm365, %v5724
      %5757 = vst.msk [vmem:[%s332 + $0x10] sm:$0xff] %vm365, %v5725
      %5758 = vst.msk [vmem:[%s332 + $0x18] sm:$0xff] %vm365, %v5726
      %5759 = vst.msk [vmem:[%s332 + $0x20] sm:$0xff] %vm365, %v5727
      %5760 = vst.msk [vmem:[%s332 + $0x28] sm:$0xff] %vm365, %v5728
      %5761 = vst.msk [vmem:[%s332 + $0x30] sm:$0xff] %vm365, %v5729
      %5762 = vst.msk [vmem:[%s332 + $0x38] sm:$0xff] %vm365, %v5730
      %5763 = vst.msk [vmem:[%s332 + $0x40] sm:$0xff] %vm365, %v5731
      %5764 = vst.msk [vmem:[%s332 + $0x48] sm:$0xff] %vm365, %v5732
      %5765 = vst.msk [vmem:[%s332 + $0x50] sm:$0xff] %vm365, %v5733
      %5766 = vst.msk [vmem:[%s332 + $0x58] sm:$0xff] %vm365, %v5734
      %5767 = vst.msk [vmem:[%s332 + $0x60] sm:$0xff] %vm365, %v5735
      %5768 = vst.msk [vmem:[%s332 + $0x68] sm:$0xff] %vm365, %v5736
      %5769 = vst.msk [vmem:[%s332 + $0x70] sm:$0xff] %vm365, %v5737
      %5770 = vst.msk [vmem:[%s332 + $0x78] sm:$0xff] %vm365, %v5738
      %5771 = vst.msk [vmem:[%s332 + $0x80] sm:$0xff] %vm365, %v5739
      %5772 = vst.msk [vmem:[%s332 + $0x88] sm:$0xff] %vm365, %v5740
      %5773 = vst.msk [vmem:[%s332 + $0x90] sm:$0xff] %vm365, %v5741
      %5774 = vst.msk [vmem:[%s332 + $0x98] sm:$0xff] %vm365, %v5742
      %5775 = vst.msk [vmem:[%s332 + $0xa0] sm:$0xff] %vm365, %v5743
      %5776 = vst.msk [vmem:[%s332 + $0xa8] sm:$0xff] %vm365, %v5744
      %5777 = vst.msk [vmem:[%s332 + $0xb0] sm:$0xff] %vm365, %v5745
      %5778 = vst.msk [vmem:[%s332 + $0xb8] sm:$0xff] %vm365, %v5746
      %5779 = vst.msk [vmem:[%s332 + $0xc0] sm:$0xff] %vm365, %v5747
      %5780 = vst.msk [vmem:[%s332 + $0xc8] sm:$0xff] %vm365, %v5748
      %5781 = vst.msk [vmem:[%s332 + $0xd0] sm:$0xff] %vm365, %v5749
      %5782 = vst.msk [vmem:[%s332 + $0xd8] sm:$0xff] %vm365, %v5750
      %5783 = vst.msk [vmem:[%s332 + $0xe0] sm:$0xff] %vm365, %v5751
      %5784 = vst.msk [vmem:[%s332 + $0xe8] sm:$0xff] %vm365, %v5752
      %5785 = vst.msk [vmem:[%s332 + $0xf0] sm:$0xff] %vm365, %v5753
      %5786 = vst.msk [vmem:[%s332 + $0xf8] sm:$0xff] %vm365, %v5754
      %p5787 = scmp.lt.s32.totalorder %s20, 1
      %s5788 = scalar_select %p5787, %s20, 1
      %s5789 = smul.addr %s5788, 32
      %s5790 = smul.addr %s5789, 8
      %s5791 = scalar_lea.vmem %s9, %s5790
      // Predicated region
      $region57: #{dense_block.2} parent=55 // pred_check
        %p5792 = pneg %p232
      $region58: #{dense_block.2} parent=55 // pred_check_branch
        %5794 = sbr.rel (%p5792) target = $region60
      $region59: #{dense_block.2} parent=55 // pred_region
        _
      $region60: #{dense_block.2} parent=55 // pred_fallthru
        _
    $region56: #{dense_block.2} parent=5 // pred_fallthru
      _
    %p5795 = scmp.le.s32.totalorder 2, %s15
    // Predicated region
    $region61: #{dense_block.2} parent=5 // pred_check
      %p5796 = pneg %p5795
    $region62: #{dense_block.2} parent=5 // pred_check_branch
      %5798 = sbr.rel (%p5796) target = $region64
    $region63: #{dense_block.2} parent=5 // pred_region
      %s5799 = ssub.s32 %s15, 2
      // Predicated region
      $region65: #{dense_block.2} parent=63 // pred_check
        %p5800 = pneg %p238
      $region66: #{dense_block.2} parent=63 // pred_check_branch
        %5802 = sbr.rel (%p5800) target = $region68
      $region67: #{dense_block.2} parent=63 // pred_region
        %p5803 = scmp.lt.s32.totalorder %s21, 1
        %s5804 = scalar_select %p5803, %s21, 1
        %s5805 = smul.addr %s5804, 32
        %s5806 = smul.addr %s5805, 8
        %s5807 = scalar_lea.vmem %s9, %s5806
      $region68: #{dense_block.2} parent=63 // pred_fallthru
        _
    $region64: #{dense_block.2} parent=5 // pred_fallthru
      _
  $region6: #{dense_block.2} parent=0 // loop_footer
    %s19 = sadd.s32 1, %s15
  $region7: #{dense_block.2} parent=0 // loop_footer_branch
    %14 = sbr.rel target = $region3
  $region8: #{dense_block.2} parent=0 // loop_exit
    _

// kernel: dense_block.3
$region0: #{dense_block.3}
  #allocation0 [shape = 'u32[]', space=smem, size = 0x4, offset = 0x4, fixed_abs, tag = 'smem constant byte address 0x4 - core index']
  #allocation1 [shape = 'u32[72,128]{1,0:T(1,128)}', space=vmem, size = 0x9000, scoped, tag = 'internal scratch']
  #allocation2 [shape = 'f32[18,18,32]{2,1,0:T(8,128)}', space=vmem, size = 0x36000, scoped, tag = 'scratch operand']
  #allocation3 [shape = 'f32[18,18,16]{2,1,0:T(8,128)}', space=vmem, size = 0x36000, scoped, tag = 'scratch operand']
  %s0 = inlined_call_operand.vmem [shape: f32[2,16,16,32], index: 0, kind: input, shape index: {}]
  %s1 = inlined_call_operand.vmem [shape: f32[9,32,16], index: 1, kind: input, shape index: {}]
  %s2 = inlined_call_operand.vmem [shape: f32[1,16], index: 2, kind: input, shape index: {}]
  %s3 = inlined_call_operand.vmem [shape: f32[1,16], index: 3, kind: input, shape index: {}]
  %s4 = inlined_call_operand.vmem [shape: f32[9,16,16], index: 4, kind: input, shape index: {}]
  %s5 = inlined_call_operand.vmem [shape: f32[1,16], index: 5, kind: input, shape index: {}]
  %s6 = inlined_call_operand.vmem [shape: f32[1,16], index: 6, kind: input, shape index: {}]
  %s7 = inlined_call_operand.vmem [shape: f32[1,16], index: 7, kind: input, shape index: {}]
  %s8 = inlined_call_operand.vmem [shape: f32[1,16], index: 8, kind: input, shape index: {}]
  %s9 = inlined_call_operand.vmem [shape: f32[32,16], index: 9, kind: input, shape index: {}]
  %s10 = inlined_call_operand.vmem [shape: f32[1,16], index: 10, kind: input, shape index: {}]
  %s11 = inlined_call_operand.vmem [shape: f32[1,16], index: 11, kind: input, shape index: {}]
  %s12 = inlined_call_operand.vmem [shape: f32[2,16,16,16], index: 12, kind: output, shape index: {}]
  %s13 = sld [smem:[#allocation0]]
  $region81: #{dense_block.3} parent=0
    _
  %s15 = ssub.s32 1, %s13
  %s16 = scalar_select 0, %s15, %s13
  loop: start=0, step=1, limit=4
  $region2: #{dense_block.3} parent=0 // loop_pre_header
    _
  $region3: #{dense_block.3} parent=0 // loop_header
    %s18 = sphi 0, %s22
    %p19 = scmp.ge.s32.totalorder %s18, 4
    %s28 = sphi 0, %s30
    %s31 = sphi 0, %s28
    %s32 = sphi 0, %s31
    %s48 = sphi 0, %s32
    %s52 = sphi 0, %s52
    %s54 = sphi 0, %s52
    %s55 = sphi 0, %s54
    %s69 = sphi 0, %s55
    %s73 = sphi 0, %s73
    %s75 = sphi 0, %s73
    %s76 = sphi 0, %s75
    %s90 = sphi 0, %s76
    %s94 = sphi 0, %s94
    %s96 = sphi 0, %s94
    %s97 = sphi 0, %s96
    %s111 = sphi 0, %s97
    %s115 = sphi 0, %s115
    %s117 = sphi 0, %s115
    %s118 = sphi 0, %s117
    %s132 = sphi 0, %s118
    %s136 = sphi 0, %s136
    %s138 = sphi 0, %s136
    %s139 = sphi 0, %s138
    %s153 = sphi 0, %s139
    %s157 = sphi 0, %s157
    %s159 = sphi 0, %s157
    %s160 = sphi 0, %s159
    %s174 = sphi 0, %s160
    %s178 = sphi 0, %s178
    %s180 = sphi 0, %s178
    %s181 = sphi 0, %s180
    %s195 = sphi 0, %s181
    %s199 = sphi 0, %s199
    %s201 = sphi 0, %s199
    %s202 = sphi 0, %s201
    %s216 = sphi 0, %s202
    %s220 = sphi 0, %s220
    %s222 = sphi 0, %s220
    %s223 = sphi 0, %s222
    %s237 = sphi 0, %s223
    %s241 = sphi 0, %s241
    %s243 = sphi 0, %s241
    %s244 = sphi 0, %s243
    %s258 = sphi 0, %s244
    %s262 = sphi 0, %s262
    %s264 = sphi 0, %s262
    %s265 = sphi 0, %s264
    %s279 = sphi 0, %s265
    %s285 = sphi 0, %s287
    %s288 = sphi 0, %s285
    %s289 = sphi 0, %s288
    %s305 = sphi 0, %s289
  $region4: #{dense_block.3} parent=0 // loop_header_branch
    %21 = sbr.rel (%p19) target = $region8
  $region5: #{dense_block.3} parent=0 // loop_body
    %s23 = ssub.s32 %s18, 1
    %s24 = ssub.s32 %s18, 2
    %s25 = sadd.s32 %s18, 1
    %s26 = ssub.s32 %s18, %s25
    %p27 = scmp.eq.s32.totalorder %s26, 0
    %s29 = sadd.s32 %s28, 1
    %s30 = scalar_select %p27, %s28, %s29
    %p33 = pneg %p27
    %p34 = scmp.eq.s32.totalorder %s18, 1
    %p35 = por %p33, %p34
    %p36 = scmp.ne.s32.totalorder %s28, %s31
    %p37 = scmp.eq.s32.totalorder %s18, 0
    %p38 = por %p36, %p37
    %p39 = scmp.ne.s32.totalorder %s28, %s31
    %p40 = scmp.eq.s32.totalorder %s23, 1
    %p41 = por %p39, %p40
    %p42 = scmp.ne.s32.totalorder %s31, %s32
    %p43 = scmp.eq.s32.totalorder %s23, 0
    %p44 = por %p42, %p43
    %p45 = scmp.ne.s32.totalorder %s31, %s32
    %p46 = scmp.eq.s32.totalorder %s24, 1
    %p47 = por %p45, %p46
    %p49 = scmp.ne.s32.totalorder %s32, %s48
    %p50 = scmp.eq.s32.totalorder %s24, 0
    %p51 = por %p49, %p50
    %s53 = sadd.s32 %s52, 1
    %p56 = scmp.eq.s32.totalorder %s18, 1
    %p57 = scmp.ne.s32.totalorder %s52, %s54
    %p58 = scmp.eq.s32.totalorder %s18, 0
    %p59 = por %p57, %p58
    %p60 = scmp.ne.s32.totalorder %s52, %s54
    %p61 = scmp.eq.s32.totalorder %s23, 1
    %p62 = por %p60, %p61
    %p63 = scmp.ne.s32.totalorder %s54, %s55
    %p64 = scmp.eq.s32.totalorder %s23, 0
    %p65 = por %p63, %p64
    %p66 = scmp.ne.s32.totalorder %s54, %s55
    %p67 = scmp.eq.s32.totalorder %s24, 1
    %p68 = por %p66, %p67
    %p70 = scmp.ne.s32.totalorder %s55, %s69
    %p71 = scmp.eq.s32.totalorder %s24, 0
    %p72 = por %p70, %p71
    %s74 = sadd.s32 %s73, 1
    %p77 = scmp.eq.s32.totalorder %s18, 1
    %p78 = scmp.ne.s32.totalorder %s73, %s75
    %p79 = scmp.eq.s32.totalorder %s18, 0
    %p80 = por %p78, %p79
    %p81 = scmp.ne.s32.totalorder %s73, %s75
    %p82 = scmp.eq.s32.totalorder %s23, 1
    %p83 = por %p81, %p82
    %p84 = scmp.ne.s32.totalorder %s75, %s76
    %p85 = scmp.eq.s32.totalorder %s23, 0
    %p86 = por %p84, %p85
    %p87 = scmp.ne.s32.totalorder %s75, %s76
    %p88 = scmp.eq.s32.totalorder %s24, 1
    %p89 = por %p87, %p88
    %p91 = scmp.ne.s32.totalorder %s76, %s90
    %p92 = scmp.eq.s32.totalorder %s24, 0
    %p93 = por %p91, %p92
    %s95 = sadd.s32 %s94, 1
    %p98 = scmp.eq.s32.totalorder %s18, 1
    %p99 = scmp.ne.s32.totalorder %s94, %s96
    %p100 = scmp.eq.s32.totalorder %s18, 0
    %p101 = por %p99, %p100
    %p102 = scmp.ne.s32.totalorder %s94, %s96
    %p103 = scmp.eq.s32.totalorder %s23, 1
    %p104 = por %p102, %p103
    %p105 = scmp.ne.s32.totalorder %s96, %s97
    %p106 = scmp.eq.s32.totalorder %s23, 0
    %p107 = por %p105, %p106
    %p108 = scmp.ne.s32.totalorder %s96, %s97
    %p109 = scmp.eq.s32.totalorder %s24, 1
    %p110 = por %p108, %p109
    %p112 = scmp.ne.s32.totalorder %s97, %s111
    %p113 = scmp.eq.s32.totalorder %s24, 0
    %p114 = por %p112, %p113
    %s116 = sadd.s32 %s115, 1
    %p119 = scmp.eq.s32.totalorder %s18, 1
    %p120 = scmp.ne.s32.totalorder %s115, %s117
    %p121 = scmp.eq.s32.totalorder %s18, 0
    %p122 = por %p120, %p121
    %p123 = scmp.ne.s32.totalorder %s115, %s117
    %p124 = scmp.eq.s32.totalorder %s23, 1
    %p125 = por %p123, %p124
    %p126 = scmp.ne.s32.totalorder %s117, %s118
    %p127 = scmp.eq.s32.totalorder %s23, 0
    %p128 = por %p126, %p127
    %p129 = scmp.ne.s32.totalorder %s117, %s118
    %p130 = scmp.eq.s32.totalorder %s24, 1
    %p131 = por %p129, %p130
    %p133 = scmp.ne.s32.totalorder %s118, %s132
    %p134 = scmp.eq.s32.totalorder %s24, 0
    %p135 = por %p133, %p134
    %s137 = sadd.s32 %s136, 1
    %p140 = scmp.eq.s32.totalorder %s18, 1
    %p141 = scmp.ne.s32.totalorder %s136, %s138
    %p142 = scmp.eq.s32.totalorder %s18, 0
    %p143 = por %p141, %p142
    %p144 = scmp.ne.s32.totalorder %s136, %s138
    %p145 = scmp.eq.s32.totalorder %s23, 1
    %p146 = por %p144, %p145
    %p147 = scmp.ne.s32.totalorder %s138, %s139
    %p148 = scmp.eq.s32.totalorder %s23, 0
    %p149 = por %p147, %p148
    %p150 = scmp.ne.s32.totalorder %s138, %s139
    %p151 = scmp.eq.s32.totalorder %s24, 1
    %p152 = por %p150, %p151
    %p154 = scmp.ne.s32.totalorder %s139, %s153
    %p155 = scmp.eq.s32.totalorder %s24, 0
    %p156 = por %p154, %p155
    %s158 = sadd.s32 %s157, 1
    %p161 = scmp.eq.s32.totalorder %s18, 1
    %p162 = scmp.ne.s32.totalorder %s157, %s159
    %p163 = scmp.eq.s32.totalorder %s18, 0
    %p164 = por %p162, %p163
    %p165 = scmp.ne.s32.totalorder %s157, %s159
    %p166 = scmp.eq.s32.totalorder %s23, 1
    %p167 = por %p165, %p166
    %p168 = scmp.ne.s32.totalorder %s159, %s160
    %p169 = scmp.eq.s32.totalorder %s23, 0
    %p170 = por %p168, %p169
    %p171 = scmp.ne.s32.totalorder %s159, %s160
    %p172 = scmp.eq.s32.totalorder %s24, 1
    %p173 = por %p171, %p172
    %p175 = scmp.ne.s32.totalorder %s160, %s174
    %p176 = scmp.eq.s32.totalorder %s24, 0
    %p177 = por %p175, %p176
    %s179 = sadd.s32 %s178, 1
    %p182 = scmp.eq.s32.totalorder %s18, 1
    %p183 = scmp.ne.s32.totalorder %s178, %s180
    %p184 = scmp.eq.s32.totalorder %s18, 0
    %p185 = por %p183, %p184
    %p186 = scmp.ne.s32.totalorder %s178, %s180
    %p187 = scmp.eq.s32.totalorder %s23, 1
    %p188 = por %p186, %p187
    %p189 = scmp.ne.s32.totalorder %s180, %s181
    %p190 = scmp.eq.s32.totalorder %s23, 0
    %p191 = por %p189, %p190
    %p192 = scmp.ne.s32.totalorder %s180, %s181
    %p193 = scmp.eq.s32.totalorder %s24, 1
    %p194 = por %p192, %p193
    %p196 = scmp.ne.s32.totalorder %s181, %s195
    %p197 = scmp.eq.s32.totalorder %s24, 0
    %p198 = por %p196, %p197
    %s200 = sadd.s32 %s199, 1
    %p203 = scmp.eq.s32.totalorder %s18, 1
    %p204 = scmp.ne.s32.totalorder %s199, %s201
    %p205 = scmp.eq.s32.totalorder %s18, 0
    %p206 = por %p204, %p205
    %p207 = scmp.ne.s32.totalorder %s199, %s201
    %p208 = scmp.eq.s32.totalorder %s23, 1
    %p209 = por %p207, %p208
    %p210 = scmp.ne.s32.totalorder %s201, %s202
    %p211 = scmp.eq.s32.totalorder %s23, 0
    %p212 = por %p210, %p211
    %p213 = scmp.ne.s32.totalorder %s201, %s202
    %p214 = scmp.eq.s32.totalorder %s24, 1
    %p215 = por %p213, %p214
    %p217 = scmp.ne.s32.totalorder %s202, %s216
    %p218 = scmp.eq.s32.totalorder %s24, 0
    %p219 = por %p217, %p218
    %s221 = sadd.s32 %s220, 1
    %p224 = scmp.eq.s32.totalorder %s18, 1
    %p225 = scmp.ne.s32.totalorder %s220, %s222
    %p226 = scmp.eq.s32.totalorder %s18, 0
    %p227 = por %p225, %p226
    %p228 = scmp.ne.s32.totalorder %s220, %s222
    %p229 = scmp.eq.s32.totalorder %s23, 1
    %p230 = por %p228, %p229
    %p231 = scmp.ne.s32.totalorder %s222, %s223
    %p232 = scmp.eq.s32.totalorder %s23, 0
    %p233 = por %p231, %p232
    %p234 = scmp.ne.s32.totalorder %s222, %s223
    %p235 = scmp.eq.s32.totalorder %s24, 1
    %p236 = por %p234, %p235
    %p238 = scmp.ne.s32.totalorder %s223, %s237
    %p239 = scmp.eq.s32.totalorder %s24, 0
    %p240 = por %p238, %p239
    %s242 = sadd.s32 %s241, 1
    %p245 = scmp.eq.s32.totalorder %s18, 1
    %p246 = scmp.ne.s32.totalorder %s241, %s243
    %p247 = scmp.eq.s32.totalorder %s18, 0
    %p248 = por %p246, %p247
    %p249 = scmp.ne.s32.totalorder %s241, %s243
    %p250 = scmp.eq.s32.totalorder %s23, 1
    %p251 = por %p249, %p250
    %p252 = scmp.ne.s32.totalorder %s243, %s244
    %p253 = scmp.eq.s32.totalorder %s23, 0
    %p254 = por %p252, %p253
    %p255 = scmp.ne.s32.totalorder %s243, %s244
    %p256 = scmp.eq.s32.totalorder %s24, 1
    %p257 = por %p255, %p256
    %p259 = scmp.ne.s32.totalorder %s244, %s258
    %p260 = scmp.eq.s32.totalorder %s24, 0
    %p261 = por %p259, %p260
    %s263 = sadd.s32 %s262, 1
    %p266 = scmp.eq.s32.totalorder %s18, 1
    %p267 = scmp.ne.s32.totalorder %s262, %s264
    %p268 = scmp.eq.s32.totalorder %s18, 0
    %p269 = por %p267, %p268
    %p270 = scmp.ne.s32.totalorder %s262, %s264
    %p271 = scmp.eq.s32.totalorder %s23, 1
    %p272 = por %p270, %p271
    %p273 = scmp.ne.s32.totalorder %s264, %s265
    %p274 = scmp.eq.s32.totalorder %s23, 0
    %p275 = por %p273, %p274
    %p276 = scmp.ne.s32.totalorder %s264, %s265
    %p277 = scmp.eq.s32.totalorder %s24, 1
    %p278 = por %p276, %p277
    %p280 = scmp.ne.s32.totalorder %s265, %s279
    %p281 = scmp.eq.s32.totalorder %s24, 0
    %p282 = por %p280, %p281
    %s283 = ssub.s32 %s18, %s25
    %p284 = scmp.eq.s32.totalorder %s283, 0
    %s286 = sadd.s32 %s285, 1
    %s287 = scalar_select %p284, %s285, %s286
    %p290 = pneg %p284
    %p291 = scmp.eq.s32.totalorder %s18, 1
    %p292 = por %p290, %p291
    %p293 = scmp.ne.s32.totalorder %s285, %s288
    %p294 = scmp.eq.s32.totalorder %s18, 0
    %p295 = por %p293, %p294
    %p296 = scmp.ne.s32.totalorder %s285, %s288
    %p297 = scmp.eq.s32.totalorder %s23, 1
    %p298 = por %p296, %p297
    %p299 = scmp.ne.s32.totalorder %s288, %s289
    %p300 = scmp.eq.s32.totalorder %s23, 0
    %p301 = por %p299, %p300
    %p302 = scmp.ne.s32.totalorder %s288, %s289
    %p303 = scmp.eq.s32.totalorder %s24, 1
    %p304 = por %p302, %p303
    %p306 = scmp.ne.s32.totalorder %s289, %s305
    %p307 = scmp.eq.s32.totalorder %s24, 0
    %p308 = por %p306, %p307
    %p309 = scmp.le.s32.totalorder 1, %s18
    %p310 = scmp.lt.s32.totalorder %s18, 3
    %p311 = pnand %p309, %p310
    %p312 = pneg %p311
    // Predicated region
    $region9: #{dense_block.3} parent=5 // pred_check
      _
    $region10: #{dense_block.3} parent=5 // pred_check_branch
      %314 = sbr.rel (%p311) target = $region12
    $region11: #{dense_block.3} parent=5 // pred_region
      %s315 = ssub.s32 %s18, 1
      // Predicated region
      $region13: #{dense_block.3} parent=11 // pred_check
        %p316 = pneg %p65
      $region14: #{dense_block.3} parent=11 // pred_check_branch
        %318 = sbr.rel (%p316) target = $region16
      $region15: #{dense_block.3} parent=11 // pred_region
        _
      $region16: #{dense_block.3} parent=11 // pred_fallthru
        _
      // Predicated region
      $region17: #{dense_block.3} parent=11 // pred_check
        %p319 = pneg %p86
      $region18: #{dense_block.3} parent=11 // pred_check_branch
        %321 = sbr.rel (%p319) target = $region20
      $region19: #{dense_block.3} parent=11 // pred_region
        _
      $region20: #{dense_block.3} parent=11 // pred_fallthru
        _
      // Predicated region
      $region21: #{dense_block.3} parent=11 // pred_check
        %p322 = pneg %p107
      $region22: #{dense_block.3} parent=11 // pred_check_branch
        %324 = sbr.rel (%p322) target = $region24
      $region23: #{dense_block.3} parent=11 // pred_region
        _
      $region24: #{dense_block.3} parent=11 // pred_fallthru
        _
      // Predicated region
      $region25: #{dense_block.3} parent=11 // pred_check
        %p325 = pneg %p128
      $region26: #{dense_block.3} parent=11 // pred_check_branch
        %327 = sbr.rel (%p325) target = $region28
      $region27: #{dense_block.3} parent=11 // pred_region
        _
      $region28: #{dense_block.3} parent=11 // pred_fallthru
        _
      // Predicated region
      $region29: #{dense_block.3} parent=11 // pred_check
        %p328 = pneg %p149
      $region30: #{dense_block.3} parent=11 // pred_check_branch
        %330 = sbr.rel (%p328) target = $region32
      $region31: #{dense_block.3} parent=11 // pred_region
        _
      $region32: #{dense_block.3} parent=11 // pred_fallthru
        _
      // Predicated region
      $region33: #{dense_block.3} parent=11 // pred_check
        %p331 = pneg %p170
      $region34: #{dense_block.3} parent=11 // pred_check_branch
        %333 = sbr.rel (%p331) target = $region36
      $region35: #{dense_block.3} parent=11 // pred_region
        _
      $region36: #{dense_block.3} parent=11 // pred_fallthru
        _
      // Predicated region
      $region37: #{dense_block.3} parent=11 // pred_check
        %p334 = pneg %p191
      $region38: #{dense_block.3} parent=11 // pred_check_branch
        %336 = sbr.rel (%p334) target = $region40
      $region39: #{dense_block.3} parent=11 // pred_region
        _
      $region40: #{dense_block.3} parent=11 // pred_fallthru
        _
      // Predicated region
      $region41: #{dense_block.3} parent=11 // pred_check
        %p337 = pneg %p212
      $region42: #{dense_block.3} parent=11 // pred_check_branch
        %339 = sbr.rel (%p337) target = $region44
      $region43: #{dense_block.3} parent=11 // pred_region
        _
      $region44: #{dense_block.3} parent=11 // pred_fallthru
        _
      // Predicated region
      $region45: #{dense_block.3} parent=11 // pred_check
        %p340 = pneg %p233
      $region46: #{dense_block.3} parent=11 // pred_check_branch
        %342 = sbr.rel (%p340) target = $region48
      $region47: #{dense_block.3} parent=11 // pred_region
        _
      $region48: #{dense_block.3} parent=11 // pred_fallthru
        _
      // Predicated region
      $region49: #{dense_block.3} parent=11 // pred_check
        %p343 = pneg %p254
      $region50: #{dense_block.3} parent=11 // pred_check_branch
        %345 = sbr.rel (%p343) target = $region52
      $region51: #{dense_block.3} parent=11 // pred_region
        _
      $region52: #{dense_block.3} parent=11 // pred_fallthru
        _
      // Predicated region
      $region53: #{dense_block.3} parent=11 // pred_check
        %p346 = pneg %p275
      $region54: #{dense_block.3} parent=11 // pred_check_branch
        %348 = sbr.rel (%p346) target = $region56
      $region55: #{dense_block.3} parent=11 // pred_region
        _
      $region56: #{dense_block.3} parent=11 // pred_fallthru
        _
    $region12: #{dense_block.3} parent=5 // pred_fallthru
      _
    %p349 = scmp.lt.s32.totalorder %s18, 2
    // Predicated region
    $region57: #{dense_block.3} parent=5 // pred_check
      %p350 = pneg %p349
    $region58: #{dense_block.3} parent=5 // pred_check_branch
      %352 = sbr.rel (%p350) target = $region60
    $region59: #{dense_block.3} parent=5 // pred_region
      // Predicated region
      $region61: #{dense_block.3} parent=59 // pred_check
        %p353 = pneg %p38
      $region62: #{dense_block.3} parent=59 // pred_check_branch
        %355 = sbr.rel (%p353) target = $region64
      $region63: #{dense_block.3} parent=59 // pred_region
        %p356 = scmp.lt.s32.totalorder %s18, 1
        %s357 = scalar_select %p356, %s18, 1
        %s358 = smul.addr %s357, 32
        %s359 = smul.addr %s358, 8
        %s360 = scalar_lea.vmem %s0, %s359
      $region64: #{dense_block.3} parent=59 // pred_fallthru
        _
    $region60: #{dense_block.3} parent=5 // pred_fallthru
      _
    %p361 = scmp.le.s32.totalorder 1, %s18
    %p362 = scmp.lt.s32.totalorder %s18, 3
    %p363 = pnand %p361, %p362
    %p364 = pneg %p363
    // Predicated region
    $region65: #{dense_block.3} parent=5 // pred_check
      _
    $region66: #{dense_block.3} parent=5 // pred_check_branch
      %366 = sbr.rel (%p363) target = $region68
    $region67: #{dense_block.3} parent=5 // pred_region
      %s367 = ssub.s32 %s18, 1
      %p368 = scmp.lt.s32.totalorder %s23, 1
      %s369 = scalar_select %p368, %s23, 1
      %s370 = smul.addr %s369, 32
      %s371 = smul.addr %s370, 8
      %s372 = scalar_lea.vmem %s0, %s371
      %p373 = pneg %p44
      %p374 = pneg %p41
      %p375 = pneg %p65
      %p376 = pneg %p62
      %p377 = pneg %p86
      %p378 = pneg %p83
      %p379 = pneg %p107
      %p380 = pneg %p104
      %p381 = pneg %p128
      %p382 = pneg %p125
      %p383 = pneg %p149
      %p384 = pneg %p146
      %p385 = pneg %p170
      %p386 = pneg %p167
      %p387 = pneg %p191
      %p388 = pneg %p188
      %p389 = pneg %p212
      %p390 = pneg %p209
      %p391 = pneg %p233
      %p392 = pneg %p230
      %p393 = pneg %p254
      %p394 = pneg %p251
      %p395 = pneg %p275
      %p396 = pneg %p272
      %p397 = pneg %p301
      %p398 = pneg %p298
      %p399 = scmp.lt.s32.totalorder %s23, 1
      %s400 = scalar_select %p399, %s23, 1
      %s401 = smul.addr %s400, 32
      %s402 = smul.addr %s401, 8
      %s403 = scalar_lea.vmem %s12, %s402
      %p404 = scmp.lt.s32.totalorder %s23, 1
      %s405 = scalar_select %p404, %s23, 1
      %s406 = smul.addr %s405, 32
      %s407 = smul.addr %s406, 8
      %s408 = scalar_lea.vmem %s0, %s407
      %p409 = scmp.lt.s32.totalorder %s23, 1
      %s410 = scalar_select %p409, %s23, 1
      %s411 = smul.addr %s410, 32
      %s412 = smul.addr %s411, 8
      %s413 = scalar_lea.vmem %s12, %s412
      %v414 = vld [vmem:[%s408] sm:$0xff]
      %v415 = vld [vmem:[%s408 + $0x8] sm:$0xff]
      %v416 = vld [vmem:[%s408 + $0x10] sm:$0xff]
      %v417 = vld [vmem:[%s408 + $0x18] sm:$0xff]
      %v418 = vld [vmem:[%s408 + $0x20] sm:$0xff]
      %v419 = vld [vmem:[%s408 + $0x28] sm:$0xff]
      %v420 = vld [vmem:[%s408 + $0x30] sm:$0xff]
      %v421 = vld [vmem:[%s408 + $0x38] sm:$0xff]
      %v422 = vld [vmem:[%s408 + $0x40] sm:$0xff]
      %v423 = vld [vmem:[%s408 + $0x48] sm:$0xff]
      %v424 = vld [vmem:[%s408 + $0x50] sm:$0xff]
      %v425 = vld [vmem:[%s408 + $0x58] sm:$0xff]
      %v426 = vld [vmem:[%s408 + $0x60] sm:$0xff]
      %v427 = vld [vmem:[%s408 + $0x68] sm:$0xff]
      %v428 = vld [vmem:[%s408 + $0x70] sm:$0xff]
      %v429 = vld [vmem:[%s408 + $0x78] sm:$0xff]
      %v430 = vld [vmem:[%s408 + $0x80] sm:$0xff]
      %v431 = vld [vmem:[%s408 + $0x88] sm:$0xff]
      %v432 = vld [vmem:[%s408 + $0x90] sm:$0xff]
      %v433 = vld [vmem:[%s408 + $0x98] sm:$0xff]
      %v434 = vld [vmem:[%s408 + $0xa0] sm:$0xff]
      %v435 = vld [vmem:[%s408 + $0xa8] sm:$0xff]
      %v436 = vld [vmem:[%s408 + $0xb0] sm:$0xff]
      %v437 = vld [vmem:[%s408 + $0xb8] sm:$0xff]
      %v438 = vld [vmem:[%s408 + $0xc0] sm:$0xff]
      %v439 = vld [vmem:[%s408 + $0xc8] sm:$0xff]
      %v440 = vld [vmem:[%s408 + $0xd0] sm:$0xff]
      %v441 = vld [vmem:[%s408 + $0xd8] sm:$0xff]
      %v442 = vld [vmem:[%s408 + $0xe0] sm:$0xff]
      %v443 = vld [vmem:[%s408 + $0xe8] sm:$0xff]
      %v444 = vld [vmem:[%s408 + $0xf0] sm:$0xff]
      %v445 = vld [vmem:[%s408 + $0xf8] sm:$0xff]
      %vm446 = vcmask 261120
      %447 = vst.msk [vmem:[#allocation2] sm:$0xff] %vm446, 0.0
      %448 = vst.msk [vmem:[#allocation2 + $0x8] sm:$0xff] %vm446, 0.0
      %vm449 = vcmask 254976
      %450 = vst.msk [vmem:[#allocation2 + $0x10] sm:$0x3] %vm449, 0.0
      %451 = vst.msk [vmem:[#allocation2 + $0x18] sm:$0xff] %vm446, 0.0
      %452 = vst.msk [vmem:[#allocation2 + $0x20] sm:$0xff] %vm446, 0.0
      %453 = vst.msk [vmem:[#allocation2 + $0x28] sm:$0x3] %vm449, 0.0
      %454 = vst.msk [vmem:[#allocation2 + $0x30] sm:$0xff] %vm446, 0.0
      %455 = vst.msk [vmem:[#allocation2 + $0x38] sm:$0xff] %vm446, 0.0
      %456 = vst.msk [vmem:[#allocation2 + $0x40] sm:$0x3] %vm449, 0.0
      %457 = vst.msk [vmem:[#allocation2 + $0x48] sm:$0xff] %vm446, 0.0
      %458 = vst.msk [vmem:[#allocation2 + $0x50] sm:$0xff] %vm446, 0.0
      %459 = vst.msk [vmem:[#allocation2 + $0x58] sm:$0x3] %vm449, 0.0
      %460 = vst.msk [vmem:[#allocation2 + $0x60] sm:$0xff] %vm446, 0.0
      %461 = vst.msk [vmem:[#allocation2 + $0x68] sm:$0xff] %vm446, 0.0
      %462 = vst.msk [vmem:[#allocation2 + $0x70] sm:$0x3] %vm449, 0.0
      %463 = vst.msk [vmem:[#allocation2 + $0x78] sm:$0xff] %vm446, 0.0
      %464 = vst.msk [vmem:[#allocation2 + $0x80] sm:$0xff] %vm446, 0.0
      %465 = vst.msk [vmem:[#allocation2 + $0x88] sm:$0x3] %vm449, 0.0
      %466 = vst.msk [vmem:[#allocation2 + $0x90] sm:$0xff] %vm446, 0.0
      %467 = vst.msk [vmem:[#allocation2 + $0x98] sm:$0xff] %vm446, 0.0
      %468 = vst.msk [vmem:[#allocation2 + $0xa0] sm:$0x3] %vm449, 0.0
      %469 = vst.msk [vmem:[#allocation2 + $0xa8] sm:$0xff] %vm446, 0.0
      %470 = vst.msk [vmem:[#allocation2 + $0xb0] sm:$0xff] %vm446, 0.0
      %471 = vst.msk [vmem:[#allocation2 + $0xb8] sm:$0x3] %vm449, 0.0
      %472 = vst.msk [vmem:[#allocation2 + $0xc0] sm:$0xff] %vm446, 0.0
      %473 = vst.msk [vmem:[#allocation2 + $0xc8] sm:$0xff] %vm446, 0.0
      %474 = vst.msk [vmem:[#allocation2 + $0xd0] sm:$0x3] %vm449, 0.0
      %475 = vst.msk [vmem:[#allocation2 + $0xd8] sm:$0xff] %vm446, 0.0
      %476 = vst.msk [vmem:[#allocation2 + $0xe0] sm:$0xff] %vm446, 0.0
      %477 = vst.msk [vmem:[#allocation2 + $0xe8] sm:$0x3] %vm449, 0.0
      %478 = vst.msk [vmem:[#allocation2 + $0xf0] sm:$0xff] %vm446, 0.0
      %479 = vst.msk [vmem:[#allocation2 + $0xf8] sm:$0xff] %vm446, 0.0
      %480 = vst.msk [vmem:[#allocation2 + $0x100] sm:$0x3] %vm449, 0.0
      %481 = vst.msk [vmem:[#allocation2 + $0x108] sm:$0xff] %vm446, 0.0
      %482 = vst.msk [vmem:[#allocation2 + $0x110] sm:$0xff] %vm446, 0.0
      %483 = vst.msk [vmem:[#allocation2 + $0x118] sm:$0x3] %vm449, 0.0
      %484 = vst.msk [vmem:[#allocation2 + $0x120] sm:$0xff] %vm446, 0.0
      %485 = vst.msk [vmem:[#allocation2 + $0x128] sm:$0xff] %vm446, 0.0
      %486 = vst.msk [vmem:[#allocation2 + $0x130] sm:$0x3] %vm449, 0.0
      %487 = vst.msk [vmem:[#allocation2 + $0x138] sm:$0xff] %vm446, 0.0
      %488 = vst.msk [vmem:[#allocation2 + $0x140] sm:$0xff] %vm446, 0.0
      %489 = vst.msk [vmem:[#allocation2 + $0x148] sm:$0x3] %vm449, 0.0
      %490 = vst.msk [vmem:[#allocation2 + $0x150] sm:$0xff] %vm446, 0.0
      %491 = vst.msk [vmem:[#allocation2 + $0x158] sm:$0xff] %vm446, 0.0
      %492 = vst.msk [vmem:[#allocation2 + $0x160] sm:$0x3] %vm449, 0.0
      %493 = vst.msk [vmem:[#allocation2 + $0x168] sm:$0xff] %vm446, 0.0
      %494 = vst.msk [vmem:[#allocation2 + $0x170] sm:$0xff] %vm446, 0.0
      %495 = vst.msk [vmem:[#allocation2 + $0x178] sm:$0x3] %vm449, 0.0
      %496 = vst.msk [vmem:[#allocation2 + $0x180] sm:$0xff] %vm446, 0.0
      %497 = vst.msk [vmem:[#allocation2 + $0x188] sm:$0xff] %vm446, 0.0
      %498 = vst.msk [vmem:[#allocation2 + $0x190] sm:$0x3] %vm449, 0.0
      %499 = vst.msk [vmem:[#allocation2 + $0x198] sm:$0xff] %vm446, 0.0
      %500 = vst.msk [vmem:[#allocation2 + $0x1a0] sm:$0xff] %vm446, 0.0
      %501 = vst.msk [vmem:[#allocation2 + $0x1a8] sm:$0x3] %vm449, 0.0
      %s502 = scalar_lea.vmem [#allocation2], 24
      %503 = vst.msk [vmem:[%s502 + $0x1] sm:$0xff] %vm446, %v414
      %504 = vst.msk [vmem:[%s502 + $0x9] sm:$0xff] %vm446, %v415
      %505 = vst.msk [vmem:[%s502 + $0x19] sm:$0xff] %vm446, %v416
      %506 = vst.msk [vmem:[%s502 + $0x21] sm:$0xff] %vm446, %v417
      %507 = vst.msk [vmem:[%s502 + $0x31] sm:$0xff] %vm446, %v418
      %508 = vst.msk [vmem:[%s502 + $0x39] sm:$0xff] %vm446, %v419
      %509 = vst.msk [vmem:[%s502 + $0x49] sm:$0xff] %vm446, %v420
      %510 = vst.msk [vmem:[%s502 + $0x51] sm:$0xff] %vm446, %v421
      %511 = vst.msk [vmem:[%s502 + $0x61] sm:$0xff] %vm446, %v422
      %512 = vst.msk [vmem:[%s502 + $0x69] sm:$0xff] %vm446, %v423
      %513 = vst.msk [vmem:[%s502 + $0x79] sm:$0xff] %vm446, %v424
      %514 = vst.msk [vmem:[%s502 + $0x81] sm:$0xff] %vm446, %v425
      %515 = vst.msk [vmem:[%s502 + $0x91] sm:$0xff] %vm446, %v426
      %516 = vst.msk [vmem:[%s502 + $0x99] sm:$0xff] %vm446, %v427
      %517 = vst.msk [vmem:[%s502 + $0xa9] sm:$0xff] %vm446, %v428
      %518 = vst.msk [vmem:[%s502 + $0xb1] sm:$0xff] %vm446, %v429
      %519 = vst.msk [vmem:[%s502 + $0xc1] sm:$0xff] %vm446, %v430
      %520 = vst.msk [vmem:[%s502 + $0xc9] sm:$0xff] %vm446, %v431
      %521 = vst.msk [vmem:[%s502 + $0xd9] sm:$0xff] %vm446, %v432
      %522 = vst.msk [vmem:[%s502 + $0xe1] sm:$0xff] %vm446, %v433
      %523 = vst.msk [vmem:[%s502 + $0xf1] sm:$0xff] %vm446, %v434
      %524 = vst.msk [vmem:[%s502 + $0xf9] sm:$0xff] %vm446, %v435
      %525 = vst.msk [vmem:[%s502 + $0x109] sm:$0xff] %vm446, %v436
      %526 = vst.msk [vmem:[%s502 + $0x111] sm:$0xff] %vm446, %v437
      %527 = vst.msk [vmem:[%s502 + $0x121] sm:$0xff] %vm446, %v438
      %528 = vst.msk [vmem:[%s502 + $0x129] sm:$0xff] %vm446, %v439
      %529 = vst.msk [vmem:[%s502 + $0x139] sm:$0xff] %vm446, %v440
      %530 = vst.msk [vmem:[%s502 + $0x141] sm:$0xff] %vm446, %v441
      %531 = vst.msk [vmem:[%s502 + $0x151] sm:$0xff] %vm446, %v442
      %532 = vst.msk [vmem:[%s502 + $0x159] sm:$0xff] %vm446, %v443
      %533 = vst.msk [vmem:[%s502 + $0x169] sm:$0xff] %vm446, %v444
      %534 = vst.msk [vmem:[%s502 + $0x171] sm:$0xff] %vm446, %v445
      %v535 = vld [vmem:[#allocation2] sm:$0xff]
      %v536 = vld [vmem:[#allocation2 + $0x8] sm:$0xff]
      %v537 = vld [vmem:[#allocation2 + $0x18] sm:$0xff]
      %v538 = vld [vmem:[#allocation2 + $0x20] sm:$0xff]
      %v539 = vld [vmem:[#allocation2 + $0x30] sm:$0xff]
      %v540 = vld [vmem:[#allocation2 + $0x38] sm:$0xff]
      %v541 = vld [vmem:[#allocation2 + $0x48] sm:$0xff]
      %v542 = vld [vmem:[#allocation2 + $0x50] sm:$0xff]
      %v543 = vld [vmem:[#allocation2 + $0x60] sm:$0xff]
      %v544 = vld [vmem:[#allocation2 + $0x68] sm:$0xff]
      %v545 = vld [vmem:[#allocation2 + $0x78] sm:$0xff]
      %v546 = vld [vmem:[#allocation2 + $0x80] sm:$0xff]
      %v547 = vld [vmem:[#allocation2 + $0x90] sm:$0xff]
      %v548 = vld [vmem:[#allocation2 + $0x98] sm:$0xff]
      %v549 = vld [vmem:[#allocation2 + $0xa8] sm:$0xff]
      %v550 = vld [vmem:[#allocation2 + $0xb0] sm:$0xff]
      %v551 = vld [vmem:[#allocation2 + $0xc0] sm:$0xff]
      %v552 = vld [vmem:[#allocation2 + $0xc8] sm:$0xff]
      %v553 = vld [vmem:[#allocation2 + $0xd8] sm:$0xff]
      %v554 = vld [vmem:[#allocation2 + $0xe0] sm:$0xff]
      %v555 = vld [vmem:[#allocation2 + $0xf0] sm:$0xff]
      %v556 = vld [vmem:[#allocation2 + $0xf8] sm:$0xff]
      %v557 = vld [vmem:[#allocation2 + $0x108] sm:$0xff]
      %v558 = vld [vmem:[#allocation2 + $0x110] sm:$0xff]
      %v559 = vld [vmem:[#allocation2 + $0x120] sm:$0xff]
      %v560 = vld [vmem:[#allocation2 + $0x128] sm:$0xff]
      %v561 = vld [vmem:[#allocation2 + $0x138] sm:$0xff]
      %v562 = vld [vmem:[#allocation2 + $0x140] sm:$0xff]
      %v563 = vld [vmem:[#allocation2 + $0x150] sm:$0xff]
      %v564 = vld [vmem:[#allocation2 + $0x158] sm:$0xff]
      %v565 = vld [vmem:[#allocation2 + $0x168] sm:$0xff]
      %v566 = vld [vmem:[#allocation2 + $0x170] sm:$0xff]
      %v567 = vld [vmem:[%s1] sm:$0xff]
      %v568 = vld [vmem:[%s1 + $0x8] sm:$0xff]
      %v569 = vld [vmem:[%s1 + $0x10] sm:$0xff]
      %v570 = vld [vmem:[%s1 + $0x18] sm:$0xff]
      %v571 = vld [vmem:[#allocation2 + $0x1] sm:$0xff]
      %v572 = vld [vmem:[#allocation2 + $0x9] sm:$0xff]
      %v573 = vld [vmem:[#allocation2 + $0x19] sm:$0xff]
      %v574 = vld [vmem:[#allocation2 + $0x21] sm:$0xff]
      %v575 = vld [vmem:[#allocation2 + $0x31] sm:$0xff]
      %v576 = vld [vmem:[#allocation2 + $0x39] sm:$0xff]
      %v577 = vld [vmem:[#allocation2 + $0x49] sm:$0xff]
      %v578 = vld [vmem:[#allocation2 + $0x51] sm:$0xff]
      %v579 = vld [vmem:[#allocation2 + $0x61] sm:$0xff]
      %v580 = vld [vmem:[#allocation2 + $0x69] sm:$0xff]
      %v581 = vld [vmem:[#allocation2 + $0x79] sm:$0xff]
      %v582 = vld [vmem:[#allocation2 + $0x81] sm:$0xff]
      %v583 = vld [vmem:[#allocation2 + $0x91] sm:$0xff]
      %v584 = vld [vmem:[#allocation2 + $0x99] sm:$0xff]
      %v585 = vld [vmem:[#allocation2 + $0xa9] sm:$0xff]
      %v586 = vld [vmem:[#allocation2 + $0xb1] sm:$0xff]
      %v587 = vld [vmem:[#allocation2 + $0xc1] sm:$0xff]
      %v588 = vld [vmem:[#allocation2 + $0xc9] sm:$0xff]
      %v589 = vld [vmem:[#allocation2 + $0xd9] sm:$0xff]
      %v590 = vld [vmem:[#allocation2 + $0xe1] sm:$0xff]
      %v591 = vld [vmem:[#allocation2 + $0xf1] sm:$0xff]
      %v592 = vld [vmem:[#allocation2 + $0xf9] sm:$0xff]
      %v593 = vld [vmem:[#allocation2 + $0x109] sm:$0xff]
      %v594 = vld [vmem:[#allocation2 + $0x111] sm:$0xff]
      %v595 = vld [vmem:[#allocation2 + $0x121] sm:$0xff]
      %v596 = vld [vmem:[#allocation2 + $0x129] sm:$0xff]
      %v597 = vld [vmem:[#allocation2 + $0x139] sm:$0xff]
      %v598 = vld [vmem:[#allocation2 + $0x141] sm:$0xff]
      %v599 = vld [vmem:[#allocation2 + $0x151] sm:$0xff]
      %v600 = vld [vmem:[#allocation2 + $0x159] sm:$0xff]
      %v601 = vld [vmem:[#allocation2 + $0x169] sm:$0xff]
      %v602 = vld [vmem:[#allocation2 + $0x171] sm:$0xff]
      %s603 = scalar_lea.vmem %s1, 32
      %v604 = vld [vmem:[%s603] sm:$0xff]
      %v605 = vld [vmem:[%s603 + $0x8] sm:$0xff]
      %v606 = vld [vmem:[%s603 + $0x10] sm:$0xff]
      %v607 = vld [vmem:[%s603 + $0x18] sm:$0xff]
      %v609 = vsel %vm446, %v571, 0
      %v612 = vsel %vm446, %v572, 0
      %v615 = vsel %vm446, %v573, 0
      %v618 = vsel %vm446, %v574, 0
      %v621 = vsel %vm446, %v575, 0
      %v624 = vsel %vm446, %v576, 0
      %v627 = vsel %vm446, %v577, 0
      %v630 = vsel %vm446, %v578, 0
      %v633 = vsel %vm446, %v579, 0
      %v636 = vsel %vm446, %v580, 0
      %v639 = vsel %vm446, %v581, 0
      %v642 = vsel %vm446, %v582, 0
      %v645 = vsel %vm446, %v583, 0
      %v648 = vsel %vm446, %v584, 0
      %v651 = vsel %vm446, %v585, 0
      %v654 = vsel %vm446, %v586, 0
      %v657 = vsel %vm446, %v587, 0
      %v660 = vsel %vm446, %v588, 0
      %v663 = vsel %vm446, %v589, 0
      %v666 = vsel %vm446, %v590, 0
      %v669 = vsel %vm446, %v591, 0
      %v672 = vsel %vm446, %v592, 0
      %v675 = vsel %vm446, %v593, 0
      %v678 = vsel %vm446, %v594, 0
      %v681 = vsel %vm446, %v595, 0
      %v684 = vsel %vm446, %v596, 0
      %v687 = vsel %vm446, %v597, 0
      %v690 = vsel %vm446, %v598, 0
      %v693 = vsel %vm446, %v599, 0
      %v696 = vsel %vm446, %v600, 0
      %v699 = vsel %vm446, %v601, 0
      %v702 = vsel %vm446, %v602, 0
      %704 = vmatpush.msra.mxu0 0.0
      %705 = vmatpush.msra.mxu0 0.0
      %706 = vmatpush.msra.mxu0 0.0
      %707 = vmatpush.msra.mxu0 0.0
      %708 = vmatpush.msra.mxu0 0.0
      %709 = vmatpush.msra.mxu0 0.0
      %710 = vmatpush.msra.mxu0 0.0
      %711 = vmatpush.msra.mxu0 0.0
      %712 = vmatpush.msra.mxu0 0.0
      %713 = vmatpush.msra.mxu0 0.0
      %714 = vmatpush.msra.mxu0 0.0
      %715 = vmatpush.msra.mxu0 0.0
      %716 = vmatpush.msra.mxu0 %v607
      %717 = vmatpush.msra.mxu0 %v606
      %718 = vmatpush.msra.mxu0 %v605
      %719 = vmatpush.msra.mxu0 %v604
      %720 = vmatmul.f32.gmra.mxu0 %v609
      %v721 = vpop.f32.mrf.mxu0
      %v722 = vadd.f32 0.0, %v721
      %723 = vmatmul.f32.gmra.mxu0 %v612
      %v724 = vpop.f32.mrf.mxu0
      %v725 = vadd.f32 0.0, %v724
      %726 = vmatmul.f32.gmra.mxu0 %v615
      %v727 = vpop.f32.mrf.mxu0
      %v728 = vadd.f32 0.0, %v727
      %729 = vmatmul.f32.gmra.mxu0 %v618
      %v730 = vpop.f32.mrf.mxu0
      %v731 = vadd.f32 0.0, %v730
      %732 = vmatmul.f32.gmra.mxu0 %v621
      %v733 = vpop.f32.mrf.mxu0
      %v734 = vadd.f32 0.0, %v733
      %735 = vmatmul.f32.gmra.mxu0 %v624
      %v736 = vpop.f32.mrf.mxu0
      %v737 = vadd.f32 0.0, %v736
      %738 = vmatmul.f32.gmra.mxu0 %v627
      %v739 = vpop.f32.mrf.mxu0
      %v740 = vadd.f32 0.0, %v739
      %741 = vmatmul.f32.gmra.mxu0 %v630
      %v742 = vpop.f32.mrf.mxu0
      %v743 = vadd.f32 0.0, %v742
      %744 = vmatmul.f32.gmra.mxu0 %v633
      %v745 = vpop.f32.mrf.mxu0
      %v746 = vadd.f32 0.0, %v745
      %747 = vmatmul.f32.gmra.mxu0 %v636
      %v748 = vpop.f32.mrf.mxu0
      %v749 = vadd.f32 0.0, %v748
      %750 = vmatmul.f32.gmra.mxu0 %v639
      %v751 = vpop.f32.mrf.mxu0
      %v752 = vadd.f32 0.0, %v751
      %753 = vmatmul.f32.gmra.mxu0 %v642
      %v754 = vpop.f32.mrf.mxu0
      %v755 = vadd.f32 0.0, %v754
      %756 = vmatmul.f32.gmra.mxu0 %v645
      %v757 = vpop.f32.mrf.mxu0
      %v758 = vadd.f32 0.0, %v757
      %759 = vmatmul.f32.gmra.mxu0 %v648
      %v760 = vpop.f32.mrf.mxu0
      %v761 = vadd.f32 0.0, %v760
      %762 = vmatmul.f32.gmra.mxu0 %v651
      %v763 = vpop.f32.mrf.mxu0
      %v764 = vadd.f32 0.0, %v763
      %765 = vmatmul.f32.gmra.mxu0 %v654
      %v766 = vpop.f32.mrf.mxu0
      %v767 = vadd.f32 0.0, %v766
      %768 = vmatmul.f32.gmra.mxu0 %v657
      %v769 = vpop.f32.mrf.mxu0
      %v770 = vadd.f32 0.0, %v769
      %771 = vmatmul.f32.gmra.mxu0 %v660
      %v772 = vpop.f32.mrf.mxu0
      %v773 = vadd.f32 0.0, %v772
      %774 = vmatmul.f32.gmra.mxu0 %v663
      %v775 = vpop.f32.mrf.mxu0
      %v776 = vadd.f32 0.0, %v775
      %777 = vmatmul.f32.gmra.mxu0 %v666
      %v778 = vpop.f32.mrf.mxu0
      %v779 = vadd.f32 0.0, %v778
      %780 = vmatmul.f32.gmra.mxu0 %v669
      %v781 = vpop.f32.mrf.mxu0
      %v782 = vadd.f32 0.0, %v781
      %783 = vmatmul.f32.gmra.mxu0 %v672
      %v784 = vpop.f32.mrf.mxu0
      %v785 = vadd.f32 0.0, %v784
      %786 = vmatmul.f32.gmra.mxu0 %v675
      %v787 = vpop.f32.mrf.mxu0
      %v788 = vadd.f32 0.0, %v787
      %789 = vmatmul.f32.gmra.mxu0 %v678
      %v790 = vpop.f32.mrf.mxu0
      %v791 = vadd.f32 0.0, %v790
      %792 = vmatmul.f32.gmra.mxu0 %v681
      %v793 = vpop.f32.mrf.mxu0
      %v794 = vadd.f32 0.0, %v793
      %795 = vmatmul.f32.gmra.mxu0 %v684
      %v796 = vpop.f32.mrf.mxu0
      %v797 = vadd.f32 0.0, %v796
      %798 = vmatmul.f32.gmra.mxu0 %v687
      %v799 = vpop.f32.mrf.mxu0
      %v800 = vadd.f32 0.0, %v799
      %801 = vmatmul.f32.gmra.mxu0 %v690
      %v802 = vpop.f32.mrf.mxu0
      %v803 = vadd.f32 0.0, %v802
      %804 = vmatmul.f32.gmra.mxu0 %v693
      %v805 = vpop.f32.mrf.mxu0
      %v806 = vadd.f32 0.0, %v805
      %807 = vmatmul.f32.gmra.mxu0 %v696
      %v808 = vpop.f32.mrf.mxu0
      %v809 = vadd.f32 0.0, %v808
      %810 = vmatmul.f32.gmra.mxu0 %v699
      %v811 = vpop.f32.mrf.mxu0
      %v812 = vadd.f32 0.0, %v811
      %813 = vmatmul.f32.gmra.mxu0 %v702
      %v814 = vpop.f32.mrf.mxu0
      %v815 = vadd.f32 0.0, %v814
      %816 = vdwg.mxu0
      %v818 = vsel %vm446, %v535, 0
      %v821 = vsel %vm446, %v536, 0
      %v824 = vsel %vm446, %v537, 0
      %v827 = vsel %vm446, %v538, 0
      %v830 = vsel %vm446, %v539, 0
      %v833 = vsel %vm446, %v540, 0
      %v836 = vsel %vm446, %v541, 0
      %v839 = vsel %vm446, %v542, 0
      %v842 = vsel %vm446, %v543, 0
      %v845 = vsel %vm446, %v544, 0
      %v848 = vsel %vm446, %v545, 0
      %v851 = vsel %vm446, %v546, 0
      %v854 = vsel %vm446, %v547, 0
      %v857 = vsel %vm446, %v548, 0
      %v860 = vsel %vm446, %v549, 0
      %v863 = vsel %vm446, %v550, 0
      %v866 = vsel %vm446, %v551, 0
      %v869 = vsel %vm446, %v552, 0
      %v872 = vsel %vm446, %v553, 0
      %v875 = vsel %vm446, %v554, 0
      %v878 = vsel %vm446, %v555, 0
      %v881 = vsel %vm446, %v556, 0
      %v884 = vsel %vm446, %v557, 0
      %v887 = vsel %vm446, %v558, 0
      %v890 = vsel %vm446, %v559, 0
      %v893 = vsel %vm446, %v560, 0
      %v896 = vsel %vm446, %v561, 0
      %v899 = vsel %vm446, %v562, 0
      %v902 = vsel %vm446, %v563, 0
      %v905 = vsel %vm446, %v564, 0
      %v908 = vsel %vm446, %v565, 0
      %v911 = vsel %vm446, %v566, 0
      %913 = vmatpush.msra.mxu0 0.0
      %914 = vmatpush.msra.mxu0 0.0
      %915 = vmatpush.msra.mxu0 0.0
      %916 = vmatpush.msra.mxu0 0.0
      %917 = vmatpush.msra.mxu0 0.0
      %918 = vmatpush.msra.mxu0 0.0
      %919 = vmatpush.msra.mxu0 0.0
      %920 = vmatpush.msra.mxu0 0.0
      %921 = vmatpush.msra.mxu0 0.0
      %922 = vmatpush.msra.mxu0 0.0
      %923 = vmatpush.msra.mxu0 0.0
      %924 = vmatpush.msra.mxu0 0.0
      %925 = vmatpush.msra.mxu0 %v570
      %926 = vmatpush.msra.mxu0 %v569
      %927 = vmatpush.msra.mxu0 %v568
      %928 = vmatpush.msra.mxu0 %v567
      %929 = vmatmul.f32.gmra.mxu0 %v818
      %v930 = vpop.f32.mrf.mxu0
      %v931 = vadd.f32 %v722, %v930
      %932 = vmatmul.f32.gmra.mxu0 %v821
      %v933 = vpop.f32.mrf.mxu0
      %v934 = vadd.f32 %v725, %v933
      %935 = vmatmul.f32.gmra.mxu0 %v824
      %v936 = vpop.f32.mrf.mxu0
      %v937 = vadd.f32 %v728, %v936
      %938 = vmatmul.f32.gmra.mxu0 %v827
      %v939 = vpop.f32.mrf.mxu0
      %v940 = vadd.f32 %v731, %v939
      %941 = vmatmul.f32.gmra.mxu0 %v830
      %v942 = vpop.f32.mrf.mxu0
      %v943 = vadd.f32 %v734, %v942
      %944 = vmatmul.f32.gmra.mxu0 %v833
      %v945 = vpop.f32.mrf.mxu0
      %v946 = vadd.f32 %v737, %v945
      %947 = vmatmul.f32.gmra.mxu0 %v836
      %v948 = vpop.f32.mrf.mxu0
      %v949 = vadd.f32 %v740, %v948
      %950 = vmatmul.f32.gmra.mxu0 %v839
      %v951 = vpop.f32.mrf.mxu0
      %v952 = vadd.f32 %v743, %v951
      %953 = vmatmul.f32.gmra.mxu0 %v842
      %v954 = vpop.f32.mrf.mxu0
      %v955 = vadd.f32 %v746, %v954
      %956 = vmatmul.f32.gmra.mxu0 %v845
      %v957 = vpop.f32.mrf.mxu0
      %v958 = vadd.f32 %v749, %v957
      %959 = vmatmul.f32.gmra.mxu0 %v848
      %v960 = vpop.f32.mrf.mxu0
      %v961 = vadd.f32 %v752, %v960
      %962 = vmatmul.f32.gmra.mxu0 %v851
      %v963 = vpop.f32.mrf.mxu0
      %v964 = vadd.f32 %v755, %v963
      %965 = vmatmul.f32.gmra.mxu0 %v854
      %v966 = vpop.f32.mrf.mxu0
      %v967 = vadd.f32 %v758, %v966
      %968 = vmatmul.f32.gmra.mxu0 %v857
      %v969 = vpop.f32.mrf.mxu0
      %v970 = vadd.f32 %v761, %v969
      %971 = vmatmul.f32.gmra.mxu0 %v860
      %v972 = vpop.f32.mrf.mxu0
      %v973 = vadd.f32 %v764, %v972
      %974 = vmatmul.f32.gmra.mxu0 %v863
      %v975 = vpop.f32.mrf.mxu0
      %v976 = vadd.f32 %v767, %v975
      %977 = vmatmul.f32.gmra.mxu0 %v866
      %v978 = vpop.f32.mrf.mxu0
      %v979 = vadd.f32 %v770, %v978
      %980 = vmatmul.f32.gmra.mxu0 %v869
      %v981 = vpop.f32.mrf.mxu0
      %v982 = vadd.f32 %v773, %v981
      %983 = vmatmul.f32.gmra.mxu0 %v872
      %v984 = vpop.f32.mrf.mxu0
      %v985 = vadd.f32 %v776, %v984
      %986 = vmatmul.f32.gmra.mxu0 %v875
      %v987 = vpop.f32.mrf.mxu0
      %v988 = vadd.f32 %v779, %v987
      %989 = vmatmul.f32.gmra.mxu0 %v878
      %v990 = vpop.f32.mrf.mxu0
      %v991 = vadd.f32 %v782, %v990
      %992 = vmatmul.f32.gmra.mxu0 %v881
      %v993 = vpop.f32.mrf.mxu0
      %v994 = vadd.f32 %v785, %v993
      %995 = vmatmul.f32.gmra.mxu0 %v884
      %v996 = vpop.f32.mrf.mxu0
      %v997 = vadd.f32 %v788, %v996
      %998 = vmatmul.f32.gmra.mxu0 %v887
      %v999 = vpop.f32.mrf.mxu0
      %v1000 = vadd.f32 %v791, %v999
      %1001 = vmatmul.f32.gmra.mxu0 %v890
      %v1002 = vpop.f32.mrf.mxu0
      %v1003 = vadd.f32 %v794, %v1002
      %1004 = vmatmul.f32.gmra.mxu0 %v893
      %v1005 = vpop.f32.mrf.mxu0
      %v1006 = vadd.f32 %v797, %v1005
      %1007 = vmatmul.f32.gmra.mxu0 %v896
      %v1008 = vpop.f32.mrf.mxu0
      %v1009 = vadd.f32 %v800, %v1008
      %1010 = vmatmul.f32.gmra.mxu0 %v899
      %v1011 = vpop.f32.mrf.mxu0
      %v1012 = vadd.f32 %v803, %v1011
      %1013 = vmatmul.f32.gmra.mxu0 %v902
      %v1014 = vpop.f32.mrf.mxu0
      %v1015 = vadd.f32 %v806, %v1014
      %1016 = vmatmul.f32.gmra.mxu0 %v905
      %v1017 = vpop.f32.mrf.mxu0
      %v1018 = vadd.f32 %v809, %v1017
      %1019 = vmatmul.f32.gmra.mxu0 %v908
      %v1020 = vpop.f32.mrf.mxu0
      %v1021 = vadd.f32 %v812, %v1020
      %1022 = vmatmul.f32.gmra.mxu0 %v911
      %v1023 = vpop.f32.mrf.mxu0
      %v1024 = vadd.f32 %v815, %v1023
      %1025 = vdwg.mxu0
      %v1026 = vld [vmem:[#allocation2 + $0x2] sm:$0xff]
      %v1027 = vld [vmem:[#allocation2 + $0xa] sm:$0xff]
      %v1028 = vld [vmem:[#allocation2 + $0x1a] sm:$0xff]
      %v1029 = vld [vmem:[#allocation2 + $0x22] sm:$0xff]
      %v1030 = vld [vmem:[#allocation2 + $0x32] sm:$0xff]
      %v1031 = vld [vmem:[#allocation2 + $0x3a] sm:$0xff]
      %v1032 = vld [vmem:[#allocation2 + $0x4a] sm:$0xff]
      %v1033 = vld [vmem:[#allocation2 + $0x52] sm:$0xff]
      %v1034 = vld [vmem:[#allocation2 + $0x62] sm:$0xff]
      %v1035 = vld [vmem:[#allocation2 + $0x6a] sm:$0xff]
      %v1036 = vld [vmem:[#allocation2 + $0x7a] sm:$0xff]
      %v1037 = vld [vmem:[#allocation2 + $0x82] sm:$0xff]
      %v1038 = vld [vmem:[#allocation2 + $0x92] sm:$0xff]
      %v1039 = vld [vmem:[#allocation2 + $0x9a] sm:$0xff]
      %v1040 = vld [vmem:[#allocation2 + $0xaa] sm:$0xff]
      %v1041 = vld [vmem:[#allocation2 + $0xb2] sm:$0xff]
      %v1042 = vld [vmem:[#allocation2 + $0xc2] sm:$0xff]
      %v1043 = vld [vmem:[#allocation2 + $0xca] sm:$0xff]
      %v1044 = vld [vmem:[#allocation2 + $0xda] sm:$0xff]
      %v1045 = vld [vmem:[#allocation2 + $0xe2] sm:$0xff]
      %v1046 = vld [vmem:[#allocation2 + $0xf2] sm:$0xff]
      %v1047 = vld [vmem:[#allocation2 + $0xfa] sm:$0xff]
      %v1048 = vld [vmem:[#allocation2 + $0x10a] sm:$0xff]
      %v1049 = vld [vmem:[#allocation2 + $0x112] sm:$0xff]
      %v1050 = vld [vmem:[#allocation2 + $0x122] sm:$0xff]
      %v1051 = vld [vmem:[#allocation2 + $0x12a] sm:$0xff]
      %v1052 = vld [vmem:[#allocation2 + $0x13a] sm:$0xff]
      %v1053 = vld [vmem:[#allocation2 + $0x142] sm:$0xff]
      %v1054 = vld [vmem:[#allocation2 + $0x152] sm:$0xff]
      %v1055 = vld [vmem:[#allocation2 + $0x15a] sm:$0xff]
      %v1056 = vld [vmem:[#allocation2 + $0x16a] sm:$0xff]
      %v1057 = vld [vmem:[#allocation2 + $0x172] sm:$0xff]
      %s1058 = scalar_lea.vmem %s1, 64
      %v1059 = vld [vmem:[%s1058] sm:$0xff]
      %v1060 = vld [vmem:[%s1058 + $0x8] sm:$0xff]
      %v1061 = vld [vmem:[%s1058 + $0x10] sm:$0xff]
      %v1062 = vld [vmem:[%s1058 + $0x18] sm:$0xff]
      %v1064 = vsel %vm446, %v1026, 0
      %v1067 = vsel %vm446, %v1027, 0
      %v1070 = vsel %vm446, %v1028, 0
      %v1073 = vsel %vm446, %v1029, 0
      %v1076 = vsel %vm446, %v1030, 0
      %v1079 = vsel %vm446, %v1031, 0
      %v1082 = vsel %vm446, %v1032, 0
      %v1085 = vsel %vm446, %v1033, 0
      %v1088 = vsel %vm446, %v1034, 0
      %v1091 = vsel %vm446, %v1035, 0
      %v1094 = vsel %vm446, %v1036, 0
      %v1097 = vsel %vm446, %v1037, 0
      %v1100 = vsel %vm446, %v1038, 0
      %v1103 = vsel %vm446, %v1039, 0
      %v1106 = vsel %vm446, %v1040, 0
      %v1109 = vsel %vm446, %v1041, 0
      %v1112 = vsel %vm446, %v1042, 0
      %v1115 = vsel %vm446, %v1043, 0
      %v1118 = vsel %vm446, %v1044, 0
      %v1121 = vsel %vm446, %v1045, 0
      %v1124 = vsel %vm446, %v1046, 0
      %v1127 = vsel %vm446, %v1047, 0
      %v1130 = vsel %vm446, %v1048, 0
      %v1133 = vsel %vm446, %v1049, 0
      %v1136 = vsel %vm446, %v1050, 0
      %v1139 = vsel %vm446, %v1051, 0
      %v1142 = vsel %vm446, %v1052, 0
      %v1145 = vsel %vm446, %v1053, 0
      %v1148 = vsel %vm446, %v1054, 0
      %v1151 = vsel %vm446, %v1055, 0
      %v1154 = vsel %vm446, %v1056, 0
      %v1157 = vsel %vm446, %v1057, 0
      %1159 = vmatpush.msra.mxu0 0.0
      %1160 = vmatpush.msra.mxu0 0.0
      %1161 = vmatpush.msra.mxu0 0.0
      %1162 = vmatpush.msra.mxu0 0.0
      %1163 = vmatpush.msra.mxu0 0.0
      %1164 = vmatpush.msra.mxu0 0.0
      %1165 = vmatpush.msra.mxu0 0.0
      %1166 = vmatpush.msra.mxu0 0.0
      %1167 = vmatpush.msra.mxu0 0.0
      %1168 = vmatpush.msra.mxu0 0.0
      %1169 = vmatpush.msra.mxu0 0.0
      %1170 = vmatpush.msra.mxu0 0.0
      %1171 = vmatpush.msra.mxu0 %v1062
      %1172 = vmatpush.msra.mxu0 %v1061
      %1173 = vmatpush.msra.mxu0 %v1060
      %1174 = vmatpush.msra.mxu0 %v1059
      %1175 = vmatmul.f32.gmra.mxu0 %v1064
      %v1176 = vpop.f32.mrf.mxu0
      %v1177 = vadd.f32 0.0, %v1176
      %1178 = vmatmul.f32.gmra.mxu0 %v1067
      %v1179 = vpop.f32.mrf.mxu0
      %v1180 = vadd.f32 0.0, %v1179
      %1181 = vmatmul.f32.gmra.mxu0 %v1070
      %v1182 = vpop.f32.mrf.mxu0
      %v1183 = vadd.f32 0.0, %v1182
      %1184 = vmatmul.f32.gmra.mxu0 %v1073
      %v1185 = vpop.f32.mrf.mxu0
      %v1186 = vadd.f32 0.0, %v1185
      %1187 = vmatmul.f32.gmra.mxu0 %v1076
      %v1188 = vpop.f32.mrf.mxu0
      %v1189 = vadd.f32 0.0, %v1188
      %1190 = vmatmul.f32.gmra.mxu0 %v1079
      %v1191 = vpop.f32.mrf.mxu0
      %v1192 = vadd.f32 0.0, %v1191
      %1193 = vmatmul.f32.gmra.mxu0 %v1082
      %v1194 = vpop.f32.mrf.mxu0
      %v1195 = vadd.f32 0.0, %v1194
      %1196 = vmatmul.f32.gmra.mxu0 %v1085
      %v1197 = vpop.f32.mrf.mxu0
      %v1198 = vadd.f32 0.0, %v1197
      %1199 = vmatmul.f32.gmra.mxu0 %v1088
      %v1200 = vpop.f32.mrf.mxu0
      %v1201 = vadd.f32 0.0, %v1200
      %1202 = vmatmul.f32.gmra.mxu0 %v1091
      %v1203 = vpop.f32.mrf.mxu0
      %v1204 = vadd.f32 0.0, %v1203
      %1205 = vmatmul.f32.gmra.mxu0 %v1094
      %v1206 = vpop.f32.mrf.mxu0
      %v1207 = vadd.f32 0.0, %v1206
      %1208 = vmatmul.f32.gmra.mxu0 %v1097
      %v1209 = vpop.f32.mrf.mxu0
      %v1210 = vadd.f32 0.0, %v1209
      %1211 = vmatmul.f32.gmra.mxu0 %v1100
      %v1212 = vpop.f32.mrf.mxu0
      %v1213 = vadd.f32 0.0, %v1212
      %1214 = vmatmul.f32.gmra.mxu0 %v1103
      %v1215 = vpop.f32.mrf.mxu0
      %v1216 = vadd.f32 0.0, %v1215
      %1217 = vmatmul.f32.gmra.mxu0 %v1106
      %v1218 = vpop.f32.mrf.mxu0
      %v1219 = vadd.f32 0.0, %v1218
      %1220 = vmatmul.f32.gmra.mxu0 %v1109
      %v1221 = vpop.f32.mrf.mxu0
      %v1222 = vadd.f32 0.0, %v1221
      %1223 = vmatmul.f32.gmra.mxu0 %v1112
      %v1224 = vpop.f32.mrf.mxu0
      %v1225 = vadd.f32 0.0, %v1224
      %1226 = vmatmul.f32.gmra.mxu0 %v1115
      %v1227 = vpop.f32.mrf.mxu0
      %v1228 = vadd.f32 0.0, %v1227
      %1229 = vmatmul.f32.gmra.mxu0 %v1118
      %v1230 = vpop.f32.mrf.mxu0
      %v1231 = vadd.f32 0.0, %v1230
      %1232 = vmatmul.f32.gmra.mxu0 %v1121
      %v1233 = vpop.f32.mrf.mxu0
      %v1234 = vadd.f32 0.0, %v1233
      %1235 = vmatmul.f32.gmra.mxu0 %v1124
      %v1236 = vpop.f32.mrf.mxu0
      %v1237 = vadd.f32 0.0, %v1236
      %1238 = vmatmul.f32.gmra.mxu0 %v1127
      %v1239 = vpop.f32.mrf.mxu0
      %v1240 = vadd.f32 0.0, %v1239
      %1241 = vmatmul.f32.gmra.mxu0 %v1130
      %v1242 = vpop.f32.mrf.mxu0
      %v1243 = vadd.f32 0.0, %v1242
      %1244 = vmatmul.f32.gmra.mxu0 %v1133
      %v1245 = vpop.f32.mrf.mxu0
      %v1246 = vadd.f32 0.0, %v1245
      %1247 = vmatmul.f32.gmra.mxu0 %v1136
      %v1248 = vpop.f32.mrf.mxu0
      %v1249 = vadd.f32 0.0, %v1248
      %1250 = vmatmul.f32.gmra.mxu0 %v1139
      %v1251 = vpop.f32.mrf.mxu0
      %v1252 = vadd.f32 0.0, %v1251
      %1253 = vmatmul.f32.gmra.mxu0 %v1142
      %v1254 = vpop.f32.mrf.mxu0
      %v1255 = vadd.f32 0.0, %v1254
      %1256 = vmatmul.f32.gmra.mxu0 %v1145
      %v1257 = vpop.f32.mrf.mxu0
      %v1258 = vadd.f32 0.0, %v1257
      %1259 = vmatmul.f32.gmra.mxu0 %v1148
      %v1260 = vpop.f32.mrf.mxu0
      %v1261 = vadd.f32 0.0, %v1260
      %1262 = vmatmul.f32.gmra.mxu0 %v1151
      %v1263 = vpop.f32.mrf.mxu0
      %v1264 = vadd.f32 0.0, %v1263
      %1265 = vmatmul.f32.gmra.mxu0 %v1154
      %v1266 = vpop.f32.mrf.mxu0
      %v1267 = vadd.f32 0.0, %v1266
      %1268 = vmatmul.f32.gmra.mxu0 %v1157
      %v1269 = vpop.f32.mrf.mxu0
      %v1270 = vadd.f32 0.0, %v1269
      %1271 = vdwg.mxu0
      %v1272 = vadd.f32 %v931, %v1177
      %v1273 = vadd.f32 %v934, %v1180
      %v1274 = vadd.f32 %v937, %v1183
      %v1275 = vadd.f32 %v940, %v1186
      %v1276 = vadd.f32 %v943, %v1189
      %v1277 = vadd.f32 %v946, %v1192
      %v1278 = vadd.f32 %v949, %v1195
      %v1279 = vadd.f32 %v952, %v1198
      %v1280 = vadd.f32 %v955, %v1201
      %v1281 = vadd.f32 %v958, %v1204
      %v1282 = vadd.f32 %v961, %v1207
      %v1283 = vadd.f32 %v964, %v1210
      %v1284 = vadd.f32 %v967, %v1213
      %v1285 = vadd.f32 %v970, %v1216
      %v1286 = vadd.f32 %v973, %v1219
      %v1287 = vadd.f32 %v976, %v1222
      %v1288 = vadd.f32 %v979, %v1225
      %v1289 = vadd.f32 %v982, %v1228
      %v1290 = vadd.f32 %v985, %v1231
      %v1291 = vadd.f32 %v988, %v1234
      %v1292 = vadd.f32 %v991, %v1237
      %v1293 = vadd.f32 %v994, %v1240
      %v1294 = vadd.f32 %v997, %v1243
      %v1295 = vadd.f32 %v1000, %v1246
      %v1296 = vadd.f32 %v1003, %v1249
      %v1297 = vadd.f32 %v1006, %v1252
      %v1298 = vadd.f32 %v1009, %v1255
      %v1299 = vadd.f32 %v1012, %v1258
      %v1300 = vadd.f32 %v1015, %v1261
      %v1301 = vadd.f32 %v1018, %v1264
      %v1302 = vadd.f32 %v1021, %v1267
      %v1303 = vadd.f32 %v1024, %v1270
      %v1304 = vld [vmem:[%s502] sm:$0xff]
      %v1305 = vld [vmem:[%s502 + $0x8] sm:$0xff]
      %v1306 = vld [vmem:[%s502 + $0x18] sm:$0xff]
      %v1307 = vld [vmem:[%s502 + $0x20] sm:$0xff]
      %v1308 = vld [vmem:[%s502 + $0x30] sm:$0xff]
      %v1309 = vld [vmem:[%s502 + $0x38] sm:$0xff]
      %v1310 = vld [vmem:[%s502 + $0x48] sm:$0xff]
      %v1311 = vld [vmem:[%s502 + $0x50] sm:$0xff]
      %v1312 = vld [vmem:[%s502 + $0x60] sm:$0xff]
      %v1313 = vld [vmem:[%s502 + $0x68] sm:$0xff]
      %v1314 = vld [vmem:[%s502 + $0x78] sm:$0xff]
      %v1315 = vld [vmem:[%s502 + $0x80] sm:$0xff]
      %v1316 = vld [vmem:[%s502 + $0x90] sm:$0xff]
      %v1317 = vld [vmem:[%s502 + $0x98] sm:$0xff]
      %v1318 = vld [vmem:[%s502 + $0xa8] sm:$0xff]
      %v1319 = vld [vmem:[%s502 + $0xb0] sm:$0xff]
      %v1320 = vld [vmem:[%s502 + $0xc0] sm:$0xff]
      %v1321 = vld [vmem:[%s502 + $0xc8] sm:$0xff]
      %v1322 = vld [vmem:[%s502 + $0xd8] sm:$0xff]
      %v1323 = vld [vmem:[%s502 + $0xe0] sm:$0xff]
      %v1324 = vld [vmem:[%s502 + $0xf0] sm:$0xff]
      %v1325 = vld [vmem:[%s502 + $0xf8] sm:$0xff]
      %v1326 = vld [vmem:[%s502 + $0x108] sm:$0xff]
      %v1327 = vld [vmem:[%s502 + $0x110] sm:$0xff]
      %v1328 = vld [vmem:[%s502 + $0x120] sm:$0xff]
      %v1329 = vld [vmem:[%s502 + $0x128] sm:$0xff]
      %v1330 = vld [vmem:[%s502 + $0x138] sm:$0xff]
      %v1331 = vld [vmem:[%s502 + $0x140] sm:$0xff]
      %v1332 = vld [vmem:[%s502 + $0x150] sm:$0xff]
      %v1333 = vld [vmem:[%s502 + $0x158] sm:$0xff]
      %v1334 = vld [vmem:[%s502 + $0x168] sm:$0xff]
      %v1335 = vld [vmem:[%s502 + $0x170] sm:$0xff]
      %s1336 = scalar_lea.vmem %s1, 96
      %v1337 = vld [vmem:[%s1336] sm:$0xff]
      %v1338 = vld [vmem:[%s1336 + $0x8] sm:$0xff]
      %v1339 = vld [vmem:[%s1336 + $0x10] sm:$0xff]
      %v1340 = vld [vmem:[%s1336 + $0x18] sm:$0xff]
      %v1342 = vsel %vm446, %v1304, 0
      %v1345 = vsel %vm446, %v1305, 0
      %v1348 = vsel %vm446, %v1306, 0
      %v1351 = vsel %vm446, %v1307, 0
      %v1354 = vsel %vm446, %v1308, 0
      %v1357 = vsel %vm446, %v1309, 0
      %v1360 = vsel %vm446, %v1310, 0
      %v1363 = vsel %vm446, %v1311, 0
      %v1366 = vsel %vm446, %v1312, 0
      %v1369 = vsel %vm446, %v1313, 0
      %v1372 = vsel %vm446, %v1314, 0
      %v1375 = vsel %vm446, %v1315, 0
      %v1378 = vsel %vm446, %v1316, 0
      %v1381 = vsel %vm446, %v1317, 0
      %v1384 = vsel %vm446, %v1318, 0
      %v1387 = vsel %vm446, %v1319, 0
      %v1390 = vsel %vm446, %v1320, 0
      %v1393 = vsel %vm446, %v1321, 0
      %v1396 = vsel %vm446, %v1322, 0
      %v1399 = vsel %vm446, %v1323, 0
      %v1402 = vsel %vm446, %v1324, 0
      %v1405 = vsel %vm446, %v1325, 0
      %v1408 = vsel %vm446, %v1326, 0
      %v1411 = vsel %vm446, %v1327, 0
      %v1414 = vsel %vm446, %v1328, 0
      %v1417 = vsel %vm446, %v1329, 0
      %v1420 = vsel %vm446, %v1330, 0
      %v1423 = vsel %vm446, %v1331, 0
      %v1426 = vsel %vm446, %v1332, 0
      %v1429 = vsel %vm446, %v1333, 0
      %v1432 = vsel %vm446, %v1334, 0
      %v1435 = vsel %vm446, %v1335, 0
      %1437 = vmatpush.msra.mxu0 0.0
      %1438 = vmatpush.msra.mxu0 0.0
      %1439 = vmatpush.msra.mxu0 0.0
      %1440 = vmatpush.msra.mxu0 0.0
      %1441 = vmatpush.msra.mxu0 0.0
      %1442 = vmatpush.msra.mxu0 0.0
      %1443 = vmatpush.msra.mxu0 0.0
      %1444 = vmatpush.msra.mxu0 0.0
      %1445 = vmatpush.msra.mxu0 0.0
      %1446 = vmatpush.msra.mxu0 0.0
      %1447 = vmatpush.msra.mxu0 0.0
      %1448 = vmatpush.msra.mxu0 0.0
      %1449 = vmatpush.msra.mxu0 %v1340
      %1450 = vmatpush.msra.mxu0 %v1339
      %1451 = vmatpush.msra.mxu0 %v1338
      %1452 = vmatpush.msra.mxu0 %v1337
      %1453 = vmatmul.f32.gmra.mxu0 %v1342
      %v1454 = vpop.f32.mrf.mxu0
      %v1455 = vadd.f32 0.0, %v1454
      %1456 = vmatmul.f32.gmra.mxu0 %v1345
      %v1457 = vpop.f32.mrf.mxu0
      %v1458 = vadd.f32 0.0, %v1457
      %1459 = vmatmul.f32.gmra.mxu0 %v1348
      %v1460 = vpop.f32.mrf.mxu0
      %v1461 = vadd.f32 0.0, %v1460
      %1462 = vmatmul.f32.gmra.mxu0 %v1351
      %v1463 = vpop.f32.mrf.mxu0
      %v1464 = vadd.f32 0.0, %v1463
      %1465 = vmatmul.f32.gmra.mxu0 %v1354
      %v1466 = vpop.f32.mrf.mxu0
      %v1467 = vadd.f32 0.0, %v1466
      %1468 = vmatmul.f32.gmra.mxu0 %v1357
      %v1469 = vpop.f32.mrf.mxu0
      %v1470 = vadd.f32 0.0, %v1469
      %1471 = vmatmul.f32.gmra.mxu0 %v1360
      %v1472 = vpop.f32.mrf.mxu0
      %v1473 = vadd.f32 0.0, %v1472
      %1474 = vmatmul.f32.gmra.mxu0 %v1363
      %v1475 = vpop.f32.mrf.mxu0
      %v1476 = vadd.f32 0.0, %v1475
      %1477 = vmatmul.f32.gmra.mxu0 %v1366
      %v1478 = vpop.f32.mrf.mxu0
      %v1479 = vadd.f32 0.0, %v1478
      %1480 = vmatmul.f32.gmra.mxu0 %v1369
      %v1481 = vpop.f32.mrf.mxu0
      %v1482 = vadd.f32 0.0, %v1481
      %1483 = vmatmul.f32.gmra.mxu0 %v1372
      %v1484 = vpop.f32.mrf.mxu0
      %v1485 = vadd.f32 0.0, %v1484
      %1486 = vmatmul.f32.gmra.mxu0 %v1375
      %v1487 = vpop.f32.mrf.mxu0
      %v1488 = vadd.f32 0.0, %v1487
      %1489 = vmatmul.f32.gmra.mxu0 %v1378
      %v1490 = vpop.f32.mrf.mxu0
      %v1491 = vadd.f32 0.0, %v1490
      %1492 = vmatmul.f32.gmra.mxu0 %v1381
      %v1493 = vpop.f32.mrf.mxu0
      %v1494 = vadd.f32 0.0, %v1493
      %1495 = vmatmul.f32.gmra.mxu0 %v1384
      %v1496 = vpop.f32.mrf.mxu0
      %v1497 = vadd.f32 0.0, %v1496
      %1498 = vmatmul.f32.gmra.mxu0 %v1387
      %v1499 = vpop.f32.mrf.mxu0
      %v1500 = vadd.f32 0.0, %v1499
      %1501 = vmatmul.f32.gmra.mxu0 %v1390
      %v1502 = vpop.f32.mrf.mxu0
      %v1503 = vadd.f32 0.0, %v1502
      %1504 = vmatmul.f32.gmra.mxu0 %v1393
      %v1505 = vpop.f32.mrf.mxu0
      %v1506 = vadd.f32 0.0, %v1505
      %1507 = vmatmul.f32.gmra.mxu0 %v1396
      %v1508 = vpop.f32.mrf.mxu0
      %v1509 = vadd.f32 0.0, %v1508
      %1510 = vmatmul.f32.gmra.mxu0 %v1399
      %v1511 = vpop.f32.mrf.mxu0
      %v1512 = vadd.f32 0.0, %v1511
      %1513 = vmatmul.f32.gmra.mxu0 %v1402
      %v1514 = vpop.f32.mrf.mxu0
      %v1515 = vadd.f32 0.0, %v1514
      %1516 = vmatmul.f32.gmra.mxu0 %v1405
      %v1517 = vpop.f32.mrf.mxu0
      %v1518 = vadd.f32 0.0, %v1517
      %1519 = vmatmul.f32.gmra.mxu0 %v1408
      %v1520 = vpop.f32.mrf.mxu0
      %v1521 = vadd.f32 0.0, %v1520
      %1522 = vmatmul.f32.gmra.mxu0 %v1411
      %v1523 = vpop.f32.mrf.mxu0
      %v1524 = vadd.f32 0.0, %v1523
      %1525 = vmatmul.f32.gmra.mxu0 %v1414
      %v1526 = vpop.f32.mrf.mxu0
      %v1527 = vadd.f32 0.0, %v1526
      %1528 = vmatmul.f32.gmra.mxu0 %v1417
      %v1529 = vpop.f32.mrf.mxu0
      %v1530 = vadd.f32 0.0, %v1529
      %1531 = vmatmul.f32.gmra.mxu0 %v1420
      %v1532 = vpop.f32.mrf.mxu0
      %v1533 = vadd.f32 0.0, %v1532
      %1534 = vmatmul.f32.gmra.mxu0 %v1423
      %v1535 = vpop.f32.mrf.mxu0
      %v1536 = vadd.f32 0.0, %v1535
      %1537 = vmatmul.f32.gmra.mxu0 %v1426
      %v1538 = vpop.f32.mrf.mxu0
      %v1539 = vadd.f32 0.0, %v1538
      %1540 = vmatmul.f32.gmra.mxu0 %v1429
      %v1541 = vpop.f32.mrf.mxu0
      %v1542 = vadd.f32 0.0, %v1541
      %1543 = vmatmul.f32.gmra.mxu0 %v1432
      %v1544 = vpop.f32.mrf.mxu0
      %v1545 = vadd.f32 0.0, %v1544
      %1546 = vmatmul.f32.gmra.mxu0 %v1435
      %v1547 = vpop.f32.mrf.mxu0
      %v1548 = vadd.f32 0.0, %v1547
      %1549 = vdwg.mxu0
      %v1550 = vadd.f32 %v1272, %v1455
      %v1551 = vadd.f32 %v1273, %v1458
      %v1552 = vadd.f32 %v1274, %v1461
      %v1553 = vadd.f32 %v1275, %v1464
      %v1554 = vadd.f32 %v1276, %v1467
      %v1555 = vadd.f32 %v1277, %v1470
      %v1556 = vadd.f32 %v1278, %v1473
      %v1557 = vadd.f32 %v1279, %v1476
      %v1558 = vadd.f32 %v1280, %v1479
      %v1559 = vadd.f32 %v1281, %v1482
      %v1560 = vadd.f32 %v1282, %v1485
      %v1561 = vadd.f32 %v1283, %v1488
      %v1562 = vadd.f32 %v1284, %v1491
      %v1563 = vadd.f32 %v1285, %v1494
      %v1564 = vadd.f32 %v1286, %v1497
      %v1565 = vadd.f32 %v1287, %v1500
      %v1566 = vadd.f32 %v1288, %v1503
      %v1567 = vadd.f32 %v1289, %v1506
      %v1568 = vadd.f32 %v1290, %v1509
      %v1569 = vadd.f32 %v1291, %v1512
      %v1570 = vadd.f32 %v1292, %v1515
      %v1571 = vadd.f32 %v1293, %v1518
      %v1572 = vadd.f32 %v1294, %v1521
      %v1573 = vadd.f32 %v1295, %v1524
      %v1574 = vadd.f32 %v1296, %v1527
      %v1575 = vadd.f32 %v1297, %v1530
      %v1576 = vadd.f32 %v1298, %v1533
      %v1577 = vadd.f32 %v1299, %v1536
      %v1578 = vadd.f32 %v1300, %v1539
      %v1579 = vadd.f32 %v1301, %v1542
      %v1580 = vadd.f32 %v1302, %v1545
      %v1581 = vadd.f32 %v1303, %v1548
      %v1582 = vld [vmem:[%s502 + $0x1] sm:$0xff]
      %v1583 = vld [vmem:[%s502 + $0x9] sm:$0xff]
      %v1584 = vld [vmem:[%s502 + $0x19] sm:$0xff]
      %v1585 = vld [vmem:[%s502 + $0x21] sm:$0xff]
      %v1586 = vld [vmem:[%s502 + $0x31] sm:$0xff]
      %v1587 = vld [vmem:[%s502 + $0x39] sm:$0xff]
      %v1588 = vld [vmem:[%s502 + $0x49] sm:$0xff]
      %v1589 = vld [vmem:[%s502 + $0x51] sm:$0xff]
      %v1590 = vld [vmem:[%s502 + $0x61] sm:$0xff]
      %v1591 = vld [vmem:[%s502 + $0x69] sm:$0xff]
      %v1592 = vld [vmem:[%s502 + $0x79] sm:$0xff]
      %v1593 = vld [vmem:[%s502 + $0x81] sm:$0xff]
      %v1594 = vld [vmem:[%s502 + $0x91] sm:$0xff]
      %v1595 = vld [vmem:[%s502 + $0x99] sm:$0xff]
      %v1596 = vld [vmem:[%s502 + $0xa9] sm:$0xff]
      %v1597 = vld [vmem:[%s502 + $0xb1] sm:$0xff]
      %v1598 = vld [vmem:[%s502 + $0xc1] sm:$0xff]
      %v1599 = vld [vmem:[%s502 + $0xc9] sm:$0xff]
      %v1600 = vld [vmem:[%s502 + $0xd9] sm:$0xff]
      %v1601 = vld [vmem:[%s502 + $0xe1] sm:$0xff]
      %v1602 = vld [vmem:[%s502 + $0xf1] sm:$0xff]
      %v1603 = vld [vmem:[%s502 + $0xf9] sm:$0xff]
      %v1604 = vld [vmem:[%s502 + $0x109] sm:$0xff]
      %v1605 = vld [vmem:[%s502 + $0x111] sm:$0xff]
      %v1606 = vld [vmem:[%s502 + $0x121] sm:$0xff]
      %v1607 = vld [vmem:[%s502 + $0x129] sm:$0xff]
      %v1608 = vld [vmem:[%s502 + $0x139] sm:$0xff]
      %v1609 = vld [vmem:[%s502 + $0x141] sm:$0xff]
      %v1610 = vld [vmem:[%s502 + $0x151] sm:$0xff]
      %v1611 = vld [vmem:[%s502 + $0x159] sm:$0xff]
      %v1612 = vld [vmem:[%s502 + $0x169] sm:$0xff]
      %v1613 = vld [vmem:[%s502 + $0x171] sm:$0xff]
      %s1614 = scalar_lea.vmem %s1, 128
      %v1615 = vld [vmem:[%s1614] sm:$0xff]
      %v1616 = vld [vmem:[%s1614 + $0x8] sm:$0xff]
      %v1617 = vld [vmem:[%s1614 + $0x10] sm:$0xff]
      %v1618 = vld [vmem:[%s1614 + $0x18] sm:$0xff]
      %v1620 = vsel %vm446, %v1582, 0
      %v1623 = vsel %vm446, %v1583, 0
      %v1626 = vsel %vm446, %v1584, 0
      %v1629 = vsel %vm446, %v1585, 0
      %v1632 = vsel %vm446, %v1586, 0
      %v1635 = vsel %vm446, %v1587, 0
      %v1638 = vsel %vm446, %v1588, 0
      %v1641 = vsel %vm446, %v1589, 0
      %v1644 = vsel %vm446, %v1590, 0
      %v1647 = vsel %vm446, %v1591, 0
      %v1650 = vsel %vm446, %v1592, 0
      %v1653 = vsel %vm446, %v1593, 0
      %v1656 = vsel %vm446, %v1594, 0
      %v1659 = vsel %vm446, %v1595, 0
      %v1662 = vsel %vm446, %v1596, 0
      %v1665 = vsel %vm446, %v1597, 0
      %v1668 = vsel %vm446, %v1598, 0
      %v1671 = vsel %vm446, %v1599, 0
      %v1674 = vsel %vm446, %v1600, 0
      %v1677 = vsel %vm446, %v1601, 0
      %v1680 = vsel %vm446, %v1602, 0
      %v1683 = vsel %vm446, %v1603, 0
      %v1686 = vsel %vm446, %v1604, 0
      %v1689 = vsel %vm446, %v1605, 0
      %v1692 = vsel %vm446, %v1606, 0
      %v1695 = vsel %vm446, %v1607, 0
      %v1698 = vsel %vm446, %v1608, 0
      %v1701 = vsel %vm446, %v1609, 0
      %v1704 = vsel %vm446, %v1610, 0
      %v1707 = vsel %vm446, %v1611, 0
      %v1710 = vsel %vm446, %v1612, 0
      %v1713 = vsel %vm446, %v1613, 0
      %1715 = vmatpush.msra.mxu0 0.0
      %1716 = vmatpush.msra.mxu0 0.0
      %1717 = vmatpush.msra.mxu0 0.0
      %1718 = vmatpush.msra.mxu0 0.0
      %1719 = vmatpush.msra.mxu0 0.0
      %1720 = vmatpush.msra.mxu0 0.0
      %1721 = vmatpush.msra.mxu0 0.0
      %1722 = vmatpush.msra.mxu0 0.0
      %1723 = vmatpush.msra.mxu0 0.0
      %1724 = vmatpush.msra.mxu0 0.0
      %1725 = vmatpush.msra.mxu0 0.0
      %1726 = vmatpush.msra.mxu0 0.0
      %1727 = vmatpush.msra.mxu0 %v1618
      %1728 = vmatpush.msra.mxu0 %v1617
      %1729 = vmatpush.msra.mxu0 %v1616
      %1730 = vmatpush.msra.mxu0 %v1615
      %1731 = vmatmul.f32.gmra.mxu0 %v1620
      %v1732 = vpop.f32.mrf.mxu0
      %v1733 = vadd.f32 0.0, %v1732
      %1734 = vmatmul.f32.gmra.mxu0 %v1623
      %v1735 = vpop.f32.mrf.mxu0
      %v1736 = vadd.f32 0.0, %v1735
      %1737 = vmatmul.f32.gmra.mxu0 %v1626
      %v1738 = vpop.f32.mrf.mxu0
      %v1739 = vadd.f32 0.0, %v1738
      %1740 = vmatmul.f32.gmra.mxu0 %v1629
      %v1741 = vpop.f32.mrf.mxu0
      %v1742 = vadd.f32 0.0, %v1741
      %1743 = vmatmul.f32.gmra.mxu0 %v1632
      %v1744 = vpop.f32.mrf.mxu0
      %v1745 = vadd.f32 0.0, %v1744
      %1746 = vmatmul.f32.gmra.mxu0 %v1635
      %v1747 = vpop.f32.mrf.mxu0
      %v1748 = vadd.f32 0.0, %v1747
      %1749 = vmatmul.f32.gmra.mxu0 %v1638
      %v1750 = vpop.f32.mrf.mxu0
      %v1751 = vadd.f32 0.0, %v1750
      %1752 = vmatmul.f32.gmra.mxu0 %v1641
      %v1753 = vpop.f32.mrf.mxu0
      %v1754 = vadd.f32 0.0, %v1753
      %1755 = vmatmul.f32.gmra.mxu0 %v1644
      %v1756 = vpop.f32.mrf.mxu0
      %v1757 = vadd.f32 0.0, %v1756
      %1758 = vmatmul.f32.gmra.mxu0 %v1647
      %v1759 = vpop.f32.mrf.mxu0
      %v1760 = vadd.f32 0.0, %v1759
      %1761 = vmatmul.f32.gmra.mxu0 %v1650
      %v1762 = vpop.f32.mrf.mxu0
      %v1763 = vadd.f32 0.0, %v1762
      %1764 = vmatmul.f32.gmra.mxu0 %v1653
      %v1765 = vpop.f32.mrf.mxu0
      %v1766 = vadd.f32 0.0, %v1765
      %1767 = vmatmul.f32.gmra.mxu0 %v1656
      %v1768 = vpop.f32.mrf.mxu0
      %v1769 = vadd.f32 0.0, %v1768
      %1770 = vmatmul.f32.gmra.mxu0 %v1659
      %v1771 = vpop.f32.mrf.mxu0
      %v1772 = vadd.f32 0.0, %v1771
      %1773 = vmatmul.f32.gmra.mxu0 %v1662
      %v1774 = vpop.f32.mrf.mxu0
      %v1775 = vadd.f32 0.0, %v1774
      %1776 = vmatmul.f32.gmra.mxu0 %v1665
      %v1777 = vpop.f32.mrf.mxu0
      %v1778 = vadd.f32 0.0, %v1777
      %1779 = vmatmul.f32.gmra.mxu0 %v1668
      %v1780 = vpop.f32.mrf.mxu0
      %v1781 = vadd.f32 0.0, %v1780
      %1782 = vmatmul.f32.gmra.mxu0 %v1671
      %v1783 = vpop.f32.mrf.mxu0
      %v1784 = vadd.f32 0.0, %v1783
      %1785 = vmatmul.f32.gmra.mxu0 %v1674
      %v1786 = vpop.f32.mrf.mxu0
      %v1787 = vadd.f32 0.0, %v1786
      %1788 = vmatmul.f32.gmra.mxu0 %v1677
      %v1789 = vpop.f32.mrf.mxu0
      %v1790 = vadd.f32 0.0, %v1789
      %1791 = vmatmul.f32.gmra.mxu0 %v1680
      %v1792 = vpop.f32.mrf.mxu0
      %v1793 = vadd.f32 0.0, %v1792
      %1794 = vmatmul.f32.gmra.mxu0 %v1683
      %v1795 = vpop.f32.mrf.mxu0
      %v1796 = vadd.f32 0.0, %v1795
      %1797 = vmatmul.f32.gmra.mxu0 %v1686
      %v1798 = vpop.f32.mrf.mxu0
      %v1799 = vadd.f32 0.0, %v1798
      %1800 = vmatmul.f32.gmra.mxu0 %v1689
      %v1801 = vpop.f32.mrf.mxu0
      %v1802 = vadd.f32 0.0, %v1801
      %1803 = vmatmul.f32.gmra.mxu0 %v1692
      %v1804 = vpop.f32.mrf.mxu0
      %v1805 = vadd.f32 0.0, %v1804
      %1806 = vmatmul.f32.gmra.mxu0 %v1695
      %v1807 = vpop.f32.mrf.mxu0
      %v1808 = vadd.f32 0.0, %v1807
      %1809 = vmatmul.f32.gmra.mxu0 %v1698
      %v1810 = vpop.f32.mrf.mxu0
      %v1811 = vadd.f32 0.0, %v1810
      %1812 = vmatmul.f32.gmra.mxu0 %v1701
      %v1813 = vpop.f32.mrf.mxu0
      %v1814 = vadd.f32 0.0, %v1813
      %1815 = vmatmul.f32.gmra.mxu0 %v1704
      %v1816 = vpop.f32.mrf.mxu0
      %v1817 = vadd.f32 0.0, %v1816
      %1818 = vmatmul.f32.gmra.mxu0 %v1707
      %v1819 = vpop.f32.mrf.mxu0
      %v1820 = vadd.f32 0.0, %v1819
      %1821 = vmatmul.f32.gmra.mxu0 %v1710
      %v1822 = vpop.f32.mrf.mxu0
      %v1823 = vadd.f32 0.0, %v1822
      %1824 = vmatmul.f32.gmra.mxu0 %v1713
      %v1825 = vpop.f32.mrf.mxu0
      %v1826 = vadd.f32 0.0, %v1825
      %1827 = vdwg.mxu0
      %v1828 = vadd.f32 %v1550, %v1733
      %v1829 = vadd.f32 %v1551, %v1736
      %v1830 = vadd.f32 %v1552, %v1739
      %v1831 = vadd.f32 %v1553, %v1742
      %v1832 = vadd.f32 %v1554, %v1745
      %v1833 = vadd.f32 %v1555, %v1748
      %v1834 = vadd.f32 %v1556, %v1751
      %v1835 = vadd.f32 %v1557, %v1754
      %v1836 = vadd.f32 %v1558, %v1757
      %v1837 = vadd.f32 %v1559, %v1760
      %v1838 = vadd.f32 %v1560, %v1763
      %v1839 = vadd.f32 %v1561, %v1766
      %v1840 = vadd.f32 %v1562, %v1769
      %v1841 = vadd.f32 %v1563, %v1772
      %v1842 = vadd.f32 %v1564, %v1775
      %v1843 = vadd.f32 %v1565, %v1778
      %v1844 = vadd.f32 %v1566, %v1781
      %v1845 = vadd.f32 %v1567, %v1784
      %v1846 = vadd.f32 %v1568, %v1787
      %v1847 = vadd.f32 %v1569, %v1790
      %v1848 = vadd.f32 %v1570, %v1793
      %v1849 = vadd.f32 %v1571, %v1796
      %v1850 = vadd.f32 %v1572, %v1799
      %v1851 = vadd.f32 %v1573, %v1802
      %v1852 = vadd.f32 %v1574, %v1805
      %v1853 = vadd.f32 %v1575, %v1808
      %v1854 = vadd.f32 %v1576, %v1811
      %v1855 = vadd.f32 %v1577, %v1814
      %v1856 = vadd.f32 %v1578, %v1817
      %v1857 = vadd.f32 %v1579, %v1820
      %v1858 = vadd.f32 %v1580, %v1823
      %v1859 = vadd.f32 %v1581, %v1826
      %v1860 = vld [vmem:[%s502 + $0x2] sm:$0xff]
      %v1861 = vld [vmem:[%s502 + $0xa] sm:$0xff]
      %v1862 = vld [vmem:[%s502 + $0x1a] sm:$0xff]
      %v1863 = vld [vmem:[%s502 + $0x22] sm:$0xff]
      %v1864 = vld [vmem:[%s502 + $0x32] sm:$0xff]
      %v1865 = vld [vmem:[%s502 + $0x3a] sm:$0xff]
      %v1866 = vld [vmem:[%s502 + $0x4a] sm:$0xff]
      %v1867 = vld [vmem:[%s502 + $0x52] sm:$0xff]
      %v1868 = vld [vmem:[%s502 + $0x62] sm:$0xff]
      %v1869 = vld [vmem:[%s502 + $0x6a] sm:$0xff]
      %v1870 = vld [vmem:[%s502 + $0x7a] sm:$0xff]
      %v1871 = vld [vmem:[%s502 + $0x82] sm:$0xff]
      %v1872 = vld [vmem:[%s502 + $0x92] sm:$0xff]
      %v1873 = vld [vmem:[%s502 + $0x9a] sm:$0xff]
      %v1874 = vld [vmem:[%s502 + $0xaa] sm:$0xff]
      %v1875 = vld [vmem:[%s502 + $0xb2] sm:$0xff]
      %v1876 = vld [vmem:[%s502 + $0xc2] sm:$0xff]
      %v1877 = vld [vmem:[%s502 + $0xca] sm:$0xff]
      %v1878 = vld [vmem:[%s502 + $0xda] sm:$0xff]
      %v1879 = vld [vmem:[%s502 + $0xe2] sm:$0xff]
      %v1880 = vld [vmem:[%s502 + $0xf2] sm:$0xff]
      %v1881 = vld [vmem:[%s502 + $0xfa] sm:$0xff]
      %v1882 = vld [vmem:[%s502 + $0x10a] sm:$0xff]
      %v1883 = vld [vmem:[%s502 + $0x112] sm:$0xff]
      %v1884 = vld [vmem:[%s502 + $0x122] sm:$0xff]
      %v1885 = vld [vmem:[%s502 + $0x12a] sm:$0xff]
      %v1886 = vld [vmem:[%s502 + $0x13a] sm:$0xff]
      %v1887 = vld [vmem:[%s502 + $0x142] sm:$0xff]
      %v1888 = vld [vmem:[%s502 + $0x152] sm:$0xff]
      %v1889 = vld [vmem:[%s502 + $0x15a] sm:$0xff]
      %v1890 = vld [vmem:[%s502 + $0x16a] sm:$0xff]
      %v1891 = vld [vmem:[%s502 + $0x172] sm:$0xff]
      %s1892 = scalar_lea.vmem %s1, 160
      %v1893 = vld [vmem:[%s1892] sm:$0xff]
      %v1894 = vld [vmem:[%s1892 + $0x8] sm:$0xff]
      %v1895 = vld [vmem:[%s1892 + $0x10] sm:$0xff]
      %v1896 = vld [vmem:[%s1892 + $0x18] sm:$0xff]
      %v1898 = vsel %vm446, %v1860, 0
      %v1901 = vsel %vm446, %v1861, 0
      %v1904 = vsel %vm446, %v1862, 0
      %v1907 = vsel %vm446, %v1863, 0
      %v1910 = vsel %vm446, %v1864, 0
      %v1913 = vsel %vm446, %v1865, 0
      %v1916 = vsel %vm446, %v1866, 0
      %v1919 = vsel %vm446, %v1867, 0
      %v1922 = vsel %vm446, %v1868, 0
      %v1925 = vsel %vm446, %v1869, 0
      %v1928 = vsel %vm446, %v1870, 0
      %v1931 = vsel %vm446, %v1871, 0
      %v1934 = vsel %vm446, %v1872, 0
      %v1937 = vsel %vm446, %v1873, 0
      %v1940 = vsel %vm446, %v1874, 0
      %v1943 = vsel %vm446, %v1875, 0
      %v1946 = vsel %vm446, %v1876, 0
      %v1949 = vsel %vm446, %v1877, 0
      %v1952 = vsel %vm446, %v1878, 0
      %v1955 = vsel %vm446, %v1879, 0
      %v1958 = vsel %vm446, %v1880, 0
      %v1961 = vsel %vm446, %v1881, 0
      %v1964 = vsel %vm446, %v1882, 0
      %v1967 = vsel %vm446, %v1883, 0
      %v1970 = vsel %vm446, %v1884, 0
      %v1973 = vsel %vm446, %v1885, 0
      %v1976 = vsel %vm446, %v1886, 0
      %v1979 = vsel %vm446, %v1887, 0
      %v1982 = vsel %vm446, %v1888, 0
      %v1985 = vsel %vm446, %v1889, 0
      %v1988 = vsel %vm446, %v1890, 0
      %v1991 = vsel %vm446, %v1891, 0
      %1993 = vmatpush.msra.mxu0 0.0
      %1994 = vmatpush.msra.mxu0 0.0
      %1995 = vmatpush.msra.mxu0 0.0
      %1996 = vmatpush.msra.mxu0 0.0
      %1997 = vmatpush.msra.mxu0 0.0
      %1998 = vmatpush.msra.mxu0 0.0
      %1999 = vmatpush.msra.mxu0 0.0
      %2000 = vmatpush.msra.mxu0 0.0
      %2001 = vmatpush.msra.mxu0 0.0
      %2002 = vmatpush.msra.mxu0 0.0
      %2003 = vmatpush.msra.mxu0 0.0
      %2004 = vmatpush.msra.mxu0 0.0
      %2005 = vmatpush.msra.mxu0 %v1896
      %2006 = vmatpush.msra.mxu0 %v1895
      %2007 = vmatpush.msra.mxu0 %v1894
      %2008 = vmatpush.msra.mxu0 %v1893
      %2009 = vmatmul.f32.gmra.mxu0 %v1898
      %v2010 = vpop.f32.mrf.mxu0
      %v2011 = vadd.f32 0.0, %v2010
      %2012 = vmatmul.f32.gmra.mxu0 %v1901
      %v2013 = vpop.f32.mrf.mxu0
      %v2014 = vadd.f32 0.0, %v2013
      %2015 = vmatmul.f32.gmra.mxu0 %v1904
      %v2016 = vpop.f32.mrf.mxu0
      %v2017 = vadd.f32 0.0, %v2016
      %2018 = vmatmul.f32.gmra.mxu0 %v1907
      %v2019 = vpop.f32.mrf.mxu0
      %v2020 = vadd.f32 0.0, %v2019
      %2021 = vmatmul.f32.gmra.mxu0 %v1910
      %v2022 = vpop.f32.mrf.mxu0
      %v2023 = vadd.f32 0.0, %v2022
      %2024 = vmatmul.f32.gmra.mxu0 %v1913
      %v2025 = vpop.f32.mrf.mxu0
      %v2026 = vadd.f32 0.0, %v2025
      %2027 = vmatmul.f32.gmra.mxu0 %v1916
      %v2028 = vpop.f32.mrf.mxu0
      %v2029 = vadd.f32 0.0, %v2028
      %2030 = vmatmul.f32.gmra.mxu0 %v1919
      %v2031 = vpop.f32.mrf.mxu0
      %v2032 = vadd.f32 0.0, %v2031
      %2033 = vmatmul.f32.gmra.mxu0 %v1922
      %v2034 = vpop.f32.mrf.mxu0
      %v2035 = vadd.f32 0.0, %v2034
      %2036 = vmatmul.f32.gmra.mxu0 %v1925
      %v2037 = vpop.f32.mrf.mxu0
      %v2038 = vadd.f32 0.0, %v2037
      %2039 = vmatmul.f32.gmra.mxu0 %v1928
      %v2040 = vpop.f32.mrf.mxu0
      %v2041 = vadd.f32 0.0, %v2040
      %2042 = vmatmul.f32.gmra.mxu0 %v1931
      %v2043 = vpop.f32.mrf.mxu0
      %v2044 = vadd.f32 0.0, %v2043
      %2045 = vmatmul.f32.gmra.mxu0 %v1934
      %v2046 = vpop.f32.mrf.mxu0
      %v2047 = vadd.f32 0.0, %v2046
      %2048 = vmatmul.f32.gmra.mxu0 %v1937
      %v2049 = vpop.f32.mrf.mxu0
      %v2050 = vadd.f32 0.0, %v2049
      %2051 = vmatmul.f32.gmra.mxu0 %v1940
      %v2052 = vpop.f32.mrf.mxu0
      %v2053 = vadd.f32 0.0, %v2052
      %2054 = vmatmul.f32.gmra.mxu0 %v1943
      %v2055 = vpop.f32.mrf.mxu0
      %v2056 = vadd.f32 0.0, %v2055
      %2057 = vmatmul.f32.gmra.mxu0 %v1946
      %v2058 = vpop.f32.mrf.mxu0
      %v2059 = vadd.f32 0.0, %v2058
      %2060 = vmatmul.f32.gmra.mxu0 %v1949
      %v2061 = vpop.f32.mrf.mxu0
      %v2062 = vadd.f32 0.0, %v2061
      %2063 = vmatmul.f32.gmra.mxu0 %v1952
      %v2064 = vpop.f32.mrf.mxu0
      %v2065 = vadd.f32 0.0, %v2064
      %2066 = vmatmul.f32.gmra.mxu0 %v1955
      %v2067 = vpop.f32.mrf.mxu0
      %v2068 = vadd.f32 0.0, %v2067
      %2069 = vmatmul.f32.gmra.mxu0 %v1958
      %v2070 = vpop.f32.mrf.mxu0
      %v2071 = vadd.f32 0.0, %v2070
      %2072 = vmatmul.f32.gmra.mxu0 %v1961
      %v2073 = vpop.f32.mrf.mxu0
      %v2074 = vadd.f32 0.0, %v2073
      %2075 = vmatmul.f32.gmra.mxu0 %v1964
      %v2076 = vpop.f32.mrf.mxu0
      %v2077 = vadd.f32 0.0, %v2076
      %2078 = vmatmul.f32.gmra.mxu0 %v1967
      %v2079 = vpop.f32.mrf.mxu0
      %v2080 = vadd.f32 0.0, %v2079
      %2081 = vmatmul.f32.gmra.mxu0 %v1970
      %v2082 = vpop.f32.mrf.mxu0
      %v2083 = vadd.f32 0.0, %v2082
      %2084 = vmatmul.f32.gmra.mxu0 %v1973
      %v2085 = vpop.f32.mrf.mxu0
      %v2086 = vadd.f32 0.0, %v2085
      %2087 = vmatmul.f32.gmra.mxu0 %v1976
      %v2088 = vpop.f32.mrf.mxu0
      %v2089 = vadd.f32 0.0, %v2088
      %2090 = vmatmul.f32.gmra.mxu0 %v1979
      %v2091 = vpop.f32.mrf.mxu0
      %v2092 = vadd.f32 0.0, %v2091
      %2093 = vmatmul.f32.gmra.mxu0 %v1982
      %v2094 = vpop.f32.mrf.mxu0
      %v2095 = vadd.f32 0.0, %v2094
      %2096 = vmatmul.f32.gmra.mxu0 %v1985
      %v2097 = vpop.f32.mrf.mxu0
      %v2098 = vadd.f32 0.0, %v2097
      %2099 = vmatmul.f32.gmra.mxu0 %v1988
      %v2100 = vpop.f32.mrf.mxu0
      %v2101 = vadd.f32 0.0, %v2100
      %2102 = vmatmul.f32.gmra.mxu0 %v1991
      %v2103 = vpop.f32.mrf.mxu0
      %v2104 = vadd.f32 0.0, %v2103
      %2105 = vdwg.mxu0
      %v2106 = vadd.f32 %v1828, %v2011
      %v2107 = vadd.f32 %v1829, %v2014
      %v2108 = vadd.f32 %v1830, %v2017
      %v2109 = vadd.f32 %v1831, %v2020
      %v2110 = vadd.f32 %v1832, %v2023
      %v2111 = vadd.f32 %v1833, %v2026
      %v2112 = vadd.f32 %v1834, %v2029
      %v2113 = vadd.f32 %v1835, %v2032
      %v2114 = vadd.f32 %v1836, %v2035
      %v2115 = vadd.f32 %v1837, %v2038
      %v2116 = vadd.f32 %v1838, %v2041
      %v2117 = vadd.f32 %v1839, %v2044
      %v2118 = vadd.f32 %v1840, %v2047
      %v2119 = vadd.f32 %v1841, %v2050
      %v2120 = vadd.f32 %v1842, %v2053
      %v2121 = vadd.f32 %v1843, %v2056
      %v2122 = vadd.f32 %v1844, %v2059
      %v2123 = vadd.f32 %v1845, %v2062
      %v2124 = vadd.f32 %v1846, %v2065
      %v2125 = vadd.f32 %v1847, %v2068
      %v2126 = vadd.f32 %v1848, %v2071
      %v2127 = vadd.f32 %v1849, %v2074
      %v2128 = vadd.f32 %v1850, %v2077
      %v2129 = vadd.f32 %v1851, %v2080
      %v2130 = vadd.f32 %v1852, %v2083
      %v2131 = vadd.f32 %v1853, %v2086
      %v2132 = vadd.f32 %v1854, %v2089
      %v2133 = vadd.f32 %v1855, %v2092
      %v2134 = vadd.f32 %v1856, %v2095
      %v2135 = vadd.f32 %v1857, %v2098
      %v2136 = vadd.f32 %v1858, %v2101
      %v2137 = vadd.f32 %v1859, %v2104
      %s2138 = scalar_lea.vmem [#allocation2], 48
      %v2139 = vld [vmem:[%s2138] sm:$0xff]
      %v2140 = vld [vmem:[%s2138 + $0x8] sm:$0xff]
      %v2141 = vld [vmem:[%s2138 + $0x18] sm:$0xff]
      %v2142 = vld [vmem:[%s2138 + $0x20] sm:$0xff]
      %v2143 = vld [vmem:[%s2138 + $0x30] sm:$0xff]
      %v2144 = vld [vmem:[%s2138 + $0x38] sm:$0xff]
      %v2145 = vld [vmem:[%s2138 + $0x48] sm:$0xff]
      %v2146 = vld [vmem:[%s2138 + $0x50] sm:$0xff]
      %v2147 = vld [vmem:[%s2138 + $0x60] sm:$0xff]
      %v2148 = vld [vmem:[%s2138 + $0x68] sm:$0xff]
      %v2149 = vld [vmem:[%s2138 + $0x78] sm:$0xff]
      %v2150 = vld [vmem:[%s2138 + $0x80] sm:$0xff]
      %v2151 = vld [vmem:[%s2138 + $0x90] sm:$0xff]
      %v2152 = vld [vmem:[%s2138 + $0x98] sm:$0xff]
      %v2153 = vld [vmem:[%s2138 + $0xa8] sm:$0xff]
      %v2154 = vld [vmem:[%s2138 + $0xb0] sm:$0xff]
      %v2155 = vld [vmem:[%s2138 + $0xc0] sm:$0xff]
      %v2156 = vld [vmem:[%s2138 + $0xc8] sm:$0xff]
      %v2157 = vld [vmem:[%s2138 + $0xd8] sm:$0xff]
      %v2158 = vld [vmem:[%s2138 + $0xe0] sm:$0xff]
      %v2159 = vld [vmem:[%s2138 + $0xf0] sm:$0xff]
      %v2160 = vld [vmem:[%s2138 + $0xf8] sm:$0xff]
      %v2161 = vld [vmem:[%s2138 + $0x108] sm:$0xff]
      %v2162 = vld [vmem:[%s2138 + $0x110] sm:$0xff]
      %v2163 = vld [vmem:[%s2138 + $0x120] sm:$0xff]
      %v2164 = vld [vmem:[%s2138 + $0x128] sm:$0xff]
      %v2165 = vld [vmem:[%s2138 + $0x138] sm:$0xff]
      %v2166 = vld [vmem:[%s2138 + $0x140] sm:$0xff]
      %v2167 = vld [vmem:[%s2138 + $0x150] sm:$0xff]
      %v2168 = vld [vmem:[%s2138 + $0x158] sm:$0xff]
      %v2169 = vld [vmem:[%s2138 + $0x168] sm:$0xff]
      %v2170 = vld [vmem:[%s2138 + $0x170] sm:$0xff]
      %s2171 = scalar_lea.vmem %s1, 192
      %v2172 = vld [vmem:[%s2171] sm:$0xff]
      %v2173 = vld [vmem:[%s2171 + $0x8] sm:$0xff]
      %v2174 = vld [vmem:[%s2171 + $0x10] sm:$0xff]
      %v2175 = vld [vmem:[%s2171 + $0x18] sm:$0xff]
      %v2177 = vsel %vm446, %v2139, 0
      %v2180 = vsel %vm446, %v2140, 0
      %v2183 = vsel %vm446, %v2141, 0
      %v2186 = vsel %vm446, %v2142, 0
      %v2189 = vsel %vm446, %v2143, 0
      %v2192 = vsel %vm446, %v2144, 0
      %v2195 = vsel %vm446, %v2145, 0
      %v2198 = vsel %vm446, %v2146, 0
      %v2201 = vsel %vm446, %v2147, 0
      %v2204 = vsel %vm446, %v2148, 0
      %v2207 = vsel %vm446, %v2149, 0
      %v2210 = vsel %vm446, %v2150, 0
      %v2213 = vsel %vm446, %v2151, 0
      %v2216 = vsel %vm446, %v2152, 0
      %v2219 = vsel %vm446, %v2153, 0
      %v2222 = vsel %vm446, %v2154, 0
      %v2225 = vsel %vm446, %v2155, 0
      %v2228 = vsel %vm446, %v2156, 0
      %v2231 = vsel %vm446, %v2157, 0
      %v2234 = vsel %vm446, %v2158, 0
      %v2237 = vsel %vm446, %v2159, 0
      %v2240 = vsel %vm446, %v2160, 0
      %v2243 = vsel %vm446, %v2161, 0
      %v2246 = vsel %vm446, %v2162, 0
      %v2249 = vsel %vm446, %v2163, 0
      %v2252 = vsel %vm446, %v2164, 0
      %v2255 = vsel %vm446, %v2165, 0
      %v2258 = vsel %vm446, %v2166, 0
      %v2261 = vsel %vm446, %v2167, 0
      %v2264 = vsel %vm446, %v2168, 0
      %v2267 = vsel %vm446, %v2169, 0
      %v2270 = vsel %vm446, %v2170, 0
      %2272 = vmatpush.msra.mxu0 0.0
      %2273 = vmatpush.msra.mxu0 0.0
      %2274 = vmatpush.msra.mxu0 0.0
      %2275 = vmatpush.msra.mxu0 0.0
      %2276 = vmatpush.msra.mxu0 0.0
      %2277 = vmatpush.msra.mxu0 0.0
      %2278 = vmatpush.msra.mxu0 0.0
      %2279 = vmatpush.msra.mxu0 0.0
      %2280 = vmatpush.msra.mxu0 0.0
      %2281 = vmatpush.msra.mxu0 0.0
      %2282 = vmatpush.msra.mxu0 0.0
      %2283 = vmatpush.msra.mxu0 0.0
      %2284 = vmatpush.msra.mxu0 %v2175
      %2285 = vmatpush.msra.mxu0 %v2174
      %2286 = vmatpush.msra.mxu0 %v2173
      %2287 = vmatpush.msra.mxu0 %v2172
      %2288 = vmatmul.f32.gmra.mxu0 %v2177
      %v2289 = vpop.f32.mrf.mxu0
      %v2290 = vadd.f32 0.0, %v2289
      %2291 = vmatmul.f32.gmra.mxu0 %v2180
      %v2292 = vpop.f32.mrf.mxu0
      %v2293 = vadd.f32 0.0, %v2292
      %2294 = vmatmul.f32.gmra.mxu0 %v2183
      %v2295 = vpop.f32.mrf.mxu0
      %v2296 = vadd.f32 0.0, %v2295
      %2297 = vmatmul.f32.gmra.mxu0 %v2186
      %v2298 = vpop.f32.mrf.mxu0
      %v2299 = vadd.f32 0.0, %v2298
      %2300 = vmatmul.f32.gmra.mxu0 %v2189
      %v2301 = vpop.f32.mrf.mxu0
      %v2302 = vadd.f32 0.0, %v2301
      %2303 = vmatmul.f32.gmra.mxu0 %v2192
      %v2304 = vpop.f32.mrf.mxu0
      %v2305 = vadd.f32 0.0, %v2304
      %2306 = vmatmul.f32.gmra.mxu0 %v2195
      %v2307 = vpop.f32.mrf.mxu0
      %v2308 = vadd.f32 0.0, %v2307
      %2309 = vmatmul.f32.gmra.mxu0 %v2198
      %v2310 = vpop.f32.mrf.mxu0
      %v2311 = vadd.f32 0.0, %v2310
      %2312 = vmatmul.f32.gmra.mxu0 %v2201
      %v2313 = vpop.f32.mrf.mxu0
      %v2314 = vadd.f32 0.0, %v2313
      %2315 = vmatmul.f32.gmra.mxu0 %v2204
      %v2316 = vpop.f32.mrf.mxu0
      %v2317 = vadd.f32 0.0, %v2316
      %2318 = vmatmul.f32.gmra.mxu0 %v2207
      %v2319 = vpop.f32.mrf.mxu0
      %v2320 = vadd.f32 0.0, %v2319
      %2321 = vmatmul.f32.gmra.mxu0 %v2210
      %v2322 = vpop.f32.mrf.mxu0
      %v2323 = vadd.f32 0.0, %v2322
      %2324 = vmatmul.f32.gmra.mxu0 %v2213
      %v2325 = vpop.f32.mrf.mxu0
      %v2326 = vadd.f32 0.0, %v2325
      %2327 = vmatmul.f32.gmra.mxu0 %v2216
      %v2328 = vpop.f32.mrf.mxu0
      %v2329 = vadd.f32 0.0, %v2328
      %2330 = vmatmul.f32.gmra.mxu0 %v2219
      %v2331 = vpop.f32.mrf.mxu0
      %v2332 = vadd.f32 0.0, %v2331
      %2333 = vmatmul.f32.gmra.mxu0 %v2222
      %v2334 = vpop.f32.mrf.mxu0
      %v2335 = vadd.f32 0.0, %v2334
      %2336 = vmatmul.f32.gmra.mxu0 %v2225
      %v2337 = vpop.f32.mrf.mxu0
      %v2338 = vadd.f32 0.0, %v2337
      %2339 = vmatmul.f32.gmra.mxu0 %v2228
      %v2340 = vpop.f32.mrf.mxu0
      %v2341 = vadd.f32 0.0, %v2340
      %2342 = vmatmul.f32.gmra.mxu0 %v2231
      %v2343 = vpop.f32.mrf.mxu0
      %v2344 = vadd.f32 0.0, %v2343
      %2345 = vmatmul.f32.gmra.mxu0 %v2234
      %v2346 = vpop.f32.mrf.mxu0
      %v2347 = vadd.f32 0.0, %v2346
      %2348 = vmatmul.f32.gmra.mxu0 %v2237
      %v2349 = vpop.f32.mrf.mxu0
      %v2350 = vadd.f32 0.0, %v2349
      %2351 = vmatmul.f32.gmra.mxu0 %v2240
      %v2352 = vpop.f32.mrf.mxu0
      %v2353 = vadd.f32 0.0, %v2352
      %2354 = vmatmul.f32.gmra.mxu0 %v2243
      %v2355 = vpop.f32.mrf.mxu0
      %v2356 = vadd.f32 0.0, %v2355
      %2357 = vmatmul.f32.gmra.mxu0 %v2246
      %v2358 = vpop.f32.mrf.mxu0
      %v2359 = vadd.f32 0.0, %v2358
      %2360 = vmatmul.f32.gmra.mxu0 %v2249
      %v2361 = vpop.f32.mrf.mxu0
      %v2362 = vadd.f32 0.0, %v2361
      %2363 = vmatmul.f32.gmra.mxu0 %v2252
      %v2364 = vpop.f32.mrf.mxu0
      %v2365 = vadd.f32 0.0, %v2364
      %2366 = vmatmul.f32.gmra.mxu0 %v2255
      %v2367 = vpop.f32.mrf.mxu0
      %v2368 = vadd.f32 0.0, %v2367
      %2369 = vmatmul.f32.gmra.mxu0 %v2258
      %v2370 = vpop.f32.mrf.mxu0
      %v2371 = vadd.f32 0.0, %v2370
      %2372 = vmatmul.f32.gmra.mxu0 %v2261
      %v2373 = vpop.f32.mrf.mxu0
      %v2374 = vadd.f32 0.0, %v2373
      %2375 = vmatmul.f32.gmra.mxu0 %v2264
      %v2376 = vpop.f32.mrf.mxu0
      %v2377 = vadd.f32 0.0, %v2376
      %2378 = vmatmul.f32.gmra.mxu0 %v2267
      %v2379 = vpop.f32.mrf.mxu0
      %v2380 = vadd.f32 0.0, %v2379
      %2381 = vmatmul.f32.gmra.mxu0 %v2270
      %v2382 = vpop.f32.mrf.mxu0
      %v2383 = vadd.f32 0.0, %v2382
      %2384 = vdwg.mxu0
      %v2385 = vadd.f32 %v2106, %v2290
      %v2386 = vadd.f32 %v2107, %v2293
      %v2387 = vadd.f32 %v2108, %v2296
      %v2388 = vadd.f32 %v2109, %v2299
      %v2389 = vadd.f32 %v2110, %v2302
      %v2390 = vadd.f32 %v2111, %v2305
      %v2391 = vadd.f32 %v2112, %v2308
      %v2392 = vadd.f32 %v2113, %v2311
      %v2393 = vadd.f32 %v2114, %v2314
      %v2394 = vadd.f32 %v2115, %v2317
      %v2395 = vadd.f32 %v2116, %v2320
      %v2396 = vadd.f32 %v2117, %v2323
      %v2397 = vadd.f32 %v2118, %v2326
      %v2398 = vadd.f32 %v2119, %v2329
      %v2399 = vadd.f32 %v2120, %v2332
      %v2400 = vadd.f32 %v2121, %v2335
      %v2401 = vadd.f32 %v2122, %v2338
      %v2402 = vadd.f32 %v2123, %v2341
      %v2403 = vadd.f32 %v2124, %v2344
      %v2404 = vadd.f32 %v2125, %v2347
      %v2405 = vadd.f32 %v2126, %v2350
      %v2406 = vadd.f32 %v2127, %v2353
      %v2407 = vadd.f32 %v2128, %v2356
      %v2408 = vadd.f32 %v2129, %v2359
      %v2409 = vadd.f32 %v2130, %v2362
      %v2410 = vadd.f32 %v2131, %v2365
      %v2411 = vadd.f32 %v2132, %v2368
      %v2412 = vadd.f32 %v2133, %v2371
      %v2413 = vadd.f32 %v2134, %v2374
      %v2414 = vadd.f32 %v2135, %v2377
      %v2415 = vadd.f32 %v2136, %v2380
      %v2416 = vadd.f32 %v2137, %v2383
      %v2417 = vld [vmem:[%s2138 + $0x1] sm:$0xff]
      %v2418 = vld [vmem:[%s2138 + $0x9] sm:$0xff]
      %v2419 = vld [vmem:[%s2138 + $0x19] sm:$0xff]
      %v2420 = vld [vmem:[%s2138 + $0x21] sm:$0xff]
      %v2421 = vld [vmem:[%s2138 + $0x31] sm:$0xff]
      %v2422 = vld [vmem:[%s2138 + $0x39] sm:$0xff]
      %v2423 = vld [vmem:[%s2138 + $0x49] sm:$0xff]
      %v2424 = vld [vmem:[%s2138 + $0x51] sm:$0xff]
      %v2425 = vld [vmem:[%s2138 + $0x61] sm:$0xff]
      %v2426 = vld [vmem:[%s2138 + $0x69] sm:$0xff]
      %v2427 = vld [vmem:[%s2138 + $0x79] sm:$0xff]
      %v2428 = vld [vmem:[%s2138 + $0x81] sm:$0xff]
      %v2429 = vld [vmem:[%s2138 + $0x91] sm:$0xff]
      %v2430 = vld [vmem:[%s2138 + $0x99] sm:$0xff]
      %v2431 = vld [vmem:[%s2138 + $0xa9] sm:$0xff]
      %v2432 = vld [vmem:[%s2138 + $0xb1] sm:$0xff]
      %v2433 = vld [vmem:[%s2138 + $0xc1] sm:$0xff]
      %v2434 = vld [vmem:[%s2138 + $0xc9] sm:$0xff]
      %v2435 = vld [vmem:[%s2138 + $0xd9] sm:$0xff]
      %v2436 = vld [vmem:[%s2138 + $0xe1] sm:$0xff]
      %v2437 = vld [vmem:[%s2138 + $0xf1] sm:$0xff]
      %v2438 = vld [vmem:[%s2138 + $0xf9] sm:$0xff]
      %v2439 = vld [vmem:[%s2138 + $0x109] sm:$0xff]
      %v2440 = vld [vmem:[%s2138 + $0x111] sm:$0xff]
      %v2441 = vld [vmem:[%s2138 + $0x121] sm:$0xff]
      %v2442 = vld [vmem:[%s2138 + $0x129] sm:$0xff]
      %v2443 = vld [vmem:[%s2138 + $0x139] sm:$0xff]
      %v2444 = vld [vmem:[%s2138 + $0x141] sm:$0xff]
      %v2445 = vld [vmem:[%s2138 + $0x151] sm:$0xff]
      %v2446 = vld [vmem:[%s2138 + $0x159] sm:$0xff]
      %v2447 = vld [vmem:[%s2138 + $0x169] sm:$0xff]
      %v2448 = vld [vmem:[%s2138 + $0x171] sm:$0xff]
      %s2449 = scalar_lea.vmem %s1, 224
      %v2450 = vld [vmem:[%s2449] sm:$0xff]
      %v2451 = vld [vmem:[%s2449 + $0x8] sm:$0xff]
      %v2452 = vld [vmem:[%s2449 + $0x10] sm:$0xff]
      %v2453 = vld [vmem:[%s2449 + $0x18] sm:$0xff]
      %v2455 = vsel %vm446, %v2417, 0
      %v2458 = vsel %vm446, %v2418, 0
      %v2461 = vsel %vm446, %v2419, 0
      %v2464 = vsel %vm446, %v2420, 0
      %v2467 = vsel %vm446, %v2421, 0
      %v2470 = vsel %vm446, %v2422, 0
      %v2473 = vsel %vm446, %v2423, 0
      %v2476 = vsel %vm446, %v2424, 0
      %v2479 = vsel %vm446, %v2425, 0
      %v2482 = vsel %vm446, %v2426, 0
      %v2485 = vsel %vm446, %v2427, 0
      %v2488 = vsel %vm446, %v2428, 0
      %v2491 = vsel %vm446, %v2429, 0
      %v2494 = vsel %vm446, %v2430, 0
      %v2497 = vsel %vm446, %v2431, 0
      %v2500 = vsel %vm446, %v2432, 0
      %v2503 = vsel %vm446, %v2433, 0
      %v2506 = vsel %vm446, %v2434, 0
      %v2509 = vsel %vm446, %v2435, 0
      %v2512 = vsel %vm446, %v2436, 0
      %v2515 = vsel %vm446, %v2437, 0
      %v2518 = vsel %vm446, %v2438, 0
      %v2521 = vsel %vm446, %v2439, 0
      %v2524 = vsel %vm446, %v2440, 0
      %v2527 = vsel %vm446, %v2441, 0
      %v2530 = vsel %vm446, %v2442, 0
      %v2533 = vsel %vm446, %v2443, 0
      %v2536 = vsel %vm446, %v2444, 0
      %v2539 = vsel %vm446, %v2445, 0
      %v2542 = vsel %vm446, %v2446, 0
      %v2545 = vsel %vm446, %v2447, 0
      %v2548 = vsel %vm446, %v2448, 0
      %2550 = vmatpush.msra.mxu0 0.0
      %2551 = vmatpush.msra.mxu0 0.0
      %2552 = vmatpush.msra.mxu0 0.0
      %2553 = vmatpush.msra.mxu0 0.0
      %2554 = vmatpush.msra.mxu0 0.0
      %2555 = vmatpush.msra.mxu0 0.0
      %2556 = vmatpush.msra.mxu0 0.0
      %2557 = vmatpush.msra.mxu0 0.0
      %2558 = vmatpush.msra.mxu0 0.0
      %2559 = vmatpush.msra.mxu0 0.0
      %2560 = vmatpush.msra.mxu0 0.0
      %2561 = vmatpush.msra.mxu0 0.0
      %2562 = vmatpush.msra.mxu0 %v2453
      %2563 = vmatpush.msra.mxu0 %v2452
      %2564 = vmatpush.msra.mxu0 %v2451
      %2565 = vmatpush.msra.mxu0 %v2450
      %2566 = vmatmul.f32.gmra.mxu0 %v2455
      %v2567 = vpop.f32.mrf.mxu0
      %v2568 = vadd.f32 0.0, %v2567
      %2569 = vmatmul.f32.gmra.mxu0 %v2458
      %v2570 = vpop.f32.mrf.mxu0
      %v2571 = vadd.f32 0.0, %v2570
      %2572 = vmatmul.f32.gmra.mxu0 %v2461
      %v2573 = vpop.f32.mrf.mxu0
      %v2574 = vadd.f32 0.0, %v2573
      %2575 = vmatmul.f32.gmra.mxu0 %v2464
      %v2576 = vpop.f32.mrf.mxu0
      %v2577 = vadd.f32 0.0, %v2576
      %2578 = vmatmul.f32.gmra.mxu0 %v2467
      %v2579 = vpop.f32.mrf.mxu0
      %v2580 = vadd.f32 0.0, %v2579
      %2581 = vmatmul.f32.gmra.mxu0 %v2470
      %v2582 = vpop.f32.mrf.mxu0
      %v2583 = vadd.f32 0.0, %v2582
      %2584 = vmatmul.f32.gmra.mxu0 %v2473
      %v2585 = vpop.f32.mrf.mxu0
      %v2586 = vadd.f32 0.0, %v2585
      %2587 = vmatmul.f32.gmra.mxu0 %v2476
      %v2588 = vpop.f32.mrf.mxu0
      %v2589 = vadd.f32 0.0, %v2588
      %2590 = vmatmul.f32.gmra.mxu0 %v2479
      %v2591 = vpop.f32.mrf.mxu0
      %v2592 = vadd.f32 0.0, %v2591
      %2593 = vmatmul.f32.gmra.mxu0 %v2482
      %v2594 = vpop.f32.mrf.mxu0
      %v2595 = vadd.f32 0.0, %v2594
      %2596 = vmatmul.f32.gmra.mxu0 %v2485
      %v2597 = vpop.f32.mrf.mxu0
      %v2598 = vadd.f32 0.0, %v2597
      %2599 = vmatmul.f32.gmra.mxu0 %v2488
      %v2600 = vpop.f32.mrf.mxu0
      %v2601 = vadd.f32 0.0, %v2600
      %2602 = vmatmul.f32.gmra.mxu0 %v2491
      %v2603 = vpop.f32.mrf.mxu0
      %v2604 = vadd.f32 0.0, %v2603
      %2605 = vmatmul.f32.gmra.mxu0 %v2494
      %v2606 = vpop.f32.mrf.mxu0
      %v2607 = vadd.f32 0.0, %v2606
      %2608 = vmatmul.f32.gmra.mxu0 %v2497
      %v2609 = vpop.f32.mrf.mxu0
      %v2610 = vadd.f32 0.0, %v2609
      %2611 = vmatmul.f32.gmra.mxu0 %v2500
      %v2612 = vpop.f32.mrf.mxu0
      %v2613 = vadd.f32 0.0, %v2612
      %2614 = vmatmul.f32.gmra.mxu0 %v2503
      %v2615 = vpop.f32.mrf.mxu0
      %v2616 = vadd.f32 0.0, %v2615
      %2617 = vmatmul.f32.gmra.mxu0 %v2506
      %v2618 = vpop.f32.mrf.mxu0
      %v2619 = vadd.f32 0.0, %v2618
      %2620 = vmatmul.f32.gmra.mxu0 %v2509
      %v2621 = vpop.f32.mrf.mxu0
      %v2622 = vadd.f32 0.0, %v2621
      %2623 = vmatmul.f32.gmra.mxu0 %v2512
      %v2624 = vpop.f32.mrf.mxu0
      %v2625 = vadd.f32 0.0, %v2624
      %2626 = vmatmul.f32.gmra.mxu0 %v2515
      %v2627 = vpop.f32.mrf.mxu0
      %v2628 = vadd.f32 0.0, %v2627
      %2629 = vmatmul.f32.gmra.mxu0 %v2518
      %v2630 = vpop.f32.mrf.mxu0
      %v2631 = vadd.f32 0.0, %v2630
      %2632 = vmatmul.f32.gmra.mxu0 %v2521
      %v2633 = vpop.f32.mrf.mxu0
      %v2634 = vadd.f32 0.0, %v2633
      %2635 = vmatmul.f32.gmra.mxu0 %v2524
      %v2636 = vpop.f32.mrf.mxu0
      %v2637 = vadd.f32 0.0, %v2636
      %2638 = vmatmul.f32.gmra.mxu0 %v2527
      %v2639 = vpop.f32.mrf.mxu0
      %v2640 = vadd.f32 0.0, %v2639
      %2641 = vmatmul.f32.gmra.mxu0 %v2530
      %v2642 = vpop.f32.mrf.mxu0
      %v2643 = vadd.f32 0.0, %v2642
      %2644 = vmatmul.f32.gmra.mxu0 %v2533
      %v2645 = vpop.f32.mrf.mxu0
      %v2646 = vadd.f32 0.0, %v2645
      %2647 = vmatmul.f32.gmra.mxu0 %v2536
      %v2648 = vpop.f32.mrf.mxu0
      %v2649 = vadd.f32 0.0, %v2648
      %2650 = vmatmul.f32.gmra.mxu0 %v2539
      %v2651 = vpop.f32.mrf.mxu0
      %v2652 = vadd.f32 0.0, %v2651
      %2653 = vmatmul.f32.gmra.mxu0 %v2542
      %v2654 = vpop.f32.mrf.mxu0
      %v2655 = vadd.f32 0.0, %v2654
      %2656 = vmatmul.f32.gmra.mxu0 %v2545
      %v2657 = vpop.f32.mrf.mxu0
      %v2658 = vadd.f32 0.0, %v2657
      %2659 = vmatmul.f32.gmra.mxu0 %v2548
      %v2660 = vpop.f32.mrf.mxu0
      %v2661 = vadd.f32 0.0, %v2660
      %2662 = vdwg.mxu0
      %v2663 = vadd.f32 %v2385, %v2568
      %v2664 = vadd.f32 %v2386, %v2571
      %v2665 = vadd.f32 %v2387, %v2574
      %v2666 = vadd.f32 %v2388, %v2577
      %v2667 = vadd.f32 %v2389, %v2580
      %v2668 = vadd.f32 %v2390, %v2583
      %v2669 = vadd.f32 %v2391, %v2586
      %v2670 = vadd.f32 %v2392, %v2589
      %v2671 = vadd.f32 %v2393, %v2592
      %v2672 = vadd.f32 %v2394, %v2595
      %v2673 = vadd.f32 %v2395, %v2598
      %v2674 = vadd.f32 %v2396, %v2601
      %v2675 = vadd.f32 %v2397, %v2604
      %v2676 = vadd.f32 %v2398, %v2607
      %v2677 = vadd.f32 %v2399, %v2610
      %v2678 = vadd.f32 %v2400, %v2613
      %v2679 = vadd.f32 %v2401, %v2616
      %v2680 = vadd.f32 %v2402, %v2619
      %v2681 = vadd.f32 %v2403, %v2622
      %v2682 = vadd.f32 %v2404, %v2625
      %v2683 = vadd.f32 %v2405, %v2628
      %v2684 = vadd.f32 %v2406, %v2631
      %v2685 = vadd.f32 %v2407, %v2634
      %v2686 = vadd.f32 %v2408, %v2637
      %v2687 = vadd.f32 %v2409, %v2640
      %v2688 = vadd.f32 %v2410, %v2643
      %v2689 = vadd.f32 %v2411, %v2646
      %v2690 = vadd.f32 %v2412, %v2649
      %v2691 = vadd.f32 %v2413, %v2652
      %v2692 = vadd.f32 %v2414, %v2655
      %v2693 = vadd.f32 %v2415, %v2658
      %v2694 = vadd.f32 %v2416, %v2661
      %v2695 = vld [vmem:[%s2138 + $0x2] sm:$0xff]
      %v2696 = vld [vmem:[%s2138 + $0xa] sm:$0xff]
      %v2697 = vld [vmem:[%s2138 + $0x1a] sm:$0xff]
      %v2698 = vld [vmem:[%s2138 + $0x22] sm:$0xff]
      %v2699 = vld [vmem:[%s2138 + $0x32] sm:$0xff]
      %v2700 = vld [vmem:[%s2138 + $0x3a] sm:$0xff]
      %v2701 = vld [vmem:[%s2138 + $0x4a] sm:$0xff]
      %v2702 = vld [vmem:[%s2138 + $0x52] sm:$0xff]
      %v2703 = vld [vmem:[%s2138 + $0x62] sm:$0xff]
      %v2704 = vld [vmem:[%s2138 + $0x6a] sm:$0xff]
      %v2705 = vld [vmem:[%s2138 + $0x7a] sm:$0xff]
      %v2706 = vld [vmem:[%s2138 + $0x82] sm:$0xff]
      %v2707 = vld [vmem:[%s2138 + $0x92] sm:$0xff]
      %v2708 = vld [vmem:[%s2138 + $0x9a] sm:$0xff]
      %v2709 = vld [vmem:[%s2138 + $0xaa] sm:$0xff]
      %v2710 = vld [vmem:[%s2138 + $0xb2] sm:$0xff]
      %v2711 = vld [vmem:[%s2138 + $0xc2] sm:$0xff]
      %v2712 = vld [vmem:[%s2138 + $0xca] sm:$0xff]
      %v2713 = vld [vmem:[%s2138 + $0xda] sm:$0xff]
      %v2714 = vld [vmem:[%s2138 + $0xe2] sm:$0xff]
      %v2715 = vld [vmem:[%s2138 + $0xf2] sm:$0xff]
      %v2716 = vld [vmem:[%s2138 + $0xfa] sm:$0xff]
      %v2717 = vld [vmem:[%s2138 + $0x10a] sm:$0xff]
      %v2718 = vld [vmem:[%s2138 + $0x112] sm:$0xff]
      %v2719 = vld [vmem:[%s2138 + $0x122] sm:$0xff]
      %v2720 = vld [vmem:[%s2138 + $0x12a] sm:$0xff]
      %v2721 = vld [vmem:[%s2138 + $0x13a] sm:$0xff]
      %v2722 = vld [vmem:[%s2138 + $0x142] sm:$0xff]
      %v2723 = vld [vmem:[%s2138 + $0x152] sm:$0xff]
      %v2724 = vld [vmem:[%s2138 + $0x15a] sm:$0xff]
      %v2725 = vld [vmem:[%s2138 + $0x16a] sm:$0xff]
      %v2726 = vld [vmem:[%s2138 + $0x172] sm:$0xff]
      %s2727 = scalar_lea.vmem %s1, 256
      %v2728 = vld [vmem:[%s2727] sm:$0xff]
      %v2729 = vld [vmem:[%s2727 + $0x8] sm:$0xff]
      %v2730 = vld [vmem:[%s2727 + $0x10] sm:$0xff]
      %v2731 = vld [vmem:[%s2727 + $0x18] sm:$0xff]
      %v2733 = vsel %vm446, %v2695, 0
      %v2736 = vsel %vm446, %v2696, 0
      %v2739 = vsel %vm446, %v2697, 0
      %v2742 = vsel %vm446, %v2698, 0
      %v2745 = vsel %vm446, %v2699, 0
      %v2748 = vsel %vm446, %v2700, 0
      %v2751 = vsel %vm446, %v2701, 0
      %v2754 = vsel %vm446, %v2702, 0
      %v2757 = vsel %vm446, %v2703, 0
      %v2760 = vsel %vm446, %v2704, 0
      %v2763 = vsel %vm446, %v2705, 0
      %v2766 = vsel %vm446, %v2706, 0
      %v2769 = vsel %vm446, %v2707, 0
      %v2772 = vsel %vm446, %v2708, 0
      %v2775 = vsel %vm446, %v2709, 0
      %v2778 = vsel %vm446, %v2710, 0
      %v2781 = vsel %vm446, %v2711, 0
      %v2784 = vsel %vm446, %v2712, 0
      %v2787 = vsel %vm446, %v2713, 0
      %v2790 = vsel %vm446, %v2714, 0
      %v2793 = vsel %vm446, %v2715, 0
      %v2796 = vsel %vm446, %v2716, 0
      %v2799 = vsel %vm446, %v2717, 0
      %v2802 = vsel %vm446, %v2718, 0
      %v2805 = vsel %vm446, %v2719, 0
      %v2808 = vsel %vm446, %v2720, 0
      %v2811 = vsel %vm446, %v2721, 0
      %v2814 = vsel %vm446, %v2722, 0
      %v2817 = vsel %vm446, %v2723, 0
      %v2820 = vsel %vm446, %v2724, 0
      %v2823 = vsel %vm446, %v2725, 0
      %v2826 = vsel %vm446, %v2726, 0
      %2828 = vmatpush.msra.mxu0 0.0
      %2829 = vmatpush.msra.mxu0 0.0
      %2830 = vmatpush.msra.mxu0 0.0
      %2831 = vmatpush.msra.mxu0 0.0
      %2832 = vmatpush.msra.mxu0 0.0
      %2833 = vmatpush.msra.mxu0 0.0
      %2834 = vmatpush.msra.mxu0 0.0
      %2835 = vmatpush.msra.mxu0 0.0
      %2836 = vmatpush.msra.mxu0 0.0
      %2837 = vmatpush.msra.mxu0 0.0
      %2838 = vmatpush.msra.mxu0 0.0
      %2839 = vmatpush.msra.mxu0 0.0
      %2840 = vmatpush.msra.mxu0 %v2731
      %2841 = vmatpush.msra.mxu0 %v2730
      %2842 = vmatpush.msra.mxu0 %v2729
      %2843 = vmatpush.msra.mxu0 %v2728
      %2844 = vmatmul.f32.gmra.mxu0 %v2733
      %v2845 = vpop.f32.mrf.mxu0
      %v2846 = vadd.f32 0.0, %v2845
      %2847 = vmatmul.f32.gmra.mxu0 %v2736
      %v2848 = vpop.f32.mrf.mxu0
      %v2849 = vadd.f32 0.0, %v2848
      %2850 = vmatmul.f32.gmra.mxu0 %v2739
      %v2851 = vpop.f32.mrf.mxu0
      %v2852 = vadd.f32 0.0, %v2851
      %2853 = vmatmul.f32.gmra.mxu0 %v2742
      %v2854 = vpop.f32.mrf.mxu0
      %v2855 = vadd.f32 0.0, %v2854
      %2856 = vmatmul.f32.gmra.mxu0 %v2745
      %v2857 = vpop.f32.mrf.mxu0
      %v2858 = vadd.f32 0.0, %v2857
      %2859 = vmatmul.f32.gmra.mxu0 %v2748
      %v2860 = vpop.f32.mrf.mxu0
      %v2861 = vadd.f32 0.0, %v2860
      %2862 = vmatmul.f32.gmra.mxu0 %v2751
      %v2863 = vpop.f32.mrf.mxu0
      %v2864 = vadd.f32 0.0, %v2863
      %2865 = vmatmul.f32.gmra.mxu0 %v2754
      %v2866 = vpop.f32.mrf.mxu0
      %v2867 = vadd.f32 0.0, %v2866
      %2868 = vmatmul.f32.gmra.mxu0 %v2757
      %v2869 = vpop.f32.mrf.mxu0
      %v2870 = vadd.f32 0.0, %v2869
      %2871 = vmatmul.f32.gmra.mxu0 %v2760
      %v2872 = vpop.f32.mrf.mxu0
      %v2873 = vadd.f32 0.0, %v2872
      %2874 = vmatmul.f32.gmra.mxu0 %v2763
      %v2875 = vpop.f32.mrf.mxu0
      %v2876 = vadd.f32 0.0, %v2875
      %2877 = vmatmul.f32.gmra.mxu0 %v2766
      %v2878 = vpop.f32.mrf.mxu0
      %v2879 = vadd.f32 0.0, %v2878
      %2880 = vmatmul.f32.gmra.mxu0 %v2769
      %v2881 = vpop.f32.mrf.mxu0
      %v2882 = vadd.f32 0.0, %v2881
      %2883 = vmatmul.f32.gmra.mxu0 %v2772
      %v2884 = vpop.f32.mrf.mxu0
      %v2885 = vadd.f32 0.0, %v2884
      %2886 = vmatmul.f32.gmra.mxu0 %v2775
      %v2887 = vpop.f32.mrf.mxu0
      %v2888 = vadd.f32 0.0, %v2887
      %2889 = vmatmul.f32.gmra.mxu0 %v2778
      %v2890 = vpop.f32.mrf.mxu0
      %v2891 = vadd.f32 0.0, %v2890
      %2892 = vmatmul.f32.gmra.mxu0 %v2781
      %v2893 = vpop.f32.mrf.mxu0
      %v2894 = vadd.f32 0.0, %v2893
      %2895 = vmatmul.f32.gmra.mxu0 %v2784
      %v2896 = vpop.f32.mrf.mxu0
      %v2897 = vadd.f32 0.0, %v2896
      %2898 = vmatmul.f32.gmra.mxu0 %v2787
      %v2899 = vpop.f32.mrf.mxu0
      %v2900 = vadd.f32 0.0, %v2899
      %2901 = vmatmul.f32.gmra.mxu0 %v2790
      %v2902 = vpop.f32.mrf.mxu0
      %v2903 = vadd.f32 0.0, %v2902
      %2904 = vmatmul.f32.gmra.mxu0 %v2793
      %v2905 = vpop.f32.mrf.mxu0
      %v2906 = vadd.f32 0.0, %v2905
      %2907 = vmatmul.f32.gmra.mxu0 %v2796
      %v2908 = vpop.f32.mrf.mxu0
      %v2909 = vadd.f32 0.0, %v2908
      %2910 = vmatmul.f32.gmra.mxu0 %v2799
      %v2911 = vpop.f32.mrf.mxu0
      %v2912 = vadd.f32 0.0, %v2911
      %2913 = vmatmul.f32.gmra.mxu0 %v2802
      %v2914 = vpop.f32.mrf.mxu0
      %v2915 = vadd.f32 0.0, %v2914
      %2916 = vmatmul.f32.gmra.mxu0 %v2805
      %v2917 = vpop.f32.mrf.mxu0
      %v2918 = vadd.f32 0.0, %v2917
      %2919 = vmatmul.f32.gmra.mxu0 %v2808
      %v2920 = vpop.f32.mrf.mxu0
      %v2921 = vadd.f32 0.0, %v2920
      %2922 = vmatmul.f32.gmra.mxu0 %v2811
      %v2923 = vpop.f32.mrf.mxu0
      %v2924 = vadd.f32 0.0, %v2923
      %2925 = vmatmul.f32.gmra.mxu0 %v2814
      %v2926 = vpop.f32.mrf.mxu0
      %v2927 = vadd.f32 0.0, %v2926
      %2928 = vmatmul.f32.gmra.mxu0 %v2817
      %v2929 = vpop.f32.mrf.mxu0
      %v2930 = vadd.f32 0.0, %v2929
      %2931 = vmatmul.f32.gmra.mxu0 %v2820
      %v2932 = vpop.f32.mrf.mxu0
      %v2933 = vadd.f32 0.0, %v2932
      %2934 = vmatmul.f32.gmra.mxu0 %v2823
      %v2935 = vpop.f32.mrf.mxu0
      %v2936 = vadd.f32 0.0, %v2935
      %2937 = vmatmul.f32.gmra.mxu0 %v2826
      %v2938 = vpop.f32.mrf.mxu0
      %v2939 = vadd.f32 0.0, %v2938
      %2940 = vdwg.mxu0
      %v2941 = vadd.f32 %v2663, %v2846
      %v2942 = vadd.f32 %v2664, %v2849
      %v2943 = vadd.f32 %v2665, %v2852
      %v2944 = vadd.f32 %v2666, %v2855
      %v2945 = vadd.f32 %v2667, %v2858
      %v2946 = vadd.f32 %v2668, %v2861
      %v2947 = vadd.f32 %v2669, %v2864
      %v2948 = vadd.f32 %v2670, %v2867
      %v2949 = vadd.f32 %v2671, %v2870
      %v2950 = vadd.f32 %v2672, %v2873
      %v2951 = vadd.f32 %v2673, %v2876
      %v2952 = vadd.f32 %v2674, %v2879
      %v2953 = vadd.f32 %v2675, %v2882
      %v2954 = vadd.f32 %v2676, %v2885
      %v2955 = vadd.f32 %v2677, %v2888
      %v2956 = vadd.f32 %v2678, %v2891
      %v2957 = vadd.f32 %v2679, %v2894
      %v2958 = vadd.f32 %v2680, %v2897
      %v2959 = vadd.f32 %v2681, %v2900
      %v2960 = vadd.f32 %v2682, %v2903
      %v2961 = vadd.f32 %v2683, %v2906
      %v2962 = vadd.f32 %v2684, %v2909
      %v2963 = vadd.f32 %v2685, %v2912
      %v2964 = vadd.f32 %v2686, %v2915
      %v2965 = vadd.f32 %v2687, %v2918
      %v2966 = vadd.f32 %v2688, %v2921
      %v2967 = vadd.f32 %v2689, %v2924
      %v2968 = vadd.f32 %v2690, %v2927
      %v2969 = vadd.f32 %v2691, %v2930
      %v2970 = vadd.f32 %v2692, %v2933
      %v2971 = vadd.f32 %v2693, %v2936
      %v2972 = vadd.f32 %v2694, %v2939
      %v2973 = vld [vmem:[%s2] sm:$0x1]
      %v2975 = vperm.slane %v2973, 0
      %v2977 = vmul.f32 %v2941, %v2975
      %v2978 = vmul.f32 %v2942, %v2975
      %v2979 = vmul.f32 %v2943, %v2975
      %v2980 = vmul.f32 %v2944, %v2975
      %v2981 = vmul.f32 %v2945, %v2975
      %v2982 = vmul.f32 %v2946, %v2975
      %v2983 = vmul.f32 %v2947, %v2975
      %v2984 = vmul.f32 %v2948, %v2975
      %v2985 = vmul.f32 %v2949, %v2975
      %v2986 = vmul.f32 %v2950, %v2975
      %v2987 = vmul.f32 %v2951, %v2975
      %v2988 = vmul.f32 %v2952, %v2975
      %v2989 = vmul.f32 %v2953, %v2975
      %v2990 = vmul.f32 %v2954, %v2975
      %v2991 = vmul.f32 %v2955, %v2975
      %v2992 = vmul.f32 %v2956, %v2975
      %v2993 = vmul.f32 %v2957, %v2975
      %v2994 = vmul.f32 %v2958, %v2975
      %v2995 = vmul.f32 %v2959, %v2975
      %v2996 = vmul.f32 %v2960, %v2975
      %v2997 = vmul.f32 %v2961, %v2975
      %v2998 = vmul.f32 %v2962, %v2975
      %v2999 = vmul.f32 %v2963, %v2975
      %v3000 = vmul.f32 %v2964, %v2975
      %v3001 = vmul.f32 %v2965, %v2975
      %v3002 = vmul.f32 %v2966, %v2975
      %v3003 = vmul.f32 %v2967, %v2975
      %v3004 = vmul.f32 %v2968, %v2975
      %v3005 = vmul.f32 %v2969, %v2975
      %v3006 = vmul.f32 %v2970, %v2975
      %v3007 = vmul.f32 %v2971, %v2975
      %v3008 = vmul.f32 %v2972, %v2975
      %v3009 = vld [vmem:[%s3] sm:$0x1]
      %v3011 = vperm.slane %v3009, 0
      %v3013 = vadd.f32 %v2977, %v3011
      %v3014 = vadd.f32 %v2978, %v3011
      %v3015 = vadd.f32 %v2979, %v3011
      %v3016 = vadd.f32 %v2980, %v3011
      %v3017 = vadd.f32 %v2981, %v3011
      %v3018 = vadd.f32 %v2982, %v3011
      %v3019 = vadd.f32 %v2983, %v3011
      %v3020 = vadd.f32 %v2984, %v3011
      %v3021 = vadd.f32 %v2985, %v3011
      %v3022 = vadd.f32 %v2986, %v3011
      %v3023 = vadd.f32 %v2987, %v3011
      %v3024 = vadd.f32 %v2988, %v3011
      %v3025 = vadd.f32 %v2989, %v3011
      %v3026 = vadd.f32 %v2990, %v3011
      %v3027 = vadd.f32 %v2991, %v3011
      %v3028 = vadd.f32 %v2992, %v3011
      %v3029 = vadd.f32 %v2993, %v3011
      %v3030 = vadd.f32 %v2994, %v3011
      %v3031 = vadd.f32 %v2995, %v3011
      %v3032 = vadd.f32 %v2996, %v3011
      %v3033 = vadd.f32 %v2997, %v3011
      %v3034 = vadd.f32 %v2998, %v3011
      %v3035 = vadd.f32 %v2999, %v3011
      %v3036 = vadd.f32 %v3000, %v3011
      %v3037 = vadd.f32 %v3001, %v3011
      %v3038 = vadd.f32 %v3002, %v3011
      %v3039 = vadd.f32 %v3003, %v3011
      %v3040 = vadd.f32 %v3004, %v3011
      %v3041 = vadd.f32 %v3005, %v3011
      %v3042 = vadd.f32 %v3006, %v3011
      %v3043 = vadd.f32 %v3007, %v3011
      %v3044 = vadd.f32 %v3008, %v3011
      %v3045 = vmax.f32 %v3013, 0.0
      %v3046 = vmax.f32 %v3014, 0.0
      %v3047 = vmax.f32 %v3015, 0.0
      %v3048 = vmax.f32 %v3016, 0.0
      %v3049 = vmax.f32 %v3017, 0.0
      %v3050 = vmax.f32 %v3018, 0.0
      %v3051 = vmax.f32 %v3019, 0.0
      %v3052 = vmax.f32 %v3020, 0.0
      %v3053 = vmax.f32 %v3021, 0.0
      %v3054 = vmax.f32 %v3022, 0.0
      %v3055 = vmax.f32 %v3023, 0.0
      %v3056 = vmax.f32 %v3024, 0.0
      %v3057 = vmax.f32 %v3025, 0.0
      %v3058 = vmax.f32 %v3026, 0.0
      %v3059 = vmax.f32 %v3027, 0.0
      %v3060 = vmax.f32 %v3028, 0.0
      %v3061 = vmax.f32 %v3029, 0.0
      %v3062 = vmax.f32 %v3030, 0.0
      %v3063 = vmax.f32 %v3031, 0.0
      %v3064 = vmax.f32 %v3032, 0.0
      %v3065 = vmax.f32 %v3033, 0.0
      %v3066 = vmax.f32 %v3034, 0.0
      %v3067 = vmax.f32 %v3035, 0.0
      %v3068 = vmax.f32 %v3036, 0.0
      %v3069 = vmax.f32 %v3037, 0.0
      %v3070 = vmax.f32 %v3038, 0.0
      %v3071 = vmax.f32 %v3039, 0.0
      %v3072 = vmax.f32 %v3040, 0.0
      %v3073 = vmax.f32 %v3041, 0.0
      %v3074 = vmax.f32 %v3042, 0.0
      %v3075 = vmax.f32 %v3043, 0.0
      %v3076 = vmax.f32 %v3044, 0.0
      %vm3077 = vcmask 130048
      %3078 = vst.msk [vmem:[#allocation3] sm:$0xff] %vm3077, 0.0
      %3079 = vst.msk [vmem:[#allocation3 + $0x8] sm:$0xff] %vm3077, 0.0
      %vm3080 = vcmask 123904
      %3081 = vst.msk [vmem:[#allocation3 + $0x10] sm:$0x3] %vm3080, 0.0
      %3082 = vst.msk [vmem:[#allocation3 + $0x18] sm:$0xff] %vm3077, 0.0
      %3083 = vst.msk [vmem:[#allocation3 + $0x20] sm:$0xff] %vm3077, 0.0
      %3084 = vst.msk [vmem:[#allocation3 + $0x28] sm:$0x3] %vm3080, 0.0
      %3085 = vst.msk [vmem:[#allocation3 + $0x30] sm:$0xff] %vm3077, 0.0
      %3086 = vst.msk [vmem:[#allocation3 + $0x38] sm:$0xff] %vm3077, 0.0
      %3087 = vst.msk [vmem:[#allocation3 + $0x40] sm:$0x3] %vm3080, 0.0
      %3088 = vst.msk [vmem:[#allocation3 + $0x48] sm:$0xff] %vm3077, 0.0
      %3089 = vst.msk [vmem:[#allocation3 + $0x50] sm:$0xff] %vm3077, 0.0
      %3090 = vst.msk [vmem:[#allocation3 + $0x58] sm:$0x3] %vm3080, 0.0
      %3091 = vst.msk [vmem:[#allocation3 + $0x60] sm:$0xff] %vm3077, 0.0
      %3092 = vst.msk [vmem:[#allocation3 + $0x68] sm:$0xff] %vm3077, 0.0
      %3093 = vst.msk [vmem:[#allocation3 + $0x70] sm:$0x3] %vm3080, 0.0
      %3094 = vst.msk [vmem:[#allocation3 + $0x78] sm:$0xff] %vm3077, 0.0
      %3095 = vst.msk [vmem:[#allocation3 + $0x80] sm:$0xff] %vm3077, 0.0
      %3096 = vst.msk [vmem:[#allocation3 + $0x88] sm:$0x3] %vm3080, 0.0
      %3097 = vst.msk [vmem:[#allocation3 + $0x90] sm:$0xff] %vm3077, 0.0
      %3098 = vst.msk [vmem:[#allocation3 + $0x98] sm:$0xff] %vm3077, 0.0
      %3099 = vst.msk [vmem:[#allocation3 + $0xa0] sm:$0x3] %vm3080, 0.0
      %3100 = vst.msk [vmem:[#allocation3 + $0xa8] sm:$0xff] %vm3077, 0.0
      %3101 = vst.msk [vmem:[#allocation3 + $0xb0] sm:$0xff] %vm3077, 0.0
      %3102 = vst.msk [vmem:[#allocation3 + $0xb8] sm:$0x3] %vm3080, 0.0
      %3103 = vst.msk [vmem:[#allocation3 + $0xc0] sm:$0xff] %vm3077, 0.0
      %3104 = vst.msk [vmem:[#allocation3 + $0xc8] sm:$0xff] %vm3077, 0.0
      %3105 = vst.msk [vmem:[#allocation3 + $0xd0] sm:$0x3] %vm3080, 0.0
      %3106 = vst.msk [vmem:[#allocation3 + $0xd8] sm:$0xff] %vm3077, 0.0
      %3107 = vst.msk [vmem:[#allocation3 + $0xe0] sm:$0xff] %vm3077, 0.0
      %3108 = vst.msk [vmem:[#allocation3 + $0xe8] sm:$0x3] %vm3080, 0.0
      %3109 = vst.msk [vmem:[#allocation3 + $0xf0] sm:$0xff] %vm3077, 0.0
      %3110 = vst.msk [vmem:[#allocation3 + $0xf8] sm:$0xff] %vm3077, 0.0
      %3111 = vst.msk [vmem:[#allocation3 + $0x100] sm:$0x3] %vm3080, 0.0
      %3112 = vst.msk [vmem:[#allocation3 + $0x108] sm:$0xff] %vm3077, 0.0
      %3113 = vst.msk [vmem:[#allocation3 + $0x110] sm:$0xff] %vm3077, 0.0
      %3114 = vst.msk [vmem:[#allocation3 + $0x118] sm:$0x3] %vm3080, 0.0
      %3115 = vst.msk [vmem:[#allocation3 + $0x120] sm:$0xff] %vm3077, 0.0
      %3116 = vst.msk [vmem:[#allocation3 + $0x128] sm:$0xff] %vm3077, 0.0
      %3117 = vst.msk [vmem:[#allocation3 + $0x130] sm:$0x3] %vm3080, 0.0
      %3118 = vst.msk [vmem:[#allocation3 + $0x138] sm:$0xff] %vm3077, 0.0
      %3119 = vst.msk [vmem:[#allocation3 + $0x140] sm:$0xff] %vm3077, 0.0
      %3120 = vst.msk [vmem:[#allocation3 + $0x148] sm:$0x3] %vm3080, 0.0
      %3121 = vst.msk [vmem:[#allocation3 + $0x150] sm:$0xff] %vm3077, 0.0
      %3122 = vst.msk [vmem:[#allocation3 + $0x158] sm:$0xff] %vm3077, 0.0
      %3123 = vst.msk [vmem:[#allocation3 + $0x160] sm:$0x3] %vm3080, 0.0
      %3124 = vst.msk [vmem:[#allocation3 + $0x168] sm:$0xff] %vm3077, 0.0
      %3125 = vst.msk [vmem:[#allocation3 + $0x170] sm:$0xff] %vm3077, 0.0
      %3126 = vst.msk [vmem:[#allocation3 + $0x178] sm:$0x3] %vm3080, 0.0
      %3127 = vst.msk [vmem:[#allocation3 + $0x180] sm:$0xff] %vm3077, 0.0
      %3128 = vst.msk [vmem:[#allocation3 + $0x188] sm:$0xff] %vm3077, 0.0
      %3129 = vst.msk [vmem:[#allocation3 + $0x190] sm:$0x3] %vm3080, 0.0
      %3130 = vst.msk [vmem:[#allocation3 + $0x198] sm:$0xff] %vm3077, 0.0
      %3131 = vst.msk [vmem:[#allocation3 + $0x1a0] sm:$0xff] %vm3077, 0.0
      %3132 = vst.msk [vmem:[#allocation3 + $0x1a8] sm:$0x3] %vm3080, 0.0
      %s3133 = scalar_lea.vmem [#allocation3], 24
      %3134 = vst.msk [vmem:[%s3133 + $0x1] sm:$0xff] %vm3077, %v3045
      %3135 = vst.msk [vmem:[%s3133 + $0x9] sm:$0xff] %vm3077, %v3046
      %3136 = vst.msk [vmem:[%s3133 + $0x19] sm:$0xff] %vm3077, %v3047
      %3137 = vst.msk [vmem:[%s3133 + $0x21] sm:$0xff] %vm3077, %v3048
      %3138 = vst.msk [vmem:[%s3133 + $0x31] sm:$0xff] %vm3077, %v3049
      %3139 = vst.msk [vmem:[%s3133 + $0x39] sm:$0xff] %vm3077, %v3050
      %3140 = vst.msk [vmem:[%s3133 + $0x49] sm:$0xff] %vm3077, %v3051
      %3141 = vst.msk [vmem:[%s3133 + $0x51] sm:$0xff] %vm3077, %v3052
      %3142 = vst.msk [vmem:[%s3133 + $0x61] sm:$0xff] %vm3077, %v3053
      %3143 = vst.msk [vmem:[%s3133 + $0x69] sm:$0xff] %vm3077, %v3054
      %3144 = vst.msk [vmem:[%s3133 + $0x79] sm:$0xff] %vm3077, %v3055
      %3145 = vst.msk [vmem:[%s3133 + $0x81] sm:$0xff] %vm3077, %v3056
      %3146 = vst.msk [vmem:[%s3133 + $0x91] sm:$0xff] %vm3077, %v3057
      %3147 = vst.msk [vmem:[%s3133 + $0x99] sm:$0xff] %vm3077, %v3058
      %3148 = vst.msk [vmem:[%s3133 + $0xa9] sm:$0xff] %vm3077, %v3059
      %3149 = vst.msk [vmem:[%s3133 + $0xb1] sm:$0xff] %vm3077, %v3060
      %3150 = vst.msk [vmem:[%s3133 + $0xc1] sm:$0xff] %vm3077, %v3061
      %3151 = vst.msk [vmem:[%s3133 + $0xc9] sm:$0xff] %vm3077, %v3062
      %3152 = vst.msk [vmem:[%s3133 + $0xd9] sm:$0xff] %vm3077, %v3063
      %3153 = vst.msk [vmem:[%s3133 + $0xe1] sm:$0xff] %vm3077, %v3064
      %3154 = vst.msk [vmem:[%s3133 + $0xf1] sm:$0xff] %vm3077, %v3065
      %3155 = vst.msk [vmem:[%s3133 + $0xf9] sm:$0xff] %vm3077, %v3066
      %3156 = vst.msk [vmem:[%s3133 + $0x109] sm:$0xff] %vm3077, %v3067
      %3157 = vst.msk [vmem:[%s3133 + $0x111] sm:$0xff] %vm3077, %v3068
      %3158 = vst.msk [vmem:[%s3133 + $0x121] sm:$0xff] %vm3077, %v3069
      %3159 = vst.msk [vmem:[%s3133 + $0x129] sm:$0xff] %vm3077, %v3070
      %3160 = vst.msk [vmem:[%s3133 + $0x139] sm:$0xff] %vm3077, %v3071
      %3161 = vst.msk [vmem:[%s3133 + $0x141] sm:$0xff] %vm3077, %v3072
      %3162 = vst.msk [vmem:[%s3133 + $0x151] sm:$0xff] %vm3077, %v3073
      %3163 = vst.msk [vmem:[%s3133 + $0x159] sm:$0xff] %vm3077, %v3074
      %3164 = vst.msk [vmem:[%s3133 + $0x169] sm:$0xff] %vm3077, %v3075
      %3165 = vst.msk [vmem:[%s3133 + $0x171] sm:$0xff] %vm3077, %v3076
      %v3166 = vld [vmem:[#allocation3] sm:$0xff]
      %v3167 = vld [vmem:[#allocation3 + $0x8] sm:$0xff]
      %v3168 = vld [vmem:[#allocation3 + $0x18] sm:$0xff]
      %v3169 = vld [vmem:[#allocation3 + $0x20] sm:$0xff]
      %v3170 = vld [vmem:[#allocation3 + $0x30] sm:$0xff]
      %v3171 = vld [vmem:[#allocation3 + $0x38] sm:$0xff]
      %v3172 = vld [vmem:[#allocation3 + $0x48] sm:$0xff]
      %v3173 = vld [vmem:[#allocation3 + $0x50] sm:$0xff]
      %v3174 = vld [vmem:[#allocation3 + $0x60] sm:$0xff]
      %v3175 = vld [vmem:[#allocation3 + $0x68] sm:$0xff]
      %v3176 = vld [vmem:[#allocation3 + $0x78] sm:$0xff]
      %v3177 = vld [vmem:[#allocation3 + $0x80] sm:$0xff]
      %v3178 = vld [vmem:[#allocation3 + $0x90] sm:$0xff]
      %v3179 = vld [vmem:[#allocation3 + $0x98] sm:$0xff]
      %v3180 = vld [vmem:[#allocation3 + $0xa8] sm:$0xff]
      %v3181 = vld [vmem:[#allocation3 + $0xb0] sm:$0xff]
      %v3182 = vld [vmem:[#allocation3 + $0xc0] sm:$0xff]
      %v3183 = vld [vmem:[#allocation3 + $0xc8] sm:$0xff]
      %v3184 = vld [vmem:[#allocation3 + $0xd8] sm:$0xff]
      %v3185 = vld [vmem:[#allocation3 + $0xe0] sm:$0xff]
      %v3186 = vld [vmem:[#allocation3 + $0xf0] sm:$0xff]
      %v3187 = vld [vmem:[#allocation3 + $0xf8] sm:$0xff]
      %v3188 = vld [vmem:[#allocation3 + $0x108] sm:$0xff]
      %v3189 = vld [vmem:[#allocation3 + $0x110] sm:$0xff]
      %v3190 = vld [vmem:[#allocation3 + $0x120] sm:$0xff]
      %v3191 = vld [vmem:[#allocation3 + $0x128] sm:$0xff]
      %v3192 = vld [vmem:[#allocation3 + $0x138] sm:$0xff]
      %v3193 = vld [vmem:[#allocation3 + $0x140] sm:$0xff]
      %v3194 = vld [vmem:[#allocation3 + $0x150] sm:$0xff]
      %v3195 = vld [vmem:[#allocation3 + $0x158] sm:$0xff]
      %v3196 = vld [vmem:[#allocation3 + $0x168] sm:$0xff]
      %v3197 = vld [vmem:[#allocation3 + $0x170] sm:$0xff]
      %v3198 = vld [vmem:[%s4] sm:$0xff]
      %v3199 = vld [vmem:[%s4 + $0x8] sm:$0xff]
      %v3200 = vld [vmem:[#allocation3 + $0x1] sm:$0xff]
      %v3201 = vld [vmem:[#allocation3 + $0x9] sm:$0xff]
      %v3202 = vld [vmem:[#allocation3 + $0x19] sm:$0xff]
      %v3203 = vld [vmem:[#allocation3 + $0x21] sm:$0xff]
      %v3204 = vld [vmem:[#allocation3 + $0x31] sm:$0xff]
      %v3205 = vld [vmem:[#allocation3 + $0x39] sm:$0xff]
      %v3206 = vld [vmem:[#allocation3 + $0x49] sm:$0xff]
      %v3207 = vld [vmem:[#allocation3 + $0x51] sm:$0xff]
      %v3208 = vld [vmem:[#allocation3 + $0x61] sm:$0xff]
      %v3209 = vld [vmem:[#allocation3 + $0x69] sm:$0xff]
      %v3210 = vld [vmem:[#allocation3 + $0x79] sm:$0xff]
      %v3211 = vld [vmem:[#allocation3 + $0x81] sm:$0xff]
      %v3212 = vld [vmem:[#allocation3 + $0x91] sm:$0xff]
      %v3213 = vld [vmem:[#allocation3 + $0x99] sm:$0xff]
      %v3214 = vld [vmem:[#allocation3 + $0xa9] sm:$0xff]
      %v3215 = vld [vmem:[#allocation3 + $0xb1] sm:$0xff]
      %v3216 = vld [vmem:[#allocation3 + $0xc1] sm:$0xff]
      %v3217 = vld [vmem:[#allocation3 + $0xc9] sm:$0xff]
      %v3218 = vld [vmem:[#allocation3 + $0xd9] sm:$0xff]
      %v3219 = vld [vmem:[#allocation3 + $0xe1] sm:$0xff]
      %v3220 = vld [vmem:[#allocation3 + $0xf1] sm:$0xff]
      %v3221 = vld [vmem:[#allocation3 + $0xf9] sm:$0xff]
      %v3222 = vld [vmem:[#allocation3 + $0x109] sm:$0xff]
      %v3223 = vld [vmem:[#allocation3 + $0x111] sm:$0xff]
      %v3224 = vld [vmem:[#allocation3 + $0x121] sm:$0xff]
      %v3225 = vld [vmem:[#allocation3 + $0x129] sm:$0xff]
      %v3226 = vld [vmem:[#allocation3 + $0x139] sm:$0xff]
      %v3227 = vld [vmem:[#allocation3 + $0x141] sm:$0xff]
      %v3228 = vld [vmem:[#allocation3 + $0x151] sm:$0xff]
      %v3229 = vld [vmem:[#allocation3 + $0x159] sm:$0xff]
      %v3230 = vld [vmem:[#allocation3 + $0x169] sm:$0xff]
      %v3231 = vld [vmem:[#allocation3 + $0x171] sm:$0xff]
      %s3232 = scalar_lea.vmem %s4, 16
      %v3233 = vld [vmem:[%s3232] sm:$0xff]
      %v3234 = vld [vmem:[%s3232 + $0x8] sm:$0xff]
      %v3236 = vsel %vm3077, %v3200, 0
      %v3239 = vsel %vm3077, %v3201, 0
      %v3242 = vsel %vm3077, %v3202, 0
      %v3245 = vsel %vm3077, %v3203, 0
      %v3248 = vsel %vm3077, %v3204, 0
      %v3251 = vsel %vm3077, %v3205, 0
      %v3254 = vsel %vm3077, %v3206, 0
      %v3257 = vsel %vm3077, %v3207, 0
      %v3260 = vsel %vm3077, %v3208, 0
      %v3263 = vsel %vm3077, %v3209, 0
      %v3266 = vsel %vm3077, %v3210, 0
      %v3269 = vsel %vm3077, %v3211, 0
      %v3272 = vsel %vm3077, %v3212, 0
      %v3275 = vsel %vm3077, %v3213, 0
      %v3278 = vsel %vm3077, %v3214, 0
      %v3281 = vsel %vm3077, %v3215, 0
      %v3284 = vsel %vm3077, %v3216, 0
      %v3287 = vsel %vm3077, %v3217, 0
      %v3290 = vsel %vm3077, %v3218, 0
      %v3293 = vsel %vm3077, %v3219, 0
      %v3296 = vsel %vm3077, %v3220, 0
      %v3299 = vsel %vm3077, %v3221, 0
      %v3302 = vsel %vm3077, %v3222, 0
      %v3305 = vsel %vm3077, %v3223, 0
      %v3308 = vsel %vm3077, %v3224, 0
      %v3311 = vsel %vm3077, %v3225, 0
      %v3314 = vsel %vm3077, %v3226, 0
      %v3317 = vsel %vm3077, %v3227, 0
      %v3320 = vsel %vm3077, %v3228, 0
      %v3323 = vsel %vm3077, %v3229, 0
      %v3326 = vsel %vm3077, %v3230, 0
      %v3329 = vsel %vm3077, %v3231, 0
      %3331 = vmatpush.msra.mxu0 0.0
      %3332 = vmatpush.msra.mxu0 0.0
      %3333 = vmatpush.msra.mxu0 0.0
      %3334 = vmatpush.msra.mxu0 0.0
      %3335 = vmatpush.msra.mxu0 0.0
      %3336 = vmatpush.msra.mxu0 0.0
      %3337 = vmatpush.msra.mxu0 0.0
      %3338 = vmatpush.msra.mxu0 0.0
      %3339 = vmatpush.msra.mxu0 0.0
      %3340 = vmatpush.msra.mxu0 0.0
      %3341 = vmatpush.msra.mxu0 0.0
      %3342 = vmatpush.msra.mxu0 0.0
      %3343 = vmatpush.msra.mxu0 0.0
      %3344 = vmatpush.msra.mxu0 0.0
      %3345 = vmatpush.msra.mxu0 %v3234
      %3346 = vmatpush.msra.mxu0 %v3233
      %3347 = vmatmul.f32.gmra.mxu0 %v3236
      %v3348 = vpop.f32.mrf.mxu0
      %v3349 = vadd.f32 0.0, %v3348
      %3350 = vmatmul.f32.gmra.mxu0 %v3239
      %v3351 = vpop.f32.mrf.mxu0
      %v3352 = vadd.f32 0.0, %v3351
      %3353 = vmatmul.f32.gmra.mxu0 %v3242
      %v3354 = vpop.f32.mrf.mxu0
      %v3355 = vadd.f32 0.0, %v3354
      %3356 = vmatmul.f32.gmra.mxu0 %v3245
      %v3357 = vpop.f32.mrf.mxu0
      %v3358 = vadd.f32 0.0, %v3357
      %3359 = vmatmul.f32.gmra.mxu0 %v3248
      %v3360 = vpop.f32.mrf.mxu0
      %v3361 = vadd.f32 0.0, %v3360
      %3362 = vmatmul.f32.gmra.mxu0 %v3251
      %v3363 = vpop.f32.mrf.mxu0
      %v3364 = vadd.f32 0.0, %v3363
      %3365 = vmatmul.f32.gmra.mxu0 %v3254
      %v3366 = vpop.f32.mrf.mxu0
      %v3367 = vadd.f32 0.0, %v3366
      %3368 = vmatmul.f32.gmra.mxu0 %v3257
      %v3369 = vpop.f32.mrf.mxu0
      %v3370 = vadd.f32 0.0, %v3369
      %3371 = vmatmul.f32.gmra.mxu0 %v3260
      %v3372 = vpop.f32.mrf.mxu0
      %v3373 = vadd.f32 0.0, %v3372
      %3374 = vmatmul.f32.gmra.mxu0 %v3263
      %v3375 = vpop.f32.mrf.mxu0
      %v3376 = vadd.f32 0.0, %v3375
      %3377 = vmatmul.f32.gmra.mxu0 %v3266
      %v3378 = vpop.f32.mrf.mxu0
      %v3379 = vadd.f32 0.0, %v3378
      %3380 = vmatmul.f32.gmra.mxu0 %v3269
      %v3381 = vpop.f32.mrf.mxu0
      %v3382 = vadd.f32 0.0, %v3381
      %3383 = vmatmul.f32.gmra.mxu0 %v3272
      %v3384 = vpop.f32.mrf.mxu0
      %v3385 = vadd.f32 0.0, %v3384
      %3386 = vmatmul.f32.gmra.mxu0 %v3275
      %v3387 = vpop.f32.mrf.mxu0
      %v3388 = vadd.f32 0.0, %v3387
      %3389 = vmatmul.f32.gmra.mxu0 %v3278
      %v3390 = vpop.f32.mrf.mxu0
      %v3391 = vadd.f32 0.0, %v3390
      %3392 = vmatmul.f32.gmra.mxu0 %v3281
      %v3393 = vpop.f32.mrf.mxu0
      %v3394 = vadd.f32 0.0, %v3393
      %3395 = vmatmul.f32.gmra.mxu0 %v3284
      %v3396 = vpop.f32.mrf.mxu0
      %v3397 = vadd.f32 0.0, %v3396
      %3398 = vmatmul.f32.gmra.mxu0 %v3287
      %v3399 = vpop.f32.mrf.mxu0
      %v3400 = vadd.f32 0.0, %v3399
      %3401 = vmatmul.f32.gmra.mxu0 %v3290
      %v3402 = vpop.f32.mrf.mxu0
      %v3403 = vadd.f32 0.0, %v3402
      %3404 = vmatmul.f32.gmra.mxu0 %v3293
      %v3405 = vpop.f32.mrf.mxu0
      %v3406 = vadd.f32 0.0, %v3405
      %3407 = vmatmul.f32.gmra.mxu0 %v3296
      %v3408 = vpop.f32.mrf.mxu0
      %v3409 = vadd.f32 0.0, %v3408
      %3410 = vmatmul.f32.gmra.mxu0 %v3299
      %v3411 = vpop.f32.mrf.mxu0
      %v3412 = vadd.f32 0.0, %v3411
      %3413 = vmatmul.f32.gmra.mxu0 %v3302
      %v3414 = vpop.f32.mrf.mxu0
      %v3415 = vadd.f32 0.0, %v3414
      %3416 = vmatmul.f32.gmra.mxu0 %v3305
      %v3417 = vpop.f32.mrf.mxu0
      %v3418 = vadd.f32 0.0, %v3417
      %3419 = vmatmul.f32.gmra.mxu0 %v3308
      %v3420 = vpop.f32.mrf.mxu0
      %v3421 = vadd.f32 0.0, %v3420
      %3422 = vmatmul.f32.gmra.mxu0 %v3311
      %v3423 = vpop.f32.mrf.mxu0
      %v3424 = vadd.f32 0.0, %v3423
      %3425 = vmatmul.f32.gmra.mxu0 %v3314
      %v3426 = vpop.f32.mrf.mxu0
      %v3427 = vadd.f32 0.0, %v3426
      %3428 = vmatmul.f32.gmra.mxu0 %v3317
      %v3429 = vpop.f32.mrf.mxu0
      %v3430 = vadd.f32 0.0, %v3429
      %3431 = vmatmul.f32.gmra.mxu0 %v3320
      %v3432 = vpop.f32.mrf.mxu0
      %v3433 = vadd.f32 0.0, %v3432
      %3434 = vmatmul.f32.gmra.mxu0 %v3323
      %v3435 = vpop.f32.mrf.mxu0
      %v3436 = vadd.f32 0.0, %v3435
      %3437 = vmatmul.f32.gmra.mxu0 %v3326
      %v3438 = vpop.f32.mrf.mxu0
      %v3439 = vadd.f32 0.0, %v3438
      %3440 = vmatmul.f32.gmra.mxu0 %v3329
      %v3441 = vpop.f32.mrf.mxu0
      %v3442 = vadd.f32 0.0, %v3441
      %3443 = vdwg.mxu0
      %v3445 = vsel %vm3077, %v3166, 0
      %v3448 = vsel %vm3077, %v3167, 0
      %v3451 = vsel %vm3077, %v3168, 0
      %v3454 = vsel %vm3077, %v3169, 0
      %v3457 = vsel %vm3077, %v3170, 0
      %v3460 = vsel %vm3077, %v3171, 0
      %v3463 = vsel %vm3077, %v3172, 0
      %v3466 = vsel %vm3077, %v3173, 0
      %v3469 = vsel %vm3077, %v3174, 0
      %v3472 = vsel %vm3077, %v3175, 0
      %v3475 = vsel %vm3077, %v3176, 0
      %v3478 = vsel %vm3077, %v3177, 0
      %v3481 = vsel %vm3077, %v3178, 0
      %v3484 = vsel %vm3077, %v3179, 0
      %v3487 = vsel %vm3077, %v3180, 0
      %v3490 = vsel %vm3077, %v3181, 0
      %v3493 = vsel %vm3077, %v3182, 0
      %v3496 = vsel %vm3077, %v3183, 0
      %v3499 = vsel %vm3077, %v3184, 0
      %v3502 = vsel %vm3077, %v3185, 0
      %v3505 = vsel %vm3077, %v3186, 0
      %v3508 = vsel %vm3077, %v3187, 0
      %v3511 = vsel %vm3077, %v3188, 0
      %v3514 = vsel %vm3077, %v3189, 0
      %v3517 = vsel %vm3077, %v3190, 0
      %v3520 = vsel %vm3077, %v3191, 0
      %v3523 = vsel %vm3077, %v3192, 0
      %v3526 = vsel %vm3077, %v3193, 0
      %v3529 = vsel %vm3077, %v3194, 0
      %v3532 = vsel %vm3077, %v3195, 0
      %v3535 = vsel %vm3077, %v3196, 0
      %v3538 = vsel %vm3077, %v3197, 0
      %3540 = vmatpush.msra.mxu0 0.0
      %3541 = vmatpush.msra.mxu0 0.0
      %3542 = vmatpush.msra.mxu0 0.0
      %3543 = vmatpush.msra.mxu0 0.0
      %3544 = vmatpush.msra.mxu0 0.0
      %3545 = vmatpush.msra.mxu0 0.0
      %3546 = vmatpush.msra.mxu0 0.0
      %3547 = vmatpush.msra.mxu0 0.0
      %3548 = vmatpush.msra.mxu0 0.0
      %3549 = vmatpush.msra.mxu0 0.0
      %3550 = vmatpush.msra.mxu0 0.0
      %3551 = vmatpush.msra.mxu0 0.0
      %3552 = vmatpush.msra.mxu0 0.0
      %3553 = vmatpush.msra.mxu0 0.0
      %3554 = vmatpush.msra.mxu0 %v3199
      %3555 = vmatpush.msra.mxu0 %v3198
      %3556 = vmatmul.f32.gmra.mxu0 %v3445
      %v3557 = vpop.f32.mrf.mxu0
      %v3558 = vadd.f32 %v3349, %v3557
      %3559 = vmatmul.f32.gmra.mxu0 %v3448
      %v3560 = vpop.f32.mrf.mxu0
      %v3561 = vadd.f32 %v3352, %v3560
      %3562 = vmatmul.f32.gmra.mxu0 %v3451
      %v3563 = vpop.f32.mrf.mxu0
      %v3564 = vadd.f32 %v3355, %v3563
      %3565 = vmatmul.f32.gmra.mxu0 %v3454
      %v3566 = vpop.f32.mrf.mxu0
      %v3567 = vadd.f32 %v3358, %v3566
      %3568 = vmatmul.f32.gmra.mxu0 %v3457
      %v3569 = vpop.f32.mrf.mxu0
      %v3570 = vadd.f32 %v3361, %v3569
      %3571 = vmatmul.f32.gmra.mxu0 %v3460
      %v3572 = vpop.f32.mrf.mxu0
      %v3573 = vadd.f32 %v3364, %v3572
      %3574 = vmatmul.f32.gmra.mxu0 %v3463
      %v3575 = vpop.f32.mrf.mxu0
      %v3576 = vadd.f32 %v3367, %v3575
      %3577 = vmatmul.f32.gmra.mxu0 %v3466
      %v3578 = vpop.f32.mrf.mxu0
      %v3579 = vadd.f32 %v3370, %v3578
      %3580 = vmatmul.f32.gmra.mxu0 %v3469
      %v3581 = vpop.f32.mrf.mxu0
      %v3582 = vadd.f32 %v3373, %v3581
      %3583 = vmatmul.f32.gmra.mxu0 %v3472
      %v3584 = vpop.f32.mrf.mxu0
      %v3585 = vadd.f32 %v3376, %v3584
      %3586 = vmatmul.f32.gmra.mxu0 %v3475
      %v3587 = vpop.f32.mrf.mxu0
      %v3588 = vadd.f32 %v3379, %v3587
      %3589 = vmatmul.f32.gmra.mxu0 %v3478
      %v3590 = vpop.f32.mrf.mxu0
      %v3591 = vadd.f32 %v3382, %v3590
      %3592 = vmatmul.f32.gmra.mxu0 %v3481
      %v3593 = vpop.f32.mrf.mxu0
      %v3594 = vadd.f32 %v3385, %v3593
      %3595 = vmatmul.f32.gmra.mxu0 %v3484
      %v3596 = vpop.f32.mrf.mxu0
      %v3597 = vadd.f32 %v3388, %v3596
      %3598 = vmatmul.f32.gmra.mxu0 %v3487
      %v3599 = vpop.f32.mrf.mxu0
      %v3600 = vadd.f32 %v3391, %v3599
      %3601 = vmatmul.f32.gmra.mxu0 %v3490
      %v3602 = vpop.f32.mrf.mxu0
      %v3603 = vadd.f32 %v3394, %v3602
      %3604 = vmatmul.f32.gmra.mxu0 %v3493
      %v3605 = vpop.f32.mrf.mxu0
      %v3606 = vadd.f32 %v3397, %v3605
      %3607 = vmatmul.f32.gmra.mxu0 %v3496
      %v3608 = vpop.f32.mrf.mxu0
      %v3609 = vadd.f32 %v3400, %v3608
      %3610 = vmatmul.f32.gmra.mxu0 %v3499
      %v3611 = vpop.f32.mrf.mxu0
      %v3612 = vadd.f32 %v3403, %v3611
      %3613 = vmatmul.f32.gmra.mxu0 %v3502
      %v3614 = vpop.f32.mrf.mxu0
      %v3615 = vadd.f32 %v3406, %v3614
      %3616 = vmatmul.f32.gmra.mxu0 %v3505
      %v3617 = vpop.f32.mrf.mxu0
      %v3618 = vadd.f32 %v3409, %v3617
      %3619 = vmatmul.f32.gmra.mxu0 %v3508
      %v3620 = vpop.f32.mrf.mxu0
      %v3621 = vadd.f32 %v3412, %v3620
      %3622 = vmatmul.f32.gmra.mxu0 %v3511
      %v3623 = vpop.f32.mrf.mxu0
      %v3624 = vadd.f32 %v3415, %v3623
      %3625 = vmatmul.f32.gmra.mxu0 %v3514
      %v3626 = vpop.f32.mrf.mxu0
      %v3627 = vadd.f32 %v3418, %v3626
      %3628 = vmatmul.f32.gmra.mxu0 %v3517
      %v3629 = vpop.f32.mrf.mxu0
      %v3630 = vadd.f32 %v3421, %v3629
      %3631 = vmatmul.f32.gmra.mxu0 %v3520
      %v3632 = vpop.f32.mrf.mxu0
      %v3633 = vadd.f32 %v3424, %v3632
      %3634 = vmatmul.f32.gmra.mxu0 %v3523
      %v3635 = vpop.f32.mrf.mxu0
      %v3636 = vadd.f32 %v3427, %v3635
      %3637 = vmatmul.f32.gmra.mxu0 %v3526
      %v3638 = vpop.f32.mrf.mxu0
      %v3639 = vadd.f32 %v3430, %v3638
      %3640 = vmatmul.f32.gmra.mxu0 %v3529
      %v3641 = vpop.f32.mrf.mxu0
      %v3642 = vadd.f32 %v3433, %v3641
      %3643 = vmatmul.f32.gmra.mxu0 %v3532
      %v3644 = vpop.f32.mrf.mxu0
      %v3645 = vadd.f32 %v3436, %v3644
      %3646 = vmatmul.f32.gmra.mxu0 %v3535
      %v3647 = vpop.f32.mrf.mxu0
      %v3648 = vadd.f32 %v3439, %v3647
      %3649 = vmatmul.f32.gmra.mxu0 %v3538
      %v3650 = vpop.f32.mrf.mxu0
      %v3651 = vadd.f32 %v3442, %v3650
      %3652 = vdwg.mxu0
      %v3653 = vld [vmem:[#allocation3 + $0x2] sm:$0xff]
      %v3654 = vld [vmem:[#allocation3 + $0xa] sm:$0xff]
      %v3655 = vld [vmem:[#allocation3 + $0x1a] sm:$0xff]
      %v3656 = vld [vmem:[#allocation3 + $0x22] sm:$0xff]
      %v3657 = vld [vmem:[#allocation3 + $0x32] sm:$0xff]
      %v3658 = vld [vmem:[#allocation3 + $0x3a] sm:$0xff]
      %v3659 = vld [vmem:[#allocation3 + $0x4a] sm:$0xff]
      %v3660 = vld [vmem:[#allocation3 + $0x52] sm:$0xff]
      %v3661 = vld [vmem:[#allocation3 + $0x62] sm:$0xff]
      %v3662 = vld [vmem:[#allocation3 + $0x6a] sm:$0xff]
      %v3663 = vld [vmem:[#allocation3 + $0x7a] sm:$0xff]
      %v3664 = vld [vmem:[#allocation3 + $0x82] sm:$0xff]
      %v3665 = vld [vmem:[#allocation3 + $0x92] sm:$0xff]
      %v3666 = vld [vmem:[#allocation3 + $0x9a] sm:$0xff]
      %v3667 = vld [vmem:[#allocation3 + $0xaa] sm:$0xff]
      %v3668 = vld [vmem:[#allocation3 + $0xb2] sm:$0xff]
      %v3669 = vld [vmem:[#allocation3 + $0xc2] sm:$0xff]
      %v3670 = vld [vmem:[#allocation3 + $0xca] sm:$0xff]
      %v3671 = vld [vmem:[#allocation3 + $0xda] sm:$0xff]
      %v3672 = vld [vmem:[#allocation3 + $0xe2] sm:$0xff]
      %v3673 = vld [vmem:[#allocation3 + $0xf2] sm:$0xff]
      %v3674 = vld [vmem:[#allocation3 + $0xfa] sm:$0xff]
      %v3675 = vld [vmem:[#allocation3 + $0x10a] sm:$0xff]
      %v3676 = vld [vmem:[#allocation3 + $0x112] sm:$0xff]
      %v3677 = vld [vmem:[#allocation3 + $0x122] sm:$0xff]
      %v3678 = vld [vmem:[#allocation3 + $0x12a] sm:$0xff]
      %v3679 = vld [vmem:[#allocation3 + $0x13a] sm:$0xff]
      %v3680 = vld [vmem:[#allocation3 + $0x142] sm:$0xff]
      %v3681 = vld [vmem:[#allocation3 + $0x152] sm:$0xff]
      %v3682 = vld [vmem:[#allocation3 + $0x15a] sm:$0xff]
      %v3683 = vld [vmem:[#allocation3 + $0x16a] sm:$0xff]
      %v3684 = vld [vmem:[#allocation3 + $0x172] sm:$0xff]
      %s3685 = scalar_lea.vmem %s4, 32
      %v3686 = vld [vmem:[%s3685] sm:$0xff]
      %v3687 = vld [vmem:[%s3685 + $0x8] sm:$0xff]
      %v3689 = vsel %vm3077, %v3653, 0
      %v3692 = vsel %vm3077, %v3654, 0
      %v3695 = vsel %vm3077, %v3655, 0
      %v3698 = vsel %vm3077, %v3656, 0
      %v3701 = vsel %vm3077, %v3657, 0
      %v3704 = vsel %vm3077, %v3658, 0
      %v3707 = vsel %vm3077, %v3659, 0
      %v3710 = vsel %vm3077, %v3660, 0
      %v3713 = vsel %vm3077, %v3661, 0
      %v3716 = vsel %vm3077, %v3662, 0
      %v3719 = vsel %vm3077, %v3663, 0
      %v3722 = vsel %vm3077, %v3664, 0
      %v3725 = vsel %vm3077, %v3665, 0
      %v3728 = vsel %vm3077, %v3666, 0
      %v3731 = vsel %vm3077, %v3667, 0
      %v3734 = vsel %vm3077, %v3668, 0
      %v3737 = vsel %vm3077, %v3669, 0
      %v3740 = vsel %vm3077, %v3670, 0
      %v3743 = vsel %vm3077, %v3671, 0
      %v3746 = vsel %vm3077, %v3672, 0
      %v3749 = vsel %vm3077, %v3673, 0
      %v3752 = vsel %vm3077, %v3674, 0
      %v3755 = vsel %vm3077, %v3675, 0
      %v3758 = vsel %vm3077, %v3676, 0
      %v3761 = vsel %vm3077, %v3677, 0
      %v3764 = vsel %vm3077, %v3678, 0
      %v3767 = vsel %vm3077, %v3679, 0
      %v3770 = vsel %vm3077, %v3680, 0
      %v3773 = vsel %vm3077, %v3681, 0
      %v3776 = vsel %vm3077, %v3682, 0
      %v3779 = vsel %vm3077, %v3683, 0
      %v3782 = vsel %vm3077, %v3684, 0
      %3784 = vmatpush.msra.mxu0 0.0
      %3785 = vmatpush.msra.mxu0 0.0
      %3786 = vmatpush.msra.mxu0 0.0
      %3787 = vmatpush.msra.mxu0 0.0
      %3788 = vmatpush.msra.mxu0 0.0
      %3789 = vmatpush.msra.mxu0 0.0
      %3790 = vmatpush.msra.mxu0 0.0
      %3791 = vmatpush.msra.mxu0 0.0
      %3792 = vmatpush.msra.mxu0 0.0
      %3793 = vmatpush.msra.mxu0 0.0
      %3794 = vmatpush.msra.mxu0 0.0
      %3795 = vmatpush.msra.mxu0 0.0
      %3796 = vmatpush.msra.mxu0 0.0
      %3797 = vmatpush.msra.mxu0 0.0
      %3798 = vmatpush.msra.mxu0 %v3687
      %3799 = vmatpush.msra.mxu0 %v3686
      %3800 = vmatmul.f32.gmra.mxu0 %v3689
      %v3801 = vpop.f32.mrf.mxu0
      %v3802 = vadd.f32 0.0, %v3801
      %3803 = vmatmul.f32.gmra.mxu0 %v3692
      %v3804 = vpop.f32.mrf.mxu0
      %v3805 = vadd.f32 0.0, %v3804
      %3806 = vmatmul.f32.gmra.mxu0 %v3695
      %v3807 = vpop.f32.mrf.mxu0
      %v3808 = vadd.f32 0.0, %v3807
      %3809 = vmatmul.f32.gmra.mxu0 %v3698
      %v3810 = vpop.f32.mrf.mxu0
      %v3811 = vadd.f32 0.0, %v3810
      %3812 = vmatmul.f32.gmra.mxu0 %v3701
      %v3813 = vpop.f32.mrf.mxu0
      %v3814 = vadd.f32 0.0, %v3813
      %3815 = vmatmul.f32.gmra.mxu0 %v3704
      %v3816 = vpop.f32.mrf.mxu0
      %v3817 = vadd.f32 0.0, %v3816
      %3818 = vmatmul.f32.gmra.mxu0 %v3707
      %v3819 = vpop.f32.mrf.mxu0
      %v3820 = vadd.f32 0.0, %v3819
      %3821 = vmatmul.f32.gmra.mxu0 %v3710
      %v3822 = vpop.f32.mrf.mxu0
      %v3823 = vadd.f32 0.0, %v3822
      %3824 = vmatmul.f32.gmra.mxu0 %v3713
      %v3825 = vpop.f32.mrf.mxu0
      %v3826 = vadd.f32 0.0, %v3825
      %3827 = vmatmul.f32.gmra.mxu0 %v3716
      %v3828 = vpop.f32.mrf.mxu0
      %v3829 = vadd.f32 0.0, %v3828
      %3830 = vmatmul.f32.gmra.mxu0 %v3719
      %v3831 = vpop.f32.mrf.mxu0
      %v3832 = vadd.f32 0.0, %v3831
      %3833 = vmatmul.f32.gmra.mxu0 %v3722
      %v3834 = vpop.f32.mrf.mxu0
      %v3835 = vadd.f32 0.0, %v3834
      %3836 = vmatmul.f32.gmra.mxu0 %v3725
      %v3837 = vpop.f32.mrf.mxu0
      %v3838 = vadd.f32 0.0, %v3837
      %3839 = vmatmul.f32.gmra.mxu0 %v3728
      %v3840 = vpop.f32.mrf.mxu0
      %v3841 = vadd.f32 0.0, %v3840
      %3842 = vmatmul.f32.gmra.mxu0 %v3731
      %v3843 = vpop.f32.mrf.mxu0
      %v3844 = vadd.f32 0.0, %v3843
      %3845 = vmatmul.f32.gmra.mxu0 %v3734
      %v3846 = vpop.f32.mrf.mxu0
      %v3847 = vadd.f32 0.0, %v3846
      %3848 = vmatmul.f32.gmra.mxu0 %v3737
      %v3849 = vpop.f32.mrf.mxu0
      %v3850 = vadd.f32 0.0, %v3849
      %3851 = vmatmul.f32.gmra.mxu0 %v3740
      %v3852 = vpop.f32.mrf.mxu0
      %v3853 = vadd.f32 0.0, %v3852
      %3854 = vmatmul.f32.gmra.mxu0 %v3743
      %v3855 = vpop.f32.mrf.mxu0
      %v3856 = vadd.f32 0.0, %v3855
      %3857 = vmatmul.f32.gmra.mxu0 %v3746
      %v3858 = vpop.f32.mrf.mxu0
      %v3859 = vadd.f32 0.0, %v3858
      %3860 = vmatmul.f32.gmra.mxu0 %v3749
      %v3861 = vpop.f32.mrf.mxu0
      %v3862 = vadd.f32 0.0, %v3861
      %3863 = vmatmul.f32.gmra.mxu0 %v3752
      %v3864 = vpop.f32.mrf.mxu0
      %v3865 = vadd.f32 0.0, %v3864
      %3866 = vmatmul.f32.gmra.mxu0 %v3755
      %v3867 = vpop.f32.mrf.mxu0
      %v3868 = vadd.f32 0.0, %v3867
      %3869 = vmatmul.f32.gmra.mxu0 %v3758
      %v3870 = vpop.f32.mrf.mxu0
      %v3871 = vadd.f32 0.0, %v3870
      %3872 = vmatmul.f32.gmra.mxu0 %v3761
      %v3873 = vpop.f32.mrf.mxu0
      %v3874 = vadd.f32 0.0, %v3873
      %3875 = vmatmul.f32.gmra.mxu0 %v3764
      %v3876 = vpop.f32.mrf.mxu0
      %v3877 = vadd.f32 0.0, %v3876
      %3878 = vmatmul.f32.gmra.mxu0 %v3767
      %v3879 = vpop.f32.mrf.mxu0
      %v3880 = vadd.f32 0.0, %v3879
      %3881 = vmatmul.f32.gmra.mxu0 %v3770
      %v3882 = vpop.f32.mrf.mxu0
      %v3883 = vadd.f32 0.0, %v3882
      %3884 = vmatmul.f32.gmra.mxu0 %v3773
      %v3885 = vpop.f32.mrf.mxu0
      %v3886 = vadd.f32 0.0, %v3885
      %3887 = vmatmul.f32.gmra.mxu0 %v3776
      %v3888 = vpop.f32.mrf.mxu0
      %v3889 = vadd.f32 0.0, %v3888
      %3890 = vmatmul.f32.gmra.mxu0 %v3779
      %v3891 = vpop.f32.mrf.mxu0
      %v3892 = vadd.f32 0.0, %v3891
      %3893 = vmatmul.f32.gmra.mxu0 %v3782
      %v3894 = vpop.f32.mrf.mxu0
      %v3895 = vadd.f32 0.0, %v3894
      %3896 = vdwg.mxu0
      %v3897 = vadd.f32 %v3558, %v3802
      %v3898 = vadd.f32 %v3561, %v3805
      %v3899 = vadd.f32 %v3564, %v3808
      %v3900 = vadd.f32 %v3567, %v3811
      %v3901 = vadd.f32 %v3570, %v3814
      %v3902 = vadd.f32 %v3573, %v3817
      %v3903 = vadd.f32 %v3576, %v3820
      %v3904 = vadd.f32 %v3579, %v3823
      %v3905 = vadd.f32 %v3582, %v3826
      %v3906 = vadd.f32 %v3585, %v3829
      %v3907 = vadd.f32 %v3588, %v3832
      %v3908 = vadd.f32 %v3591, %v3835
      %v3909 = vadd.f32 %v3594, %v3838
      %v3910 = vadd.f32 %v3597, %v3841
      %v3911 = vadd.f32 %v3600, %v3844
      %v3912 = vadd.f32 %v3603, %v3847
      %v3913 = vadd.f32 %v3606, %v3850
      %v3914 = vadd.f32 %v3609, %v3853
      %v3915 = vadd.f32 %v3612, %v3856
      %v3916 = vadd.f32 %v3615, %v3859
      %v3917 = vadd.f32 %v3618, %v3862
      %v3918 = vadd.f32 %v3621, %v3865
      %v3919 = vadd.f32 %v3624, %v3868
      %v3920 = vadd.f32 %v3627, %v3871
      %v3921 = vadd.f32 %v3630, %v3874
      %v3922 = vadd.f32 %v3633, %v3877
      %v3923 = vadd.f32 %v3636, %v3880
      %v3924 = vadd.f32 %v3639, %v3883
      %v3925 = vadd.f32 %v3642, %v3886
      %v3926 = vadd.f32 %v3645, %v3889
      %v3927 = vadd.f32 %v3648, %v3892
      %v3928 = vadd.f32 %v3651, %v3895
      %v3929 = vld [vmem:[%s3133] sm:$0xff]
      %v3930 = vld [vmem:[%s3133 + $0x8] sm:$0xff]
      %v3931 = vld [vmem:[%s3133 + $0x18] sm:$0xff]
      %v3932 = vld [vmem:[%s3133 + $0x20] sm:$0xff]
      %v3933 = vld [vmem:[%s3133 + $0x30] sm:$0xff]
      %v3934 = vld [vmem:[%s3133 + $0x38] sm:$0xff]
      %v3935 = vld [vmem:[%s3133 + $0x48] sm:$0xff]
      %v3936 = vld [vmem:[%s3133 + $0x50] sm:$0xff]
      %v3937 = vld [vmem:[%s3133 + $0x60] sm:$0xff]
      %v3938 = vld [vmem:[%s3133 + $0x68] sm:$0xff]
      %v3939 = vld [vmem:[%s3133 + $0x78] sm:$0xff]
      %v3940 = vld [vmem:[%s3133 + $0x80] sm:$0xff]
      %v3941 = vld [vmem:[%s3133 + $0x90] sm:$0xff]
      %v3942 = vld [vmem:[%s3133 + $0x98] sm:$0xff]
      %v3943 = vld [vmem:[%s3133 + $0xa8] sm:$0xff]
      %v3944 = vld [vmem:[%s3133 + $0xb0] sm:$0xff]
      %v3945 = vld [vmem:[%s3133 + $0xc0] sm:$0xff]
      %v3946 = vld [vmem:[%s3133 + $0xc8] sm:$0xff]
      %v3947 = vld [vmem:[%s3133 + $0xd8] sm:$0xff]
      %v3948 = vld [vmem:[%s3133 + $0xe0] sm:$0xff]
      %v3949 = vld [vmem:[%s3133 + $0xf0] sm:$0xff]
      %v3950 = vld [vmem:[%s3133 + $0xf8] sm:$0xff]
      %v3951 = vld [vmem:[%s3133 + $0x108] sm:$0xff]
      %v3952 = vld [vmem:[%s3133 + $0x110] sm:$0xff]
      %v3953 = vld [vmem:[%s3133 + $0x120] sm:$0xff]
      %v3954 = vld [vmem:[%s3133 + $0x128] sm:$0xff]
      %v3955 = vld [vmem:[%s3133 + $0x138] sm:$0xff]
      %v3956 = vld [vmem:[%s3133 + $0x140] sm:$0xff]
      %v3957 = vld [vmem:[%s3133 + $0x150] sm:$0xff]
      %v3958 = vld [vmem:[%s3133 + $0x158] sm:$0xff]
      %v3959 = vld [vmem:[%s3133 + $0x168] sm:$0xff]
      %v3960 = vld [vmem:[%s3133 + $0x170] sm:$0xff]
      %s3961 = scalar_lea.vmem %s4, 48
      %v3962 = vld [vmem:[%s3961] sm:$0xff]
      %v3963 = vld [vmem:[%s3961 + $0x8] sm:$0xff]
      %v3965 = vsel %vm3077, %v3929, 0
      %v3968 = vsel %vm3077, %v3930, 0
      %v3971 = vsel %vm3077, %v3931, 0
      %v3974 = vsel %vm3077, %v3932, 0
      %v3977 = vsel %vm3077, %v3933, 0
      %v3980 = vsel %vm3077, %v3934, 0
      %v3983 = vsel %vm3077, %v3935, 0
      %v3986 = vsel %vm3077, %v3936, 0
      %v3989 = vsel %vm3077, %v3937, 0
      %v3992 = vsel %vm3077, %v3938, 0
      %v3995 = vsel %vm3077, %v3939, 0
      %v3998 = vsel %vm3077, %v3940, 0
      %v4001 = vsel %vm3077, %v3941, 0
      %v4004 = vsel %vm3077, %v3942, 0
      %v4007 = vsel %vm3077, %v3943, 0
      %v4010 = vsel %vm3077, %v3944, 0
      %v4013 = vsel %vm3077, %v3945, 0
      %v4016 = vsel %vm3077, %v3946, 0
      %v4019 = vsel %vm3077, %v3947, 0
      %v4022 = vsel %vm3077, %v3948, 0
      %v4025 = vsel %vm3077, %v3949, 0
      %v4028 = vsel %vm3077, %v3950, 0
      %v4031 = vsel %vm3077, %v3951, 0
      %v4034 = vsel %vm3077, %v3952, 0
      %v4037 = vsel %vm3077, %v3953, 0
      %v4040 = vsel %vm3077, %v3954, 0
      %v4043 = vsel %vm3077, %v3955, 0
      %v4046 = vsel %vm3077, %v3956, 0
      %v4049 = vsel %vm3077, %v3957, 0
      %v4052 = vsel %vm3077, %v3958, 0
      %v4055 = vsel %vm3077, %v3959, 0
      %v4058 = vsel %vm3077, %v3960, 0
      %4060 = vmatpush.msra.mxu0 0.0
      %4061 = vmatpush.msra.mxu0 0.0
      %4062 = vmatpush.msra.mxu0 0.0
      %4063 = vmatpush.msra.mxu0 0.0
      %4064 = vmatpush.msra.mxu0 0.0
      %4065 = vmatpush.msra.mxu0 0.0
      %4066 = vmatpush.msra.mxu0 0.0
      %4067 = vmatpush.msra.mxu0 0.0
      %4068 = vmatpush.msra.mxu0 0.0
      %4069 = vmatpush.msra.mxu0 0.0
      %4070 = vmatpush.msra.mxu0 0.0
      %4071 = vmatpush.msra.mxu0 0.0
      %4072 = vmatpush.msra.mxu0 0.0
      %4073 = vmatpush.msra.mxu0 0.0
      %4074 = vmatpush.msra.mxu0 %v3963
      %4075 = vmatpush.msra.mxu0 %v3962
      %4076 = vmatmul.f32.gmra.mxu0 %v3965
      %v4077 = vpop.f32.mrf.mxu0
      %v4078 = vadd.f32 0.0, %v4077
      %4079 = vmatmul.f32.gmra.mxu0 %v3968
      %v4080 = vpop.f32.mrf.mxu0
      %v4081 = vadd.f32 0.0, %v4080
      %4082 = vmatmul.f32.gmra.mxu0 %v3971
      %v4083 = vpop.f32.mrf.mxu0
      %v4084 = vadd.f32 0.0, %v4083
      %4085 = vmatmul.f32.gmra.mxu0 %v3974
      %v4086 = vpop.f32.mrf.mxu0
      %v4087 = vadd.f32 0.0, %v4086
      %4088 = vmatmul.f32.gmra.mxu0 %v3977
      %v4089 = vpop.f32.mrf.mxu0
      %v4090 = vadd.f32 0.0, %v4089
      %4091 = vmatmul.f32.gmra.mxu0 %v3980
      %v4092 = vpop.f32.mrf.mxu0
      %v4093 = vadd.f32 0.0, %v4092
      %4094 = vmatmul.f32.gmra.mxu0 %v3983
      %v4095 = vpop.f32.mrf.mxu0
      %v4096 = vadd.f32 0.0, %v4095
      %4097 = vmatmul.f32.gmra.mxu0 %v3986
      %v4098 = vpop.f32.mrf.mxu0
      %v4099 = vadd.f32 0.0, %v4098
      %4100 = vmatmul.f32.gmra.mxu0 %v3989
      %v4101 = vpop.f32.mrf.mxu0
      %v4102 = vadd.f32 0.0, %v4101
      %4103 = vmatmul.f32.gmra.mxu0 %v3992
      %v4104 = vpop.f32.mrf.mxu0
      %v4105 = vadd.f32 0.0, %v4104
      %4106 = vmatmul.f32.gmra.mxu0 %v3995
      %v4107 = vpop.f32.mrf.mxu0
      %v4108 = vadd.f32 0.0, %v4107
      %4109 = vmatmul.f32.gmra.mxu0 %v3998
      %v4110 = vpop.f32.mrf.mxu0
      %v4111 = vadd.f32 0.0, %v4110
      %4112 = vmatmul.f32.gmra.mxu0 %v4001
      %v4113 = vpop.f32.mrf.mxu0
      %v4114 = vadd.f32 0.0, %v4113
      %4115 = vmatmul.f32.gmra.mxu0 %v4004
      %v4116 = vpop.f32.mrf.mxu0
      %v4117 = vadd.f32 0.0, %v4116
      %4118 = vmatmul.f32.gmra.mxu0 %v4007
      %v4119 = vpop.f32.mrf.mxu0
      %v4120 = vadd.f32 0.0, %v4119
      %4121 = vmatmul.f32.gmra.mxu0 %v4010
      %v4122 = vpop.f32.mrf.mxu0
      %v4123 = vadd.f32 0.0, %v4122
      %4124 = vmatmul.f32.gmra.mxu0 %v4013
      %v4125 = vpop.f32.mrf.mxu0
      %v4126 = vadd.f32 0.0, %v4125
      %4127 = vmatmul.f32.gmra.mxu0 %v4016
      %v4128 = vpop.f32.mrf.mxu0
      %v4129 = vadd.f32 0.0, %v4128
      %4130 = vmatmul.f32.gmra.mxu0 %v4019
      %v4131 = vpop.f32.mrf.mxu0
      %v4132 = vadd.f32 0.0, %v4131
      %4133 = vmatmul.f32.gmra.mxu0 %v4022
      %v4134 = vpop.f32.mrf.mxu0
      %v4135 = vadd.f32 0.0, %v4134
      %4136 = vmatmul.f32.gmra.mxu0 %v4025
      %v4137 = vpop.f32.mrf.mxu0
      %v4138 = vadd.f32 0.0, %v4137
      %4139 = vmatmul.f32.gmra.mxu0 %v4028
      %v4140 = vpop.f32.mrf.mxu0
      %v4141 = vadd.f32 0.0, %v4140
      %4142 = vmatmul.f32.gmra.mxu0 %v4031
      %v4143 = vpop.f32.mrf.mxu0
      %v4144 = vadd.f32 0.0, %v4143
      %4145 = vmatmul.f32.gmra.mxu0 %v4034
      %v4146 = vpop.f32.mrf.mxu0
      %v4147 = vadd.f32 0.0, %v4146
      %4148 = vmatmul.f32.gmra.mxu0 %v4037
      %v4149 = vpop.f32.mrf.mxu0
      %v4150 = vadd.f32 0.0, %v4149
      %4151 = vmatmul.f32.gmra.mxu0 %v4040
      %v4152 = vpop.f32.mrf.mxu0
      %v4153 = vadd.f32 0.0, %v4152
      %4154 = vmatmul.f32.gmra.mxu0 %v4043
      %v4155 = vpop.f32.mrf.mxu0
      %v4156 = vadd.f32 0.0, %v4155
      %4157 = vmatmul.f32.gmra.mxu0 %v4046
      %v4158 = vpop.f32.mrf.mxu0
      %v4159 = vadd.f32 0.0, %v4158
      %4160 = vmatmul.f32.gmra.mxu0 %v4049
      %v4161 = vpop.f32.mrf.mxu0
      %v4162 = vadd.f32 0.0, %v4161
      %4163 = vmatmul.f32.gmra.mxu0 %v4052
      %v4164 = vpop.f32.mrf.mxu0
      %v4165 = vadd.f32 0.0, %v4164
      %4166 = vmatmul.f32.gmra.mxu0 %v4055
      %v4167 = vpop.f32.mrf.mxu0
      %v4168 = vadd.f32 0.0, %v4167
      %4169 = vmatmul.f32.gmra.mxu0 %v4058
      %v4170 = vpop.f32.mrf.mxu0
      %v4171 = vadd.f32 0.0, %v4170
      %4172 = vdwg.mxu0
      %v4173 = vadd.f32 %v3897, %v4078
      %v4174 = vadd.f32 %v3898, %v4081
      %v4175 = vadd.f32 %v3899, %v4084
      %v4176 = vadd.f32 %v3900, %v4087
      %v4177 = vadd.f32 %v3901, %v4090
      %v4178 = vadd.f32 %v3902, %v4093
      %v4179 = vadd.f32 %v3903, %v4096
      %v4180 = vadd.f32 %v3904, %v4099
      %v4181 = vadd.f32 %v3905, %v4102
      %v4182 = vadd.f32 %v3906, %v4105
      %v4183 = vadd.f32 %v3907, %v4108
      %v4184 = vadd.f32 %v3908, %v4111
      %v4185 = vadd.f32 %v3909, %v4114
      %v4186 = vadd.f32 %v3910, %v4117
      %v4187 = vadd.f32 %v3911, %v4120
      %v4188 = vadd.f32 %v3912, %v4123
      %v4189 = vadd.f32 %v3913, %v4126
      %v4190 = vadd.f32 %v3914, %v4129
      %v4191 = vadd.f32 %v3915, %v4132
      %v4192 = vadd.f32 %v3916, %v4135
      %v4193 = vadd.f32 %v3917, %v4138
      %v4194 = vadd.f32 %v3918, %v4141
      %v4195 = vadd.f32 %v3919, %v4144
      %v4196 = vadd.f32 %v3920, %v4147
      %v4197 = vadd.f32 %v3921, %v4150
      %v4198 = vadd.f32 %v3922, %v4153
      %v4199 = vadd.f32 %v3923, %v4156
      %v4200 = vadd.f32 %v3924, %v4159
      %v4201 = vadd.f32 %v3925, %v4162
      %v4202 = vadd.f32 %v3926, %v4165
      %v4203 = vadd.f32 %v3927, %v4168
      %v4204 = vadd.f32 %v3928, %v4171
      %v4205 = vld [vmem:[%s3133 + $0x1] sm:$0xff]
      %v4206 = vld [vmem:[%s3133 + $0x9] sm:$0xff]
      %v4207 = vld [vmem:[%s3133 + $0x19] sm:$0xff]
      %v4208 = vld [vmem:[%s3133 + $0x21] sm:$0xff]
      %v4209 = vld [vmem:[%s3133 + $0x31] sm:$0xff]
      %v4210 = vld [vmem:[%s3133 + $0x39] sm:$0xff]
      %v4211 = vld [vmem:[%s3133 + $0x49] sm:$0xff]
      %v4212 = vld [vmem:[%s3133 + $0x51] sm:$0xff]
      %v4213 = vld [vmem:[%s3133 + $0x61] sm:$0xff]
      %v4214 = vld [vmem:[%s3133 + $0x69] sm:$0xff]
      %v4215 = vld [vmem:[%s3133 + $0x79] sm:$0xff]
      %v4216 = vld [vmem:[%s3133 + $0x81] sm:$0xff]
      %v4217 = vld [vmem:[%s3133 + $0x91] sm:$0xff]
      %v4218 = vld [vmem:[%s3133 + $0x99] sm:$0xff]
      %v4219 = vld [vmem:[%s3133 + $0xa9] sm:$0xff]
      %v4220 = vld [vmem:[%s3133 + $0xb1] sm:$0xff]
      %v4221 = vld [vmem:[%s3133 + $0xc1] sm:$0xff]
      %v4222 = vld [vmem:[%s3133 + $0xc9] sm:$0xff]
      %v4223 = vld [vmem:[%s3133 + $0xd9] sm:$0xff]
      %v4224 = vld [vmem:[%s3133 + $0xe1] sm:$0xff]
      %v4225 = vld [vmem:[%s3133 + $0xf1] sm:$0xff]
      %v4226 = vld [vmem:[%s3133 + $0xf9] sm:$0xff]
      %v4227 = vld [vmem:[%s3133 + $0x109] sm:$0xff]
      %v4228 = vld [vmem:[%s3133 + $0x111] sm:$0xff]
      %v4229 = vld [vmem:[%s3133 + $0x121] sm:$0xff]
      %v4230 = vld [vmem:[%s3133 + $0x129] sm:$0xff]
      %v4231 = vld [vmem:[%s3133 + $0x139] sm:$0xff]
      %v4232 = vld [vmem:[%s3133 + $0x141] sm:$0xff]
      %v4233 = vld [vmem:[%s3133 + $0x151] sm:$0xff]
      %v4234 = vld [vmem:[%s3133 + $0x159] sm:$0xff]
      %v4235 = vld [vmem:[%s3133 + $0x169] sm:$0xff]
      %v4236 = vld [vmem:[%s3133 + $0x171] sm:$0xff]
      %s4237 = scalar_lea.vmem %s4, 64
      %v4238 = vld [vmem:[%s4237] sm:$0xff]
      %v4239 = vld [vmem:[%s4237 + $0x8] sm:$0xff]
      %v4241 = vsel %vm3077, %v4205, 0
      %v4244 = vsel %vm3077, %v4206, 0
      %v4247 = vsel %vm3077, %v4207, 0
      %v4250 = vsel %vm3077, %v4208, 0
      %v4253 = vsel %vm3077, %v4209, 0
      %v4256 = vsel %vm3077, %v4210, 0
      %v4259 = vsel %vm3077, %v4211, 0
      %v4262 = vsel %vm3077, %v4212, 0
      %v4265 = vsel %vm3077, %v4213, 0
      %v4268 = vsel %vm3077, %v4214, 0
      %v4271 = vsel %vm3077, %v4215, 0
      %v4274 = vsel %vm3077, %v4216, 0
      %v4277 = vsel %vm3077, %v4217, 0
      %v4280 = vsel %vm3077, %v4218, 0
      %v4283 = vsel %vm3077, %v4219, 0
      %v4286 = vsel %vm3077, %v4220, 0
      %v4289 = vsel %vm3077, %v4221, 0
      %v4292 = vsel %vm3077, %v4222, 0
      %v4295 = vsel %vm3077, %v4223, 0
      %v4298 = vsel %vm3077, %v4224, 0
      %v4301 = vsel %vm3077, %v4225, 0
      %v4304 = vsel %vm3077, %v4226, 0
      %v4307 = vsel %vm3077, %v4227, 0
      %v4310 = vsel %vm3077, %v4228, 0
      %v4313 = vsel %vm3077, %v4229, 0
      %v4316 = vsel %vm3077, %v4230, 0
      %v4319 = vsel %vm3077, %v4231, 0
      %v4322 = vsel %vm3077, %v4232, 0
      %v4325 = vsel %vm3077, %v4233, 0
      %v4328 = vsel %vm3077, %v4234, 0
      %v4331 = vsel %vm3077, %v4235, 0
      %v4334 = vsel %vm3077, %v4236, 0
      %4336 = vmatpush.msra.mxu0 0.0
      %4337 = vmatpush.msra.mxu0 0.0
      %4338 = vmatpush.msra.mxu0 0.0
      %4339 = vmatpush.msra.mxu0 0.0
      %4340 = vmatpush.msra.mxu0 0.0
      %4341 = vmatpush.msra.mxu0 0.0
      %4342 = vmatpush.msra.mxu0 0.0
      %4343 = vmatpush.msra.mxu0 0.0
      %4344 = vmatpush.msra.mxu0 0.0
      %4345 = vmatpush.msra.mxu0 0.0
      %4346 = vmatpush.msra.mxu0 0.0
      %4347 = vmatpush.msra.mxu0 0.0
      %4348 = vmatpush.msra.mxu0 0.0
      %4349 = vmatpush.msra.mxu0 0.0
      %4350 = vmatpush.msra.mxu0 %v4239
      %4351 = vmatpush.msra.mxu0 %v4238
      %4352 = vmatmul.f32.gmra.mxu0 %v4241
      %v4353 = vpop.f32.mrf.mxu0
      %v4354 = vadd.f32 0.0, %v4353
      %4355 = vmatmul.f32.gmra.mxu0 %v4244
      %v4356 = vpop.f32.mrf.mxu0
      %v4357 = vadd.f32 0.0, %v4356
      %4358 = vmatmul.f32.gmra.mxu0 %v4247
      %v4359 = vpop.f32.mrf.mxu0
      %v4360 = vadd.f32 0.0, %v4359
      %4361 = vmatmul.f32.gmra.mxu0 %v4250
      %v4362 = vpop.f32.mrf.mxu0
      %v4363 = vadd.f32 0.0, %v4362
      %4364 = vmatmul.f32.gmra.mxu0 %v4253
      %v4365 = vpop.f32.mrf.mxu0
      %v4366 = vadd.f32 0.0, %v4365
      %4367 = vmatmul.f32.gmra.mxu0 %v4256
      %v4368 = vpop.f32.mrf.mxu0
      %v4369 = vadd.f32 0.0, %v4368
      %4370 = vmatmul.f32.gmra.mxu0 %v4259
      %v4371 = vpop.f32.mrf.mxu0
      %v4372 = vadd.f32 0.0, %v4371
      %4373 = vmatmul.f32.gmra.mxu0 %v4262
      %v4374 = vpop.f32.mrf.mxu0
      %v4375 = vadd.f32 0.0, %v4374
      %4376 = vmatmul.f32.gmra.mxu0 %v4265
      %v4377 = vpop.f32.mrf.mxu0
      %v4378 = vadd.f32 0.0, %v4377
      %4379 = vmatmul.f32.gmra.mxu0 %v4268
      %v4380 = vpop.f32.mrf.mxu0
      %v4381 = vadd.f32 0.0, %v4380
      %4382 = vmatmul.f32.gmra.mxu0 %v4271
      %v4383 = vpop.f32.mrf.mxu0
      %v4384 = vadd.f32 0.0, %v4383
      %4385 = vmatmul.f32.gmra.mxu0 %v4274
      %v4386 = vpop.f32.mrf.mxu0
      %v4387 = vadd.f32 0.0, %v4386
      %4388 = vmatmul.f32.gmra.mxu0 %v4277
      %v4389 = vpop.f32.mrf.mxu0
      %v4390 = vadd.f32 0.0, %v4389
      %4391 = vmatmul.f32.gmra.mxu0 %v4280
      %v4392 = vpop.f32.mrf.mxu0
      %v4393 = vadd.f32 0.0, %v4392
      %4394 = vmatmul.f32.gmra.mxu0 %v4283
      %v4395 = vpop.f32.mrf.mxu0
      %v4396 = vadd.f32 0.0, %v4395
      %4397 = vmatmul.f32.gmra.mxu0 %v4286
      %v4398 = vpop.f32.mrf.mxu0
      %v4399 = vadd.f32 0.0, %v4398
      %4400 = vmatmul.f32.gmra.mxu0 %v4289
      %v4401 = vpop.f32.mrf.mxu0
      %v4402 = vadd.f32 0.0, %v4401
      %4403 = vmatmul.f32.gmra.mxu0 %v4292
      %v4404 = vpop.f32.mrf.mxu0
      %v4405 = vadd.f32 0.0, %v4404
      %4406 = vmatmul.f32.gmra.mxu0 %v4295
      %v4407 = vpop.f32.mrf.mxu0
      %v4408 = vadd.f32 0.0, %v4407
      %4409 = vmatmul.f32.gmra.mxu0 %v4298
      %v4410 = vpop.f32.mrf.mxu0
      %v4411 = vadd.f32 0.0, %v4410
      %4412 = vmatmul.f32.gmra.mxu0 %v4301
      %v4413 = vpop.f32.mrf.mxu0
      %v4414 = vadd.f32 0.0, %v4413
      %4415 = vmatmul.f32.gmra.mxu0 %v4304
      %v4416 = vpop.f32.mrf.mxu0
      %v4417 = vadd.f32 0.0, %v4416
      %4418 = vmatmul.f32.gmra.mxu0 %v4307
      %v4419 = vpop.f32.mrf.mxu0
      %v4420 = vadd.f32 0.0, %v4419
      %4421 = vmatmul.f32.gmra.mxu0 %v4310
      %v4422 = vpop.f32.mrf.mxu0
      %v4423 = vadd.f32 0.0, %v4422
      %4424 = vmatmul.f32.gmra.mxu0 %v4313
      %v4425 = vpop.f32.mrf.mxu0
      %v4426 = vadd.f32 0.0, %v4425
      %4427 = vmatmul.f32.gmra.mxu0 %v4316
      %v4428 = vpop.f32.mrf.mxu0
      %v4429 = vadd.f32 0.0, %v4428
      %4430 = vmatmul.f32.gmra.mxu0 %v4319
      %v4431 = vpop.f32.mrf.mxu0
      %v4432 = vadd.f32 0.0, %v4431
      %4433 = vmatmul.f32.gmra.mxu0 %v4322
      %v4434 = vpop.f32.mrf.mxu0
      %v4435 = vadd.f32 0.0, %v4434
      %4436 = vmatmul.f32.gmra.mxu0 %v4325
      %v4437 = vpop.f32.mrf.mxu0
      %v4438 = vadd.f32 0.0, %v4437
      %4439 = vmatmul.f32.gmra.mxu0 %v4328
      %v4440 = vpop.f32.mrf.mxu0
      %v4441 = vadd.f32 0.0, %v4440
      %4442 = vmatmul.f32.gmra.mxu0 %v4331
      %v4443 = vpop.f32.mrf.mxu0
      %v4444 = vadd.f32 0.0, %v4443
      %4445 = vmatmul.f32.gmra.mxu0 %v4334
      %v4446 = vpop.f32.mrf.mxu0
      %v4447 = vadd.f32 0.0, %v4446
      %4448 = vdwg.mxu0
      %v4449 = vadd.f32 %v4173, %v4354
      %v4450 = vadd.f32 %v4174, %v4357
      %v4451 = vadd.f32 %v4175, %v4360
      %v4452 = vadd.f32 %v4176, %v4363
      %v4453 = vadd.f32 %v4177, %v4366
      %v4454 = vadd.f32 %v4178, %v4369
      %v4455 = vadd.f32 %v4179, %v4372
      %v4456 = vadd.f32 %v4180, %v4375
      %v4457 = vadd.f32 %v4181, %v4378
      %v4458 = vadd.f32 %v4182, %v4381
      %v4459 = vadd.f32 %v4183, %v4384
      %v4460 = vadd.f32 %v4184, %v4387
      %v4461 = vadd.f32 %v4185, %v4390
      %v4462 = vadd.f32 %v4186, %v4393
      %v4463 = vadd.f32 %v4187, %v4396
      %v4464 = vadd.f32 %v4188, %v4399
      %v4465 = vadd.f32 %v4189, %v4402
      %v4466 = vadd.f32 %v4190, %v4405
      %v4467 = vadd.f32 %v4191, %v4408
      %v4468 = vadd.f32 %v4192, %v4411
      %v4469 = vadd.f32 %v4193, %v4414
      %v4470 = vadd.f32 %v4194, %v4417
      %v4471 = vadd.f32 %v4195, %v4420
      %v4472 = vadd.f32 %v4196, %v4423
      %v4473 = vadd.f32 %v4197, %v4426
      %v4474 = vadd.f32 %v4198, %v4429
      %v4475 = vadd.f32 %v4199, %v4432
      %v4476 = vadd.f32 %v4200, %v4435
      %v4477 = vadd.f32 %v4201, %v4438
      %v4478 = vadd.f32 %v4202, %v4441
      %v4479 = vadd.f32 %v4203, %v4444
      %v4480 = vadd.f32 %v4204, %v4447
      %v4481 = vld [vmem:[%s3133 + $0x2] sm:$0xff]
      %v4482 = vld [vmem:[%s3133 + $0xa] sm:$0xff]
      %v4483 = vld [vmem:[%s3133 + $0x1a] sm:$0xff]
      %v4484 = vld [vmem:[%s3133 + $0x22] sm:$0xff]
      %v4485 = vld [vmem:[%s3133 + $0x32] sm:$0xff]
      %v4486 = vld [vmem:[%s3133 + $0x3a] sm:$0xff]
      %v4487 = vld [vmem:[%s3133 + $0x4a] sm:$0xff]
      %v4488 = vld [vmem:[%s3133 + $0x52] sm:$0xff]
      %v4489 = vld [vmem:[%s3133 + $0x62] sm:$0xff]
      %v4490 = vld [vmem:[%s3133 + $0x6a] sm:$0xff]
      %v4491 = vld [vmem:[%s3133 + $0x7a] sm:$0xff]
      %v4492 = vld [vmem:[%s3133 + $0x82] sm:$0xff]
      %v4493 = vld [vmem:[%s3133 + $0x92] sm:$0xff]
      %v4494 = vld [vmem:[%s3133 + $0x9a] sm:$0xff]
      %v4495 = vld [vmem:[%s3133 + $0xaa] sm:$0xff]
      %v4496 = vld [vmem:[%s3133 + $0xb2] sm:$0xff]
      %v4497 = vld [vmem:[%s3133 + $0xc2] sm:$0xff]
      %v4498 = vld [vmem:[%s3133 + $0xca] sm:$0xff]
      %v4499 = vld [vmem:[%s3133 + $0xda] sm:$0xff]
      %v4500 = vld [vmem:[%s3133 + $0xe2] sm:$0xff]
      %v4501 = vld [vmem:[%s3133 + $0xf2] sm:$0xff]
      %v4502 = vld [vmem:[%s3133 + $0xfa] sm:$0xff]
      %v4503 = vld [vmem:[%s3133 + $0x10a] sm:$0xff]
      %v4504 = vld [vmem:[%s3133 + $0x112] sm:$0xff]
      %v4505 = vld [vmem:[%s3133 + $0x122] sm:$0xff]
      %v4506 = vld [vmem:[%s3133 + $0x12a] sm:$0xff]
      %v4507 = vld [vmem:[%s3133 + $0x13a] sm:$0xff]
      %v4508 = vld [vmem:[%s3133 + $0x142] sm:$0xff]
      %v4509 = vld [vmem:[%s3133 + $0x152] sm:$0xff]
      %v4510 = vld [vmem:[%s3133 + $0x15a] sm:$0xff]
      %v4511 = vld [vmem:[%s3133 + $0x16a] sm:$0xff]
      %v4512 = vld [vmem:[%s3133 + $0x172] sm:$0xff]
      %s4513 = scalar_lea.vmem %s4, 80
      %v4514 = vld [vmem:[%s4513] sm:$0xff]
      %v4515 = vld [vmem:[%s4513 + $0x8] sm:$0xff]
      %v4517 = vsel %vm3077, %v4481, 0
      %v4520 = vsel %vm3077, %v4482, 0
      %v4523 = vsel %vm3077, %v4483, 0
      %v4526 = vsel %vm3077, %v4484, 0
      %v4529 = vsel %vm3077, %v4485, 0
      %v4532 = vsel %vm3077, %v4486, 0
      %v4535 = vsel %vm3077, %v4487, 0
      %v4538 = vsel %vm3077, %v4488, 0
      %v4541 = vsel %vm3077, %v4489, 0
      %v4544 = vsel %vm3077, %v4490, 0
      %v4547 = vsel %vm3077, %v4491, 0
      %v4550 = vsel %vm3077, %v4492, 0
      %v4553 = vsel %vm3077, %v4493, 0
      %v4556 = vsel %vm3077, %v4494, 0
      %v4559 = vsel %vm3077, %v4495, 0
      %v4562 = vsel %vm3077, %v4496, 0
      %v4565 = vsel %vm3077, %v4497, 0
      %v4568 = vsel %vm3077, %v4498, 0
      %v4571 = vsel %vm3077, %v4499, 0
      %v4574 = vsel %vm3077, %v4500, 0
      %v4577 = vsel %vm3077, %v4501, 0
      %v4580 = vsel %vm3077, %v4502, 0
      %v4583 = vsel %vm3077, %v4503, 0
      %v4586 = vsel %vm3077, %v4504, 0
      %v4589 = vsel %vm3077, %v4505, 0
      %v4592 = vsel %vm3077, %v4506, 0
      %v4595 = vsel %vm3077, %v4507, 0
      %v4598 = vsel %vm3077, %v4508, 0
      %v4601 = vsel %vm3077, %v4509, 0
      %v4604 = vsel %vm3077, %v4510, 0
      %v4607 = vsel %vm3077, %v4511, 0
      %v4610 = vsel %vm3077, %v4512, 0
      %4612 = vmatpush.msra.mxu0 0.0
      %4613 = vmatpush.msra.mxu0 0.0
      %4614 = vmatpush.msra.mxu0 0.0
      %4615 = vmatpush.msra.mxu0 0.0
      %4616 = vmatpush.msra.mxu0 0.0
      %4617 = vmatpush.msra.mxu0 0.0
      %4618 = vmatpush.msra.mxu0 0.0
      %4619 = vmatpush.msra.mxu0 0.0
      %4620 = vmatpush.msra.mxu0 0.0
      %4621 = vmatpush.msra.mxu0 0.0
      %4622 = vmatpush.msra.mxu0 0.0
      %4623 = vmatpush.msra.mxu0 0.0
      %4624 = vmatpush.msra.mxu0 0.0
      %4625 = vmatpush.msra.mxu0 0.0
      %4626 = vmatpush.msra.mxu0 %v4515
      %4627 = vmatpush.msra.mxu0 %v4514
      %4628 = vmatmul.f32.gmra.mxu0 %v4517
      %v4629 = vpop.f32.mrf.mxu0
      %v4630 = vadd.f32 0.0, %v4629
      %4631 = vmatmul.f32.gmra.mxu0 %v4520
      %v4632 = vpop.f32.mrf.mxu0
      %v4633 = vadd.f32 0.0, %v4632
      %4634 = vmatmul.f32.gmra.mxu0 %v4523
      %v4635 = vpop.f32.mrf.mxu0
      %v4636 = vadd.f32 0.0, %v4635
      %4637 = vmatmul.f32.gmra.mxu0 %v4526
      %v4638 = vpop.f32.mrf.mxu0
      %v4639 = vadd.f32 0.0, %v4638
      %4640 = vmatmul.f32.gmra.mxu0 %v4529
      %v4641 = vpop.f32.mrf.mxu0
      %v4642 = vadd.f32 0.0, %v4641
      %4643 = vmatmul.f32.gmra.mxu0 %v4532
      %v4644 = vpop.f32.mrf.mxu0
      %v4645 = vadd.f32 0.0, %v4644
      %4646 = vmatmul.f32.gmra.mxu0 %v4535
      %v4647 = vpop.f32.mrf.mxu0
      %v4648 = vadd.f32 0.0, %v4647
      %4649 = vmatmul.f32.gmra.mxu0 %v4538
      %v4650 = vpop.f32.mrf.mxu0
      %v4651 = vadd.f32 0.0, %v4650
      %4652 = vmatmul.f32.gmra.mxu0 %v4541
      %v4653 = vpop.f32.mrf.mxu0
      %v4654 = vadd.f32 0.0, %v4653
      %4655 = vmatmul.f32.gmra.mxu0 %v4544
      %v4656 = vpop.f32.mrf.mxu0
      %v4657 = vadd.f32 0.0, %v4656
      %4658 = vmatmul.f32.gmra.mxu0 %v4547
      %v4659 = vpop.f32.mrf.mxu0
      %v4660 = vadd.f32 0.0, %v4659
      %4661 = vmatmul.f32.gmra.mxu0 %v4550
      %v4662 = vpop.f32.mrf.mxu0
      %v4663 = vadd.f32 0.0, %v4662
      %4664 = vmatmul.f32.gmra.mxu0 %v4553
      %v4665 = vpop.f32.mrf.mxu0
      %v4666 = vadd.f32 0.0, %v4665
      %4667 = vmatmul.f32.gmra.mxu0 %v4556
      %v4668 = vpop.f32.mrf.mxu0
      %v4669 = vadd.f32 0.0, %v4668
      %4670 = vmatmul.f32.gmra.mxu0 %v4559
      %v4671 = vpop.f32.mrf.mxu0
      %v4672 = vadd.f32 0.0, %v4671
      %4673 = vmatmul.f32.gmra.mxu0 %v4562
      %v4674 = vpop.f32.mrf.mxu0
      %v4675 = vadd.f32 0.0, %v4674
      %4676 = vmatmul.f32.gmra.mxu0 %v4565
      %v4677 = vpop.f32.mrf.mxu0
      %v4678 = vadd.f32 0.0, %v4677
      %4679 = vmatmul.f32.gmra.mxu0 %v4568
      %v4680 = vpop.f32.mrf.mxu0
      %v4681 = vadd.f32 0.0, %v4680
      %4682 = vmatmul.f32.gmra.mxu0 %v4571
      %v4683 = vpop.f32.mrf.mxu0
      %v4684 = vadd.f32 0.0, %v4683
      %4685 = vmatmul.f32.gmra.mxu0 %v4574
      %v4686 = vpop.f32.mrf.mxu0
      %v4687 = vadd.f32 0.0, %v4686
      %4688 = vmatmul.f32.gmra.mxu0 %v4577
      %v4689 = vpop.f32.mrf.mxu0
      %v4690 = vadd.f32 0.0, %v4689
      %4691 = vmatmul.f32.gmra.mxu0 %v4580
      %v4692 = vpop.f32.mrf.mxu0
      %v4693 = vadd.f32 0.0, %v4692
      %4694 = vmatmul.f32.gmra.mxu0 %v4583
      %v4695 = vpop.f32.mrf.mxu0
      %v4696 = vadd.f32 0.0, %v4695
      %4697 = vmatmul.f32.gmra.mxu0 %v4586
      %v4698 = vpop.f32.mrf.mxu0
      %v4699 = vadd.f32 0.0, %v4698
      %4700 = vmatmul.f32.gmra.mxu0 %v4589
      %v4701 = vpop.f32.mrf.mxu0
      %v4702 = vadd.f32 0.0, %v4701
      %4703 = vmatmul.f32.gmra.mxu0 %v4592
      %v4704 = vpop.f32.mrf.mxu0
      %v4705 = vadd.f32 0.0, %v4704
      %4706 = vmatmul.f32.gmra.mxu0 %v4595
      %v4707 = vpop.f32.mrf.mxu0
      %v4708 = vadd.f32 0.0, %v4707
      %4709 = vmatmul.f32.gmra.mxu0 %v4598
      %v4710 = vpop.f32.mrf.mxu0
      %v4711 = vadd.f32 0.0, %v4710
      %4712 = vmatmul.f32.gmra.mxu0 %v4601
      %v4713 = vpop.f32.mrf.mxu0
      %v4714 = vadd.f32 0.0, %v4713
      %4715 = vmatmul.f32.gmra.mxu0 %v4604
      %v4716 = vpop.f32.mrf.mxu0
      %v4717 = vadd.f32 0.0, %v4716
      %4718 = vmatmul.f32.gmra.mxu0 %v4607
      %v4719 = vpop.f32.mrf.mxu0
      %v4720 = vadd.f32 0.0, %v4719
      %4721 = vmatmul.f32.gmra.mxu0 %v4610
      %v4722 = vpop.f32.mrf.mxu0
      %v4723 = vadd.f32 0.0, %v4722
      %4724 = vdwg.mxu0
      %v4725 = vadd.f32 %v4449, %v4630
      %v4726 = vadd.f32 %v4450, %v4633
      %v4727 = vadd.f32 %v4451, %v4636
      %v4728 = vadd.f32 %v4452, %v4639
      %v4729 = vadd.f32 %v4453, %v4642
      %v4730 = vadd.f32 %v4454, %v4645
      %v4731 = vadd.f32 %v4455, %v4648
      %v4732 = vadd.f32 %v4456, %v4651
      %v4733 = vadd.f32 %v4457, %v4654
      %v4734 = vadd.f32 %v4458, %v4657
      %v4735 = vadd.f32 %v4459, %v4660
      %v4736 = vadd.f32 %v4460, %v4663
      %v4737 = vadd.f32 %v4461, %v4666
      %v4738 = vadd.f32 %v4462, %v4669
      %v4739 = vadd.f32 %v4463, %v4672
      %v4740 = vadd.f32 %v4464, %v4675
      %v4741 = vadd.f32 %v4465, %v4678
      %v4742 = vadd.f32 %v4466, %v4681
      %v4743 = vadd.f32 %v4467, %v4684
      %v4744 = vadd.f32 %v4468, %v4687
      %v4745 = vadd.f32 %v4469, %v4690
      %v4746 = vadd.f32 %v4470, %v4693
      %v4747 = vadd.f32 %v4471, %v4696
      %v4748 = vadd.f32 %v4472, %v4699
      %v4749 = vadd.f32 %v4473, %v4702
      %v4750 = vadd.f32 %v4474, %v4705
      %v4751 = vadd.f32 %v4475, %v4708
      %v4752 = vadd.f32 %v4476, %v4711
      %v4753 = vadd.f32 %v4477, %v4714
      %v4754 = vadd.f32 %v4478, %v4717
      %v4755 = vadd.f32 %v4479, %v4720
      %v4756 = vadd.f32 %v4480, %v4723
      %s4757 = scalar_lea.vmem [#allocation3], 48
      %v4758 = vld [vmem:[%s4757] sm:$0xff]
      %v4759 = vld [vmem:[%s4757 + $0x8] sm:$0xff]
      %v4760 = vld [vmem:[%s4757 + $0x18] sm:$0xff]
      %v4761 = vld [vmem:[%s4757 + $0x20] sm:$0xff]
      %v4762 = vld [vmem:[%s4757 + $0x30] sm:$0xff]
      %v4763 = vld [vmem:[%s4757 + $0x38] sm:$0xff]
      %v4764 = vld [vmem:[%s4757 + $0x48] sm:$0xff]
      %v4765 = vld [vmem:[%s4757 + $0x50] sm:$0xff]
      %v4766 = vld [vmem:[%s4757 + $0x60] sm:$0xff]
      %v4767 = vld [vmem:[%s4757 + $0x68] sm:$0xff]
      %v4768 = vld [vmem:[%s4757 + $0x78] sm:$0xff]
      %v4769 = vld [vmem:[%s4757 + $0x80] sm:$0xff]
      %v4770 = vld [vmem:[%s4757 + $0x90] sm:$0xff]
      %v4771 = vld [vmem:[%s4757 + $0x98] sm:$0xff]
      %v4772 = vld [vmem:[%s4757 + $0xa8] sm:$0xff]
      %v4773 = vld [vmem:[%s4757 + $0xb0] sm:$0xff]
      %v4774 = vld [vmem:[%s4757 + $0xc0] sm:$0xff]
      %v4775 = vld [vmem:[%s4757 + $0xc8] sm:$0xff]
      %v4776 = vld [vmem:[%s4757 + $0xd8] sm:$0xff]
      %v4777 = vld [vmem:[%s4757 + $0xe0] sm:$0xff]
      %v4778 = vld [vmem:[%s4757 + $0xf0] sm:$0xff]
      %v4779 = vld [vmem:[%s4757 + $0xf8] sm:$0xff]
      %v4780 = vld [vmem:[%s4757 + $0x108] sm:$0xff]
      %v4781 = vld [vmem:[%s4757 + $0x110] sm:$0xff]
      %v4782 = vld [vmem:[%s4757 + $0x120] sm:$0xff]
      %v4783 = vld [vmem:[%s4757 + $0x128] sm:$0xff]
      %v4784 = vld [vmem:[%s4757 + $0x138] sm:$0xff]
      %v4785 = vld [vmem:[%s4757 + $0x140] sm:$0xff]
      %v4786 = vld [vmem:[%s4757 + $0x150] sm:$0xff]
      %v4787 = vld [vmem:[%s4757 + $0x158] sm:$0xff]
      %v4788 = vld [vmem:[%s4757 + $0x168] sm:$0xff]
      %v4789 = vld [vmem:[%s4757 + $0x170] sm:$0xff]
      %s4790 = scalar_lea.vmem %s4, 96
      %v4791 = vld [vmem:[%s4790] sm:$0xff]
      %v4792 = vld [vmem:[%s4790 + $0x8] sm:$0xff]
      %v4794 = vsel %vm3077, %v4758, 0
      %v4797 = vsel %vm3077, %v4759, 0
      %v4800 = vsel %vm3077, %v4760, 0
      %v4803 = vsel %vm3077, %v4761, 0
      %v4806 = vsel %vm3077, %v4762, 0
      %v4809 = vsel %vm3077, %v4763, 0
      %v4812 = vsel %vm3077, %v4764, 0
      %v4815 = vsel %vm3077, %v4765, 0
      %v4818 = vsel %vm3077, %v4766, 0
      %v4821 = vsel %vm3077, %v4767, 0
      %v4824 = vsel %vm3077, %v4768, 0
      %v4827 = vsel %vm3077, %v4769, 0
      %v4830 = vsel %vm3077, %v4770, 0
      %v4833 = vsel %vm3077, %v4771, 0
      %v4836 = vsel %vm3077, %v4772, 0
      %v4839 = vsel %vm3077, %v4773, 0
      %v4842 = vsel %vm3077, %v4774, 0
      %v4845 = vsel %vm3077, %v4775, 0
      %v4848 = vsel %vm3077, %v4776, 0
      %v4851 = vsel %vm3077, %v4777, 0
      %v4854 = vsel %vm3077, %v4778, 0
      %v4857 = vsel %vm3077, %v4779, 0
      %v4860 = vsel %vm3077, %v4780, 0
      %v4863 = vsel %vm3077, %v4781, 0
      %v4866 = vsel %vm3077, %v4782, 0
      %v4869 = vsel %vm3077, %v4783, 0
      %v4872 = vsel %vm3077, %v4784, 0
      %v4875 = vsel %vm3077, %v4785, 0
      %v4878 = vsel %vm3077, %v4786, 0
      %v4881 = vsel %vm3077, %v4787, 0
      %v4884 = vsel %vm3077, %v4788, 0
      %v4887 = vsel %vm3077, %v4789, 0
      %4889 = vmatpush.msra.mxu0 0.0
      %4890 = vmatpush.msra.mxu0 0.0
      %4891 = vmatpush.msra.mxu0 0.0
      %4892 = vmatpush.msra.mxu0 0.0
      %4893 = vmatpush.msra.mxu0 0.0
      %4894 = vmatpush.msra.mxu0 0.0
      %4895 = vmatpush.msra.mxu0 0.0
      %4896 = vmatpush.msra.mxu0 0.0
      %4897 = vmatpush.msra.mxu0 0.0
      %4898 = vmatpush.msra.mxu0 0.0
      %4899 = vmatpush.msra.mxu0 0.0
      %4900 = vmatpush.msra.mxu0 0.0
      %4901 = vmatpush.msra.mxu0 0.0
      %4902 = vmatpush.msra.mxu0 0.0
      %4903 = vmatpush.msra.mxu0 %v4792
      %4904 = vmatpush.msra.mxu0 %v4791
      %4905 = vmatmul.f32.gmra.mxu0 %v4794
      %v4906 = vpop.f32.mrf.mxu0
      %v4907 = vadd.f32 0.0, %v4906
      %4908 = vmatmul.f32.gmra.mxu0 %v4797
      %v4909 = vpop.f32.mrf.mxu0
      %v4910 = vadd.f32 0.0, %v4909
      %4911 = vmatmul.f32.gmra.mxu0 %v4800
      %v4912 = vpop.f32.mrf.mxu0
      %v4913 = vadd.f32 0.0, %v4912
      %4914 = vmatmul.f32.gmra.mxu0 %v4803
      %v4915 = vpop.f32.mrf.mxu0
      %v4916 = vadd.f32 0.0, %v4915
      %4917 = vmatmul.f32.gmra.mxu0 %v4806
      %v4918 = vpop.f32.mrf.mxu0
      %v4919 = vadd.f32 0.0, %v4918
      %4920 = vmatmul.f32.gmra.mxu0 %v4809
      %v4921 = vpop.f32.mrf.mxu0
      %v4922 = vadd.f32 0.0, %v4921
      %4923 = vmatmul.f32.gmra.mxu0 %v4812
      %v4924 = vpop.f32.mrf.mxu0
      %v4925 = vadd.f32 0.0, %v4924
      %4926 = vmatmul.f32.gmra.mxu0 %v4815
      %v4927 = vpop.f32.mrf.mxu0
      %v4928 = vadd.f32 0.0, %v4927
      %4929 = vmatmul.f32.gmra.mxu0 %v4818
      %v4930 = vpop.f32.mrf.mxu0
      %v4931 = vadd.f32 0.0, %v4930
      %4932 = vmatmul.f32.gmra.mxu0 %v4821
      %v4933 = vpop.f32.mrf.mxu0
      %v4934 = vadd.f32 0.0, %v4933
      %4935 = vmatmul.f32.gmra.mxu0 %v4824
      %v4936 = vpop.f32.mrf.mxu0
      %v4937 = vadd.f32 0.0, %v4936
      %4938 = vmatmul.f32.gmra.mxu0 %v4827
      %v4939 = vpop.f32.mrf.mxu0
      %v4940 = vadd.f32 0.0, %v4939
      %4941 = vmatmul.f32.gmra.mxu0 %v4830
      %v4942 = vpop.f32.mrf.mxu0
      %v4943 = vadd.f32 0.0, %v4942
      %4944 = vmatmul.f32.gmra.mxu0 %v4833
      %v4945 = vpop.f32.mrf.mxu0
      %v4946 = vadd.f32 0.0, %v4945
      %4947 = vmatmul.f32.gmra.mxu0 %v4836
      %v4948 = vpop.f32.mrf.mxu0
      %v4949 = vadd.f32 0.0, %v4948
      %4950 = vmatmul.f32.gmra.mxu0 %v4839
      %v4951 = vpop.f32.mrf.mxu0
      %v4952 = vadd.f32 0.0, %v4951
      %4953 = vmatmul.f32.gmra.mxu0 %v4842
      %v4954 = vpop.f32.mrf.mxu0
      %v4955 = vadd.f32 0.0, %v4954
      %4956 = vmatmul.f32.gmra.mxu0 %v4845
      %v4957 = vpop.f32.mrf.mxu0
      %v4958 = vadd.f32 0.0, %v4957
      %4959 = vmatmul.f32.gmra.mxu0 %v4848
      %v4960 = vpop.f32.mrf.mxu0
      %v4961 = vadd.f32 0.0, %v4960
      %4962 = vmatmul.f32.gmra.mxu0 %v4851
      %v4963 = vpop.f32.mrf.mxu0
      %v4964 = vadd.f32 0.0, %v4963
      %4965 = vmatmul.f32.gmra.mxu0 %v4854
      %v4966 = vpop.f32.mrf.mxu0
      %v4967 = vadd.f32 0.0, %v4966
      %4968 = vmatmul.f32.gmra.mxu0 %v4857
      %v4969 = vpop.f32.mrf.mxu0
      %v4970 = vadd.f32 0.0, %v4969
      %4971 = vmatmul.f32.gmra.mxu0 %v4860
      %v4972 = vpop.f32.mrf.mxu0
      %v4973 = vadd.f32 0.0, %v4972
      %4974 = vmatmul.f32.gmra.mxu0 %v4863
      %v4975 = vpop.f32.mrf.mxu0
      %v4976 = vadd.f32 0.0, %v4975
      %4977 = vmatmul.f32.gmra.mxu0 %v4866
      %v4978 = vpop.f32.mrf.mxu0
      %v4979 = vadd.f32 0.0, %v4978
      %4980 = vmatmul.f32.gmra.mxu0 %v4869
      %v4981 = vpop.f32.mrf.mxu0
      %v4982 = vadd.f32 0.0, %v4981
      %4983 = vmatmul.f32.gmra.mxu0 %v4872
      %v4984 = vpop.f32.mrf.mxu0
      %v4985 = vadd.f32 0.0, %v4984
      %4986 = vmatmul.f32.gmra.mxu0 %v4875
      %v4987 = vpop.f32.mrf.mxu0
      %v4988 = vadd.f32 0.0, %v4987
      %4989 = vmatmul.f32.gmra.mxu0 %v4878
      %v4990 = vpop.f32.mrf.mxu0
      %v4991 = vadd.f32 0.0, %v4990
      %4992 = vmatmul.f32.gmra.mxu0 %v4881
      %v4993 = vpop.f32.mrf.mxu0
      %v4994 = vadd.f32 0.0, %v4993
      %4995 = vmatmul.f32.gmra.mxu0 %v4884
      %v4996 = vpop.f32.mrf.mxu0
      %v4997 = vadd.f32 0.0, %v4996
      %4998 = vmatmul.f32.gmra.mxu0 %v4887
      %v4999 = vpop.f32.mrf.mxu0
      %v5000 = vadd.f32 0.0, %v4999
      %5001 = vdwg.mxu0
      %v5002 = vadd.f32 %v4725, %v4907
      %v5003 = vadd.f32 %v4726, %v4910
      %v5004 = vadd.f32 %v4727, %v4913
      %v5005 = vadd.f32 %v4728, %v4916
      %v5006 = vadd.f32 %v4729, %v4919
      %v5007 = vadd.f32 %v4730, %v4922
      %v5008 = vadd.f32 %v4731, %v4925
      %v5009 = vadd.f32 %v4732, %v4928
      %v5010 = vadd.f32 %v4733, %v4931
      %v5011 = vadd.f32 %v4734, %v4934
      %v5012 = vadd.f32 %v4735, %v4937
      %v5013 = vadd.f32 %v4736, %v4940
      %v5014 = vadd.f32 %v4737, %v4943
      %v5015 = vadd.f32 %v4738, %v4946
      %v5016 = vadd.f32 %v4739, %v4949
      %v5017 = vadd.f32 %v4740, %v4952
      %v5018 = vadd.f32 %v4741, %v4955
      %v5019 = vadd.f32 %v4742, %v4958
      %v5020 = vadd.f32 %v4743, %v4961
      %v5021 = vadd.f32 %v4744, %v4964
      %v5022 = vadd.f32 %v4745, %v4967
      %v5023 = vadd.f32 %v4746, %v4970
      %v5024 = vadd.f32 %v4747, %v4973
      %v5025 = vadd.f32 %v4748, %v4976
      %v5026 = vadd.f32 %v4749, %v4979
      %v5027 = vadd.f32 %v4750, %v4982
      %v5028 = vadd.f32 %v4751, %v4985
      %v5029 = vadd.f32 %v4752, %v4988
      %v5030 = vadd.f32 %v4753, %v4991
      %v5031 = vadd.f32 %v4754, %v4994
      %v5032 = vadd.f32 %v4755, %v4997
      %v5033 = vadd.f32 %v4756, %v5000
      %v5034 = vld [vmem:[%s4757 + $0x1] sm:$0xff]
      %v5035 = vld [vmem:[%s4757 + $0x9] sm:$0xff]
      %v5036 = vld [vmem:[%s4757 + $0x19] sm:$0xff]
      %v5037 = vld [vmem:[%s4757 + $0x21] sm:$0xff]
      %v5038 = vld [vmem:[%s4757 + $0x31] sm:$0xff]
      %v5039 = vld [vmem:[%s4757 + $0x39] sm:$0xff]
      %v5040 = vld [vmem:[%s4757 + $0x49] sm:$0xff]
      %v5041 = vld [vmem:[%s4757 + $0x51] sm:$0xff]
      %v5042 = vld [vmem:[%s4757 + $0x61] sm:$0xff]
      %v5043 = vld [vmem:[%s4757 + $0x69] sm:$0xff]
      %v5044 = vld [vmem:[%s4757 + $0x79] sm:$0xff]
      %v5045 = vld [vmem:[%s4757 + $0x81] sm:$0xff]
      %v5046 = vld [vmem:[%s4757 + $0x91] sm:$0xff]
      %v5047 = vld [vmem:[%s4757 + $0x99] sm:$0xff]
      %v5048 = vld [vmem:[%s4757 + $0xa9] sm:$0xff]
      %v5049 = vld [vmem:[%s4757 + $0xb1] sm:$0xff]
      %v5050 = vld [vmem:[%s4757 + $0xc1] sm:$0xff]
      %v5051 = vld [vmem:[%s4757 + $0xc9] sm:$0xff]
      %v5052 = vld [vmem:[%s4757 + $0xd9] sm:$0xff]
      %v5053 = vld [vmem:[%s4757 + $0xe1] sm:$0xff]
      %v5054 = vld [vmem:[%s4757 + $0xf1] sm:$0xff]
      %v5055 = vld [vmem:[%s4757 + $0xf9] sm:$0xff]
      %v5056 = vld [vmem:[%s4757 + $0x109] sm:$0xff]
      %v5057 = vld [vmem:[%s4757 + $0x111] sm:$0xff]
      %v5058 = vld [vmem:[%s4757 + $0x121] sm:$0xff]
      %v5059 = vld [vmem:[%s4757 + $0x129] sm:$0xff]
      %v5060 = vld [vmem:[%s4757 + $0x139] sm:$0xff]
      %v5061 = vld [vmem:[%s4757 + $0x141] sm:$0xff]
      %v5062 = vld [vmem:[%s4757 + $0x151] sm:$0xff]
      %v5063 = vld [vmem:[%s4757 + $0x159] sm:$0xff]
      %v5064 = vld [vmem:[%s4757 + $0x169] sm:$0xff]
      %v5065 = vld [vmem:[%s4757 + $0x171] sm:$0xff]
      %s5066 = scalar_lea.vmem %s4, 112
      %v5067 = vld [vmem:[%s5066] sm:$0xff]
      %v5068 = vld [vmem:[%s5066 + $0x8] sm:$0xff]
      %v5070 = vsel %vm3077, %v5034, 0
      %v5073 = vsel %vm3077, %v5035, 0
      %v5076 = vsel %vm3077, %v5036, 0
      %v5079 = vsel %vm3077, %v5037, 0
      %v5082 = vsel %vm3077, %v5038, 0
      %v5085 = vsel %vm3077, %v5039, 0
      %v5088 = vsel %vm3077, %v5040, 0
      %v5091 = vsel %vm3077, %v5041, 0
      %v5094 = vsel %vm3077, %v5042, 0
      %v5097 = vsel %vm3077, %v5043, 0
      %v5100 = vsel %vm3077, %v5044, 0
      %v5103 = vsel %vm3077, %v5045, 0
      %v5106 = vsel %vm3077, %v5046, 0
      %v5109 = vsel %vm3077, %v5047, 0
      %v5112 = vsel %vm3077, %v5048, 0
      %v5115 = vsel %vm3077, %v5049, 0
      %v5118 = vsel %vm3077, %v5050, 0
      %v5121 = vsel %vm3077, %v5051, 0
      %v5124 = vsel %vm3077, %v5052, 0
      %v5127 = vsel %vm3077, %v5053, 0
      %v5130 = vsel %vm3077, %v5054, 0
      %v5133 = vsel %vm3077, %v5055, 0
      %v5136 = vsel %vm3077, %v5056, 0
      %v5139 = vsel %vm3077, %v5057, 0
      %v5142 = vsel %vm3077, %v5058, 0
      %v5145 = vsel %vm3077, %v5059, 0
      %v5148 = vsel %vm3077, %v5060, 0
      %v5151 = vsel %vm3077, %v5061, 0
      %v5154 = vsel %vm3077, %v5062, 0
      %v5157 = vsel %vm3077, %v5063, 0
      %v5160 = vsel %vm3077, %v5064, 0
      %v5163 = vsel %vm3077, %v5065, 0
      %5165 = vmatpush.msra.mxu0 0.0
      %5166 = vmatpush.msra.mxu0 0.0
      %5167 = vmatpush.msra.mxu0 0.0
      %5168 = vmatpush.msra.mxu0 0.0
      %5169 = vmatpush.msra.mxu0 0.0
      %5170 = vmatpush.msra.mxu0 0.0
      %5171 = vmatpush.msra.mxu0 0.0
      %5172 = vmatpush.msra.mxu0 0.0
      %5173 = vmatpush.msra.mxu0 0.0
      %5174 = vmatpush.msra.mxu0 0.0
      %5175 = vmatpush.msra.mxu0 0.0
      %5176 = vmatpush.msra.mxu0 0.0
      %5177 = vmatpush.msra.mxu0 0.0
      %5178 = vmatpush.msra.mxu0 0.0
      %5179 = vmatpush.msra.mxu0 %v5068
      %5180 = vmatpush.msra.mxu0 %v5067
      %5181 = vmatmul.f32.gmra.mxu0 %v5070
      %v5182 = vpop.f32.mrf.mxu0
      %v5183 = vadd.f32 0.0, %v5182
      %5184 = vmatmul.f32.gmra.mxu0 %v5073
      %v5185 = vpop.f32.mrf.mxu0
      %v5186 = vadd.f32 0.0, %v5185
      %5187 = vmatmul.f32.gmra.mxu0 %v5076
      %v5188 = vpop.f32.mrf.mxu0
      %v5189 = vadd.f32 0.0, %v5188
      %5190 = vmatmul.f32.gmra.mxu0 %v5079
      %v5191 = vpop.f32.mrf.mxu0
      %v5192 = vadd.f32 0.0, %v5191
      %5193 = vmatmul.f32.gmra.mxu0 %v5082
      %v5194 = vpop.f32.mrf.mxu0
      %v5195 = vadd.f32 0.0, %v5194
      %5196 = vmatmul.f32.gmra.mxu0 %v5085
      %v5197 = vpop.f32.mrf.mxu0
      %v5198 = vadd.f32 0.0, %v5197
      %5199 = vmatmul.f32.gmra.mxu0 %v5088
      %v5200 = vpop.f32.mrf.mxu0
      %v5201 = vadd.f32 0.0, %v5200
      %5202 = vmatmul.f32.gmra.mxu0 %v5091
      %v5203 = vpop.f32.mrf.mxu0
      %v5204 = vadd.f32 0.0, %v5203
      %5205 = vmatmul.f32.gmra.mxu0 %v5094
      %v5206 = vpop.f32.mrf.mxu0
      %v5207 = vadd.f32 0.0, %v5206
      %5208 = vmatmul.f32.gmra.mxu0 %v5097
      %v5209 = vpop.f32.mrf.mxu0
      %v5210 = vadd.f32 0.0, %v5209
      %5211 = vmatmul.f32.gmra.mxu0 %v5100
      %v5212 = vpop.f32.mrf.mxu0
      %v5213 = vadd.f32 0.0, %v5212
      %5214 = vmatmul.f32.gmra.mxu0 %v5103
      %v5215 = vpop.f32.mrf.mxu0
      %v5216 = vadd.f32 0.0, %v5215
      %5217 = vmatmul.f32.gmra.mxu0 %v5106
      %v5218 = vpop.f32.mrf.mxu0
      %v5219 = vadd.f32 0.0, %v5218
      %5220 = vmatmul.f32.gmra.mxu0 %v5109
      %v5221 = vpop.f32.mrf.mxu0
      %v5222 = vadd.f32 0.0, %v5221
      %5223 = vmatmul.f32.gmra.mxu0 %v5112
      %v5224 = vpop.f32.mrf.mxu0
      %v5225 = vadd.f32 0.0, %v5224
      %5226 = vmatmul.f32.gmra.mxu0 %v5115
      %v5227 = vpop.f32.mrf.mxu0
      %v5228 = vadd.f32 0.0, %v5227
      %5229 = vmatmul.f32.gmra.mxu0 %v5118
      %v5230 = vpop.f32.mrf.mxu0
      %v5231 = vadd.f32 0.0, %v5230
      %5232 = vmatmul.f32.gmra.mxu0 %v5121
      %v5233 = vpop.f32.mrf.mxu0
      %v5234 = vadd.f32 0.0, %v5233
      %5235 = vmatmul.f32.gmra.mxu0 %v5124
      %v5236 = vpop.f32.mrf.mxu0
      %v5237 = vadd.f32 0.0, %v5236
      %5238 = vmatmul.f32.gmra.mxu0 %v5127
      %v5239 = vpop.f32.mrf.mxu0
      %v5240 = vadd.f32 0.0, %v5239
      %5241 = vmatmul.f32.gmra.mxu0 %v5130
      %v5242 = vpop.f32.mrf.mxu0
      %v5243 = vadd.f32 0.0, %v5242
      %5244 = vmatmul.f32.gmra.mxu0 %v5133
      %v5245 = vpop.f32.mrf.mxu0
      %v5246 = vadd.f32 0.0, %v5245
      %5247 = vmatmul.f32.gmra.mxu0 %v5136
      %v5248 = vpop.f32.mrf.mxu0
      %v5249 = vadd.f32 0.0, %v5248
      %5250 = vmatmul.f32.gmra.mxu0 %v5139
      %v5251 = vpop.f32.mrf.mxu0
      %v5252 = vadd.f32 0.0, %v5251
      %5253 = vmatmul.f32.gmra.mxu0 %v5142
      %v5254 = vpop.f32.mrf.mxu0
      %v5255 = vadd.f32 0.0, %v5254
      %5256 = vmatmul.f32.gmra.mxu0 %v5145
      %v5257 = vpop.f32.mrf.mxu0
      %v5258 = vadd.f32 0.0, %v5257
      %5259 = vmatmul.f32.gmra.mxu0 %v5148
      %v5260 = vpop.f32.mrf.mxu0
      %v5261 = vadd.f32 0.0, %v5260
      %5262 = vmatmul.f32.gmra.mxu0 %v5151
      %v5263 = vpop.f32.mrf.mxu0
      %v5264 = vadd.f32 0.0, %v5263
      %5265 = vmatmul.f32.gmra.mxu0 %v5154
      %v5266 = vpop.f32.mrf.mxu0
      %v5267 = vadd.f32 0.0, %v5266
      %5268 = vmatmul.f32.gmra.mxu0 %v5157
      %v5269 = vpop.f32.mrf.mxu0
      %v5270 = vadd.f32 0.0, %v5269
      %5271 = vmatmul.f32.gmra.mxu0 %v5160
      %v5272 = vpop.f32.mrf.mxu0
      %v5273 = vadd.f32 0.0, %v5272
      %5274 = vmatmul.f32.gmra.mxu0 %v5163
      %v5275 = vpop.f32.mrf.mxu0
      %v5276 = vadd.f32 0.0, %v5275
      %5277 = vdwg.mxu0
      %v5278 = vadd.f32 %v5002, %v5183
      %v5279 = vadd.f32 %v5003, %v5186
      %v5280 = vadd.f32 %v5004, %v5189
      %v5281 = vadd.f32 %v5005, %v5192
      %v5282 = vadd.f32 %v5006, %v5195
      %v5283 = vadd.f32 %v5007, %v5198
      %v5284 = vadd.f32 %v5008, %v5201
      %v5285 = vadd.f32 %v5009, %v5204
      %v5286 = vadd.f32 %v5010, %v5207
      %v5287 = vadd.f32 %v5011, %v5210
      %v5288 = vadd.f32 %v5012, %v5213
      %v5289 = vadd.f32 %v5013, %v5216
      %v5290 = vadd.f32 %v5014, %v5219
      %v5291 = vadd.f32 %v5015, %v5222
      %v5292 = vadd.f32 %v5016, %v5225
      %v5293 = vadd.f32 %v5017, %v5228
      %v5294 = vadd.f32 %v5018, %v5231
      %v5295 = vadd.f32 %v5019, %v5234
      %v5296 = vadd.f32 %v5020, %v5237
      %v5297 = vadd.f32 %v5021, %v5240
      %v5298 = vadd.f32 %v5022, %v5243
      %v5299 = vadd.f32 %v5023, %v5246
      %v5300 = vadd.f32 %v5024, %v5249
      %v5301 = vadd.f32 %v5025, %v5252
      %v5302 = vadd.f32 %v5026, %v5255
      %v5303 = vadd.f32 %v5027, %v5258
      %v5304 = vadd.f32 %v5028, %v5261
      %v5305 = vadd.f32 %v5029, %v5264
      %v5306 = vadd.f32 %v5030, %v5267
      %v5307 = vadd.f32 %v5031, %v5270
      %v5308 = vadd.f32 %v5032, %v5273
      %v5309 = vadd.f32 %v5033, %v5276
      %v5310 = vld [vmem:[%s4757 + $0x2] sm:$0xff]
      %v5311 = vld [vmem:[%s4757 + $0xa] sm:$0xff]
      %v5312 = vld [vmem:[%s4757 + $0x1a] sm:$0xff]
      %v5313 = vld [vmem:[%s4757 + $0x22] sm:$0xff]
      %v5314 = vld [vmem:[%s4757 + $0x32] sm:$0xff]
      %v5315 = vld [vmem:[%s4757 + $0x3a] sm:$0xff]
      %v5316 = vld [vmem:[%s4757 + $0x4a] sm:$0xff]
      %v5317 = vld [vmem:[%s4757 + $0x52] sm:$0xff]
      %v5318 = vld [vmem:[%s4757 + $0x62] sm:$0xff]
      %v5319 = vld [vmem:[%s4757 + $0x6a] sm:$0xff]
      %v5320 = vld [vmem:[%s4757 + $0x7a] sm:$0xff]
      %v5321 = vld [vmem:[%s4757 + $0x82] sm:$0xff]
      %v5322 = vld [vmem:[%s4757 + $0x92] sm:$0xff]
      %v5323 = vld [vmem:[%s4757 + $0x9a] sm:$0xff]
      %v5324 = vld [vmem:[%s4757 + $0xaa] sm:$0xff]
      %v5325 = vld [vmem:[%s4757 + $0xb2] sm:$0xff]
      %v5326 = vld [vmem:[%s4757 + $0xc2] sm:$0xff]
      %v5327 = vld [vmem:[%s4757 + $0xca] sm:$0xff]
      %v5328 = vld [vmem:[%s4757 + $0xda] sm:$0xff]
      %v5329 = vld [vmem:[%s4757 + $0xe2] sm:$0xff]
      %v5330 = vld [vmem:[%s4757 + $0xf2] sm:$0xff]
      %v5331 = vld [vmem:[%s4757 + $0xfa] sm:$0xff]
      %v5332 = vld [vmem:[%s4757 + $0x10a] sm:$0xff]
      %v5333 = vld [vmem:[%s4757 + $0x112] sm:$0xff]
      %v5334 = vld [vmem:[%s4757 + $0x122] sm:$0xff]
      %v5335 = vld [vmem:[%s4757 + $0x12a] sm:$0xff]
      %v5336 = vld [vmem:[%s4757 + $0x13a] sm:$0xff]
      %v5337 = vld [vmem:[%s4757 + $0x142] sm:$0xff]
      %v5338 = vld [vmem:[%s4757 + $0x152] sm:$0xff]
      %v5339 = vld [vmem:[%s4757 + $0x15a] sm:$0xff]
      %v5340 = vld [vmem:[%s4757 + $0x16a] sm:$0xff]
      %v5341 = vld [vmem:[%s4757 + $0x172] sm:$0xff]
      %s5342 = scalar_lea.vmem %s4, 128
      %v5343 = vld [vmem:[%s5342] sm:$0xff]
      %v5344 = vld [vmem:[%s5342 + $0x8] sm:$0xff]
      %v5346 = vsel %vm3077, %v5310, 0
      %v5349 = vsel %vm3077, %v5311, 0
      %v5352 = vsel %vm3077, %v5312, 0
      %v5355 = vsel %vm3077, %v5313, 0
      %v5358 = vsel %vm3077, %v5314, 0
      %v5361 = vsel %vm3077, %v5315, 0
      %v5364 = vsel %vm3077, %v5316, 0
      %v5367 = vsel %vm3077, %v5317, 0
      %v5370 = vsel %vm3077, %v5318, 0
      %v5373 = vsel %vm3077, %v5319, 0
      %v5376 = vsel %vm3077, %v5320, 0
      %v5379 = vsel %vm3077, %v5321, 0
      %v5382 = vsel %vm3077, %v5322, 0
      %v5385 = vsel %vm3077, %v5323, 0
      %v5388 = vsel %vm3077, %v5324, 0
      %v5391 = vsel %vm3077, %v5325, 0
      %v5394 = vsel %vm3077, %v5326, 0
      %v5397 = vsel %vm3077, %v5327, 0
      %v5400 = vsel %vm3077, %v5328, 0
      %v5403 = vsel %vm3077, %v5329, 0
      %v5406 = vsel %vm3077, %v5330, 0
      %v5409 = vsel %vm3077, %v5331, 0
      %v5412 = vsel %vm3077, %v5332, 0
      %v5415 = vsel %vm3077, %v5333, 0
      %v5418 = vsel %vm3077, %v5334, 0
      %v5421 = vsel %vm3077, %v5335, 0
      %v5424 = vsel %vm3077, %v5336, 0
      %v5427 = vsel %vm3077, %v5337, 0
      %v5430 = vsel %vm3077, %v5338, 0
      %v5433 = vsel %vm3077, %v5339, 0
      %v5436 = vsel %vm3077, %v5340, 0
      %v5439 = vsel %vm3077, %v5341, 0
      %5441 = vmatpush.msra.mxu0 0.0
      %5442 = vmatpush.msra.mxu0 0.0
      %5443 = vmatpush.msra.mxu0 0.0
      %5444 = vmatpush.msra.mxu0 0.0
      %5445 = vmatpush.msra.mxu0 0.0
      %5446 = vmatpush.msra.mxu0 0.0
      %5447 = vmatpush.msra.mxu0 0.0
      %5448 = vmatpush.msra.mxu0 0.0
      %5449 = vmatpush.msra.mxu0 0.0
      %5450 = vmatpush.msra.mxu0 0.0
      %5451 = vmatpush.msra.mxu0 0.0
      %5452 = vmatpush.msra.mxu0 0.0
      %5453 = vmatpush.msra.mxu0 0.0
      %5454 = vmatpush.msra.mxu0 0.0
      %5455 = vmatpush.msra.mxu0 %v5344
      %5456 = vmatpush.msra.mxu0 %v5343
      %5457 = vmatmul.f32.gmra.mxu0 %v5346
      %v5458 = vpop.f32.mrf.mxu0
      %v5459 = vadd.f32 0.0, %v5458
      %5460 = vmatmul.f32.gmra.mxu0 %v5349
      %v5461 = vpop.f32.mrf.mxu0
      %v5462 = vadd.f32 0.0, %v5461
      %5463 = vmatmul.f32.gmra.mxu0 %v5352
      %v5464 = vpop.f32.mrf.mxu0
      %v5465 = vadd.f32 0.0, %v5464
      %5466 = vmatmul.f32.gmra.mxu0 %v5355
      %v5467 = vpop.f32.mrf.mxu0
      %v5468 = vadd.f32 0.0, %v5467
      %5469 = vmatmul.f32.gmra.mxu0 %v5358
      %v5470 = vpop.f32.mrf.mxu0
      %v5471 = vadd.f32 0.0, %v5470
      %5472 = vmatmul.f32.gmra.mxu0 %v5361
      %v5473 = vpop.f32.mrf.mxu0
      %v5474 = vadd.f32 0.0, %v5473
      %5475 = vmatmul.f32.gmra.mxu0 %v5364
      %v5476 = vpop.f32.mrf.mxu0
      %v5477 = vadd.f32 0.0, %v5476
      %5478 = vmatmul.f32.gmra.mxu0 %v5367
      %v5479 = vpop.f32.mrf.mxu0
      %v5480 = vadd.f32 0.0, %v5479
      %5481 = vmatmul.f32.gmra.mxu0 %v5370
      %v5482 = vpop.f32.mrf.mxu0
      %v5483 = vadd.f32 0.0, %v5482
      %5484 = vmatmul.f32.gmra.mxu0 %v5373
      %v5485 = vpop.f32.mrf.mxu0
      %v5486 = vadd.f32 0.0, %v5485
      %5487 = vmatmul.f32.gmra.mxu0 %v5376
      %v5488 = vpop.f32.mrf.mxu0
      %v5489 = vadd.f32 0.0, %v5488
      %5490 = vmatmul.f32.gmra.mxu0 %v5379
      %v5491 = vpop.f32.mrf.mxu0
      %v5492 = vadd.f32 0.0, %v5491
      %5493 = vmatmul.f32.gmra.mxu0 %v5382
      %v5494 = vpop.f32.mrf.mxu0
      %v5495 = vadd.f32 0.0, %v5494
      %5496 = vmatmul.f32.gmra.mxu0 %v5385
      %v5497 = vpop.f32.mrf.mxu0
      %v5498 = vadd.f32 0.0, %v5497
      %5499 = vmatmul.f32.gmra.mxu0 %v5388
      %v5500 = vpop.f32.mrf.mxu0
      %v5501 = vadd.f32 0.0, %v5500
      %5502 = vmatmul.f32.gmra.mxu0 %v5391
      %v5503 = vpop.f32.mrf.mxu0
      %v5504 = vadd.f32 0.0, %v5503
      %5505 = vmatmul.f32.gmra.mxu0 %v5394
      %v5506 = vpop.f32.mrf.mxu0
      %v5507 = vadd.f32 0.0, %v5506
      %5508 = vmatmul.f32.gmra.mxu0 %v5397
      %v5509 = vpop.f32.mrf.mxu0
      %v5510 = vadd.f32 0.0, %v5509
      %5511 = vmatmul.f32.gmra.mxu0 %v5400
      %v5512 = vpop.f32.mrf.mxu0
      %v5513 = vadd.f32 0.0, %v5512
      %5514 = vmatmul.f32.gmra.mxu0 %v5403
      %v5515 = vpop.f32.mrf.mxu0
      %v5516 = vadd.f32 0.0, %v5515
      %5517 = vmatmul.f32.gmra.mxu0 %v5406
      %v5518 = vpop.f32.mrf.mxu0
      %v5519 = vadd.f32 0.0, %v5518
      %5520 = vmatmul.f32.gmra.mxu0 %v5409
      %v5521 = vpop.f32.mrf.mxu0
      %v5522 = vadd.f32 0.0, %v5521
      %5523 = vmatmul.f32.gmra.mxu0 %v5412
      %v5524 = vpop.f32.mrf.mxu0
      %v5525 = vadd.f32 0.0, %v5524
      %5526 = vmatmul.f32.gmra.mxu0 %v5415
      %v5527 = vpop.f32.mrf.mxu0
      %v5528 = vadd.f32 0.0, %v5527
      %5529 = vmatmul.f32.gmra.mxu0 %v5418
      %v5530 = vpop.f32.mrf.mxu0
      %v5531 = vadd.f32 0.0, %v5530
      %5532 = vmatmul.f32.gmra.mxu0 %v5421
      %v5533 = vpop.f32.mrf.mxu0
      %v5534 = vadd.f32 0.0, %v5533
      %5535 = vmatmul.f32.gmra.mxu0 %v5424
      %v5536 = vpop.f32.mrf.mxu0
      %v5537 = vadd.f32 0.0, %v5536
      %5538 = vmatmul.f32.gmra.mxu0 %v5427
      %v5539 = vpop.f32.mrf.mxu0
      %v5540 = vadd.f32 0.0, %v5539
      %5541 = vmatmul.f32.gmra.mxu0 %v5430
      %v5542 = vpop.f32.mrf.mxu0
      %v5543 = vadd.f32 0.0, %v5542
      %5544 = vmatmul.f32.gmra.mxu0 %v5433
      %v5545 = vpop.f32.mrf.mxu0
      %v5546 = vadd.f32 0.0, %v5545
      %5547 = vmatmul.f32.gmra.mxu0 %v5436
      %v5548 = vpop.f32.mrf.mxu0
      %v5549 = vadd.f32 0.0, %v5548
      %5550 = vmatmul.f32.gmra.mxu0 %v5439
      %v5551 = vpop.f32.mrf.mxu0
      %v5552 = vadd.f32 0.0, %v5551
      %5553 = vdwg.mxu0
      %v5554 = vadd.f32 %v5278, %v5459
      %v5555 = vadd.f32 %v5279, %v5462
      %v5556 = vadd.f32 %v5280, %v5465
      %v5557 = vadd.f32 %v5281, %v5468
      %v5558 = vadd.f32 %v5282, %v5471
      %v5559 = vadd.f32 %v5283, %v5474
      %v5560 = vadd.f32 %v5284, %v5477
      %v5561 = vadd.f32 %v5285, %v5480
      %v5562 = vadd.f32 %v5286, %v5483
      %v5563 = vadd.f32 %v5287, %v5486
      %v5564 = vadd.f32 %v5288, %v5489
      %v5565 = vadd.f32 %v5289, %v5492
      %v5566 = vadd.f32 %v5290, %v5495
      %v5567 = vadd.f32 %v5291, %v5498
      %v5568 = vadd.f32 %v5292, %v5501
      %v5569 = vadd.f32 %v5293, %v5504
      %v5570 = vadd.f32 %v5294, %v5507
      %v5571 = vadd.f32 %v5295, %v5510
      %v5572 = vadd.f32 %v5296, %v5513
      %v5573 = vadd.f32 %v5297, %v5516
      %v5574 = vadd.f32 %v5298, %v5519
      %v5575 = vadd.f32 %v5299, %v5522
      %v5576 = vadd.f32 %v5300, %v5525
      %v5577 = vadd.f32 %v5301, %v5528
      %v5578 = vadd.f32 %v5302, %v5531
      %v5579 = vadd.f32 %v5303, %v5534
      %v5580 = vadd.f32 %v5304, %v5537
      %v5581 = vadd.f32 %v5305, %v5540
      %v5582 = vadd.f32 %v5306, %v5543
      %v5583 = vadd.f32 %v5307, %v5546
      %v5584 = vadd.f32 %v5308, %v5549
      %v5585 = vadd.f32 %v5309, %v5552
      %v5586 = vld [vmem:[%s5] sm:$0x1]
      %v5588 = vperm.slane %v5586, 0
      %v5590 = vmul.f32 %v5554, %v5588
      %v5591 = vmul.f32 %v5555, %v5588
      %v5592 = vmul.f32 %v5556, %v5588
      %v5593 = vmul.f32 %v5557, %v5588
      %v5594 = vmul.f32 %v5558, %v5588
      %v5595 = vmul.f32 %v5559, %v5588
      %v5596 = vmul.f32 %v5560, %v5588
      %v5597 = vmul.f32 %v5561, %v5588
      %v5598 = vmul.f32 %v5562, %v5588
      %v5599 = vmul.f32 %v5563, %v5588
      %v5600 = vmul.f32 %v5564, %v5588
      %v5601 = vmul.f32 %v5565, %v5588
      %v5602 = vmul.f32 %v5566, %v5588
      %v5603 = vmul.f32 %v5567, %v5588
      %v5604 = vmul.f32 %v5568, %v5588
      %v5605 = vmul.f32 %v5569, %v5588
      %v5606 = vmul.f32 %v5570, %v5588
      %v5607 = vmul.f32 %v5571, %v5588
      %v5608 = vmul.f32 %v5572, %v5588
      %v5609 = vmul.f32 %v5573, %v5588
      %v5610 = vmul.f32 %v5574, %v5588
      %v5611 = vmul.f32 %v5575, %v5588
      %v5612 = vmul.f32 %v5576, %v5588
      %v5613 = vmul.f32 %v5577, %v5588
      %v5614 = vmul.f32 %v5578, %v5588
      %v5615 = vmul.f32 %v5579, %v5588
      %v5616 = vmul.f32 %v5580, %v5588
      %v5617 = vmul.f32 %v5581, %v5588
      %v5618 = vmul.f32 %v5582, %v5588
      %v5619 = vmul.f32 %v5583, %v5588
      %v5620 = vmul.f32 %v5584, %v5588
      %v5621 = vmul.f32 %v5585, %v5588
      %v5622 = vld [vmem:[%s6] sm:$0x1]
      %v5624 = vperm.slane %v5622, 0
      %v5626 = vadd.f32 %v5590, %v5624
      %v5627 = vadd.f32 %v5591, %v5624
      %v5628 = vadd.f32 %v5592, %v5624
      %v5629 = vadd.f32 %v5593, %v5624
      %v5630 = vadd.f32 %v5594, %v5624
      %v5631 = vadd.f32 %v5595, %v5624
      %v5632 = vadd.f32 %v5596, %v5624
      %v5633 = vadd.f32 %v5597, %v5624
      %v5634 = vadd.f32 %v5598, %v5624
      %v5635 = vadd.f32 %v5599, %v5624
      %v5636 = vadd.f32 %v5600, %v5624
      %v5637 = vadd.f32 %v5601, %v5624
      %v5638 = vadd.f32 %v5602, %v5624
      %v5639 = vadd.f32 %v5603, %v5624
      %v5640 = vadd.f32 %v5604, %v5624
      %v5641 = vadd.f32 %v5605, %v5624
      %v5642 = vadd.f32 %v5606, %v5624
      %v5643 = vadd.f32 %v5607, %v5624
      %v5644 = vadd.f32 %v5608, %v5624
      %v5645 = vadd.f32 %v5609, %v5624
      %v5646 = vadd.f32 %v5610, %v5624
      %v5647 = vadd.f32 %v5611, %v5624
      %v5648 = vadd.f32 %v5612, %v5624
      %v5649 = vadd.f32 %v5613, %v5624
      %v5650 = vadd.f32 %v5614, %v5624
      %v5651 = vadd.f32 %v5615, %v5624
      %v5652 = vadd.f32 %v5616, %v5624
      %v5653 = vadd.f32 %v5617, %v5624
      %v5654 = vadd.f32 %v5618, %v5624
      %v5655 = vadd.f32 %v5619, %v5624
      %v5656 = vadd.f32 %v5620, %v5624
      %v5657 = vadd.f32 %v5621, %v5624
      %v5658 = vsel %vm3077, %v5626, 0.0
      %v5659 = vsel %vm3077, %v5627, 0.0
      %v5660 = vadd.f32 %v5658, %v5659
      %v5661 = vsel %vm3077, %v5628, 0.0
      %v5662 = vadd.f32 %v5660, %v5661
      %v5663 = vsel %vm3077, %v5629, 0.0
      %v5664 = vadd.f32 %v5662, %v5663
      %v5665 = vsel %vm3077, %v5630, 0.0
      %v5666 = vadd.f32 %v5664, %v5665
      %v5667 = vsel %vm3077, %v5631, 0.0
      %v5668 = vadd.f32 %v5666, %v5667
      %v5669 = vsel %vm3077, %v5632, 0.0
      %v5670 = vadd.f32 %v5668, %v5669
      %v5671 = vsel %vm3077, %v5633, 0.0
      %v5672 = vadd.f32 %v5670, %v5671
      %v5673 = vsel %vm3077, %v5634, 0.0
      %v5674 = vadd.f32 %v5672, %v5673
      %v5675 = vsel %vm3077, %v5635, 0.0
      %v5676 = vadd.f32 %v5674, %v5675
      %v5677 = vsel %vm3077, %v5636, 0.0
      %v5678 = vadd.f32 %v5676, %v5677
      %v5679 = vsel %vm3077, %v5637, 0.0
      %v5680 = vadd.f32 %v5678, %v5679
      %v5681 = vsel %vm3077, %v5638, 0.0
      %v5682 = vadd.f32 %v5680, %v5681
      %v5683 = vsel %vm3077, %v5639, 0.0
      %v5684 = vadd.f32 %v5682, %v5683
      %v5685 = vsel %vm3077, %v5640, 0.0
      %v5686 = vadd.f32 %v5684, %v5685
      %v5687 = vsel %vm3077, %v5641, 0.0
      %v5688 = vadd.f32 %v5686, %v5687
      %v5689 = vsel %vm3077, %v5642, 0.0
      %v5690 = vadd.f32 %v5688, %v5689
      %v5691 = vsel %vm3077, %v5643, 0.0
      %v5692 = vadd.f32 %v5690, %v5691
      %v5693 = vsel %vm3077, %v5644, 0.0
      %v5694 = vadd.f32 %v5692, %v5693
      %v5695 = vsel %vm3077, %v5645, 0.0
      %v5696 = vadd.f32 %v5694, %v5695
      %v5697 = vsel %vm3077, %v5646, 0.0
      %v5698 = vadd.f32 %v5696, %v5697
      %v5699 = vsel %vm3077, %v5647, 0.0
      %v5700 = vadd.f32 %v5698, %v5699
      %v5701 = vsel %vm3077, %v5648, 0.0
      %v5702 = vadd.f32 %v5700, %v5701
      %v5703 = vsel %vm3077, %v5649, 0.0
      %v5704 = vadd.f32 %v5702, %v5703
      %v5705 = vsel %vm3077, %v5650, 0.0
      %v5706 = vadd.f32 %v5704, %v5705
      %v5707 = vsel %vm3077, %v5651, 0.0
      %v5708 = vadd.f32 %v5706, %v5707
      %v5709 = vsel %vm3077, %v5652, 0.0
      %v5710 = vadd.f32 %v5708, %v5709
      %v5711 = vsel %vm3077, %v5653, 0.0
      %v5712 = vadd.f32 %v5710, %v5711
      %v5713 = vsel %vm3077, %v5654, 0.0
      %v5714 = vadd.f32 %v5712, %v5713
      %v5715 = vsel %vm3077, %v5655, 0.0
      %v5716 = vadd.f32 %v5714, %v5715
      %v5717 = vsel %vm3077, %v5656, 0.0
      %v5718 = vadd.f32 %v5716, %v5717
      %v5719 = vsel %vm3077, %v5657, 0.0
      %v5720 = vadd.f32 %v5718, %v5719
      %v5721 = vrot.slane %v5720, 4
      %v5722 = vadd.f32 %v5720, %v5721
      %v5723 = vrot.slane %v5722, 2
      %v5724 = vadd.f32 %v5722, %v5723
      %v5725 = vrot.slane %v5724, 1
      %v5726 = vadd.f32 %v5724, %v5725
      %v5727 = vmul.f32 %v5726, 0.00390625
      %v5728 = vld [vmem:[%s7] sm:$0x1]
      %v5729 = vmul.f32 %v5728, %v5727
      %vm5730 = vcmask 122880
      %v5731 = vsel %vm5730, %v5729, 0.0
      %5732 = vadd.xlane.f32.xlu0 %v5731
      %v5733 = vpop.xlane.xlu0 %5732
      %v5734 = vmax.f32 %v5733, 0.0
      %v5735 = vld [vmem:[%s8] sm:$0x1]
      %v5736 = vmul.f32 %v5735, %v5734
      %v5737 = vadd.f32 %v5736, 0.0
      %v5738 = vxor.u32 %v5737, 2147483648
      %v5739 = vmul.f32 %v5738, 1.442695
      %v5740 = vpow.pop %v5739
      %v5741 = vadd.f32 %v5740, 1.0
      %v5742 = vrcp.pop %v5741
      %v5743 = vmul.f32 %v5741, %v5742
      %v5744 = vsub.f32 1.0, %v5743
      %v5745 = vmul.f32 %v5742, %v5744
      %v5746 = vadd.f32 %v5742, %v5745
      %vm5747 = vweird.f32 %v5741
      %vm5748 = vweird.f32 %v5742
      %vm5749 = vmor %vm5747, %vm5748
      %v5750 = vsel %vm5749, %v5742, %v5746
      %v5751 = vand.u32 2147483647, %v5741
      %vm5752 = vcmp.eq.f32.partialorder %v5751, 8.507059e+37
      %v5753 = vand.u32 %v5741, 2147483648
      %v5754 = vor.u32 1.1754944e-38, %v5753
      %v5755 = vsel %vm5752, %v5754, %v5750
      %v5756 = vmul.f32 1.0, %v5755
      %v5757 = vld [vmem:[%s9] sm:$0xff]
      %v5758 = vld [vmem:[%s9 + $0x8] sm:$0xff]
      %v5759 = vld [vmem:[%s9 + $0x10] sm:$0xff]
      %v5760 = vld [vmem:[%s9 + $0x18] sm:$0xff]
      %v5762 = vsel %vm446, %v414, 0
      %v5765 = vsel %vm446, %v415, 0
      %v5768 = vsel %vm446, %v416, 0
      %v5771 = vsel %vm446, %v417, 0
      %v5774 = vsel %vm446, %v418, 0
      %v5777 = vsel %vm446, %v419, 0
      %v5780 = vsel %vm446, %v420, 0
      %v5783 = vsel %vm446, %v421, 0
      %v5786 = vsel %vm446, %v422, 0
      %v5789 = vsel %vm446, %v423, 0
      %v5792 = vsel %vm446, %v424, 0
      %v5795 = vsel %vm446, %v425, 0
      %v5798 = vsel %vm446, %v426, 0
      %v5801 = vsel %vm446, %v427, 0
      %v5804 = vsel %vm446, %v428, 0
      %v5807 = vsel %vm446, %v429, 0
      %v5810 = vsel %vm446, %v430, 0
      %v5813 = vsel %vm446, %v431, 0
      %v5816 = vsel %vm446, %v432, 0
      %v5819 = vsel %vm446, %v433, 0
      %v5822 = vsel %vm446, %v434, 0
      %v5825 = vsel %vm446, %v435, 0
      %v5828 = vsel %vm446, %v436, 0
      %v5831 = vsel %vm446, %v437, 0
      %v5834 = vsel %vm446, %v438, 0
      %v5837 = vsel %vm446, %v439, 0
      %v5840 = vsel %vm446, %v440, 0
      %v5843 = vsel %vm446, %v441, 0
      %v5846 = vsel %vm446, %v442, 0
      %v5849 = vsel %vm446, %v443, 0
      %v5852 = vsel %vm446, %v444, 0
      %v5855 = vsel %vm446, %v445, 0
      %5857 = vmatpush.msra.mxu0 0.0
      %5858 = vmatpush.msra.mxu0 0.0
      %5859 = vmatpush.msra.mxu0 0.0
      %5860 = vmatpush.msra.mxu0 0.0
      %5861 = vmatpush.msra.mxu0 0.0
      %5862 = vmatpush.msra.mxu0 0.0
      %5863 = vmatpush.msra.mxu0 0.0
      %5864 = vmatpush.msra.mxu0 0.0
      %5865 = vmatpush.msra.mxu0 0.0
      %5866 = vmatpush.msra.mxu0 0.0
      %5867 = vmatpush.msra.mxu0 0.0
      %5868 = vmatpush.msra.mxu0 0.0
      %5869 = vmatpush.msra.mxu0 %v5760
      %5870 = vmatpush.msra.mxu0 %v5759
      %5871 = vmatpush.msra.mxu0 %v5758
      %5872 = vmatpush.msra.mxu0 %v5757
      %5873 = vmatmul.f32.gmra.mxu0 %v5762
      %v5874 = vpop.f32.mrf.mxu0
      %v5875 = vadd.f32 0.0, %v5874
      %5876 = vmatmul.f32.gmra.mxu0 %v5765
      %v5877 = vpop.f32.mrf.mxu0
      %v5878 = vadd.f32 0.0, %v5877
      %5879 = vmatmul.f32.gmra.mxu0 %v5768
      %v5880 = vpop.f32.mrf.mxu0
      %v5881 = vadd.f32 0.0, %v5880
      %5882 = vmatmul.f32.gmra.mxu0 %v5771
      %v5883 = vpop.f32.mrf.mxu0
      %v5884 = vadd.f32 0.0, %v5883
      %5885 = vmatmul.f32.gmra.mxu0 %v5774
      %v5886 = vpop.f32.mrf.mxu0
      %v5887 = vadd.f32 0.0, %v5886
      %5888 = vmatmul.f32.gmra.mxu0 %v5777
      %v5889 = vpop.f32.mrf.mxu0
      %v5890 = vadd.f32 0.0, %v5889
      %5891 = vmatmul.f32.gmra.mxu0 %v5780
      %v5892 = vpop.f32.mrf.mxu0
      %v5893 = vadd.f32 0.0, %v5892
      %5894 = vmatmul.f32.gmra.mxu0 %v5783
      %v5895 = vpop.f32.mrf.mxu0
      %v5896 = vadd.f32 0.0, %v5895
      %5897 = vmatmul.f32.gmra.mxu0 %v5786
      %v5898 = vpop.f32.mrf.mxu0
      %v5899 = vadd.f32 0.0, %v5898
      %5900 = vmatmul.f32.gmra.mxu0 %v5789
      %v5901 = vpop.f32.mrf.mxu0
      %v5902 = vadd.f32 0.0, %v5901
      %5903 = vmatmul.f32.gmra.mxu0 %v5792
      %v5904 = vpop.f32.mrf.mxu0
      %v5905 = vadd.f32 0.0, %v5904
      %5906 = vmatmul.f32.gmra.mxu0 %v5795
      %v5907 = vpop.f32.mrf.mxu0
      %v5908 = vadd.f32 0.0, %v5907
      %5909 = vmatmul.f32.gmra.mxu0 %v5798
      %v5910 = vpop.f32.mrf.mxu0
      %v5911 = vadd.f32 0.0, %v5910
      %5912 = vmatmul.f32.gmra.mxu0 %v5801
      %v5913 = vpop.f32.mrf.mxu0
      %v5914 = vadd.f32 0.0, %v5913
      %5915 = vmatmul.f32.gmra.mxu0 %v5804
      %v5916 = vpop.f32.mrf.mxu0
      %v5917 = vadd.f32 0.0, %v5916
      %5918 = vmatmul.f32.gmra.mxu0 %v5807
      %v5919 = vpop.f32.mrf.mxu0
      %v5920 = vadd.f32 0.0, %v5919
      %5921 = vmatmul.f32.gmra.mxu0 %v5810
      %v5922 = vpop.f32.mrf.mxu0
      %v5923 = vadd.f32 0.0, %v5922
      %5924 = vmatmul.f32.gmra.mxu0 %v5813
      %v5925 = vpop.f32.mrf.mxu0
      %v5926 = vadd.f32 0.0, %v5925
      %5927 = vmatmul.f32.gmra.mxu0 %v5816
      %v5928 = vpop.f32.mrf.mxu0
      %v5929 = vadd.f32 0.0, %v5928
      %5930 = vmatmul.f32.gmra.mxu0 %v5819
      %v5931 = vpop.f32.mrf.mxu0
      %v5932 = vadd.f32 0.0, %v5931
      %5933 = vmatmul.f32.gmra.mxu0 %v5822
      %v5934 = vpop.f32.mrf.mxu0
      %v5935 = vadd.f32 0.0, %v5934
      %5936 = vmatmul.f32.gmra.mxu0 %v5825
      %v5937 = vpop.f32.mrf.mxu0
      %v5938 = vadd.f32 0.0, %v5937
      %5939 = vmatmul.f32.gmra.mxu0 %v5828
      %v5940 = vpop.f32.mrf.mxu0
      %v5941 = vadd.f32 0.0, %v5940
      %5942 = vmatmul.f32.gmra.mxu0 %v5831
      %v5943 = vpop.f32.mrf.mxu0
      %v5944 = vadd.f32 0.0, %v5943
      %5945 = vmatmul.f32.gmra.mxu0 %v5834
      %v5946 = vpop.f32.mrf.mxu0
      %v5947 = vadd.f32 0.0, %v5946
      %5948 = vmatmul.f32.gmra.mxu0 %v5837
      %v5949 = vpop.f32.mrf.mxu0
      %v5950 = vadd.f32 0.0, %v5949
      %5951 = vmatmul.f32.gmra.mxu0 %v5840
      %v5952 = vpop.f32.mrf.mxu0
      %v5953 = vadd.f32 0.0, %v5952
      %5954 = vmatmul.f32.gmra.mxu0 %v5843
      %v5955 = vpop.f32.mrf.mxu0
      %v5956 = vadd.f32 0.0, %v5955
      %5957 = vmatmul.f32.gmra.mxu0 %v5846
      %v5958 = vpop.f32.mrf.mxu0
      %v5959 = vadd.f32 0.0, %v5958
      %5960 = vmatmul.f32.gmra.mxu0 %v5849
      %v5961 = vpop.f32.mrf.mxu0
      %v5962 = vadd.f32 0.0, %v5961
      %5963 = vmatmul.f32.gmra.mxu0 %v5852
      %v5964 = vpop.f32.mrf.mxu0
      %v5965 = vadd.f32 0.0, %v5964
      %5966 = vmatmul.f32.gmra.mxu0 %v5855
      %v5967 = vpop.f32.mrf.mxu0
      %v5968 = vadd.f32 0.0, %v5967
      %5969 = vdwg.mxu0
      %v5970 = vld [vmem:[%s10] sm:$0x1]
      %v5972 = vperm.slane %v5970, 0
      %v5974 = vmul.f32 %v5875, %v5972
      %v5975 = vmul.f32 %v5878, %v5972
      %v5976 = vmul.f32 %v5881, %v5972
      %v5977 = vmul.f32 %v5884, %v5972
      %v5978 = vmul.f32 %v5887, %v5972
      %v5979 = vmul.f32 %v5890, %v5972
      %v5980 = vmul.f32 %v5893, %v5972
      %v5981 = vmul.f32 %v5896, %v5972
      %v5982 = vmul.f32 %v5899, %v5972
      %v5983 = vmul.f32 %v5902, %v5972
      %v5984 = vmul.f32 %v5905, %v5972
      %v5985 = vmul.f32 %v5908, %v5972
      %v5986 = vmul.f32 %v5911, %v5972
      %v5987 = vmul.f32 %v5914, %v5972
      %v5988 = vmul.f32 %v5917, %v5972
      %v5989 = vmul.f32 %v5920, %v5972
      %v5990 = vmul.f32 %v5923, %v5972
      %v5991 = vmul.f32 %v5926, %v5972
      %v5992 = vmul.f32 %v5929, %v5972
      %v5993 = vmul.f32 %v5932, %v5972
      %v5994 = vmul.f32 %v5935, %v5972
      %v5995 = vmul.f32 %v5938, %v5972
      %v5996 = vmul.f32 %v5941, %v5972
      %v5997 = vmul.f32 %v5944, %v5972
      %v5998 = vmul.f32 %v5947, %v5972
      %v5999 = vmul.f32 %v5950, %v5972
      %v6000 = vmul.f32 %v5953, %v5972
      %v6001 = vmul.f32 %v5956, %v5972
      %v6002 = vmul.f32 %v5959, %v5972
      %v6003 = vmul.f32 %v5962, %v5972
      %v6004 = vmul.f32 %v5965, %v5972
      %v6005 = vmul.f32 %v5968, %v5972
      %v6006 = vld [vmem:[%s11] sm:$0x1]
      %v6008 = vperm.slane %v6006, 0
      %v6010 = vadd.f32 %v5974, %v6008
      %v6011 = vadd.f32 %v5975, %v6008
      %v6012 = vadd.f32 %v5976, %v6008
      %v6013 = vadd.f32 %v5977, %v6008
      %v6014 = vadd.f32 %v5978, %v6008
      %v6015 = vadd.f32 %v5979, %v6008
      %v6016 = vadd.f32 %v5980, %v6008
      %v6017 = vadd.f32 %v5981, %v6008
      %v6018 = vadd.f32 %v5982, %v6008
      %v6019 = vadd.f32 %v5983, %v6008
      %v6020 = vadd.f32 %v5984, %v6008
      %v6021 = vadd.f32 %v5985, %v6008
      %v6022 = vadd.f32 %v5986, %v6008
      %v6023 = vadd.f32 %v5987, %v6008
      %v6024 = vadd.f32 %v5988, %v6008
      %v6025 = vadd.f32 %v5989, %v6008
      %v6026 = vadd.f32 %v5990, %v6008
      %v6027 = vadd.f32 %v5991, %v6008
      %v6028 = vadd.f32 %v5992, %v6008
      %v6029 = vadd.f32 %v5993, %v6008
      %v6030 = vadd.f32 %v5994, %v6008
      %v6031 = vadd.f32 %v5995, %v6008
      %v6032 = vadd.f32 %v5996, %v6008
      %v6033 = vadd.f32 %v5997, %v6008
      %v6034 = vadd.f32 %v5998, %v6008
      %v6035 = vadd.f32 %v5999, %v6008
      %v6036 = vadd.f32 %v6000, %v6008
      %v6037 = vadd.f32 %v6001, %v6008
      %v6038 = vadd.f32 %v6002, %v6008
      %v6039 = vadd.f32 %v6003, %v6008
      %v6040 = vadd.f32 %v6004, %v6008
      %v6041 = vadd.f32 %v6005, %v6008
      %v6043 = vperm.slane %v5756, 0
      %v6045 = vmul.f32 %v5626, %v6043
      %v6046 = vmul.f32 %v5627, %v6043
      %v6047 = vmul.f32 %v5628, %v6043
      %v6048 = vmul.f32 %v5629, %v6043
      %v6049 = vmul.f32 %v5630, %v6043
      %v6050 = vmul.f32 %v5631, %v6043
      %v6051 = vmul.f32 %v5632, %v6043
      %v6052 = vmul.f32 %v5633, %v6043
      %v6053 = vmul.f32 %v5634, %v6043
      %v6054 = vmul.f32 %v5635, %v6043
      %v6055 = vmul.f32 %v5636, %v6043
      %v6056 = vmul.f32 %v5637, %v6043
      %v6057 = vmul.f32 %v5638, %v6043
      %v6058 = vmul.f32 %v5639, %v6043
      %v6059 = vmul.f32 %v5640, %v6043
      %v6060 = vmul.f32 %v5641, %v6043
      %v6061 = vmul.f32 %v5642, %v6043
      %v6062 = vmul.f32 %v5643, %v6043
      %v6063 = vmul.f32 %v5644, %v6043
      %v6064 = vmul.f32 %v5645, %v6043
      %v6065 = vmul.f32 %v5646, %v6043
      %v6066 = vmul.f32 %v5647, %v6043
      %v6067 = vmul.f32 %v5648, %v6043
      %v6068 = vmul.f32 %v5649, %v6043
      %v6069 = vmul.f32 %v5650, %v6043
      %v6070 = vmul.f32 %v5651, %v6043
      %v6071 = vmul.f32 %v5652, %v6043
      %v6072 = vmul.f32 %v5653, %v6043
      %v6073 = vmul.f32 %v5654, %v6043
      %v6074 = vmul.f32 %v5655, %v6043
      %v6075 = vmul.f32 %v5656, %v6043
      %v6076 = vmul.f32 %v5657, %v6043
      %v6077 = vadd.f32 %v6045, %v6010
      %v6078 = vadd.f32 %v6046, %v6011
      %v6079 = vadd.f32 %v6047, %v6012
      %v6080 = vadd.f32 %v6048, %v6013
      %v6081 = vadd.f32 %v6049, %v6014
      %v6082 = vadd.f32 %v6050, %v6015
      %v6083 = vadd.f32 %v6051, %v6016
      %v6084 = vadd.f32 %v6052, %v6017
      %v6085 = vadd.f32 %v6053, %v6018
      %v6086 = vadd.f32 %v6054, %v6019
      %v6087 = vadd.f32 %v6055, %v6020
      %v6088 = vadd.f32 %v6056, %v6021
      %v6089 = vadd.f32 %v6057, %v6022
      %v6090 = vadd.f32 %v6058, %v6023
      %v6091 = vadd.f32 %v6059, %v6024
      %v6092 = vadd.f32 %v6060, %v6025
      %v6093 = vadd.f32 %v6061, %v6026
      %v6094 = vadd.f32 %v6062, %v6027
      %v6095 = vadd.f32 %v6063, %v6028
      %v6096 = vadd.f32 %v6064, %v6029
      %v6097 = vadd.f32 %v6065, %v6030
      %v6098 = vadd.f32 %v6066, %v6031
      %v6099 = vadd.f32 %v6067, %v6032
      %v6100 = vadd.f32 %v6068, %v6033
      %v6101 = vadd.f32 %v6069, %v6034
      %v6102 = vadd.f32 %v6070, %v6035
      %v6103 = vadd.f32 %v6071, %v6036
      %v6104 = vadd.f32 %v6072, %v6037
      %v6105 = vadd.f32 %v6073, %v6038
      %v6106 = vadd.f32 %v6074, %v6039
      %v6107 = vadd.f32 %v6075, %v6040
      %v6108 = vadd.f32 %v6076, %v6041
      %v6109 = vmax.f32 %v6077, 0.0
      %v6110 = vmax.f32 %v6078, 0.0
      %v6111 = vmax.f32 %v6079, 0.0
      %v6112 = vmax.f32 %v6080, 0.0
      %v6113 = vmax.f32 %v6081, 0.0
      %v6114 = vmax.f32 %v6082, 0.0
      %v6115 = vmax.f32 %v6083, 0.0
      %v6116 = vmax.f32 %v6084, 0.0
      %v6117 = vmax.f32 %v6085, 0.0
      %v6118 = vmax.f32 %v6086, 0.0
      %v6119 = vmax.f32 %v6087, 0.0
      %v6120 = vmax.f32 %v6088, 0.0
      %v6121 = vmax.f32 %v6089, 0.0
      %v6122 = vmax.f32 %v6090, 0.0
      %v6123 = vmax.f32 %v6091, 0.0
      %v6124 = vmax.f32 %v6092, 0.0
      %v6125 = vmax.f32 %v6093, 0.0
      %v6126 = vmax.f32 %v6094, 0.0
      %v6127 = vmax.f32 %v6095, 0.0
      %v6128 = vmax.f32 %v6096, 0.0
      %v6129 = vmax.f32 %v6097, 0.0
      %v6130 = vmax.f32 %v6098, 0.0
      %v6131 = vmax.f32 %v6099, 0.0
      %v6132 = vmax.f32 %v6100, 0.0
      %v6133 = vmax.f32 %v6101, 0.0
      %v6134 = vmax.f32 %v6102, 0.0
      %v6135 = vmax.f32 %v6103, 0.0
      %v6136 = vmax.f32 %v6104, 0.0
      %v6137 = vmax.f32 %v6105, 0.0
      %v6138 = vmax.f32 %v6106, 0.0
      %v6139 = vmax.f32 %v6107, 0.0
      %v6140 = vmax.f32 %v6108, 0.0
      %6141 = vst.msk [vmem:[%s413] sm:$0xff] %vm3077, %v6109
      %6142 = vst.msk [vmem:[%s413 + $0x8] sm:$0xff] %vm3077, %v6110
      %6143 = vst.msk [vmem:[%s413 + $0x10] sm:$0xff] %vm3077, %v6111
      %6144 = vst.msk [vmem:[%s413 + $0x18] sm:$0xff] %vm3077, %v6112
      %6145 = vst.msk [vmem:[%s413 + $0x20] sm:$0xff] %vm3077, %v6113
      %6146 = vst.msk [vmem:[%s413 + $0x28] sm:$0xff] %vm3077, %v6114
      %6147 = vst.msk [vmem:[%s413 + $0x30] sm:$0xff] %vm3077, %v6115
      %6148 = vst.msk [vmem:[%s413 + $0x38] sm:$0xff] %vm3077, %v6116
      %6149 = vst.msk [vmem:[%s413 + $0x40] sm:$0xff] %vm3077, %v6117
      %6150 = vst.msk [vmem:[%s413 + $0x48] sm:$0xff] %vm3077, %v6118
      %6151 = vst.msk [vmem:[%s413 + $0x50] sm:$0xff] %vm3077, %v6119
      %6152 = vst.msk [vmem:[%s413 + $0x58] sm:$0xff] %vm3077, %v6120
      %6153 = vst.msk [vmem:[%s413 + $0x60] sm:$0xff] %vm3077, %v6121
      %6154 = vst.msk [vmem:[%s413 + $0x68] sm:$0xff] %vm3077, %v6122
      %6155 = vst.msk [vmem:[%s413 + $0x70] sm:$0xff] %vm3077, %v6123
      %6156 = vst.msk [vmem:[%s413 + $0x78] sm:$0xff] %vm3077, %v6124
      %6157 = vst.msk [vmem:[%s413 + $0x80] sm:$0xff] %vm3077, %v6125
      %6158 = vst.msk [vmem:[%s413 + $0x88] sm:$0xff] %vm3077, %v6126
      %6159 = vst.msk [vmem:[%s413 + $0x90] sm:$0xff] %vm3077, %v6127
      %6160 = vst.msk [vmem:[%s413 + $0x98] sm:$0xff] %vm3077, %v6128
      %6161 = vst.msk [vmem:[%s413 + $0xa0] sm:$0xff] %vm3077, %v6129
      %6162 = vst.msk [vmem:[%s413 + $0xa8] sm:$0xff] %vm3077, %v6130
      %6163 = vst.msk [vmem:[%s413 + $0xb0] sm:$0xff] %vm3077, %v6131
      %6164 = vst.msk [vmem:[%s413 + $0xb8] sm:$0xff] %vm3077, %v6132
      %6165 = vst.msk [vmem:[%s413 + $0xc0] sm:$0xff] %vm3077, %v6133
      %6166 = vst.msk [vmem:[%s413 + $0xc8] sm:$0xff] %vm3077, %v6134
      %6167 = vst.msk [vmem:[%s413 + $0xd0] sm:$0xff] %vm3077, %v6135
      %6168 = vst.msk [vmem:[%s413 + $0xd8] sm:$0xff] %vm3077, %v6136
      %6169 = vst.msk [vmem:[%s413 + $0xe0] sm:$0xff] %vm3077, %v6137
      %6170 = vst.msk [vmem:[%s413 + $0xe8] sm:$0xff] %vm3077, %v6138
      %6171 = vst.msk [vmem:[%s413 + $0xf0] sm:$0xff] %vm3077, %v6139
      %6172 = vst.msk [vmem:[%s413 + $0xf8] sm:$0xff] %vm3077, %v6140
      %p6173 = scmp.lt.s32.totalorder %s23, 1
      %s6174 = scalar_select %p6173, %s23, 1
      %s6175 = smul.addr %s6174, 32
      %s6176 = smul.addr %s6175, 8
      %s6177 = scalar_lea.vmem %s12, %s6176
      // Predicated region
      $region69: #{dense_block.3} parent=67 // pred_check
        %p6178 = pneg %p298
      $region70: #{dense_block.3} parent=67 // pred_check_branch
        %6180 = sbr.rel (%p6178) target = $region72
      $region71: #{dense_block.3} parent=67 // pred_region
        _
      $region72: #{dense_block.3} parent=67 // pred_fallthru
        _
    $region68: #{dense_block.3} parent=5 // pred_fallthru
      _
    %p6181 = scmp.le.s32.totalorder 2, %s18
    // Predicated region
    $region73: #{dense_block.3} parent=5 // pred_check
      %p6182 = pneg %p6181
    $region74: #{dense_block.3} parent=5 // pred_check_branch
      %6184 = sbr.rel (%p6182) target = $region76
    $region75: #{dense_block.3} parent=5 // pred_region
      %s6185 = ssub.s32 %s18, 2
      // Predicated region
      $region77: #{dense_block.3} parent=75 // pred_check
        %p6186 = pneg %p304
      $region78: #{dense_block.3} parent=75 // pred_check_branch
        %6188 = sbr.rel (%p6186) target = $region80
      $region79: #{dense_block.3} parent=75 // pred_region
        %p6189 = scmp.lt.s32.totalorder %s24, 1
        %s6190 = scalar_select %p6189, %s24, 1
        %s6191 = smul.addr %s6190, 32
        %s6192 = smul.addr %s6191, 8
        %s6193 = scalar_lea.vmem %s12, %s6192
      $region80: #{dense_block.3} parent=75 // pred_fallthru
        _
    $region76: #{dense_block.3} parent=5 // pred_fallthru
      _
  $region6: #{dense_block.3} parent=0 // loop_footer
    %s22 = sadd.s32 1, %s18
  $region7: #{dense_block.3} parent=0 // loop_footer_branch
    %17 = sbr.rel target = $region3
  $region8: #{dense_block.3} parent=0 // loop_exit
    _

</llo_original>
